<compile_context>
chip_gen: v6e
topology: v6e:2x2x1
jax: 0.10.0
libtpu: 0.0.40
codegen_flags: <defaults>
</compile_context>

<pallas_src>
import functools

import jax
import jax.numpy as jnp
from jax.experimental import pallas as pl
from jax.experimental.pallas import tpu as pltpu


# ----------------------------------------------------------------------------
# In-kernel helpers (traced inside the Pallas kernel)
# ----------------------------------------------------------------------------
def _dot_nt(a, b):
    """a @ b.T on the MXU without materializing a transpose ("NT" matmul)."""
    return jax.lax.dot_general(
        a, b, (((1,), (1,)), ((), ())), preferred_element_type=jnp.float32)


def _gn_swish_rows(x, gamma_row, beta_row, gmat, eps):
    """GroupNorm(eps, affine) + x*sigmoid(x) on a spatial-major (S, C) tile.

    gmat: (C, G) one-hot channel->group matrix.  One-pass statistics
    (sum / sum-of-squares) pooled per group with small matmuls, so no
    lane-splitting reshapes are needed.
    """
    s, c = x.shape
    g = gmat.shape[1]
    cnt = float(s * (c // g))
    s1 = jnp.sum(x, axis=0, keepdims=True)            # (1, C)
    s2 = jnp.sum(x * x, axis=0, keepdims=True)        # (1, C)
    gmean = jnp.dot(s1, gmat, preferred_element_type=jnp.float32) / cnt   # (1, G)
    gsq = jnp.dot(s2, gmat, preferred_element_type=jnp.float32) / cnt     # (1, G)
    ginv = jax.lax.rsqrt(gsq - gmean * gmean + eps)                        # (1, G)
    mean_c = _dot_nt(gmean, gmat)                      # broadcast back: (1, C)
    inv_c = _dot_nt(ginv, gmat)                        # (1, C)
    y = (x - mean_c) * (inv_c * gamma_row) + beta_row
    return y * jax.nn.sigmoid(y)


# ----------------------------------------------------------------------------
# Fused ResnetBlock kernel (one grid step == one sample)
# ----------------------------------------------------------------------------
def resnet_block_kernel(x_ref, temb_ref, tw_ref, tb_ref, g1_ref, b1_ref,
                        gm1_ref, w1_ref, b1c_ref, g2_ref, b2_ref, gm2_ref,
                        w2t_ref, b2c_ref, nwt_ref, nb_ref,
                        o_ref, pad1_ref, pad2_ref, *, H, W, eps):
    f32 = jnp.float32
    hw = H * W
    cin = x_ref.shape[1]
    cout = o_ref.shape[1]

    # Per-sample NCHW block: (Cin, H*W), channel-major.
    x_c = x_ref[0].astype(f32)

    # NCHW -> spatial-major (H*W, Cin) via one MXU "NT" matmul with an
    # identity matrix (no HBM transpose round trip).
    rr = jax.lax.broadcasted_iota(jnp.int32, (hw, hw), 0)
    cc = jax.lax.broadcasted_iota(jnp.int32, (hw, hw), 1)
    eye = jnp.where(rr == cc, 1.0, 0.0).astype(f32)
    x_s = _dot_nt(eye, x_c)                                   # (HW, Cin)

    # ---- norm1 + nonlinearity ------------------------------------------------
    h1 = _gn_swish_rows(x_s, g1_ref[...], b1_ref[...], gm1_ref[...], eps)

    # ---- temb_proj(nonlinearity(temb)) (fused, per sample) -------------------
    t_row = temb_ref[0].astype(f32)                           # (1, T)
    t_act = t_row * jax.nn.sigmoid(t_row)
    tb_row = (jnp.dot(t_act, tw_ref[...], preferred_element_type=f32)
              + tb_ref[...])                                  # (1, Cout)

    # ---- conv1 (3x3, pad=1) + bias + temb channel bias -----------------------
    pad1_ref[...] = jnp.zeros_like(pad1_ref)
    pad1_ref[pl.ds(1, H), pl.ds(1, W), :] = h1.reshape(H, W, cin)
    w1 = w1_ref[...]                                          # (3, 3, Cin, Cout)
    acc = None
    for ky in range(3):
        for kx in range(3):
            piece = pad1_ref[pl.ds(ky, H), pl.ds(kx, W), :].reshape(hw, cin)
            d = jnp.dot(piece, w1[ky, kx], preferred_element_type=f32)
            acc = d if acc is None else acc + d
    h2 = acc + b1c_ref[...] + tb_row                          # (HW, Cout), f32

    # ---- norm2 + nonlinearity (dropout == identity in inference) -------------
    # TODO(synk): training-mode dropout (stochastic masking) not implemented.
    h3 = _gn_swish_rows(h2, g2_ref[...], b2_ref[...], gm2_ref[...], eps)

    # ---- conv2 (3x3, pad=1) emitted channel-major via "NT" matmuls, fused
    #      with the 1x1 nin_shortcut on the ORIGINAL x and both biases ---------
    pad2_ref[...] = jnp.zeros_like(pad2_ref)
    pad2_ref[pl.ds(1, H), pl.ds(1, W), :] = h3.reshape(H, W, cout)
    w2t = w2t_ref[...]                                        # (3, 3, Cout, Cout) tap-transposed
    acc2 = None
    for ky in range(3):
        for kx in range(3):
            piece = pad2_ref[pl.ds(ky, H), pl.ds(kx, W), :].reshape(hw, cout)
            d = _dot_nt(w2t[ky, kx], piece)                   # (Cout, HW)
            acc2 = d if acc2 is None else acc2 + d
    shortcut = jnp.dot(nwt_ref[...], x_c, preferred_element_type=f32)  # (Cout, HW)
    out_c = acc2 + b2c_ref[...] + shortcut + nb_ref[...]
    o_ref[...] = out_c[None].astype(o_ref.dtype)              # (1, Cout, HW)


# ----------------------------------------------------------------------------
# Wrapper
# ----------------------------------------------------------------------------
def _group_matrix(c, g, dtype=jnp.float32):
    """(C, G) one-hot matrix mapping each channel to its GroupNorm group."""
    cg = c // g
    ch = jnp.arange(c) // cg
    return (ch[:, None] == jnp.arange(g)[None, :]).astype(dtype)


def resnet_block_forward(x_nchw, temb, params, *, num_groups=32, eps=1e-6):
    """x: (N, Cin, H, W), temb: (N, T) -> (N, Cout, H, W)."""
    n, cin, h, w = x_nchw.shape
    hw = h * w
    cout = params["conv1_w"].shape[-1]
    t = temb.shape[-1]
    assert cin % num_groups == 0 and cout % num_groups == 0
    f32 = jnp.float32

    # Free, contiguous reshapes only (no HBM layout churn).
    x_flat = x_nchw.reshape(n, cin, hw)
    temb3 = temb.reshape(n, 1, t)

    # Tiny parameter re-layouts (weights only, negligible).
    gm1 = _group_matrix(cin, num_groups)
    gm2 = _group_matrix(cout, num_groups)
    w2t = jnp.transpose(params["conv2_w"], (0, 1, 3, 2))      # (3,3,Cout,Cin2) per-tap T
    nwt = jnp.transpose(params["nin_w"], (1, 0))              # (Cout, Cin)

    args = (
        x_flat,                                               # (N, Cin, HW)
        temb3,                                                # (N, 1, T)
        params["temb_w"],                                     # (T, Cout)
        params["temb_b"].reshape(1, cout),
        params["norm1_gamma"].reshape(1, cin),
        params["norm1_beta"].reshape(1, cin),
        gm1,                                                  # (Cin, G)
        params["conv1_w"],                                    # (3,3,Cin,Cout)
        params["conv1_b"].reshape(1, cout),
        params["norm2_gamma"].reshape(1, cout),
        params["norm2_beta"].reshape(1, cout),
        gm2,                                                  # (Cout, G)
        w2t,                                                  # (3,3,Cout,Cout)
        params["conv2_b"].reshape(cout, 1),
        nwt,                                                  # (Cout, Cin)
        params["nin_b"].reshape(cout, 1),
    )

    def _full(shape):
        if len(shape) == 2:
            return pl.BlockSpec(shape, lambda i: (0, 0))
        if len(shape) == 3:
            return pl.BlockSpec(shape, lambda i: (0, 0, 0))
        return pl.BlockSpec(shape, lambda i: (0, 0, 0, 0))

    in_specs = [
        pl.BlockSpec((1, cin, hw), lambda i: (i, 0, 0)),      # x (per sample)
        pl.BlockSpec((1, 1, t), lambda i: (i, 0, 0)),         # temb (per sample)
        _full((t, cout)),
        _full((1, cout)),
        _full((1, cin)),
        _full((1, cin)),
        _full((cin, num_groups)),
        _full((3, 3, cin, cout)),
        _full((1, cout)),
        _full((1, cout)),
        _full((1, cout)),
        _full((cout, num_groups)),
        _full((3, 3, cout, cout)),
        _full((cout, 1)),
        _full((cout, cin)),
        _full((cout, 1)),
    ]

    kern = functools.partial(resnet_block_kernel, H=h, W=w, eps=eps)
    out = pl.pallas_call(
        kern,
        out_shape=jax.ShapeDtypeStruct((n, cout, hw), x_nchw.dtype),
        grid=(n,),
        in_specs=in_specs,
        out_specs=pl.BlockSpec((1, cout, hw), lambda i: (i, 0, 0)),
        scratch_shapes=[
            pltpu.VMEM((h + 2, w + 2, cin), f32),             # padded h1
            pltpu.VMEM((h + 2, w + 2, cout), f32),            # padded h3
        ],
        compiler_params=pltpu.CompilerParams(
            dimension_semantics=("parallel",),
            vmem_limit_bytes=48 * 1024 * 1024,
        ),
    )(*args)
    return out.reshape(n, cout, h, w)


# ----------------------------------------------------------------------------
# Plain-JAX reference (correctness check)
# ----------------------------------------------------------------------------
def _ref_forward(x, temb, params, num_groups=32, eps=1e-6):
    def gn(v, gamma, beta):
        n, c, h, w = v.shape
        vg = v.reshape(n, num_groups, c // num_groups, h, w)
        mean = vg.mean(axis=(2, 3, 4), keepdims=True)
        var = vg.var(axis=(2, 3, 4), keepdims=True)
        vn = ((vg - mean) / jnp.sqrt(var + eps)).reshape(n, c, h, w)
        return vn * gamma[None, :, None, None] + beta[None, :, None, None]

    def swish(v):
        return v * jax.nn.sigmoid(v)

    def conv3(v, wgt, b):  # wgt: (3,3,Cin,Cout)
        w_oihw = jnp.transpose(wgt, (3, 2, 0, 1))
        y = jax.lax.conv_general_dilated(
            v, w_oihw, (1, 1), ((1, 1), (1, 1)),
            dimension_numbers=("NCHW", "OIHW", "NCHW"))
        return y + b[None, :, None, None]

    h = swish(gn(x, params["norm1_gamma"], params["norm1_beta"]))
    h = conv3(h, params["conv1_w"], params["conv1_b"])
    tb = swish(temb) @ params["temb_w"] + params["temb_b"]
    h = h + tb[:, :, None, None]
    h = swish(gn(h, params["norm2_gamma"], params["norm2_beta"]))
    h = conv3(h, params["conv2_w"], params["conv2_b"])
    xs = (jnp.einsum("nchw,co->nohw", x, params["nin_w"])
          + params["nin_b"][None, :, None, None])
    return xs + h


# ----------------------------------------------------------------------------
# Main
# ----------------------------------------------------------------------------
if __name__ == "__main__":
    # GroupNorm(32) requires channels % 32 == 0; use the smallest such config.
    N, Cin, Cout, H, W, T = 2, 32, 64, 16, 16, 64

    key = jax.random.PRNGKey(0)
    ks = jax.random.split(key, 12)

    params = {
        "norm1_gamma": 1.0 + 0.05 * jax.random.normal(ks[0], (Cin,), jnp.float32),
        "norm1_beta": 0.05 * jax.random.normal(ks[1], (Cin,), jnp.float32),
        "conv1_w": 0.1 * jax.random.normal(ks[2], (3, 3, Cin, Cout), jnp.float32),
        "conv1_b": 0.05 * jax.random.normal(ks[3], (Cout,), jnp.float32),
        "temb_w": 0.1 * jax.random.normal(ks[4], (T, Cout), jnp.float32),
        "temb_b": 0.05 * jax.random.normal(ks[5], (Cout,), jnp.float32),
        "norm2_gamma": 1.0 + 0.05 * jax.random.normal(ks[6], (Cout,), jnp.float32),
        "norm2_beta": 0.05 * jax.random.normal(ks[7], (Cout,), jnp.float32),
        "conv2_w": 0.1 * jax.random.normal(ks[8], (3, 3, Cout, Cout), jnp.float32),
        "conv2_b": 0.05 * jax.random.normal(ks[9], (Cout,), jnp.float32),
        "nin_w": 0.1 * jax.random.normal(ks[10], (Cin, Cout), jnp.float32),
        "nin_b": 0.05 * jax.random.normal(ks[11], (Cout,), jnp.float32),
    }

    kx, kt = jax.random.split(jax.random.PRNGKey(42))
    x = jax.random.normal(kx, (N, Cin, H, W), jnp.float32)
    temb = jax.random.normal(kt, (N, T), jnp.float32)

    out = jax.jit(resnet_block_forward)(x, temb, params)
    out = jax.block_until_ready(out)

    ref = _ref_forward(x, temb, params)
    assert out.shape == (N, Cout, H, W)
    assert jnp.allclose(out, ref, rtol=1e-3, atol=1e-3), (
        f"max abs err {jnp.max(jnp.abs(out - ref))}")

    print("KERNEL_OK")
</pallas_src>

<mosaic_0001>
module attributes {stable_mosaic.version = 11 : i64} {
  func.func @resnet_block_kernel(%arg0: i32, %arg1: memref<1x32x256xf32, #tpu.memory_space<vmem>>, %arg2: memref<1x1x64xf32, #tpu.memory_space<vmem>>, %arg3: memref<64x64xf32, #tpu.memory_space<vmem>>, %arg4: memref<1x64xf32, #tpu.memory_space<vmem>>, %arg5: memref<1x32xf32, #tpu.memory_space<vmem>>, %arg6: memref<1x32xf32, #tpu.memory_space<vmem>>, %arg7: memref<32x32xf32, #tpu.memory_space<vmem>>, %arg8: memref<3x3x32x64xf32, #tpu.memory_space<vmem>>, %arg9: memref<1x64xf32, #tpu.memory_space<vmem>>, %arg10: memref<1x64xf32, #tpu.memory_space<vmem>>, %arg11: memref<1x64xf32, #tpu.memory_space<vmem>>, %arg12: memref<64x32xf32, #tpu.memory_space<vmem>>, %arg13: memref<3x3x64x64xf32, #tpu.memory_space<vmem>>, %arg14: memref<64x1xf32, #tpu.memory_space<vmem>>, %arg15: memref<64x32xf32, #tpu.memory_space<vmem>>, %arg16: memref<64x1xf32, #tpu.memory_space<vmem>>, %arg17: memref<1x64x256xf32, #tpu.memory_space<vmem>>, %arg18: memref<18x18x32xf32, #tpu.memory_space<vmem>>, %arg19: memref<18x18x64xf32, #tpu.memory_space<vmem>>) attributes {dimension_semantics = [#tpu.dimension_semantics<parallel>], iteration_bounds = array<i64: 2>, scalar_prefetch = 0 : i64, scratch_operands = 2 : i64, tpu.core_type = #tpu.core_type<tc>, window_params = [{transform_indices = @transform_0, window_bounds = array<i64: 1, 32, 256>}, {transform_indices = @transform_1, window_bounds = array<i64: 1, 1, 64>}, {pipeline_mode = #tpu.pipeline_mode<synchronous>, transform_indices = @transform_2, window_bounds = array<i64: 64, 64>}, {pipeline_mode = #tpu.pipeline_mode<synchronous>, transform_indices = @transform_3, window_bounds = array<i64: 1, 64>}, {pipeline_mode = #tpu.pipeline_mode<synchronous>, transform_indices = @transform_4, window_bounds = array<i64: 1, 32>}, {pipeline_mode = #tpu.pipeline_mode<synchronous>, transform_indices = @transform_5, window_bounds = array<i64: 1, 32>}, {pipeline_mode = #tpu.pipeline_mode<synchronous>, transform_indices = @transform_6, window_bounds = array<i64: 32, 32>}, {pipeline_mode = #tpu.pipeline_mode<synchronous>, transform_indices = @transform_7, window_bounds = array<i64: 3, 3, 32, 64>}, {pipeline_mode = #tpu.pipeline_mode<synchronous>, transform_indices = @transform_8, window_bounds = array<i64: 1, 64>}, {pipeline_mode = #tpu.pipeline_mode<synchronous>, transform_indices = @transform_9, window_bounds = array<i64: 1, 64>}, {pipeline_mode = #tpu.pipeline_mode<synchronous>, transform_indices = @transform_10, window_bounds = array<i64: 1, 64>}, {pipeline_mode = #tpu.pipeline_mode<synchronous>, transform_indices = @transform_11, window_bounds = array<i64: 64, 32>}, {pipeline_mode = #tpu.pipeline_mode<synchronous>, transform_indices = @transform_12, window_bounds = array<i64: 3, 3, 64, 64>}, {pipeline_mode = #tpu.pipeline_mode<synchronous>, transform_indices = @transform_13, window_bounds = array<i64: 64, 1>}, {pipeline_mode = #tpu.pipeline_mode<synchronous>, transform_indices = @transform_14, window_bounds = array<i64: 64, 32>}, {pipeline_mode = #tpu.pipeline_mode<synchronous>, transform_indices = @transform_15, window_bounds = array<i64: 64, 1>}, {transform_indices = @transform_16, window_bounds = array<i64: 1, 64, 256>}]} {
    %c0 = arith.constant 0 : index
    %c0_0 = arith.constant 0 : index
    %c0_1 = arith.constant 0 : index
    %0 = vector.load %arg1[%c0, %c0_0, %c0_1] : memref<1x32x256xf32, #tpu.memory_space<vmem>>, vector<1x32x256xf32>
    %1 = vector.shape_cast %0 : vector<1x32x256xf32> to vector<32x256xf32>
    %2 = tpu.iota {dimensions = array<i32: 0>} : vector<256x256xi32>
    %3 = tpu.iota {dimensions = array<i32: 1>} : vector<256x256xi32>
    %4 = arith.cmpi eq, %2, %3 : vector<256x256xi32>
    %cst = arith.constant 1.000000e+00 : f32
    %cst_2 = arith.constant 0.000000e+00 : f32
    %5 = vector.broadcast %cst : f32 to vector<256x256xf32>
    %6 = vector.broadcast %cst_2 : f32 to vector<256x256xf32>
    %7 = arith.select %4, %5, %6 : vector<256x256xi1>, vector<256x256xf32>
    %cst_3 = arith.constant dense<0.000000e+00> : vector<256x32xf32>
    %8 = tpu.matmul %7, %1, %cst_3 {dimension_numbers = #tpu.dot_dimension_numbers<[1], [1], [0], [0], [0, 0, 1, 0], [], []>} : vector<256x256xf32>, vector<32x256xf32>, vector<256x32xf32> -> vector<256x32xf32>
    %c0_4 = arith.constant 0 : index
    %c0_5 = arith.constant 0 : index
    %9 = vector.load %arg5[%c0_4, %c0_5] : memref<1x32xf32, #tpu.memory_space<vmem>>, vector<1x32xf32>
    %c0_6 = arith.constant 0 : index
    %c0_7 = arith.constant 0 : index
    %10 = vector.load %arg6[%c0_6, %c0_7] : memref<1x32xf32, #tpu.memory_space<vmem>>, vector<1x32xf32>
    %c0_8 = arith.constant 0 : index
    %c0_9 = arith.constant 0 : index
    %11 = vector.load %arg7[%c0_8, %c0_9] : memref<32x32xf32, #tpu.memory_space<vmem>>, vector<32x32xf32>
    %cst_10 = arith.constant dense<0.000000e+00> : vector<32xf32>
    %12 = vector.multi_reduction <add>, %8, %cst_10 [0] : vector<256x32xf32> to vector<32xf32>
    %13 = vector.shape_cast %12 : vector<32xf32> to vector<1x32xf32>
    %14 = arith.mulf %8, %8 : vector<256x32xf32>
    %cst_11 = arith.constant dense<0.000000e+00> : vector<32xf32>
    %15 = vector.multi_reduction <add>, %14, %cst_11 [0] : vector<256x32xf32> to vector<32xf32>
    %16 = vector.shape_cast %15 : vector<32xf32> to vector<1x32xf32>
    %cst_12 = arith.constant dense<0.000000e+00> : vector<1x32xf32>
    %17 = tpu.matmul %13, %11, %cst_12 {dimension_numbers = #tpu.dot_dimension_numbers<[1], [0], [0], [1], [0, 0, 1, 1], [], []>} : vector<1x32xf32>, vector<32x32xf32>, vector<1x32xf32> -> vector<1x32xf32>
    %cst_13 = arith.constant 2.560000e+02 : f32
    %18 = vector.broadcast %cst_13 : f32 to vector<1x32xf32>
    %19 = arith.divf %17, %18 : vector<1x32xf32>
    %cst_14 = arith.constant dense<0.000000e+00> : vector<1x32xf32>
    %20 = tpu.matmul %16, %11, %cst_14 {dimension_numbers = #tpu.dot_dimension_numbers<[1], [0], [0], [1], [0, 0, 1, 1], [], []>} : vector<1x32xf32>, vector<32x32xf32>, vector<1x32xf32> -> vector<1x32xf32>
    %cst_15 = arith.constant 2.560000e+02 : f32
    %21 = vector.broadcast %cst_15 : f32 to vector<1x32xf32>
    %22 = arith.divf %20, %21 : vector<1x32xf32>
    %23 = arith.mulf %19, %19 : vector<1x32xf32>
    %24 = arith.subf %22, %23 : vector<1x32xf32>
    %cst_16 = arith.constant 9.99999997E-7 : f32
    %25 = vector.broadcast %cst_16 : f32 to vector<1x32xf32>
    %26 = arith.addf %24, %25 : vector<1x32xf32>
    %27 = math.rsqrt %26 : vector<1x32xf32>
    %cst_17 = arith.constant dense<0.000000e+00> : vector<1x32xf32>
    %28 = tpu.matmul %19, %11, %cst_17 {dimension_numbers = #tpu.dot_dimension_numbers<[1], [1], [0], [0], [0, 0, 1, 0], [], []>} : vector<1x32xf32>, vector<32x32xf32>, vector<1x32xf32> -> vector<1x32xf32>
    %cst_18 = arith.constant dense<0.000000e+00> : vector<1x32xf32>
    %29 = tpu.matmul %27, %11, %cst_18 {dimension_numbers = #tpu.dot_dimension_numbers<[1], [1], [0], [0], [0, 0, 1, 0], [], []>} : vector<1x32xf32>, vector<32x32xf32>, vector<1x32xf32> -> vector<1x32xf32>
    %30 = vector.broadcast %28 : vector<1x32xf32> to vector<256x32xf32>
    %31 = arith.subf %8, %30 : vector<256x32xf32>
    %32 = arith.mulf %29, %9 : vector<1x32xf32>
    %33 = vector.broadcast %32 : vector<1x32xf32> to vector<256x32xf32>
    %34 = arith.mulf %31, %33 : vector<256x32xf32>
    %35 = vector.broadcast %10 : vector<1x32xf32> to vector<256x32xf32>
    %36 = arith.addf %34, %35 : vector<256x32xf32>
    %37 = arith.negf %36 : vector<256x32xf32>
    %38 = math.exp %37 : vector<256x32xf32>
    %cst_19 = arith.constant 1.000000e+00 : f32
    %39 = vector.broadcast %cst_19 : f32 to vector<256x32xf32>
    %40 = arith.addf %39, %38 : vector<256x32xf32>
    %41 = arith.divf %39, %40 : vector<256x32xf32>
    %42 = arith.mulf %36, %41 : vector<256x32xf32>
    %c0_20 = arith.constant 0 : index
    %c0_21 = arith.constant 0 : index
    %c0_22 = arith.constant 0 : index
    %43 = vector.load %arg2[%c0_20, %c0_21, %c0_22] : memref<1x1x64xf32, #tpu.memory_space<vmem>>, vector<1x1x64xf32>
    %44 = vector.shape_cast %43 : vector<1x1x64xf32> to vector<1x64xf32>
    %45 = arith.negf %44 : vector<1x64xf32>
    %46 = math.exp %45 : vector<1x64xf32>
    %cst_23 = arith.constant 1.000000e+00 : f32
    %47 = vector.broadcast %cst_23 : f32 to vector<1x64xf32>
    %48 = arith.addf %47, %46 : vector<1x64xf32>
    %49 = arith.divf %47, %48 : vector<1x64xf32>
    %50 = arith.mulf %44, %49 : vector<1x64xf32>
    %c0_24 = arith.constant 0 : index
    %c0_25 = arith.constant 0 : index
    %51 = vector.load %arg3[%c0_24, %c0_25] : memref<64x64xf32, #tpu.memory_space<vmem>>, vector<64x64xf32>
    %cst_26 = arith.constant dense<0.000000e+00> : vector<1x64xf32>
    %52 = tpu.matmul %50, %51, %cst_26 {dimension_numbers = #tpu.dot_dimension_numbers<[1], [0], [0], [1], [0, 0, 1, 1], [], []>} : vector<1x64xf32>, vector<64x64xf32>, vector<1x64xf32> -> vector<1x64xf32>
    %c0_27 = arith.constant 0 : index
    %c0_28 = arith.constant 0 : index
    %53 = vector.load %arg4[%c0_27, %c0_28] : memref<1x64xf32, #tpu.memory_space<vmem>>, vector<1x64xf32>
    %54 = arith.addf %52, %53 : vector<1x64xf32>
    %cst_29 = arith.constant 0.000000e+00 : f32
    %55 = vector.broadcast %cst_29 : f32 to vector<18x18x32xf32>
    %c0_30 = arith.constant 0 : index
    %c0_31 = arith.constant 0 : index
    %c0_32 = arith.constant 0 : index
    %56 = vector.load %arg18[%c0_30, %c0_31, %c0_32] : memref<18x18x32xf32, #tpu.memory_space<vmem>>, vector<18x18x32xf32>
    tpu.vector_store %arg18[%c0_30, %c0_31, %c0_32], %55 {strides = array<i32>} : memref<18x18x32xf32, #tpu.memory_space<vmem>>, vector<18x18x32xf32>,
    %57 = vector.shape_cast %42 : vector<256x32xf32> to vector<16x16x32xf32>
    %c1 = arith.constant 1 : index
    %c1_33 = arith.constant 1 : index
    %c0_34 = arith.constant 0 : index
    %58 = vector.load %arg18[%c1, %c1_33, %c0_34] : memref<18x18x32xf32, #tpu.memory_space<vmem>>, vector<16x16x32xf32>
    tpu.vector_store %arg18[%c1, %c1_33, %c0_34], %57 {strides = array<i32>} : memref<18x18x32xf32, #tpu.memory_space<vmem>>, vector<16x16x32xf32>,
    %c0_35 = arith.constant 0 : index
    %c0_36 = arith.constant 0 : index
    %c0_37 = arith.constant 0 : index
    %c0_38 = arith.constant 0 : index
    %59 = vector.load %arg8[%c0_35, %c0_36, %c0_37, %c0_38] : memref<3x3x32x64xf32, #tpu.memory_space<vmem>>, vector<3x3x32x64xf32>
    %c0_39 = arith.constant 0 : index
    %c0_40 = arith.constant 0 : index
    %c0_41 = arith.constant 0 : index
    %60 = vector.load %arg18[%c0_39, %c0_40, %c0_41] : memref<18x18x32xf32, #tpu.memory_space<vmem>>, vector<16x16x32xf32>
    %61 = vector.shape_cast %60 : vector<16x16x32xf32> to vector<256x32xf32>
    %62 = vector.extract_strided_slice %59 {offsets = [0, 0, 0, 0], sizes = [1, 1, 32, 64], strides = [1, 1, 1, 1]} : vector<3x3x32x64xf32> to vector<1x1x32x64xf32>
    %63 = vector.shape_cast %62 : vector<1x1x32x64xf32> to vector<32x64xf32>
    %cst_42 = arith.constant dense<0.000000e+00> : vector<256x64xf32>
    %64 = tpu.matmul %61, %63, %cst_42 {dimension_numbers = #tpu.dot_dimension_numbers<[1], [0], [0], [1], [0, 0, 1, 1], [], []>} : vector<256x32xf32>, vector<32x64xf32>, vector<256x64xf32> -> vector<256x64xf32>
    %c0_43 = arith.constant 0 : index
    %c1_44 = arith.constant 1 : index
    %c0_45 = arith.constant 0 : index
    %65 = vector.load %arg18[%c0_43, %c1_44, %c0_45] : memref<18x18x32xf32, #tpu.memory_space<vmem>>, vector<16x16x32xf32>
    %66 = vector.shape_cast %65 : vector<16x16x32xf32> to vector<256x32xf32>
    %67 = vector.extract_strided_slice %59 {offsets = [0, 1, 0, 0], sizes = [1, 1, 32, 64], strides = [1, 1, 1, 1]} : vector<3x3x32x64xf32> to vector<1x1x32x64xf32>
    %68 = vector.shape_cast %67 : vector<1x1x32x64xf32> to vector<32x64xf32>
    %cst_46 = arith.constant dense<0.000000e+00> : vector<256x64xf32>
    %69 = tpu.matmul %66, %68, %cst_46 {dimension_numbers = #tpu.dot_dimension_numbers<[1], [0], [0], [1], [0, 0, 1, 1], [], []>} : vector<256x32xf32>, vector<32x64xf32>, vector<256x64xf32> -> vector<256x64xf32>
    %70 = arith.addf %64, %69 : vector<256x64xf32>
    %c0_47 = arith.constant 0 : index
    %c2 = arith.constant 2 : index
    %c0_48 = arith.constant 0 : index
    %71 = vector.load %arg18[%c0_47, %c2, %c0_48] : memref<18x18x32xf32, #tpu.memory_space<vmem>>, vector<16x16x32xf32>
    %72 = vector.shape_cast %71 : vector<16x16x32xf32> to vector<256x32xf32>
    %73 = vector.extract_strided_slice %59 {offsets = [0, 2, 0, 0], sizes = [1, 1, 32, 64], strides = [1, 1, 1, 1]} : vector<3x3x32x64xf32> to vector<1x1x32x64xf32>
    %74 = vector.shape_cast %73 : vector<1x1x32x64xf32> to vector<32x64xf32>
    %cst_49 = arith.constant dense<0.000000e+00> : vector<256x64xf32>
    %75 = tpu.matmul %72, %74, %cst_49 {dimension_numbers = #tpu.dot_dimension_numbers<[1], [0], [0], [1], [0, 0, 1, 1], [], []>} : vector<256x32xf32>, vector<32x64xf32>, vector<256x64xf32> -> vector<256x64xf32>
    %76 = arith.addf %70, %75 : vector<256x64xf32>
    %c1_50 = arith.constant 1 : index
    %c0_51 = arith.constant 0 : index
    %c0_52 = arith.constant 0 : index
    %77 = vector.load %arg18[%c1_50, %c0_51, %c0_52] : memref<18x18x32xf32, #tpu.memory_space<vmem>>, vector<16x16x32xf32>
    %78 = vector.shape_cast %77 : vector<16x16x32xf32> to vector<256x32xf32>
    %79 = vector.extract_strided_slice %59 {offsets = [1, 0, 0, 0], sizes = [1, 1, 32, 64], strides = [1, 1, 1, 1]} : vector<3x3x32x64xf32> to vector<1x1x32x64xf32>
    %80 = vector.shape_cast %79 : vector<1x1x32x64xf32> to vector<32x64xf32>
    %cst_53 = arith.constant dense<0.000000e+00> : vector<256x64xf32>
    %81 = tpu.matmul %78, %80, %cst_53 {dimension_numbers = #tpu.dot_dimension_numbers<[1], [0], [0], [1], [0, 0, 1, 1], [], []>} : vector<256x32xf32>, vector<32x64xf32>, vector<256x64xf32> -> vector<256x64xf32>
    %82 = arith.addf %76, %81 : vector<256x64xf32>
    %c1_54 = arith.constant 1 : index
    %c1_55 = arith.constant 1 : index
    %c0_56 = arith.constant 0 : index
    %83 = vector.load %arg18[%c1_54, %c1_55, %c0_56] : memref<18x18x32xf32, #tpu.memory_space<vmem>>, vector<16x16x32xf32>
    %84 = vector.shape_cast %83 : vector<16x16x32xf32> to vector<256x32xf32>
    %85 = vector.extract_strided_slice %59 {offsets = [1, 1, 0, 0], sizes = [1, 1, 32, 64], strides = [1, 1, 1, 1]} : vector<3x3x32x64xf32> to vector<1x1x32x64xf32>
    %86 = vector.shape_cast %85 : vector<1x1x32x64xf32> to vector<32x64xf32>
    %cst_57 = arith.constant dense<0.000000e+00> : vector<256x64xf32>
    %87 = tpu.matmul %84, %86, %cst_57 {dimension_numbers = #tpu.dot_dimension_numbers<[1], [0], [0], [1], [0, 0, 1, 1], [], []>} : vector<256x32xf32>, vector<32x64xf32>, vector<256x64xf32> -> vector<256x64xf32>
    %88 = arith.addf %82, %87 : vector<256x64xf32>
    %c1_58 = arith.constant 1 : index
    %c2_59 = arith.constant 2 : index
    %c0_60 = arith.constant 0 : index
    %89 = vector.load %arg18[%c1_58, %c2_59, %c0_60] : memref<18x18x32xf32, #tpu.memory_space<vmem>>, vector<16x16x32xf32>
    %90 = vector.shape_cast %89 : vector<16x16x32xf32> to vector<256x32xf32>
    %91 = vector.extract_strided_slice %59 {offsets = [1, 2, 0, 0], sizes = [1, 1, 32, 64], strides = [1, 1, 1, 1]} : vector<3x3x32x64xf32> to vector<1x1x32x64xf32>
    %92 = vector.shape_cast %91 : vector<1x1x32x64xf32> to vector<32x64xf32>
    %cst_61 = arith.constant dense<0.000000e+00> : vector<256x64xf32>
    %93 = tpu.matmul %90, %92, %cst_61 {dimension_numbers = #tpu.dot_dimension_numbers<[1], [0], [0], [1], [0, 0, 1, 1], [], []>} : vector<256x32xf32>, vector<32x64xf32>, vector<256x64xf32> -> vector<256x64xf32>
    %94 = arith.addf %88, %93 : vector<256x64xf32>
    %c2_62 = arith.constant 2 : index
    %c0_63 = arith.constant 0 : index
    %c0_64 = arith.constant 0 : index
    %95 = vector.load %arg18[%c2_62, %c0_63, %c0_64] : memref<18x18x32xf32, #tpu.memory_space<vmem>>, vector<16x16x32xf32>
    %96 = vector.shape_cast %95 : vector<16x16x32xf32> to vector<256x32xf32>
    %97 = vector.extract_strided_slice %59 {offsets = [2, 0, 0, 0], sizes = [1, 1, 32, 64], strides = [1, 1, 1, 1]} : vector<3x3x32x64xf32> to vector<1x1x32x64xf32>
    %98 = vector.shape_cast %97 : vector<1x1x32x64xf32> to vector<32x64xf32>
    %cst_65 = arith.constant dense<0.000000e+00> : vector<256x64xf32>
    %99 = tpu.matmul %96, %98, %cst_65 {dimension_numbers = #tpu.dot_dimension_numbers<[1], [0], [0], [1], [0, 0, 1, 1], [], []>} : vector<256x32xf32>, vector<32x64xf32>, vector<256x64xf32> -> vector<256x64xf32>
    %100 = arith.addf %94, %99 : vector<256x64xf32>
    %c2_66 = arith.constant 2 : index
    %c1_67 = arith.constant 1 : index
    %c0_68 = arith.constant 0 : index
    %101 = vector.load %arg18[%c2_66, %c1_67, %c0_68] : memref<18x18x32xf32, #tpu.memory_space<vmem>>, vector<16x16x32xf32>
    %102 = vector.shape_cast %101 : vector<16x16x32xf32> to vector<256x32xf32>
    %103 = vector.extract_strided_slice %59 {offsets = [2, 1, 0, 0], sizes = [1, 1, 32, 64], strides = [1, 1, 1, 1]} : vector<3x3x32x64xf32> to vector<1x1x32x64xf32>
    %104 = vector.shape_cast %103 : vector<1x1x32x64xf32> to vector<32x64xf32>
    %cst_69 = arith.constant dense<0.000000e+00> : vector<256x64xf32>
    %105 = tpu.matmul %102, %104, %cst_69 {dimension_numbers = #tpu.dot_dimension_numbers<[1], [0], [0], [1], [0, 0, 1, 1], [], []>} : vector<256x32xf32>, vector<32x64xf32>, vector<256x64xf32> -> vector<256x64xf32>
    %106 = arith.addf %100, %105 : vector<256x64xf32>
    %c2_70 = arith.constant 2 : index
    %c2_71 = arith.constant 2 : index
    %c0_72 = arith.constant 0 : index
    %107 = vector.load %arg18[%c2_70, %c2_71, %c0_72] : memref<18x18x32xf32, #tpu.memory_space<vmem>>, vector<16x16x32xf32>
    %108 = vector.shape_cast %107 : vector<16x16x32xf32> to vector<256x32xf32>
    %109 = vector.extract_strided_slice %59 {offsets = [2, 2, 0, 0], sizes = [1, 1, 32, 64], strides = [1, 1, 1, 1]} : vector<3x3x32x64xf32> to vector<1x1x32x64xf32>
    %110 = vector.shape_cast %109 : vector<1x1x32x64xf32> to vector<32x64xf32>
    %cst_73 = arith.constant dense<0.000000e+00> : vector<256x64xf32>
    %111 = tpu.matmul %108, %110, %cst_73 {dimension_numbers = #tpu.dot_dimension_numbers<[1], [0], [0], [1], [0, 0, 1, 1], [], []>} : vector<256x32xf32>, vector<32x64xf32>, vector<256x64xf32> -> vector<256x64xf32>
    %112 = arith.addf %106, %111 : vector<256x64xf32>
    %c0_74 = arith.constant 0 : index
    %c0_75 = arith.constant 0 : index
    %113 = vector.load %arg9[%c0_74, %c0_75] : memref<1x64xf32, #tpu.memory_space<vmem>>, vector<1x64xf32>
    %114 = vector.broadcast %113 : vector<1x64xf32> to vector<256x64xf32>
    %115 = arith.addf %112, %114 : vector<256x64xf32>
    %116 = vector.broadcast %54 : vector<1x64xf32> to vector<256x64xf32>
    %117 = arith.addf %115, %116 : vector<256x64xf32>
    %c0_76 = arith.constant 0 : index
    %c0_77 = arith.constant 0 : index
    %118 = vector.load %arg10[%c0_76, %c0_77] : memref<1x64xf32, #tpu.memory_space<vmem>>, vector<1x64xf32>
    %c0_78 = arith.constant 0 : index
    %c0_79 = arith.constant 0 : index
    %119 = vector.load %arg11[%c0_78, %c0_79] : memref<1x64xf32, #tpu.memory_space<vmem>>, vector<1x64xf32>
    %c0_80 = arith.constant 0 : index
    %c0_81 = arith.constant 0 : index
    %120 = vector.load %arg12[%c0_80, %c0_81] : memref<64x32xf32, #tpu.memory_space<vmem>>, vector<64x32xf32>
    %cst_82 = arith.constant dense<0.000000e+00> : vector<64xf32>
    %121 = vector.multi_reduction <add>, %117, %cst_82 [0] : vector<256x64xf32> to vector<64xf32>
    %122 = vector.shape_cast %121 : vector<64xf32> to vector<1x64xf32>
    %123 = arith.mulf %117, %117 : vector<256x64xf32>
    %cst_83 = arith.constant dense<0.000000e+00> : vector<64xf32>
    %124 = vector.multi_reduction <add>, %123, %cst_83 [0] : vector<256x64xf32> to vector<64xf32>
    %125 = vector.shape_cast %124 : vector<64xf32> to vector<1x64xf32>
    %cst_84 = arith.constant dense<0.000000e+00> : vector<1x32xf32>
    %126 = tpu.matmul %122, %120, %cst_84 {dimension_numbers = #tpu.dot_dimension_numbers<[1], [0], [0], [1], [0, 0, 1, 1], [], []>} : vector<1x64xf32>, vector<64x32xf32>, vector<1x32xf32> -> vector<1x32xf32>
    %cst_85 = arith.constant 5.120000e+02 : f32
    %127 = vector.broadcast %cst_85 : f32 to vector<1x32xf32>
    %128 = arith.divf %126, %127 : vector<1x32xf32>
    %cst_86 = arith.constant dense<0.000000e+00> : vector<1x32xf32>
    %129 = tpu.matmul %125, %120, %cst_86 {dimension_numbers = #tpu.dot_dimension_numbers<[1], [0], [0], [1], [0, 0, 1, 1], [], []>} : vector<1x64xf32>, vector<64x32xf32>, vector<1x32xf32> -> vector<1x32xf32>
    %cst_87 = arith.constant 5.120000e+02 : f32
    %130 = vector.broadcast %cst_87 : f32 to vector<1x32xf32>
    %131 = arith.divf %129, %130 : vector<1x32xf32>
    %132 = arith.mulf %128, %128 : vector<1x32xf32>
    %133 = arith.subf %131, %132 : vector<1x32xf32>
    %cst_88 = arith.constant 9.99999997E-7 : f32
    %134 = vector.broadcast %cst_88 : f32 to vector<1x32xf32>
    %135 = arith.addf %133, %134 : vector<1x32xf32>
    %136 = math.rsqrt %135 : vector<1x32xf32>
    %cst_89 = arith.constant dense<0.000000e+00> : vector<1x64xf32>
    %137 = tpu.matmul %128, %120, %cst_89 {dimension_numbers = #tpu.dot_dimension_numbers<[1], [1], [0], [0], [0, 0, 1, 0], [], []>} : vector<1x32xf32>, vector<64x32xf32>, vector<1x64xf32> -> vector<1x64xf32>
    %cst_90 = arith.constant dense<0.000000e+00> : vector<1x64xf32>
    %138 = tpu.matmul %136, %120, %cst_90 {dimension_numbers = #tpu.dot_dimension_numbers<[1], [1], [0], [0], [0, 0, 1, 0], [], []>} : vector<1x32xf32>, vector<64x32xf32>, vector<1x64xf32> -> vector<1x64xf32>
    %139 = vector.broadcast %137 : vector<1x64xf32> to vector<256x64xf32>
    %140 = arith.subf %117, %139 : vector<256x64xf32>
    %141 = arith.mulf %138, %118 : vector<1x64xf32>
    %142 = vector.broadcast %141 : vector<1x64xf32> to vector<256x64xf32>
    %143 = arith.mulf %140, %142 : vector<256x64xf32>
    %144 = vector.broadcast %119 : vector<1x64xf32> to vector<256x64xf32>
    %145 = arith.addf %143, %144 : vector<256x64xf32>
    %146 = arith.negf %145 : vector<256x64xf32>
    %147 = math.exp %146 : vector<256x64xf32>
    %cst_91 = arith.constant 1.000000e+00 : f32
    %148 = vector.broadcast %cst_91 : f32 to vector<256x64xf32>
    %149 = arith.addf %148, %147 : vector<256x64xf32>
    %150 = arith.divf %148, %149 : vector<256x64xf32>
    %151 = arith.mulf %145, %150 : vector<256x64xf32>
    %cst_92 = arith.constant 0.000000e+00 : f32
    %152 = vector.broadcast %cst_92 : f32 to vector<18x18x64xf32>
    %c0_93 = arith.constant 0 : index
    %c0_94 = arith.constant 0 : index
    %c0_95 = arith.constant 0 : index
    %153 = vector.load %arg19[%c0_93, %c0_94, %c0_95] : memref<18x18x64xf32, #tpu.memory_space<vmem>>, vector<18x18x64xf32>
    tpu.vector_store %arg19[%c0_93, %c0_94, %c0_95], %152 {strides = array<i32>} : memref<18x18x64xf32, #tpu.memory_space<vmem>>, vector<18x18x64xf32>,
    %154 = vector.shape_cast %151 : vector<256x64xf32> to vector<16x16x64xf32>
    %c1_96 = arith.constant 1 : index
    %c1_97 = arith.constant 1 : index
    %c0_98 = arith.constant 0 : index
    %155 = vector.load %arg19[%c1_96, %c1_97, %c0_98] : memref<18x18x64xf32, #tpu.memory_space<vmem>>, vector<16x16x64xf32>
    tpu.vector_store %arg19[%c1_96, %c1_97, %c0_98], %154 {strides = array<i32>} : memref<18x18x64xf32, #tpu.memory_space<vmem>>, vector<16x16x64xf32>,
    %c0_99 = arith.constant 0 : index
    %c0_100 = arith.constant 0 : index
    %c0_101 = arith.constant 0 : index
    %c0_102 = arith.constant 0 : index
    %156 = vector.load %arg13[%c0_99, %c0_100, %c0_101, %c0_102] : memref<3x3x64x64xf32, #tpu.memory_space<vmem>>, vector<3x3x64x64xf32>
    %c0_103 = arith.constant 0 : index
    %c0_104 = arith.constant 0 : index
    %c0_105 = arith.constant 0 : index
    %157 = vector.load %arg19[%c0_103, %c0_104, %c0_105] : memref<18x18x64xf32, #tpu.memory_space<vmem>>, vector<16x16x64xf32>
    %158 = vector.shape_cast %157 : vector<16x16x64xf32> to vector<256x64xf32>
    %159 = vector.extract_strided_slice %156 {offsets = [0, 0, 0, 0], sizes = [1, 1, 64, 64], strides = [1, 1, 1, 1]} : vector<3x3x64x64xf32> to vector<1x1x64x64xf32>
    %160 = vector.shape_cast %159 : vector<1x1x64x64xf32> to vector<64x64xf32>
    %cst_106 = arith.constant dense<0.000000e+00> : vector<64x256xf32>
    %161 = tpu.matmul %160, %158, %cst_106 {dimension_numbers = #tpu.dot_dimension_numbers<[1], [1], [0], [0], [0, 0, 1, 0], [], []>} : vector<64x64xf32>, vector<256x64xf32>, vector<64x256xf32> -> vector<64x256xf32>
    %c0_107 = arith.constant 0 : index
    %c1_108 = arith.constant 1 : index
    %c0_109 = arith.constant 0 : index
    %162 = vector.load %arg19[%c0_107, %c1_108, %c0_109] : memref<18x18x64xf32, #tpu.memory_space<vmem>>, vector<16x16x64xf32>
    %163 = vector.shape_cast %162 : vector<16x16x64xf32> to vector<256x64xf32>
    %164 = vector.extract_strided_slice %156 {offsets = [0, 1, 0, 0], sizes = [1, 1, 64, 64], strides = [1, 1, 1, 1]} : vector<3x3x64x64xf32> to vector<1x1x64x64xf32>
    %165 = vector.shape_cast %164 : vector<1x1x64x64xf32> to vector<64x64xf32>
    %cst_110 = arith.constant dense<0.000000e+00> : vector<64x256xf32>
    %166 = tpu.matmul %165, %163, %cst_110 {dimension_numbers = #tpu.dot_dimension_numbers<[1], [1], [0], [0], [0, 0, 1, 0], [], []>} : vector<64x64xf32>, vector<256x64xf32>, vector<64x256xf32> -> vector<64x256xf32>
    %167 = arith.addf %161, %166 : vector<64x256xf32>
    %c0_111 = arith.constant 0 : index
    %c2_112 = arith.constant 2 : index
    %c0_113 = arith.constant 0 : index
    %168 = vector.load %arg19[%c0_111, %c2_112, %c0_113] : memref<18x18x64xf32, #tpu.memory_space<vmem>>, vector<16x16x64xf32>
    %169 = vector.shape_cast %168 : vector<16x16x64xf32> to vector<256x64xf32>
    %170 = vector.extract_strided_slice %156 {offsets = [0, 2, 0, 0], sizes = [1, 1, 64, 64], strides = [1, 1, 1, 1]} : vector<3x3x64x64xf32> to vector<1x1x64x64xf32>
    %171 = vector.shape_cast %170 : vector<1x1x64x64xf32> to vector<64x64xf32>
    %cst_114 = arith.constant dense<0.000000e+00> : vector<64x256xf32>
    %172 = tpu.matmul %171, %169, %cst_114 {dimension_numbers = #tpu.dot_dimension_numbers<[1], [1], [0], [0], [0, 0, 1, 0], [], []>} : vector<64x64xf32>, vector<256x64xf32>, vector<64x256xf32> -> vector<64x256xf32>
    %173 = arith.addf %167, %172 : vector<64x256xf32>
    %c1_115 = arith.constant 1 : index
    %c0_116 = arith.constant 0 : index
    %c0_117 = arith.constant 0 : index
    %174 = vector.load %arg19[%c1_115, %c0_116, %c0_117] : memref<18x18x64xf32, #tpu.memory_space<vmem>>, vector<16x16x64xf32>
    %175 = vector.shape_cast %174 : vector<16x16x64xf32> to vector<256x64xf32>
    %176 = vector.extract_strided_slice %156 {offsets = [1, 0, 0, 0], sizes = [1, 1, 64, 64], strides = [1, 1, 1, 1]} : vector<3x3x64x64xf32> to vector<1x1x64x64xf32>
    %177 = vector.shape_cast %176 : vector<1x1x64x64xf32> to vector<64x64xf32>
    %cst_118 = arith.constant dense<0.000000e+00> : vector<64x256xf32>
    %178 = tpu.matmul %177, %175, %cst_118 {dimension_numbers = #tpu.dot_dimension_numbers<[1], [1], [0], [0], [0, 0, 1, 0], [], []>} : vector<64x64xf32>, vector<256x64xf32>, vector<64x256xf32> -> vector<64x256xf32>
    %179 = arith.addf %173, %178 : vector<64x256xf32>
    %c1_119 = arith.constant 1 : index
    %c1_120 = arith.constant 1 : index
    %c0_121 = arith.constant 0 : index
    %180 = vector.load %arg19[%c1_119, %c1_120, %c0_121] : memref<18x18x64xf32, #tpu.memory_space<vmem>>, vector<16x16x64xf32>
    %181 = vector.shape_cast %180 : vector<16x16x64xf32> to vector<256x64xf32>
    %182 = vector.extract_strided_slice %156 {offsets = [1, 1, 0, 0], sizes = [1, 1, 64, 64], strides = [1, 1, 1, 1]} : vector<3x3x64x64xf32> to vector<1x1x64x64xf32>
    %183 = vector.shape_cast %182 : vector<1x1x64x64xf32> to vector<64x64xf32>
    %cst_122 = arith.constant dense<0.000000e+00> : vector<64x256xf32>
    %184 = tpu.matmul %183, %181, %cst_122 {dimension_numbers = #tpu.dot_dimension_numbers<[1], [1], [0], [0], [0, 0, 1, 0], [], []>} : vector<64x64xf32>, vector<256x64xf32>, vector<64x256xf32> -> vector<64x256xf32>
    %185 = arith.addf %179, %184 : vector<64x256xf32>
    %c1_123 = arith.constant 1 : index
    %c2_124 = arith.constant 2 : index
    %c0_125 = arith.constant 0 : index
    %186 = vector.load %arg19[%c1_123, %c2_124, %c0_125] : memref<18x18x64xf32, #tpu.memory_space<vmem>>, vector<16x16x64xf32>
    %187 = vector.shape_cast %186 : vector<16x16x64xf32> to vector<256x64xf32>
    %188 = vector.extract_strided_slice %156 {offsets = [1, 2, 0, 0], sizes = [1, 1, 64, 64], strides = [1, 1, 1, 1]} : vector<3x3x64x64xf32> to vector<1x1x64x64xf32>
    %189 = vector.shape_cast %188 : vector<1x1x64x64xf32> to vector<64x64xf32>
    %cst_126 = arith.constant dense<0.000000e+00> : vector<64x256xf32>
    %190 = tpu.matmul %189, %187, %cst_126 {dimension_numbers = #tpu.dot_dimension_numbers<[1], [1], [0], [0], [0, 0, 1, 0], [], []>} : vector<64x64xf32>, vector<256x64xf32>, vector<64x256xf32> -> vector<64x256xf32>
    %191 = arith.addf %185, %190 : vector<64x256xf32>
    %c2_127 = arith.constant 2 : index
    %c0_128 = arith.constant 0 : index
    %c0_129 = arith.constant 0 : index
    %192 = vector.load %arg19[%c2_127, %c0_128, %c0_129] : memref<18x18x64xf32, #tpu.memory_space<vmem>>, vector<16x16x64xf32>
    %193 = vector.shape_cast %192 : vector<16x16x64xf32> to vector<256x64xf32>
    %194 = vector.extract_strided_slice %156 {offsets = [2, 0, 0, 0], sizes = [1, 1, 64, 64], strides = [1, 1, 1, 1]} : vector<3x3x64x64xf32> to vector<1x1x64x64xf32>
    %195 = vector.shape_cast %194 : vector<1x1x64x64xf32> to vector<64x64xf32>
    %cst_130 = arith.constant dense<0.000000e+00> : vector<64x256xf32>
    %196 = tpu.matmul %195, %193, %cst_130 {dimension_numbers = #tpu.dot_dimension_numbers<[1], [1], [0], [0], [0, 0, 1, 0], [], []>} : vector<64x64xf32>, vector<256x64xf32>, vector<64x256xf32> -> vector<64x256xf32>
    %197 = arith.addf %191, %196 : vector<64x256xf32>
    %c2_131 = arith.constant 2 : index
    %c1_132 = arith.constant 1 : index
    %c0_133 = arith.constant 0 : index
    %198 = vector.load %arg19[%c2_131, %c1_132, %c0_133] : memref<18x18x64xf32, #tpu.memory_space<vmem>>, vector<16x16x64xf32>
    %199 = vector.shape_cast %198 : vector<16x16x64xf32> to vector<256x64xf32>
    %200 = vector.extract_strided_slice %156 {offsets = [2, 1, 0, 0], sizes = [1, 1, 64, 64], strides = [1, 1, 1, 1]} : vector<3x3x64x64xf32> to vector<1x1x64x64xf32>
    %201 = vector.shape_cast %200 : vector<1x1x64x64xf32> to vector<64x64xf32>
    %cst_134 = arith.constant dense<0.000000e+00> : vector<64x256xf32>
    %202 = tpu.matmul %201, %199, %cst_134 {dimension_numbers = #tpu.dot_dimension_numbers<[1], [1], [0], [0], [0, 0, 1, 0], [], []>} : vector<64x64xf32>, vector<256x64xf32>, vector<64x256xf32> -> vector<64x256xf32>
    %203 = arith.addf %197, %202 : vector<64x256xf32>
    %c2_135 = arith.constant 2 : index
    %c2_136 = arith.constant 2 : index
    %c0_137 = arith.constant 0 : index
    %204 = vector.load %arg19[%c2_135, %c2_136, %c0_137] : memref<18x18x64xf32, #tpu.memory_space<vmem>>, vector<16x16x64xf32>
    %205 = vector.shape_cast %204 : vector<16x16x64xf32> to vector<256x64xf32>
    %206 = vector.extract_strided_slice %156 {offsets = [2, 2, 0, 0], sizes = [1, 1, 64, 64], strides = [1, 1, 1, 1]} : vector<3x3x64x64xf32> to vector<1x1x64x64xf32>
    %207 = vector.shape_cast %206 : vector<1x1x64x64xf32> to vector<64x64xf32>
    %cst_138 = arith.constant dense<0.000000e+00> : vector<64x256xf32>
    %208 = tpu.matmul %207, %205, %cst_138 {dimension_numbers = #tpu.dot_dimension_numbers<[1], [1], [0], [0], [0, 0, 1, 0], [], []>} : vector<64x64xf32>, vector<256x64xf32>, vector<64x256xf32> -> vector<64x256xf32>
    %209 = arith.addf %203, %208 : vector<64x256xf32>
    %c0_139 = arith.constant 0 : index
    %c0_140 = arith.constant 0 : index
    %210 = vector.load %arg15[%c0_139, %c0_140] : memref<64x32xf32, #tpu.memory_space<vmem>>, vector<64x32xf32>
    %cst_141 = arith.constant dense<0.000000e+00> : vector<64x256xf32>
    %211 = tpu.matmul %210, %1, %cst_141 {dimension_numbers = #tpu.dot_dimension_numbers<[1], [0], [0], [1], [0, 0, 1, 1], [], []>} : vector<64x32xf32>, vector<32x256xf32>, vector<64x256xf32> -> vector<64x256xf32>
    %c0_142 = arith.constant 0 : index
    %c0_143 = arith.constant 0 : index
    %212 = vector.load %arg14[%c0_142, %c0_143] : memref<64x1xf32, #tpu.memory_space<vmem>>, vector<64x1xf32>
    %213 = vector.broadcast %212 : vector<64x1xf32> to vector<64x256xf32>
    %214 = arith.addf %209, %213 : vector<64x256xf32>
    %215 = arith.addf %214, %211 : vector<64x256xf32>
    %c0_144 = arith.constant 0 : index
    %c0_145 = arith.constant 0 : index
    %216 = vector.load %arg16[%c0_144, %c0_145] : memref<64x1xf32, #tpu.memory_space<vmem>>, vector<64x1xf32>
    %217 = vector.broadcast %216 : vector<64x1xf32> to vector<64x256xf32>
    %218 = arith.addf %215, %217 : vector<64x256xf32>
    %219 = vector.shape_cast %218 : vector<64x256xf32> to vector<1x64x256xf32>
    %c0_146 = arith.constant 0 : index
    %c0_147 = arith.constant 0 : index
    %c0_148 = arith.constant 0 : index
    %220 = vector.load %arg17[%c0_146, %c0_147, %c0_148] : memref<1x64x256xf32, #tpu.memory_space<vmem>>, vector<1x64x256xf32>
    tpu.vector_store %arg17[%c0_146, %c0_147, %c0_148], %219 {strides = array<i32>} : memref<1x64x256xf32, #tpu.memory_space<vmem>>, vector<1x64x256xf32>,
    return
  }
  func.func @transform_0(%arg0: i32) -> (i32, i32, i32) {
    %c0_i32 = arith.constant 0 : i32
    %c0_i32_0 = arith.constant 0 : i32
    %c0_i32_1 = arith.constant 0 : i32
    return %arg0, %c0_i32, %c0_i32_0 : i32, i32, i32
  }
  func.func @transform_1(%arg0: i32) -> (i32, i32, i32) {
    %c0_i32 = arith.constant 0 : i32
    %c0_i32_0 = arith.constant 0 : i32
    %c0_i32_1 = arith.constant 0 : i32
    return %arg0, %c0_i32, %c0_i32_0 : i32, i32, i32
  }
  func.func @transform_2(%arg0: i32) -> (i32, i32) {
    %c0_i32 = arith.constant 0 : i32
    %c0_i32_0 = arith.constant 0 : i32
    %c0_i32_1 = arith.constant 0 : i32
    return %c0_i32, %c0_i32_0 : i32, i32
  }
  func.func @transform_3(%arg0: i32) -> (i32, i32) {
    %c0_i32 = arith.constant 0 : i32
    %c0_i32_0 = arith.constant 0 : i32
    %c0_i32_1 = arith.constant 0 : i32
    return %c0_i32, %c0_i32_0 : i32, i32
  }
  func.func @transform_4(%arg0: i32) -> (i32, i32) {
    %c0_i32 = arith.constant 0 : i32
    %c0_i32_0 = arith.constant 0 : i32
    %c0_i32_1 = arith.constant 0 : i32
    return %c0_i32, %c0_i32_0 : i32, i32
  }
  func.func @transform_5(%arg0: i32) -> (i32, i32) {
    %c0_i32 = arith.constant 0 : i32
    %c0_i32_0 = arith.constant 0 : i32
    %c0_i32_1 = arith.constant 0 : i32
    return %c0_i32, %c0_i32_0 : i32, i32
  }
  func.func @transform_6(%arg0: i32) -> (i32, i32) {
    %c0_i32 = arith.constant 0 : i32
    %c0_i32_0 = arith.constant 0 : i32
    %c0_i32_1 = arith.constant 0 : i32
    return %c0_i32, %c0_i32_0 : i32, i32
  }
  func.func @transform_7(%arg0: i32) -> (i32, i32, i32, i32) {
    %c0_i32 = arith.constant 0 : i32
    %c0_i32_0 = arith.constant 0 : i32
    %c0_i32_1 = arith.constant 0 : i32
    %c0_i32_2 = arith.constant 0 : i32
    %c0_i32_3 = arith.constant 0 : i32
    return %c0_i32, %c0_i32_0, %c0_i32_1, %c0_i32_2 : i32, i32, i32, i32
  }
  func.func @transform_8(%arg0: i32) -> (i32, i32) {
    %c0_i32 = arith.constant 0 : i32
    %c0_i32_0 = arith.constant 0 : i32
    %c0_i32_1 = arith.constant 0 : i32
    return %c0_i32, %c0_i32_0 : i32, i32
  }
  func.func @transform_9(%arg0: i32) -> (i32, i32) {
    %c0_i32 = arith.constant 0 : i32
    %c0_i32_0 = arith.constant 0 : i32
    %c0_i32_1 = arith.constant 0 : i32
    return %c0_i32, %c0_i32_0 : i32, i32
  }
  func.func @transform_10(%arg0: i32) -> (i32, i32) {
    %c0_i32 = arith.constant 0 : i32
    %c0_i32_0 = arith.constant 0 : i32
    %c0_i32_1 = arith.constant 0 : i32
    return %c0_i32, %c0_i32_0 : i32, i32
  }
  func.func @transform_11(%arg0: i32) -> (i32, i32) {
    %c0_i32 = arith.constant 0 : i32
    %c0_i32_0 = arith.constant 0 : i32
    %c0_i32_1 = arith.constant 0 : i32
    return %c0_i32, %c0_i32_0 : i32, i32
  }
  func.func @transform_12(%arg0: i32) -> (i32, i32, i32, i32) {
    %c0_i32 = arith.constant 0 : i32
    %c0_i32_0 = arith.constant 0 : i32
    %c0_i32_1 = arith.constant 0 : i32
    %c0_i32_2 = arith.constant 0 : i32
    %c0_i32_3 = arith.constant 0 : i32
    return %c0_i32, %c0_i32_0, %c0_i32_1, %c0_i32_2 : i32, i32, i32, i32
  }
  func.func @transform_13(%arg0: i32) -> (i32, i32) {
    %c0_i32 = arith.constant 0 : i32
    %c0_i32_0 = arith.constant 0 : i32
    %c0_i32_1 = arith.constant 0 : i32
    return %c0_i32, %c0_i32_0 : i32, i32
  }
  func.func @transform_14(%arg0: i32) -> (i32, i32) {
    %c0_i32 = arith.constant 0 : i32
    %c0_i32_0 = arith.constant 0 : i32
    %c0_i32_1 = arith.constant 0 : i32
    return %c0_i32, %c0_i32_0 : i32, i32
  }
  func.func @transform_15(%arg0: i32) -> (i32, i32) {
    %c0_i32 = arith.constant 0 : i32
    %c0_i32_0 = arith.constant 0 : i32
    %c0_i32_1 = arith.constant 0 : i32
    return %c0_i32, %c0_i32_0 : i32, i32
  }
  func.func @transform_16(%arg0: i32) -> (i32, i32, i32) {
    %c0_i32 = arith.constant 0 : i32
    %c0_i32_0 = arith.constant 0 : i32
    %c0_i32_1 = arith.constant 0 : i32
    return %arg0, %c0_i32, %c0_i32_0 : i32, i32, i32
  }
}

</mosaic_0001>

<llo_original>
// kernel: resnet_block_forward.1
$region0: #{resnet_block_forward.1}
  #allocation0 [shape = 'u32[]', space=smem, size = 0x4, offset = 0x4, fixed_abs, tag = 'smem constant byte address 0x4 - core index']
  #allocation1 [shape = 'u32[144,128]{1,0:T(1,128)}', space=vmem, size = 0x12000, scoped, tag = 'internal scratch']
  #allocation2 [shape = 'f32[18,18,32]{2,1,0:T(8,128)}', space=vmem, size = 0x36000, scoped, tag = 'scratch operand']
  #allocation3 [shape = 'f32[18,18,64]{2,1,0:T(8,128)}', space=vmem, size = 0x36000, scoped, tag = 'scratch operand']
  %s0 = inlined_call_operand.vmem [shape: f32[2,32,256], index: 0, kind: input, shape index: {}]
  %s1 = inlined_call_operand.vmem [shape: f32[2,1,64], index: 1, kind: input, shape index: {}]
  %s2 = inlined_call_operand.vmem [shape: f32[64,64], index: 2, kind: input, shape index: {}]
  %s3 = inlined_call_operand.vmem [shape: f32[1,64], index: 3, kind: input, shape index: {}]
  %s4 = inlined_call_operand.vmem [shape: f32[1,32], index: 4, kind: input, shape index: {}]
  %s5 = inlined_call_operand.vmem [shape: f32[1,32], index: 5, kind: input, shape index: {}]
  %s6 = inlined_call_operand.vmem [shape: f32[32,32], index: 6, kind: input, shape index: {}]
  %s7 = inlined_call_operand.vmem [shape: f32[3,3,32,64], index: 7, kind: input, shape index: {}]
  %s8 = inlined_call_operand.vmem [shape: f32[1,64], index: 8, kind: input, shape index: {}]
  %s9 = inlined_call_operand.vmem [shape: f32[1,64], index: 9, kind: input, shape index: {}]
  %s10 = inlined_call_operand.vmem [shape: f32[1,64], index: 10, kind: input, shape index: {}]
  %s11 = inlined_call_operand.vmem [shape: f32[64,32], index: 11, kind: input, shape index: {}]
  %s12 = inlined_call_operand.vmem [shape: f32[3,3,64,64], index: 12, kind: input, shape index: {}]
  %s13 = inlined_call_operand.vmem [shape: f32[64,1], index: 13, kind: input, shape index: {}]
  %s14 = inlined_call_operand.vmem [shape: f32[64,32], index: 14, kind: input, shape index: {}]
  %s15 = inlined_call_operand.vmem [shape: f32[64,1], index: 15, kind: input, shape index: {}]
  %s16 = inlined_call_operand.vmem [shape: f32[2,64,256], index: 16, kind: output, shape index: {}]
  %s17 = sld [smem:[#allocation0]]
  $region97: #{resnet_block_forward.1} parent=0
    _
  %s19 = ssub.s32 1, %s17
  %s20 = scalar_select 0, %s19, %s17
  loop: start=0, step=1, limit=4
  $region2: #{resnet_block_forward.1} parent=0 // loop_pre_header
    _
  $region3: #{resnet_block_forward.1} parent=0 // loop_header
    %s22 = sphi 0, %s26
    %p23 = scmp.ge.s32.totalorder %s22, 4
    %s32 = sphi 0, %s34
    %s35 = sphi 0, %s32
    %s36 = sphi 0, %s35
    %s52 = sphi 0, %s36
    %s58 = sphi 0, %s60
    %s61 = sphi 0, %s58
    %s62 = sphi 0, %s61
    %s78 = sphi 0, %s62
    %s82 = sphi 0, %s82
    %s84 = sphi 0, %s82
    %s85 = sphi 0, %s84
    %s99 = sphi 0, %s85
    %s103 = sphi 0, %s103
    %s105 = sphi 0, %s103
    %s106 = sphi 0, %s105
    %s120 = sphi 0, %s106
    %s124 = sphi 0, %s124
    %s126 = sphi 0, %s124
    %s127 = sphi 0, %s126
    %s141 = sphi 0, %s127
    %s145 = sphi 0, %s145
    %s147 = sphi 0, %s145
    %s148 = sphi 0, %s147
    %s162 = sphi 0, %s148
    %s166 = sphi 0, %s166
    %s168 = sphi 0, %s166
    %s169 = sphi 0, %s168
    %s183 = sphi 0, %s169
    %s187 = sphi 0, %s187
    %s189 = sphi 0, %s187
    %s190 = sphi 0, %s189
    %s204 = sphi 0, %s190
    %s208 = sphi 0, %s208
    %s210 = sphi 0, %s208
    %s211 = sphi 0, %s210
    %s225 = sphi 0, %s211
    %s229 = sphi 0, %s229
    %s231 = sphi 0, %s229
    %s232 = sphi 0, %s231
    %s246 = sphi 0, %s232
    %s250 = sphi 0, %s250
    %s252 = sphi 0, %s250
    %s253 = sphi 0, %s252
    %s267 = sphi 0, %s253
    %s271 = sphi 0, %s271
    %s273 = sphi 0, %s271
    %s274 = sphi 0, %s273
    %s288 = sphi 0, %s274
    %s292 = sphi 0, %s292
    %s294 = sphi 0, %s292
    %s295 = sphi 0, %s294
    %s309 = sphi 0, %s295
    %s313 = sphi 0, %s313
    %s315 = sphi 0, %s313
    %s316 = sphi 0, %s315
    %s330 = sphi 0, %s316
    %s334 = sphi 0, %s334
    %s336 = sphi 0, %s334
    %s337 = sphi 0, %s336
    %s351 = sphi 0, %s337
    %s355 = sphi 0, %s355
    %s357 = sphi 0, %s355
    %s358 = sphi 0, %s357
    %s372 = sphi 0, %s358
    %s378 = sphi 0, %s380
    %s381 = sphi 0, %s378
    %s382 = sphi 0, %s381
    %s398 = sphi 0, %s382
  $region4: #{resnet_block_forward.1} parent=0 // loop_header_branch
    %25 = sbr.rel (%p23) target = $region8
  $region5: #{resnet_block_forward.1} parent=0 // loop_body
    %s27 = ssub.s32 %s22, 1
    %s28 = ssub.s32 %s22, 2
    %s29 = sadd.s32 %s22, 1
    %s30 = ssub.s32 %s22, %s29
    %p31 = scmp.eq.s32.totalorder %s30, 0
    %s33 = sadd.s32 %s32, 1
    %s34 = scalar_select %p31, %s32, %s33
    %p37 = pneg %p31
    %p38 = scmp.eq.s32.totalorder %s22, 1
    %p39 = por %p37, %p38
    %p40 = scmp.ne.s32.totalorder %s32, %s35
    %p41 = scmp.eq.s32.totalorder %s22, 0
    %p42 = por %p40, %p41
    %p43 = scmp.ne.s32.totalorder %s32, %s35
    %p44 = scmp.eq.s32.totalorder %s27, 1
    %p45 = por %p43, %p44
    %p46 = scmp.ne.s32.totalorder %s35, %s36
    %p47 = scmp.eq.s32.totalorder %s27, 0
    %p48 = por %p46, %p47
    %p49 = scmp.ne.s32.totalorder %s35, %s36
    %p50 = scmp.eq.s32.totalorder %s28, 1
    %p51 = por %p49, %p50
    %p53 = scmp.ne.s32.totalorder %s36, %s52
    %p54 = scmp.eq.s32.totalorder %s28, 0
    %p55 = por %p53, %p54
    %s56 = ssub.s32 %s22, %s29
    %p57 = scmp.eq.s32.totalorder %s56, 0
    %s59 = sadd.s32 %s58, 1
    %s60 = scalar_select %p57, %s58, %s59
    %p63 = pneg %p57
    %p64 = scmp.eq.s32.totalorder %s22, 1
    %p65 = por %p63, %p64
    %p66 = scmp.ne.s32.totalorder %s58, %s61
    %p67 = scmp.eq.s32.totalorder %s22, 0
    %p68 = por %p66, %p67
    %p69 = scmp.ne.s32.totalorder %s58, %s61
    %p70 = scmp.eq.s32.totalorder %s27, 1
    %p71 = por %p69, %p70
    %p72 = scmp.ne.s32.totalorder %s61, %s62
    %p73 = scmp.eq.s32.totalorder %s27, 0
    %p74 = por %p72, %p73
    %p75 = scmp.ne.s32.totalorder %s61, %s62
    %p76 = scmp.eq.s32.totalorder %s28, 1
    %p77 = por %p75, %p76
    %p79 = scmp.ne.s32.totalorder %s62, %s78
    %p80 = scmp.eq.s32.totalorder %s28, 0
    %p81 = por %p79, %p80
    %s83 = sadd.s32 %s82, 1
    %p86 = scmp.eq.s32.totalorder %s22, 1
    %p87 = scmp.ne.s32.totalorder %s82, %s84
    %p88 = scmp.eq.s32.totalorder %s22, 0
    %p89 = por %p87, %p88
    %p90 = scmp.ne.s32.totalorder %s82, %s84
    %p91 = scmp.eq.s32.totalorder %s27, 1
    %p92 = por %p90, %p91
    %p93 = scmp.ne.s32.totalorder %s84, %s85
    %p94 = scmp.eq.s32.totalorder %s27, 0
    %p95 = por %p93, %p94
    %p96 = scmp.ne.s32.totalorder %s84, %s85
    %p97 = scmp.eq.s32.totalorder %s28, 1
    %p98 = por %p96, %p97
    %p100 = scmp.ne.s32.totalorder %s85, %s99
    %p101 = scmp.eq.s32.totalorder %s28, 0
    %p102 = por %p100, %p101
    %s104 = sadd.s32 %s103, 1
    %p107 = scmp.eq.s32.totalorder %s22, 1
    %p108 = scmp.ne.s32.totalorder %s103, %s105
    %p109 = scmp.eq.s32.totalorder %s22, 0
    %p110 = por %p108, %p109
    %p111 = scmp.ne.s32.totalorder %s103, %s105
    %p112 = scmp.eq.s32.totalorder %s27, 1
    %p113 = por %p111, %p112
    %p114 = scmp.ne.s32.totalorder %s105, %s106
    %p115 = scmp.eq.s32.totalorder %s27, 0
    %p116 = por %p114, %p115
    %p117 = scmp.ne.s32.totalorder %s105, %s106
    %p118 = scmp.eq.s32.totalorder %s28, 1
    %p119 = por %p117, %p118
    %p121 = scmp.ne.s32.totalorder %s106, %s120
    %p122 = scmp.eq.s32.totalorder %s28, 0
    %p123 = por %p121, %p122
    %s125 = sadd.s32 %s124, 1
    %p128 = scmp.eq.s32.totalorder %s22, 1
    %p129 = scmp.ne.s32.totalorder %s124, %s126
    %p130 = scmp.eq.s32.totalorder %s22, 0
    %p131 = por %p129, %p130
    %p132 = scmp.ne.s32.totalorder %s124, %s126
    %p133 = scmp.eq.s32.totalorder %s27, 1
    %p134 = por %p132, %p133
    %p135 = scmp.ne.s32.totalorder %s126, %s127
    %p136 = scmp.eq.s32.totalorder %s27, 0
    %p137 = por %p135, %p136
    %p138 = scmp.ne.s32.totalorder %s126, %s127
    %p139 = scmp.eq.s32.totalorder %s28, 1
    %p140 = por %p138, %p139
    %p142 = scmp.ne.s32.totalorder %s127, %s141
    %p143 = scmp.eq.s32.totalorder %s28, 0
    %p144 = por %p142, %p143
    %s146 = sadd.s32 %s145, 1
    %p149 = scmp.eq.s32.totalorder %s22, 1
    %p150 = scmp.ne.s32.totalorder %s145, %s147
    %p151 = scmp.eq.s32.totalorder %s22, 0
    %p152 = por %p150, %p151
    %p153 = scmp.ne.s32.totalorder %s145, %s147
    %p154 = scmp.eq.s32.totalorder %s27, 1
    %p155 = por %p153, %p154
    %p156 = scmp.ne.s32.totalorder %s147, %s148
    %p157 = scmp.eq.s32.totalorder %s27, 0
    %p158 = por %p156, %p157
    %p159 = scmp.ne.s32.totalorder %s147, %s148
    %p160 = scmp.eq.s32.totalorder %s28, 1
    %p161 = por %p159, %p160
    %p163 = scmp.ne.s32.totalorder %s148, %s162
    %p164 = scmp.eq.s32.totalorder %s28, 0
    %p165 = por %p163, %p164
    %s167 = sadd.s32 %s166, 1
    %p170 = scmp.eq.s32.totalorder %s22, 1
    %p171 = scmp.ne.s32.totalorder %s166, %s168
    %p172 = scmp.eq.s32.totalorder %s22, 0
    %p173 = por %p171, %p172
    %p174 = scmp.ne.s32.totalorder %s166, %s168
    %p175 = scmp.eq.s32.totalorder %s27, 1
    %p176 = por %p174, %p175
    %p177 = scmp.ne.s32.totalorder %s168, %s169
    %p178 = scmp.eq.s32.totalorder %s27, 0
    %p179 = por %p177, %p178
    %p180 = scmp.ne.s32.totalorder %s168, %s169
    %p181 = scmp.eq.s32.totalorder %s28, 1
    %p182 = por %p180, %p181
    %p184 = scmp.ne.s32.totalorder %s169, %s183
    %p185 = scmp.eq.s32.totalorder %s28, 0
    %p186 = por %p184, %p185
    %s188 = sadd.s32 %s187, 1
    %p191 = scmp.eq.s32.totalorder %s22, 1
    %p192 = scmp.ne.s32.totalorder %s187, %s189
    %p193 = scmp.eq.s32.totalorder %s22, 0
    %p194 = por %p192, %p193
    %p195 = scmp.ne.s32.totalorder %s187, %s189
    %p196 = scmp.eq.s32.totalorder %s27, 1
    %p197 = por %p195, %p196
    %p198 = scmp.ne.s32.totalorder %s189, %s190
    %p199 = scmp.eq.s32.totalorder %s27, 0
    %p200 = por %p198, %p199
    %p201 = scmp.ne.s32.totalorder %s189, %s190
    %p202 = scmp.eq.s32.totalorder %s28, 1
    %p203 = por %p201, %p202
    %p205 = scmp.ne.s32.totalorder %s190, %s204
    %p206 = scmp.eq.s32.totalorder %s28, 0
    %p207 = por %p205, %p206
    %s209 = sadd.s32 %s208, 1
    %p212 = scmp.eq.s32.totalorder %s22, 1
    %p213 = scmp.ne.s32.totalorder %s208, %s210
    %p214 = scmp.eq.s32.totalorder %s22, 0
    %p215 = por %p213, %p214
    %p216 = scmp.ne.s32.totalorder %s208, %s210
    %p217 = scmp.eq.s32.totalorder %s27, 1
    %p218 = por %p216, %p217
    %p219 = scmp.ne.s32.totalorder %s210, %s211
    %p220 = scmp.eq.s32.totalorder %s27, 0
    %p221 = por %p219, %p220
    %p222 = scmp.ne.s32.totalorder %s210, %s211
    %p223 = scmp.eq.s32.totalorder %s28, 1
    %p224 = por %p222, %p223
    %p226 = scmp.ne.s32.totalorder %s211, %s225
    %p227 = scmp.eq.s32.totalorder %s28, 0
    %p228 = por %p226, %p227
    %s230 = sadd.s32 %s229, 1
    %p233 = scmp.eq.s32.totalorder %s22, 1
    %p234 = scmp.ne.s32.totalorder %s229, %s231
    %p235 = scmp.eq.s32.totalorder %s22, 0
    %p236 = por %p234, %p235
    %p237 = scmp.ne.s32.totalorder %s229, %s231
    %p238 = scmp.eq.s32.totalorder %s27, 1
    %p239 = por %p237, %p238
    %p240 = scmp.ne.s32.totalorder %s231, %s232
    %p241 = scmp.eq.s32.totalorder %s27, 0
    %p242 = por %p240, %p241
    %p243 = scmp.ne.s32.totalorder %s231, %s232
    %p244 = scmp.eq.s32.totalorder %s28, 1
    %p245 = por %p243, %p244
    %p247 = scmp.ne.s32.totalorder %s232, %s246
    %p248 = scmp.eq.s32.totalorder %s28, 0
    %p249 = por %p247, %p248
    %s251 = sadd.s32 %s250, 1
    %p254 = scmp.eq.s32.totalorder %s22, 1
    %p255 = scmp.ne.s32.totalorder %s250, %s252
    %p256 = scmp.eq.s32.totalorder %s22, 0
    %p257 = por %p255, %p256
    %p258 = scmp.ne.s32.totalorder %s250, %s252
    %p259 = scmp.eq.s32.totalorder %s27, 1
    %p260 = por %p258, %p259
    %p261 = scmp.ne.s32.totalorder %s252, %s253
    %p262 = scmp.eq.s32.totalorder %s27, 0
    %p263 = por %p261, %p262
    %p264 = scmp.ne.s32.totalorder %s252, %s253
    %p265 = scmp.eq.s32.totalorder %s28, 1
    %p266 = por %p264, %p265
    %p268 = scmp.ne.s32.totalorder %s253, %s267
    %p269 = scmp.eq.s32.totalorder %s28, 0
    %p270 = por %p268, %p269
    %s272 = sadd.s32 %s271, 1
    %p275 = scmp.eq.s32.totalorder %s22, 1
    %p276 = scmp.ne.s32.totalorder %s271, %s273
    %p277 = scmp.eq.s32.totalorder %s22, 0
    %p278 = por %p276, %p277
    %p279 = scmp.ne.s32.totalorder %s271, %s273
    %p280 = scmp.eq.s32.totalorder %s27, 1
    %p281 = por %p279, %p280
    %p282 = scmp.ne.s32.totalorder %s273, %s274
    %p283 = scmp.eq.s32.totalorder %s27, 0
    %p284 = por %p282, %p283
    %p285 = scmp.ne.s32.totalorder %s273, %s274
    %p286 = scmp.eq.s32.totalorder %s28, 1
    %p287 = por %p285, %p286
    %p289 = scmp.ne.s32.totalorder %s274, %s288
    %p290 = scmp.eq.s32.totalorder %s28, 0
    %p291 = por %p289, %p290
    %s293 = sadd.s32 %s292, 1
    %p296 = scmp.eq.s32.totalorder %s22, 1
    %p297 = scmp.ne.s32.totalorder %s292, %s294
    %p298 = scmp.eq.s32.totalorder %s22, 0
    %p299 = por %p297, %p298
    %p300 = scmp.ne.s32.totalorder %s292, %s294
    %p301 = scmp.eq.s32.totalorder %s27, 1
    %p302 = por %p300, %p301
    %p303 = scmp.ne.s32.totalorder %s294, %s295
    %p304 = scmp.eq.s32.totalorder %s27, 0
    %p305 = por %p303, %p304
    %p306 = scmp.ne.s32.totalorder %s294, %s295
    %p307 = scmp.eq.s32.totalorder %s28, 1
    %p308 = por %p306, %p307
    %p310 = scmp.ne.s32.totalorder %s295, %s309
    %p311 = scmp.eq.s32.totalorder %s28, 0
    %p312 = por %p310, %p311
    %s314 = sadd.s32 %s313, 1
    %p317 = scmp.eq.s32.totalorder %s22, 1
    %p318 = scmp.ne.s32.totalorder %s313, %s315
    %p319 = scmp.eq.s32.totalorder %s22, 0
    %p320 = por %p318, %p319
    %p321 = scmp.ne.s32.totalorder %s313, %s315
    %p322 = scmp.eq.s32.totalorder %s27, 1
    %p323 = por %p321, %p322
    %p324 = scmp.ne.s32.totalorder %s315, %s316
    %p325 = scmp.eq.s32.totalorder %s27, 0
    %p326 = por %p324, %p325
    %p327 = scmp.ne.s32.totalorder %s315, %s316
    %p328 = scmp.eq.s32.totalorder %s28, 1
    %p329 = por %p327, %p328
    %p331 = scmp.ne.s32.totalorder %s316, %s330
    %p332 = scmp.eq.s32.totalorder %s28, 0
    %p333 = por %p331, %p332
    %s335 = sadd.s32 %s334, 1
    %p338 = scmp.eq.s32.totalorder %s22, 1
    %p339 = scmp.ne.s32.totalorder %s334, %s336
    %p340 = scmp.eq.s32.totalorder %s22, 0
    %p341 = por %p339, %p340
    %p342 = scmp.ne.s32.totalorder %s334, %s336
    %p343 = scmp.eq.s32.totalorder %s27, 1
    %p344 = por %p342, %p343
    %p345 = scmp.ne.s32.totalorder %s336, %s337
    %p346 = scmp.eq.s32.totalorder %s27, 0
    %p347 = por %p345, %p346
    %p348 = scmp.ne.s32.totalorder %s336, %s337
    %p349 = scmp.eq.s32.totalorder %s28, 1
    %p350 = por %p348, %p349
    %p352 = scmp.ne.s32.totalorder %s337, %s351
    %p353 = scmp.eq.s32.totalorder %s28, 0
    %p354 = por %p352, %p353
    %s356 = sadd.s32 %s355, 1
    %p359 = scmp.eq.s32.totalorder %s22, 1
    %p360 = scmp.ne.s32.totalorder %s355, %s357
    %p361 = scmp.eq.s32.totalorder %s22, 0
    %p362 = por %p360, %p361
    %p363 = scmp.ne.s32.totalorder %s355, %s357
    %p364 = scmp.eq.s32.totalorder %s27, 1
    %p365 = por %p363, %p364
    %p366 = scmp.ne.s32.totalorder %s357, %s358
    %p367 = scmp.eq.s32.totalorder %s27, 0
    %p368 = por %p366, %p367
    %p369 = scmp.ne.s32.totalorder %s357, %s358
    %p370 = scmp.eq.s32.totalorder %s28, 1
    %p371 = por %p369, %p370
    %p373 = scmp.ne.s32.totalorder %s358, %s372
    %p374 = scmp.eq.s32.totalorder %s28, 0
    %p375 = por %p373, %p374
    %s376 = ssub.s32 %s22, %s29
    %p377 = scmp.eq.s32.totalorder %s376, 0
    %s379 = sadd.s32 %s378, 1
    %s380 = scalar_select %p377, %s378, %s379
    %p383 = pneg %p377
    %p384 = scmp.eq.s32.totalorder %s22, 1
    %p385 = por %p383, %p384
    %p386 = scmp.ne.s32.totalorder %s378, %s381
    %p387 = scmp.eq.s32.totalorder %s22, 0
    %p388 = por %p386, %p387
    %p389 = scmp.ne.s32.totalorder %s378, %s381
    %p390 = scmp.eq.s32.totalorder %s27, 1
    %p391 = por %p389, %p390
    %p392 = scmp.ne.s32.totalorder %s381, %s382
    %p393 = scmp.eq.s32.totalorder %s27, 0
    %p394 = por %p392, %p393
    %p395 = scmp.ne.s32.totalorder %s381, %s382
    %p396 = scmp.eq.s32.totalorder %s28, 1
    %p397 = por %p395, %p396
    %p399 = scmp.ne.s32.totalorder %s382, %s398
    %p400 = scmp.eq.s32.totalorder %s28, 0
    %p401 = por %p399, %p400
    %p402 = scmp.le.s32.totalorder 1, %s22
    %p403 = scmp.lt.s32.totalorder %s22, 3
    %p404 = pnand %p402, %p403
    %p405 = pneg %p404
    // Predicated region
    $region9: #{resnet_block_forward.1} parent=5 // pred_check
      _
    $region10: #{resnet_block_forward.1} parent=5 // pred_check_branch
      %407 = sbr.rel (%p404) target = $region12
    $region11: #{resnet_block_forward.1} parent=5 // pred_region
      %s408 = ssub.s32 %s22, 1
      // Predicated region
      $region13: #{resnet_block_forward.1} parent=11 // pred_check
        %p409 = pneg %p95
      $region14: #{resnet_block_forward.1} parent=11 // pred_check_branch
        %411 = sbr.rel (%p409) target = $region16
      $region15: #{resnet_block_forward.1} parent=11 // pred_region
        _
      $region16: #{resnet_block_forward.1} parent=11 // pred_fallthru
        _
      // Predicated region
      $region17: #{resnet_block_forward.1} parent=11 // pred_check
        %p412 = pneg %p116
      $region18: #{resnet_block_forward.1} parent=11 // pred_check_branch
        %414 = sbr.rel (%p412) target = $region20
      $region19: #{resnet_block_forward.1} parent=11 // pred_region
        _
      $region20: #{resnet_block_forward.1} parent=11 // pred_fallthru
        _
      // Predicated region
      $region21: #{resnet_block_forward.1} parent=11 // pred_check
        %p415 = pneg %p137
      $region22: #{resnet_block_forward.1} parent=11 // pred_check_branch
        %417 = sbr.rel (%p415) target = $region24
      $region23: #{resnet_block_forward.1} parent=11 // pred_region
        _
      $region24: #{resnet_block_forward.1} parent=11 // pred_fallthru
        _
      // Predicated region
      $region25: #{resnet_block_forward.1} parent=11 // pred_check
        %p418 = pneg %p158
      $region26: #{resnet_block_forward.1} parent=11 // pred_check_branch
        %420 = sbr.rel (%p418) target = $region28
      $region27: #{resnet_block_forward.1} parent=11 // pred_region
        _
      $region28: #{resnet_block_forward.1} parent=11 // pred_fallthru
        _
      // Predicated region
      $region29: #{resnet_block_forward.1} parent=11 // pred_check
        %p421 = pneg %p179
      $region30: #{resnet_block_forward.1} parent=11 // pred_check_branch
        %423 = sbr.rel (%p421) target = $region32
      $region31: #{resnet_block_forward.1} parent=11 // pred_region
        _
      $region32: #{resnet_block_forward.1} parent=11 // pred_fallthru
        _
      // Predicated region
      $region33: #{resnet_block_forward.1} parent=11 // pred_check
        %p424 = pneg %p200
      $region34: #{resnet_block_forward.1} parent=11 // pred_check_branch
        %426 = sbr.rel (%p424) target = $region36
      $region35: #{resnet_block_forward.1} parent=11 // pred_region
        _
      $region36: #{resnet_block_forward.1} parent=11 // pred_fallthru
        _
      // Predicated region
      $region37: #{resnet_block_forward.1} parent=11 // pred_check
        %p427 = pneg %p221
      $region38: #{resnet_block_forward.1} parent=11 // pred_check_branch
        %429 = sbr.rel (%p427) target = $region40
      $region39: #{resnet_block_forward.1} parent=11 // pred_region
        _
      $region40: #{resnet_block_forward.1} parent=11 // pred_fallthru
        _
      // Predicated region
      $region41: #{resnet_block_forward.1} parent=11 // pred_check
        %p430 = pneg %p242
      $region42: #{resnet_block_forward.1} parent=11 // pred_check_branch
        %432 = sbr.rel (%p430) target = $region44
      $region43: #{resnet_block_forward.1} parent=11 // pred_region
        _
      $region44: #{resnet_block_forward.1} parent=11 // pred_fallthru
        _
      // Predicated region
      $region45: #{resnet_block_forward.1} parent=11 // pred_check
        %p433 = pneg %p263
      $region46: #{resnet_block_forward.1} parent=11 // pred_check_branch
        %435 = sbr.rel (%p433) target = $region48
      $region47: #{resnet_block_forward.1} parent=11 // pred_region
        _
      $region48: #{resnet_block_forward.1} parent=11 // pred_fallthru
        _
      // Predicated region
      $region49: #{resnet_block_forward.1} parent=11 // pred_check
        %p436 = pneg %p284
      $region50: #{resnet_block_forward.1} parent=11 // pred_check_branch
        %438 = sbr.rel (%p436) target = $region52
      $region51: #{resnet_block_forward.1} parent=11 // pred_region
        _
      $region52: #{resnet_block_forward.1} parent=11 // pred_fallthru
        _
      // Predicated region
      $region53: #{resnet_block_forward.1} parent=11 // pred_check
        %p439 = pneg %p305
      $region54: #{resnet_block_forward.1} parent=11 // pred_check_branch
        %441 = sbr.rel (%p439) target = $region56
      $region55: #{resnet_block_forward.1} parent=11 // pred_region
        _
      $region56: #{resnet_block_forward.1} parent=11 // pred_fallthru
        _
      // Predicated region
      $region57: #{resnet_block_forward.1} parent=11 // pred_check
        %p442 = pneg %p326
      $region58: #{resnet_block_forward.1} parent=11 // pred_check_branch
        %444 = sbr.rel (%p442) target = $region60
      $region59: #{resnet_block_forward.1} parent=11 // pred_region
        _
      $region60: #{resnet_block_forward.1} parent=11 // pred_fallthru
        _
      // Predicated region
      $region61: #{resnet_block_forward.1} parent=11 // pred_check
        %p445 = pneg %p347
      $region62: #{resnet_block_forward.1} parent=11 // pred_check_branch
        %447 = sbr.rel (%p445) target = $region64
      $region63: #{resnet_block_forward.1} parent=11 // pred_region
        _
      $region64: #{resnet_block_forward.1} parent=11 // pred_fallthru
        _
      // Predicated region
      $region65: #{resnet_block_forward.1} parent=11 // pred_check
        %p448 = pneg %p368
      $region66: #{resnet_block_forward.1} parent=11 // pred_check_branch
        %450 = sbr.rel (%p448) target = $region68
      $region67: #{resnet_block_forward.1} parent=11 // pred_region
        _
      $region68: #{resnet_block_forward.1} parent=11 // pred_fallthru
        _
    $region12: #{resnet_block_forward.1} parent=5 // pred_fallthru
      _
    %p451 = scmp.lt.s32.totalorder %s22, 2
    // Predicated region
    $region69: #{resnet_block_forward.1} parent=5 // pred_check
      %p452 = pneg %p451
    $region70: #{resnet_block_forward.1} parent=5 // pred_check_branch
      %454 = sbr.rel (%p452) target = $region72
    $region71: #{resnet_block_forward.1} parent=5 // pred_region
      // Predicated region
      $region73: #{resnet_block_forward.1} parent=71 // pred_check
        %p455 = pneg %p42
      $region74: #{resnet_block_forward.1} parent=71 // pred_check_branch
        %457 = sbr.rel (%p455) target = $region76
      $region75: #{resnet_block_forward.1} parent=71 // pred_region
        %p458 = scmp.lt.s32.totalorder %s22, 1
        %s459 = scalar_select %p458, %s22, 1
        %s460 = smul.addr %s459, 8
        %s461 = smul.addr %s460, 8
        %s462 = scalar_lea.vmem %s0, %s461
      $region76: #{resnet_block_forward.1} parent=71 // pred_fallthru
        _
      // Predicated region
      $region77: #{resnet_block_forward.1} parent=71 // pred_check
        %p463 = pneg %p68
      $region78: #{resnet_block_forward.1} parent=71 // pred_check_branch
        %465 = sbr.rel (%p463) target = $region80
      $region79: #{resnet_block_forward.1} parent=71 // pred_region
        %p466 = scmp.lt.s32.totalorder %s22, 1
        %s467 = scalar_select %p466, %s22, 1
        %s468 = scalar_lea.vmem %s1, %s467
      $region80: #{resnet_block_forward.1} parent=71 // pred_fallthru
        _
    $region72: #{resnet_block_forward.1} parent=5 // pred_fallthru
      _
    %p469 = scmp.le.s32.totalorder 1, %s22
    %p470 = scmp.lt.s32.totalorder %s22, 3
    %p471 = pnand %p469, %p470
    %p472 = pneg %p471
    // Predicated region
    $region81: #{resnet_block_forward.1} parent=5 // pred_check
      _
    $region82: #{resnet_block_forward.1} parent=5 // pred_check_branch
      %474 = sbr.rel (%p471) target = $region84
    $region83: #{resnet_block_forward.1} parent=5 // pred_region
      %s475 = ssub.s32 %s22, 1
      %p476 = scmp.lt.s32.totalorder %s27, 1
      %s477 = scalar_select %p476, %s27, 1
      %s478 = smul.addr %s477, 8
      %s479 = smul.addr %s478, 8
      %s480 = scalar_lea.vmem %s0, %s479
      %p481 = pneg %p48
      %p482 = pneg %p45
      %p483 = scmp.lt.s32.totalorder %s27, 1
      %s484 = scalar_select %p483, %s27, 1
      %s485 = scalar_lea.vmem %s1, %s484
      %p486 = pneg %p74
      %p487 = pneg %p71
      %p488 = pneg %p95
      %p489 = pneg %p92
      %p490 = pneg %p116
      %p491 = pneg %p113
      %p492 = pneg %p137
      %p493 = pneg %p134
      %p494 = pneg %p158
      %p495 = pneg %p155
      %p496 = pneg %p179
      %p497 = pneg %p176
      %p498 = pneg %p200
      %p499 = pneg %p197
      %p500 = pneg %p221
      %p501 = pneg %p218
      %p502 = pneg %p242
      %p503 = pneg %p239
      %p504 = pneg %p263
      %p505 = pneg %p260
      %p506 = pneg %p284
      %p507 = pneg %p281
      %p508 = pneg %p305
      %p509 = pneg %p302
      %p510 = pneg %p326
      %p511 = pneg %p323
      %p512 = pneg %p347
      %p513 = pneg %p344
      %p514 = pneg %p368
      %p515 = pneg %p365
      %p516 = pneg %p394
      %p517 = pneg %p391
      %p518 = scmp.lt.s32.totalorder %s27, 1
      %s519 = scalar_select %p518, %s27, 1
      %s520 = smul.addr %s519, 16
      %s521 = smul.addr %s520, 8
      %s522 = scalar_lea.vmem %s16, %s521
      %p523 = scmp.lt.s32.totalorder %s27, 1
      %s524 = scalar_select %p523, %s27, 1
      %s525 = smul.addr %s524, 8
      %s526 = smul.addr %s525, 8
      %s527 = scalar_lea.vmem %s0, %s526
      %p528 = scmp.lt.s32.totalorder %s27, 1
      %s529 = scalar_select %p528, %s27, 1
      %s530 = scalar_lea.vmem %s1, %s529
      %p531 = scmp.lt.s32.totalorder %s27, 1
      %s532 = scalar_select %p531, %s27, 1
      %s533 = smul.addr %s532, 16
      %s534 = smul.addr %s533, 8
      %s535 = scalar_lea.vmem %s16, %s534
      %v536 = vld [vmem:[%s527] sm:$0xff]
      %v537 = vld [vmem:[%s527 + $0x8] sm:$0xff]
      %v538 = vld [vmem:[%s527 + $0x10] sm:$0xff]
      %v539 = vld [vmem:[%s527 + $0x18] sm:$0xff]
      %v540 = vld [vmem:[%s527 + $0x20] sm:$0xff]
      %v541 = vld [vmem:[%s527 + $0x28] sm:$0xff]
      %v542 = vld [vmem:[%s527 + $0x30] sm:$0xff]
      %v543 = vld [vmem:[%s527 + $0x38] sm:$0xff]
      %v544 = vlaneseq
      %v545 = vshrl.u32 %v544, 7
      %v546 = vadd.s32 %v545, 8
      %v547 = vadd.s32 %v545, 16
      %v548 = vadd.s32 %v545, 24
      %v549 = vadd.s32 %v545, 32
      %v550 = vadd.s32 %v545, 40
      %v551 = vadd.s32 %v545, 48
      %v552 = vadd.s32 %v545, 56
      %v553 = vadd.s32 %v545, 64
      %v554 = vadd.s32 %v545, 72
      %v555 = vadd.s32 %v545, 80
      %v556 = vadd.s32 %v545, 88
      %v557 = vadd.s32 %v545, 96
      %v558 = vadd.s32 %v545, 104
      %v559 = vadd.s32 %v545, 112
      %v560 = vadd.s32 %v545, 120
      %v561 = vadd.s32 %v545, 128
      %v562 = vadd.s32 %v545, 136
      %v563 = vadd.s32 %v545, 144
      %v564 = vadd.s32 %v545, 152
      %v565 = vadd.s32 %v545, 160
      %v566 = vadd.s32 %v545, 168
      %v567 = vadd.s32 %v545, 176
      %v568 = vadd.s32 %v545, 184
      %v569 = vadd.s32 %v545, 192
      %v570 = vadd.s32 %v545, 200
      %v571 = vadd.s32 %v545, 208
      %v572 = vadd.s32 %v545, 216
      %v573 = vadd.s32 %v545, 224
      %v574 = vadd.s32 %v545, 232
      %v575 = vadd.s32 %v545, 240
      %v576 = vadd.s32 %v545, 248
      %v577 = vlaneseq
      %v578 = vand.u32 %v577, 127
      %v579 = vadd.s32 %v578, 128
      %vm580 = vcmp.eq.s32.totalorder %v545, %v578
      %vm581 = vcmp.eq.s32.totalorder %v545, %v579
      %vm582 = vcmp.eq.s32.totalorder %v546, %v578
      %vm583 = vcmp.eq.s32.totalorder %v546, %v579
      %vm584 = vcmp.eq.s32.totalorder %v547, %v578
      %vm585 = vcmp.eq.s32.totalorder %v547, %v579
      %vm586 = vcmp.eq.s32.totalorder %v548, %v578
      %vm587 = vcmp.eq.s32.totalorder %v548, %v579
      %vm588 = vcmp.eq.s32.totalorder %v549, %v578
      %vm589 = vcmp.eq.s32.totalorder %v549, %v579
      %vm590 = vcmp.eq.s32.totalorder %v550, %v578
      %vm591 = vcmp.eq.s32.totalorder %v550, %v579
      %vm592 = vcmp.eq.s32.totalorder %v551, %v578
      %vm593 = vcmp.eq.s32.totalorder %v551, %v579
      %vm594 = vcmp.eq.s32.totalorder %v552, %v578
      %vm595 = vcmp.eq.s32.totalorder %v552, %v579
      %vm596 = vcmp.eq.s32.totalorder %v553, %v578
      %vm597 = vcmp.eq.s32.totalorder %v553, %v579
      %vm598 = vcmp.eq.s32.totalorder %v554, %v578
      %vm599 = vcmp.eq.s32.totalorder %v554, %v579
      %vm600 = vcmp.eq.s32.totalorder %v555, %v578
      %vm601 = vcmp.eq.s32.totalorder %v555, %v579
      %vm602 = vcmp.eq.s32.totalorder %v556, %v578
      %vm603 = vcmp.eq.s32.totalorder %v556, %v579
      %vm604 = vcmp.eq.s32.totalorder %v557, %v578
      %vm605 = vcmp.eq.s32.totalorder %v557, %v579
      %vm606 = vcmp.eq.s32.totalorder %v558, %v578
      %vm607 = vcmp.eq.s32.totalorder %v558, %v579
      %vm608 = vcmp.eq.s32.totalorder %v559, %v578
      %vm609 = vcmp.eq.s32.totalorder %v559, %v579
      %vm610 = vcmp.eq.s32.totalorder %v560, %v578
      %vm611 = vcmp.eq.s32.totalorder %v560, %v579
      %vm612 = vcmp.eq.s32.totalorder %v561, %v578
      %vm613 = vcmp.eq.s32.totalorder %v561, %v579
      %vm614 = vcmp.eq.s32.totalorder %v562, %v578
      %vm615 = vcmp.eq.s32.totalorder %v562, %v579
      %vm616 = vcmp.eq.s32.totalorder %v563, %v578
      %vm617 = vcmp.eq.s32.totalorder %v563, %v579
      %vm618 = vcmp.eq.s32.totalorder %v564, %v578
      %vm619 = vcmp.eq.s32.totalorder %v564, %v579
      %vm620 = vcmp.eq.s32.totalorder %v565, %v578
      %vm621 = vcmp.eq.s32.totalorder %v565, %v579
      %vm622 = vcmp.eq.s32.totalorder %v566, %v578
      %vm623 = vcmp.eq.s32.totalorder %v566, %v579
      %vm624 = vcmp.eq.s32.totalorder %v567, %v578
      %vm625 = vcmp.eq.s32.totalorder %v567, %v579
      %vm626 = vcmp.eq.s32.totalorder %v568, %v578
      %vm627 = vcmp.eq.s32.totalorder %v568, %v579
      %vm628 = vcmp.eq.s32.totalorder %v569, %v578
      %vm629 = vcmp.eq.s32.totalorder %v569, %v579
      %vm630 = vcmp.eq.s32.totalorder %v570, %v578
      %vm631 = vcmp.eq.s32.totalorder %v570, %v579
      %vm632 = vcmp.eq.s32.totalorder %v571, %v578
      %vm633 = vcmp.eq.s32.totalorder %v571, %v579
      %vm634 = vcmp.eq.s32.totalorder %v572, %v578
      %vm635 = vcmp.eq.s32.totalorder %v572, %v579
      %vm636 = vcmp.eq.s32.totalorder %v573, %v578
      %vm637 = vcmp.eq.s32.totalorder %v573, %v579
      %vm638 = vcmp.eq.s32.totalorder %v574, %v578
      %vm639 = vcmp.eq.s32.totalorder %v574, %v579
      %vm640 = vcmp.eq.s32.totalorder %v575, %v578
      %vm641 = vcmp.eq.s32.totalorder %v575, %v579
      %vm642 = vcmp.eq.s32.totalorder %v576, %v578
      %vm643 = vcmp.eq.s32.totalorder %v576, %v579
      %v644 = vsel %vm580, 1.0, 0.0
      %v645 = vsel %vm581, 1.0, 0.0
      %v646 = vsel %vm582, 1.0, 0.0
      %v647 = vsel %vm583, 1.0, 0.0
      %v648 = vsel %vm584, 1.0, 0.0
      %v649 = vsel %vm585, 1.0, 0.0
      %v650 = vsel %vm586, 1.0, 0.0
      %v651 = vsel %vm587, 1.0, 0.0
      %v652 = vsel %vm588, 1.0, 0.0
      %v653 = vsel %vm589, 1.0, 0.0
      %v654 = vsel %vm590, 1.0, 0.0
      %v655 = vsel %vm591, 1.0, 0.0
      %v656 = vsel %vm592, 1.0, 0.0
      %v657 = vsel %vm593, 1.0, 0.0
      %v658 = vsel %vm594, 1.0, 0.0
      %v659 = vsel %vm595, 1.0, 0.0
      %v660 = vsel %vm596, 1.0, 0.0
      %v661 = vsel %vm597, 1.0, 0.0
      %v662 = vsel %vm598, 1.0, 0.0
      %v663 = vsel %vm599, 1.0, 0.0
      %v664 = vsel %vm600, 1.0, 0.0
      %v665 = vsel %vm601, 1.0, 0.0
      %v666 = vsel %vm602, 1.0, 0.0
      %v667 = vsel %vm603, 1.0, 0.0
      %v668 = vsel %vm604, 1.0, 0.0
      %v669 = vsel %vm605, 1.0, 0.0
      %v670 = vsel %vm606, 1.0, 0.0
      %v671 = vsel %vm607, 1.0, 0.0
      %v672 = vsel %vm608, 1.0, 0.0
      %v673 = vsel %vm609, 1.0, 0.0
      %v674 = vsel %vm610, 1.0, 0.0
      %v675 = vsel %vm611, 1.0, 0.0
      %v676 = vsel %vm612, 1.0, 0.0
      %v677 = vsel %vm613, 1.0, 0.0
      %v678 = vsel %vm614, 1.0, 0.0
      %v679 = vsel %vm615, 1.0, 0.0
      %v680 = vsel %vm616, 1.0, 0.0
      %v681 = vsel %vm617, 1.0, 0.0
      %v682 = vsel %vm618, 1.0, 0.0
      %v683 = vsel %vm619, 1.0, 0.0
      %v684 = vsel %vm620, 1.0, 0.0
      %v685 = vsel %vm621, 1.0, 0.0
      %v686 = vsel %vm622, 1.0, 0.0
      %v687 = vsel %vm623, 1.0, 0.0
      %v688 = vsel %vm624, 1.0, 0.0
      %v689 = vsel %vm625, 1.0, 0.0
      %v690 = vsel %vm626, 1.0, 0.0
      %v691 = vsel %vm627, 1.0, 0.0
      %v692 = vsel %vm628, 1.0, 0.0
      %v693 = vsel %vm629, 1.0, 0.0
      %v694 = vsel %vm630, 1.0, 0.0
      %v695 = vsel %vm631, 1.0, 0.0
      %v696 = vsel %vm632, 1.0, 0.0
      %v697 = vsel %vm633, 1.0, 0.0
      %v698 = vsel %vm634, 1.0, 0.0
      %v699 = vsel %vm635, 1.0, 0.0
      %v700 = vsel %vm636, 1.0, 0.0
      %v701 = vsel %vm637, 1.0, 0.0
      %v702 = vsel %vm638, 1.0, 0.0
      %v703 = vsel %vm639, 1.0, 0.0
      %v704 = vsel %vm640, 1.0, 0.0
      %v705 = vsel %vm641, 1.0, 0.0
      %v706 = vsel %vm642, 1.0, 0.0
      %v707 = vsel %vm643, 1.0, 0.0
      %708 = vmatprep.subr.mxu0 0.0
      %709 = vmatpush1.xpose.msra.mxu0 0.0
      %710 = vmatprep.subr.mxu0 0.0
      %711 = vmatpush1.xpose.msra.mxu0 0.0
      %712 = vmatprep.subr.mxu0 0.0
      %713 = vmatpush1.xpose.msra.mxu0 0.0
      %714 = vmatprep.subr.mxu0 0.0
      %715 = vmatpush1.xpose.msra.mxu0 0.0
      %716 = vmatprep.subr.mxu0 0.0
      %717 = vmatpush1.xpose.msra.mxu0 0.0
      %718 = vmatprep.subr.mxu0 0.0
      %719 = vmatpush1.xpose.msra.mxu0 0.0
      %720 = vmatprep.subr.mxu0 0.0
      %721 = vmatpush1.xpose.msra.mxu0 0.0
      %722 = vmatprep.subr.mxu0 0.0
      %723 = vmatpush1.xpose.msra.mxu0 0.0
      %724 = vmatprep.subr.mxu0 0.0
      %725 = vmatpush1.xpose.msra.mxu0 0.0
      %726 = vmatprep.subr.mxu0 0.0
      %727 = vmatpush1.xpose.msra.mxu0 0.0
      %728 = vmatprep.subr.mxu0 0.0
      %729 = vmatpush1.xpose.msra.mxu0 0.0
      %730 = vmatprep.subr.mxu0 0.0
      %731 = vmatpush1.xpose.msra.mxu0 0.0
      %732 = vmatprep.subr.mxu0 %v543
      %733 = vmatpush1.xpose.msra.mxu0 %v542
      %734 = vmatprep.subr.mxu0 %v541
      %735 = vmatpush1.xpose.msra.mxu0 %v540
      %736 = vmatprep.subr.mxu0 %v539
      %737 = vmatpush1.xpose.msra.mxu0 %v538
      %738 = vmatprep.subr.mxu0 %v537
      %739 = vmatpush1.xpose.msra.mxu0 %v536
      %740 = vmatprep.subr.mxu0 0.0
      %741 = vmatpush2.xpose.msra.mxu0 0.0
      %742 = vmatprep.subr.mxu0 0.0
      %743 = vmatpush2.xpose.msra.mxu0 0.0
      %744 = vmatprep.subr.mxu0 0.0
      %745 = vmatpush2.xpose.msra.mxu0 0.0
      %746 = vmatprep.subr.mxu0 0.0
      %747 = vmatpush2.xpose.msra.mxu0 0.0
      %748 = vmatprep.subr.mxu0 0.0
      %749 = vmatpush2.xpose.msra.mxu0 0.0
      %750 = vmatprep.subr.mxu0 0.0
      %751 = vmatpush2.xpose.msra.mxu0 0.0
      %752 = vmatprep.subr.mxu0 0.0
      %753 = vmatpush2.xpose.msra.mxu0 0.0
      %754 = vmatprep.subr.mxu0 0.0
      %755 = vmatpush2.xpose.msra.mxu0 0.0
      %756 = vmatprep.subr.mxu0 0.0
      %757 = vmatpush2.xpose.msra.mxu0 0.0
      %758 = vmatprep.subr.mxu0 0.0
      %759 = vmatpush2.xpose.msra.mxu0 0.0
      %760 = vmatprep.subr.mxu0 0.0
      %761 = vmatpush2.xpose.msra.mxu0 0.0
      %762 = vmatprep.subr.mxu0 0.0
      %763 = vmatpush2.xpose.msra.mxu0 0.0
      %764 = vmatprep.subr.mxu0 0.0
      %765 = vmatpush2.xpose.msra.mxu0 0.0
      %766 = vmatprep.subr.mxu0 0.0
      %767 = vmatpush2.xpose.msra.mxu0 0.0
      %768 = vmatprep.subr.mxu0 0.0
      %769 = vmatpush2.xpose.msra.mxu0 0.0
      %770 = vmatprep.subr.mxu0 0.0
      %771 = vmatpush2.xpose.msra.mxu0 0.0
      %772 = vmatprep.mubr.f32.mxu0 %v645
      %773 = vmatmul.mubr.f32.gmra.mxu0 %v644
      %v774 = vpop.f32.mrf.mxu0
      %v775 = vadd.f32 0.0, %v774
      %v776 = vpop.f32.mrf.mxu0
      %777 = vmatprep.mubr.f32.mxu0 %v647
      %778 = vmatmul.mubr.f32.gmra.mxu0 %v646
      %v779 = vpop.f32.mrf.mxu0
      %v780 = vadd.f32 0.0, %v779
      %v781 = vpop.f32.mrf.mxu0
      %782 = vmatprep.mubr.f32.mxu0 %v649
      %783 = vmatmul.mubr.f32.gmra.mxu0 %v648
      %v784 = vpop.f32.mrf.mxu0
      %v785 = vadd.f32 0.0, %v784
      %v786 = vpop.f32.mrf.mxu0
      %787 = vmatprep.mubr.f32.mxu0 %v651
      %788 = vmatmul.mubr.f32.gmra.mxu0 %v650
      %v789 = vpop.f32.mrf.mxu0
      %v790 = vadd.f32 0.0, %v789
      %v791 = vpop.f32.mrf.mxu0
      %792 = vmatprep.mubr.f32.mxu0 %v653
      %793 = vmatmul.mubr.f32.gmra.mxu0 %v652
      %v794 = vpop.f32.mrf.mxu0
      %v795 = vadd.f32 0.0, %v794
      %v796 = vpop.f32.mrf.mxu0
      %797 = vmatprep.mubr.f32.mxu0 %v655
      %798 = vmatmul.mubr.f32.gmra.mxu0 %v654
      %v799 = vpop.f32.mrf.mxu0
      %v800 = vadd.f32 0.0, %v799
      %v801 = vpop.f32.mrf.mxu0
      %802 = vmatprep.mubr.f32.mxu0 %v657
      %803 = vmatmul.mubr.f32.gmra.mxu0 %v656
      %v804 = vpop.f32.mrf.mxu0
      %v805 = vadd.f32 0.0, %v804
      %v806 = vpop.f32.mrf.mxu0
      %807 = vmatprep.mubr.f32.mxu0 %v659
      %808 = vmatmul.mubr.f32.gmra.mxu0 %v658
      %v809 = vpop.f32.mrf.mxu0
      %v810 = vadd.f32 0.0, %v809
      %v811 = vpop.f32.mrf.mxu0
      %812 = vmatprep.mubr.f32.mxu0 %v661
      %813 = vmatmul.mubr.f32.gmra.mxu0 %v660
      %v814 = vpop.f32.mrf.mxu0
      %v815 = vadd.f32 0.0, %v814
      %v816 = vpop.f32.mrf.mxu0
      %817 = vmatprep.mubr.f32.mxu0 %v663
      %818 = vmatmul.mubr.f32.gmra.mxu0 %v662
      %v819 = vpop.f32.mrf.mxu0
      %v820 = vadd.f32 0.0, %v819
      %v821 = vpop.f32.mrf.mxu0
      %822 = vmatprep.mubr.f32.mxu0 %v665
      %823 = vmatmul.mubr.f32.gmra.mxu0 %v664
      %v824 = vpop.f32.mrf.mxu0
      %v825 = vadd.f32 0.0, %v824
      %v826 = vpop.f32.mrf.mxu0
      %827 = vmatprep.mubr.f32.mxu0 %v667
      %828 = vmatmul.mubr.f32.gmra.mxu0 %v666
      %v829 = vpop.f32.mrf.mxu0
      %v830 = vadd.f32 0.0, %v829
      %v831 = vpop.f32.mrf.mxu0
      %832 = vmatprep.mubr.f32.mxu0 %v669
      %833 = vmatmul.mubr.f32.gmra.mxu0 %v668
      %v834 = vpop.f32.mrf.mxu0
      %v835 = vadd.f32 0.0, %v834
      %v836 = vpop.f32.mrf.mxu0
      %837 = vmatprep.mubr.f32.mxu0 %v671
      %838 = vmatmul.mubr.f32.gmra.mxu0 %v670
      %v839 = vpop.f32.mrf.mxu0
      %v840 = vadd.f32 0.0, %v839
      %v841 = vpop.f32.mrf.mxu0
      %842 = vmatprep.mubr.f32.mxu0 %v673
      %843 = vmatmul.mubr.f32.gmra.mxu0 %v672
      %v844 = vpop.f32.mrf.mxu0
      %v845 = vadd.f32 0.0, %v844
      %v846 = vpop.f32.mrf.mxu0
      %847 = vmatprep.mubr.f32.mxu0 %v675
      %848 = vmatmul.mubr.f32.gmra.mxu0 %v674
      %v849 = vpop.f32.mrf.mxu0
      %v850 = vadd.f32 0.0, %v849
      %v851 = vpop.f32.mrf.mxu0
      %852 = vmatprep.mubr.f32.mxu0 %v677
      %853 = vmatmul.mubr.f32.gmra.mxu0 %v676
      %v854 = vpop.f32.mrf.mxu0
      %v855 = vadd.f32 0.0, %v854
      %v856 = vpop.f32.mrf.mxu0
      %857 = vmatprep.mubr.f32.mxu0 %v679
      %858 = vmatmul.mubr.f32.gmra.mxu0 %v678
      %v859 = vpop.f32.mrf.mxu0
      %v860 = vadd.f32 0.0, %v859
      %v861 = vpop.f32.mrf.mxu0
      %862 = vmatprep.mubr.f32.mxu0 %v681
      %863 = vmatmul.mubr.f32.gmra.mxu0 %v680
      %v864 = vpop.f32.mrf.mxu0
      %v865 = vadd.f32 0.0, %v864
      %v866 = vpop.f32.mrf.mxu0
      %867 = vmatprep.mubr.f32.mxu0 %v683
      %868 = vmatmul.mubr.f32.gmra.mxu0 %v682
      %v869 = vpop.f32.mrf.mxu0
      %v870 = vadd.f32 0.0, %v869
      %v871 = vpop.f32.mrf.mxu0
      %872 = vmatprep.mubr.f32.mxu0 %v685
      %873 = vmatmul.mubr.f32.gmra.mxu0 %v684
      %v874 = vpop.f32.mrf.mxu0
      %v875 = vadd.f32 0.0, %v874
      %v876 = vpop.f32.mrf.mxu0
      %877 = vmatprep.mubr.f32.mxu0 %v687
      %878 = vmatmul.mubr.f32.gmra.mxu0 %v686
      %v879 = vpop.f32.mrf.mxu0
      %v880 = vadd.f32 0.0, %v879
      %v881 = vpop.f32.mrf.mxu0
      %882 = vmatprep.mubr.f32.mxu0 %v689
      %883 = vmatmul.mubr.f32.gmra.mxu0 %v688
      %v884 = vpop.f32.mrf.mxu0
      %v885 = vadd.f32 0.0, %v884
      %v886 = vpop.f32.mrf.mxu0
      %887 = vmatprep.mubr.f32.mxu0 %v691
      %888 = vmatmul.mubr.f32.gmra.mxu0 %v690
      %v889 = vpop.f32.mrf.mxu0
      %v890 = vadd.f32 0.0, %v889
      %v891 = vpop.f32.mrf.mxu0
      %892 = vmatprep.mubr.f32.mxu0 %v693
      %893 = vmatmul.mubr.f32.gmra.mxu0 %v692
      %v894 = vpop.f32.mrf.mxu0
      %v895 = vadd.f32 0.0, %v894
      %v896 = vpop.f32.mrf.mxu0
      %897 = vmatprep.mubr.f32.mxu0 %v695
      %898 = vmatmul.mubr.f32.gmra.mxu0 %v694
      %v899 = vpop.f32.mrf.mxu0
      %v900 = vadd.f32 0.0, %v899
      %v901 = vpop.f32.mrf.mxu0
      %902 = vmatprep.mubr.f32.mxu0 %v697
      %903 = vmatmul.mubr.f32.gmra.mxu0 %v696
      %v904 = vpop.f32.mrf.mxu0
      %v905 = vadd.f32 0.0, %v904
      %v906 = vpop.f32.mrf.mxu0
      %907 = vmatprep.mubr.f32.mxu0 %v699
      %908 = vmatmul.mubr.f32.gmra.mxu0 %v698
      %v909 = vpop.f32.mrf.mxu0
      %v910 = vadd.f32 0.0, %v909
      %v911 = vpop.f32.mrf.mxu0
      %912 = vmatprep.mubr.f32.mxu0 %v701
      %913 = vmatmul.mubr.f32.gmra.mxu0 %v700
      %v914 = vpop.f32.mrf.mxu0
      %v915 = vadd.f32 0.0, %v914
      %v916 = vpop.f32.mrf.mxu0
      %917 = vmatprep.mubr.f32.mxu0 %v703
      %918 = vmatmul.mubr.f32.gmra.mxu0 %v702
      %v919 = vpop.f32.mrf.mxu0
      %v920 = vadd.f32 0.0, %v919
      %v921 = vpop.f32.mrf.mxu0
      %922 = vmatprep.mubr.f32.mxu0 %v705
      %923 = vmatmul.mubr.f32.gmra.mxu0 %v704
      %v924 = vpop.f32.mrf.mxu0
      %v925 = vadd.f32 0.0, %v924
      %v926 = vpop.f32.mrf.mxu0
      %927 = vmatprep.mubr.f32.mxu0 %v707
      %928 = vmatmul.mubr.f32.gmra.mxu0 %v706
      %v929 = vpop.f32.mrf.mxu0
      %v930 = vadd.f32 0.0, %v929
      %v931 = vpop.f32.mrf.mxu0
      %932 = vdwg.mxu0
      %v933 = vld [vmem:[%s4] sm:$0x1]
      %v934 = vld [vmem:[%s5] sm:$0x1]
      %v935 = vld [vmem:[%s6] sm:$0xff]
      %v936 = vld [vmem:[%s6 + $0x8] sm:$0xff]
      %v937 = vld [vmem:[%s6 + $0x10] sm:$0xff]
      %v938 = vld [vmem:[%s6 + $0x18] sm:$0xff]
      %vm939 = vcmask 261120
      %v940 = vsel %vm939, %v775, 0.0
      %v941 = vsel %vm939, %v780, 0.0
      %v942 = vadd.f32 %v940, %v941
      %v943 = vsel %vm939, %v785, 0.0
      %v944 = vadd.f32 %v942, %v943
      %v945 = vsel %vm939, %v790, 0.0
      %v946 = vadd.f32 %v944, %v945
      %v947 = vsel %vm939, %v795, 0.0
      %v948 = vadd.f32 %v946, %v947
      %v949 = vsel %vm939, %v800, 0.0
      %v950 = vadd.f32 %v948, %v949
      %v951 = vsel %vm939, %v805, 0.0
      %v952 = vadd.f32 %v950, %v951
      %v953 = vsel %vm939, %v810, 0.0
      %v954 = vadd.f32 %v952, %v953
      %v955 = vsel %vm939, %v815, 0.0
      %v956 = vadd.f32 %v954, %v955
      %v957 = vsel %vm939, %v820, 0.0
      %v958 = vadd.f32 %v956, %v957
      %v959 = vsel %vm939, %v825, 0.0
      %v960 = vadd.f32 %v958, %v959
      %v961 = vsel %vm939, %v830, 0.0
      %v962 = vadd.f32 %v960, %v961
      %v963 = vsel %vm939, %v835, 0.0
      %v964 = vadd.f32 %v962, %v963
      %v965 = vsel %vm939, %v840, 0.0
      %v966 = vadd.f32 %v964, %v965
      %v967 = vsel %vm939, %v845, 0.0
      %v968 = vadd.f32 %v966, %v967
      %v969 = vsel %vm939, %v850, 0.0
      %v970 = vadd.f32 %v968, %v969
      %v971 = vsel %vm939, %v855, 0.0
      %v972 = vadd.f32 %v970, %v971
      %v973 = vsel %vm939, %v860, 0.0
      %v974 = vadd.f32 %v972, %v973
      %v975 = vsel %vm939, %v865, 0.0
      %v976 = vadd.f32 %v974, %v975
      %v977 = vsel %vm939, %v870, 0.0
      %v978 = vadd.f32 %v976, %v977
      %v979 = vsel %vm939, %v875, 0.0
      %v980 = vadd.f32 %v978, %v979
      %v981 = vsel %vm939, %v880, 0.0
      %v982 = vadd.f32 %v980, %v981
      %v983 = vsel %vm939, %v885, 0.0
      %v984 = vadd.f32 %v982, %v983
      %v985 = vsel %vm939, %v890, 0.0
      %v986 = vadd.f32 %v984, %v985
      %v987 = vsel %vm939, %v895, 0.0
      %v988 = vadd.f32 %v986, %v987
      %v989 = vsel %vm939, %v900, 0.0
      %v990 = vadd.f32 %v988, %v989
      %v991 = vsel %vm939, %v905, 0.0
      %v992 = vadd.f32 %v990, %v991
      %v993 = vsel %vm939, %v910, 0.0
      %v994 = vadd.f32 %v992, %v993
      %v995 = vsel %vm939, %v915, 0.0
      %v996 = vadd.f32 %v994, %v995
      %v997 = vsel %vm939, %v920, 0.0
      %v998 = vadd.f32 %v996, %v997
      %v999 = vsel %vm939, %v925, 0.0
      %v1000 = vadd.f32 %v998, %v999
      %v1001 = vsel %vm939, %v930, 0.0
      %v1002 = vadd.f32 %v1000, %v1001
      %v1003 = vrot.slane %v1002, 4
      %v1004 = vadd.f32 %v1002, %v1003
      %v1005 = vrot.slane %v1004, 2
      %v1006 = vadd.f32 %v1004, %v1005
      %v1007 = vrot.slane %v1006, 1
      %v1008 = vadd.f32 %v1006, %v1007
      %v1009 = vmul.f32 %v775, %v775
      %v1010 = vmul.f32 %v780, %v780
      %v1011 = vmul.f32 %v785, %v785
      %v1012 = vmul.f32 %v790, %v790
      %v1013 = vmul.f32 %v795, %v795
      %v1014 = vmul.f32 %v800, %v800
      %v1015 = vmul.f32 %v805, %v805
      %v1016 = vmul.f32 %v810, %v810
      %v1017 = vmul.f32 %v815, %v815
      %v1018 = vmul.f32 %v820, %v820
      %v1019 = vmul.f32 %v825, %v825
      %v1020 = vmul.f32 %v830, %v830
      %v1021 = vmul.f32 %v835, %v835
      %v1022 = vmul.f32 %v840, %v840
      %v1023 = vmul.f32 %v845, %v845
      %v1024 = vmul.f32 %v850, %v850
      %v1025 = vmul.f32 %v855, %v855
      %v1026 = vmul.f32 %v860, %v860
      %v1027 = vmul.f32 %v865, %v865
      %v1028 = vmul.f32 %v870, %v870
      %v1029 = vmul.f32 %v875, %v875
      %v1030 = vmul.f32 %v880, %v880
      %v1031 = vmul.f32 %v885, %v885
      %v1032 = vmul.f32 %v890, %v890
      %v1033 = vmul.f32 %v895, %v895
      %v1034 = vmul.f32 %v900, %v900
      %v1035 = vmul.f32 %v905, %v905
      %v1036 = vmul.f32 %v910, %v910
      %v1037 = vmul.f32 %v915, %v915
      %v1038 = vmul.f32 %v920, %v920
      %v1039 = vmul.f32 %v925, %v925
      %v1040 = vmul.f32 %v930, %v930
      %v1041 = vsel %vm939, %v1009, 0.0
      %v1042 = vsel %vm939, %v1010, 0.0
      %v1043 = vadd.f32 %v1041, %v1042
      %v1044 = vsel %vm939, %v1011, 0.0
      %v1045 = vadd.f32 %v1043, %v1044
      %v1046 = vsel %vm939, %v1012, 0.0
      %v1047 = vadd.f32 %v1045, %v1046
      %v1048 = vsel %vm939, %v1013, 0.0
      %v1049 = vadd.f32 %v1047, %v1048
      %v1050 = vsel %vm939, %v1014, 0.0
      %v1051 = vadd.f32 %v1049, %v1050
      %v1052 = vsel %vm939, %v1015, 0.0
      %v1053 = vadd.f32 %v1051, %v1052
      %v1054 = vsel %vm939, %v1016, 0.0
      %v1055 = vadd.f32 %v1053, %v1054
      %v1056 = vsel %vm939, %v1017, 0.0
      %v1057 = vadd.f32 %v1055, %v1056
      %v1058 = vsel %vm939, %v1018, 0.0
      %v1059 = vadd.f32 %v1057, %v1058
      %v1060 = vsel %vm939, %v1019, 0.0
      %v1061 = vadd.f32 %v1059, %v1060
      %v1062 = vsel %vm939, %v1020, 0.0
      %v1063 = vadd.f32 %v1061, %v1062
      %v1064 = vsel %vm939, %v1021, 0.0
      %v1065 = vadd.f32 %v1063, %v1064
      %v1066 = vsel %vm939, %v1022, 0.0
      %v1067 = vadd.f32 %v1065, %v1066
      %v1068 = vsel %vm939, %v1023, 0.0
      %v1069 = vadd.f32 %v1067, %v1068
      %v1070 = vsel %vm939, %v1024, 0.0
      %v1071 = vadd.f32 %v1069, %v1070
      %v1072 = vsel %vm939, %v1025, 0.0
      %v1073 = vadd.f32 %v1071, %v1072
      %v1074 = vsel %vm939, %v1026, 0.0
      %v1075 = vadd.f32 %v1073, %v1074
      %v1076 = vsel %vm939, %v1027, 0.0
      %v1077 = vadd.f32 %v1075, %v1076
      %v1078 = vsel %vm939, %v1028, 0.0
      %v1079 = vadd.f32 %v1077, %v1078
      %v1080 = vsel %vm939, %v1029, 0.0
      %v1081 = vadd.f32 %v1079, %v1080
      %v1082 = vsel %vm939, %v1030, 0.0
      %v1083 = vadd.f32 %v1081, %v1082
      %v1084 = vsel %vm939, %v1031, 0.0
      %v1085 = vadd.f32 %v1083, %v1084
      %v1086 = vsel %vm939, %v1032, 0.0
      %v1087 = vadd.f32 %v1085, %v1086
      %v1088 = vsel %vm939, %v1033, 0.0
      %v1089 = vadd.f32 %v1087, %v1088
      %v1090 = vsel %vm939, %v1034, 0.0
      %v1091 = vadd.f32 %v1089, %v1090
      %v1092 = vsel %vm939, %v1035, 0.0
      %v1093 = vadd.f32 %v1091, %v1092
      %v1094 = vsel %vm939, %v1036, 0.0
      %v1095 = vadd.f32 %v1093, %v1094
      %v1096 = vsel %vm939, %v1037, 0.0
      %v1097 = vadd.f32 %v1095, %v1096
      %v1098 = vsel %vm939, %v1038, 0.0
      %v1099 = vadd.f32 %v1097, %v1098
      %v1100 = vsel %vm939, %v1039, 0.0
      %v1101 = vadd.f32 %v1099, %v1100
      %v1102 = vsel %vm939, %v1040, 0.0
      %v1103 = vadd.f32 %v1101, %v1102
      %v1104 = vrot.slane %v1103, 4
      %v1105 = vadd.f32 %v1103, %v1104
      %v1106 = vrot.slane %v1105, 2
      %v1107 = vadd.f32 %v1105, %v1106
      %v1108 = vrot.slane %v1107, 1
      %v1109 = vadd.f32 %v1107, %v1108
      %v1111 = vsel %vm939, %v1008, 0
      %1113 = vmatprep.subr.mxu0 0.0
      %1114 = vmatpush1.msra.mxu0 0.0
      %1115 = vmatprep.subr.mxu0 0.0
      %1116 = vmatpush1.msra.mxu0 0.0
      %1117 = vmatprep.subr.mxu0 0.0
      %1118 = vmatpush1.msra.mxu0 0.0
      %1119 = vmatprep.subr.mxu0 0.0
      %1120 = vmatpush1.msra.mxu0 0.0
      %1121 = vmatprep.subr.mxu0 0.0
      %1122 = vmatpush1.msra.mxu0 0.0
      %1123 = vmatprep.subr.mxu0 0.0
      %1124 = vmatpush1.msra.mxu0 0.0
      %1125 = vmatprep.subr.mxu0 0.0
      %1126 = vmatpush1.msra.mxu0 0.0
      %1127 = vmatprep.subr.mxu0 0.0
      %1128 = vmatpush1.msra.mxu0 0.0
      %1129 = vmatprep.subr.mxu0 0.0
      %1130 = vmatpush1.msra.mxu0 0.0
      %1131 = vmatprep.subr.mxu0 0.0
      %1132 = vmatpush1.msra.mxu0 0.0
      %1133 = vmatprep.subr.mxu0 0.0
      %1134 = vmatpush1.msra.mxu0 0.0
      %1135 = vmatprep.subr.mxu0 0.0
      %1136 = vmatpush1.msra.mxu0 0.0
      %1137 = vmatprep.subr.mxu0 0.0
      %1138 = vmatpush1.msra.mxu0 %v938
      %1139 = vmatprep.subr.mxu0 0.0
      %1140 = vmatpush1.msra.mxu0 %v937
      %1141 = vmatprep.subr.mxu0 0.0
      %1142 = vmatpush1.msra.mxu0 %v936
      %1143 = vmatprep.subr.mxu0 0.0
      %1144 = vmatpush1.msra.mxu0 %v935
      %1145 = vmatprep.subr.mxu0 0.0
      %1146 = vmatpush2.msra.mxu0 0.0
      %1147 = vmatprep.subr.mxu0 0.0
      %1148 = vmatpush2.msra.mxu0 0.0
      %1149 = vmatprep.subr.mxu0 0.0
      %1150 = vmatpush2.msra.mxu0 0.0
      %1151 = vmatprep.subr.mxu0 0.0
      %1152 = vmatpush2.msra.mxu0 0.0
      %1153 = vmatprep.subr.mxu0 0.0
      %1154 = vmatpush2.msra.mxu0 0.0
      %1155 = vmatprep.subr.mxu0 0.0
      %1156 = vmatpush2.msra.mxu0 0.0
      %1157 = vmatprep.subr.mxu0 0.0
      %1158 = vmatpush2.msra.mxu0 0.0
      %1159 = vmatprep.subr.mxu0 0.0
      %1160 = vmatpush2.msra.mxu0 0.0
      %1161 = vmatprep.subr.mxu0 0.0
      %1162 = vmatpush2.msra.mxu0 0.0
      %1163 = vmatprep.subr.mxu0 0.0
      %1164 = vmatpush2.msra.mxu0 0.0
      %1165 = vmatprep.subr.mxu0 0.0
      %1166 = vmatpush2.msra.mxu0 0.0
      %1167 = vmatprep.subr.mxu0 0.0
      %1168 = vmatpush2.msra.mxu0 0.0
      %1169 = vmatprep.subr.mxu0 0.0
      %1170 = vmatpush2.msra.mxu0 0.0
      %1171 = vmatprep.subr.mxu0 0.0
      %1172 = vmatpush2.msra.mxu0 0.0
      %1173 = vmatprep.subr.mxu0 0.0
      %1174 = vmatpush2.msra.mxu0 0.0
      %1175 = vmatprep.subr.mxu0 0.0
      %1176 = vmatpush2.msra.mxu0 0.0
      %1177 = vmatprep.mubr.f32.mxu0 0.0
      %1178 = vmatmul.mubr.f32.gmra.mxu0 %v1111
      %v1179 = vpop.f32.mrf.mxu0
      %v1180 = vadd.f32 0.0, %v1179
      %v1181 = vpop.f32.mrf.mxu0
      %1182 = vdwg.mxu0
      %v1183 = vrcp.pop 256.0
      %v1184 = vmul.f32 %v1180, %v1183
      %v1186 = vsel %vm939, %v1109, 0
      %1188 = vmatprep.subr.mxu0 0.0
      %1189 = vmatpush1.msra.mxu0 0.0
      %1190 = vmatprep.subr.mxu0 0.0
      %1191 = vmatpush1.msra.mxu0 0.0
      %1192 = vmatprep.subr.mxu0 0.0
      %1193 = vmatpush1.msra.mxu0 0.0
      %1194 = vmatprep.subr.mxu0 0.0
      %1195 = vmatpush1.msra.mxu0 0.0
      %1196 = vmatprep.subr.mxu0 0.0
      %1197 = vmatpush1.msra.mxu0 0.0
      %1198 = vmatprep.subr.mxu0 0.0
      %1199 = vmatpush1.msra.mxu0 0.0
      %1200 = vmatprep.subr.mxu0 0.0
      %1201 = vmatpush1.msra.mxu0 0.0
      %1202 = vmatprep.subr.mxu0 0.0
      %1203 = vmatpush1.msra.mxu0 0.0
      %1204 = vmatprep.subr.mxu0 0.0
      %1205 = vmatpush1.msra.mxu0 0.0
      %1206 = vmatprep.subr.mxu0 0.0
      %1207 = vmatpush1.msra.mxu0 0.0
      %1208 = vmatprep.subr.mxu0 0.0
      %1209 = vmatpush1.msra.mxu0 0.0
      %1210 = vmatprep.subr.mxu0 0.0
      %1211 = vmatpush1.msra.mxu0 0.0
      %1212 = vmatprep.subr.mxu0 0.0
      %1213 = vmatpush1.msra.mxu0 %v938
      %1214 = vmatprep.subr.mxu0 0.0
      %1215 = vmatpush1.msra.mxu0 %v937
      %1216 = vmatprep.subr.mxu0 0.0
      %1217 = vmatpush1.msra.mxu0 %v936
      %1218 = vmatprep.subr.mxu0 0.0
      %1219 = vmatpush1.msra.mxu0 %v935
      %1220 = vmatprep.subr.mxu0 0.0
      %1221 = vmatpush2.msra.mxu0 0.0
      %1222 = vmatprep.subr.mxu0 0.0
      %1223 = vmatpush2.msra.mxu0 0.0
      %1224 = vmatprep.subr.mxu0 0.0
      %1225 = vmatpush2.msra.mxu0 0.0
      %1226 = vmatprep.subr.mxu0 0.0
      %1227 = vmatpush2.msra.mxu0 0.0
      %1228 = vmatprep.subr.mxu0 0.0
      %1229 = vmatpush2.msra.mxu0 0.0
      %1230 = vmatprep.subr.mxu0 0.0
      %1231 = vmatpush2.msra.mxu0 0.0
      %1232 = vmatprep.subr.mxu0 0.0
      %1233 = vmatpush2.msra.mxu0 0.0
      %1234 = vmatprep.subr.mxu0 0.0
      %1235 = vmatpush2.msra.mxu0 0.0
      %1236 = vmatprep.subr.mxu0 0.0
      %1237 = vmatpush2.msra.mxu0 0.0
      %1238 = vmatprep.subr.mxu0 0.0
      %1239 = vmatpush2.msra.mxu0 0.0
      %1240 = vmatprep.subr.mxu0 0.0
      %1241 = vmatpush2.msra.mxu0 0.0
      %1242 = vmatprep.subr.mxu0 0.0
      %1243 = vmatpush2.msra.mxu0 0.0
      %1244 = vmatprep.subr.mxu0 0.0
      %1245 = vmatpush2.msra.mxu0 0.0
      %1246 = vmatprep.subr.mxu0 0.0
      %1247 = vmatpush2.msra.mxu0 0.0
      %1248 = vmatprep.subr.mxu0 0.0
      %1249 = vmatpush2.msra.mxu0 0.0
      %1250 = vmatprep.subr.mxu0 0.0
      %1251 = vmatpush2.msra.mxu0 0.0
      %1252 = vmatprep.mubr.f32.mxu0 0.0
      %1253 = vmatmul.mubr.f32.gmra.mxu0 %v1186
      %v1254 = vpop.f32.mrf.mxu0
      %v1255 = vadd.f32 0.0, %v1254
      %v1256 = vpop.f32.mrf.mxu0
      %1257 = vdwg.mxu0
      %v1258 = vmul.f32 %v1255, %v1183
      %v1259 = vmul.f32 %v1184, %v1184
      %v1260 = vsub.f32 %v1258, %v1259
      %v1261 = vadd.f32 %v1260, 1e-06
      %v1262 = vrsqrt.pop %v1261
      %v1264 = vsel %vm939, %v1184, 0
      %v1267 = vsel %vm939, %v935, 0
      %v1270 = vsel %vm939, %v936, 0
      %v1273 = vsel %vm939, %v937, 0
      %v1276 = vsel %vm939, %v938, 0
      %1278 = vmatprep.subr.mxu0 0.0
      %1279 = vmatpush1.xpose.msra.mxu0 0.0
      %1280 = vmatprep.subr.mxu0 0.0
      %1281 = vmatpush1.xpose.msra.mxu0 0.0
      %1282 = vmatprep.subr.mxu0 0.0
      %1283 = vmatpush1.xpose.msra.mxu0 0.0
      %1284 = vmatprep.subr.mxu0 0.0
      %1285 = vmatpush1.xpose.msra.mxu0 0.0
      %1286 = vmatprep.subr.mxu0 0.0
      %1287 = vmatpush1.xpose.msra.mxu0 0.0
      %1288 = vmatprep.subr.mxu0 0.0
      %1289 = vmatpush1.xpose.msra.mxu0 0.0
      %1290 = vmatprep.subr.mxu0 0.0
      %1291 = vmatpush1.xpose.msra.mxu0 0.0
      %1292 = vmatprep.subr.mxu0 0.0
      %1293 = vmatpush1.xpose.msra.mxu0 0.0
      %1294 = vmatprep.subr.mxu0 0.0
      %1295 = vmatpush1.xpose.msra.mxu0 0.0
      %1296 = vmatprep.subr.mxu0 0.0
      %1297 = vmatpush1.xpose.msra.mxu0 0.0
      %1298 = vmatprep.subr.mxu0 0.0
      %1299 = vmatpush1.xpose.msra.mxu0 0.0
      %1300 = vmatprep.subr.mxu0 0.0
      %1301 = vmatpush1.xpose.msra.mxu0 0.0
      %1302 = vmatprep.subr.mxu0 0.0
      %1303 = vmatpush1.xpose.msra.mxu0 %v1276
      %1304 = vmatprep.subr.mxu0 0.0
      %1305 = vmatpush1.xpose.msra.mxu0 %v1273
      %1306 = vmatprep.subr.mxu0 0.0
      %1307 = vmatpush1.xpose.msra.mxu0 %v1270
      %1308 = vmatprep.subr.mxu0 0.0
      %1309 = vmatpush1.xpose.msra.mxu0 %v1267
      %1310 = vmatprep.subr.mxu0 0.0
      %1311 = vmatpush2.xpose.msra.mxu0 0.0
      %1312 = vmatprep.subr.mxu0 0.0
      %1313 = vmatpush2.xpose.msra.mxu0 0.0
      %1314 = vmatprep.subr.mxu0 0.0
      %1315 = vmatpush2.xpose.msra.mxu0 0.0
      %1316 = vmatprep.subr.mxu0 0.0
      %1317 = vmatpush2.xpose.msra.mxu0 0.0
      %1318 = vmatprep.subr.mxu0 0.0
      %1319 = vmatpush2.xpose.msra.mxu0 0.0
      %1320 = vmatprep.subr.mxu0 0.0
      %1321 = vmatpush2.xpose.msra.mxu0 0.0
      %1322 = vmatprep.subr.mxu0 0.0
      %1323 = vmatpush2.xpose.msra.mxu0 0.0
      %1324 = vmatprep.subr.mxu0 0.0
      %1325 = vmatpush2.xpose.msra.mxu0 0.0
      %1326 = vmatprep.subr.mxu0 0.0
      %1327 = vmatpush2.xpose.msra.mxu0 0.0
      %1328 = vmatprep.subr.mxu0 0.0
      %1329 = vmatpush2.xpose.msra.mxu0 0.0
      %1330 = vmatprep.subr.mxu0 0.0
      %1331 = vmatpush2.xpose.msra.mxu0 0.0
      %1332 = vmatprep.subr.mxu0 0.0
      %1333 = vmatpush2.xpose.msra.mxu0 0.0
      %1334 = vmatprep.subr.mxu0 0.0
      %1335 = vmatpush2.xpose.msra.mxu0 0.0
      %1336 = vmatprep.subr.mxu0 0.0
      %1337 = vmatpush2.xpose.msra.mxu0 0.0
      %1338 = vmatprep.subr.mxu0 0.0
      %1339 = vmatpush2.xpose.msra.mxu0 0.0
      %1340 = vmatprep.subr.mxu0 0.0
      %1341 = vmatpush2.xpose.msra.mxu0 0.0
      %1342 = vmatprep.mubr.f32.mxu0 0.0
      %1343 = vmatmul.mubr.f32.gmra.mxu0 %v1264
      %v1344 = vpop.f32.mrf.mxu0
      %v1345 = vadd.f32 0.0, %v1344
      %v1346 = vpop.f32.mrf.mxu0
      %1347 = vdwg.mxu0
      %v1349 = vsel %vm939, %v1262, 0
      %1351 = vmatprep.subr.mxu0 0.0
      %1352 = vmatpush1.xpose.msra.mxu0 0.0
      %1353 = vmatprep.subr.mxu0 0.0
      %1354 = vmatpush1.xpose.msra.mxu0 0.0
      %1355 = vmatprep.subr.mxu0 0.0
      %1356 = vmatpush1.xpose.msra.mxu0 0.0
      %1357 = vmatprep.subr.mxu0 0.0
      %1358 = vmatpush1.xpose.msra.mxu0 0.0
      %1359 = vmatprep.subr.mxu0 0.0
      %1360 = vmatpush1.xpose.msra.mxu0 0.0
      %1361 = vmatprep.subr.mxu0 0.0
      %1362 = vmatpush1.xpose.msra.mxu0 0.0
      %1363 = vmatprep.subr.mxu0 0.0
      %1364 = vmatpush1.xpose.msra.mxu0 0.0
      %1365 = vmatprep.subr.mxu0 0.0
      %1366 = vmatpush1.xpose.msra.mxu0 0.0
      %1367 = vmatprep.subr.mxu0 0.0
      %1368 = vmatpush1.xpose.msra.mxu0 0.0
      %1369 = vmatprep.subr.mxu0 0.0
      %1370 = vmatpush1.xpose.msra.mxu0 0.0
      %1371 = vmatprep.subr.mxu0 0.0
      %1372 = vmatpush1.xpose.msra.mxu0 0.0
      %1373 = vmatprep.subr.mxu0 0.0
      %1374 = vmatpush1.xpose.msra.mxu0 0.0
      %1375 = vmatprep.subr.mxu0 0.0
      %1376 = vmatpush1.xpose.msra.mxu0 %v1276
      %1377 = vmatprep.subr.mxu0 0.0
      %1378 = vmatpush1.xpose.msra.mxu0 %v1273
      %1379 = vmatprep.subr.mxu0 0.0
      %1380 = vmatpush1.xpose.msra.mxu0 %v1270
      %1381 = vmatprep.subr.mxu0 0.0
      %1382 = vmatpush1.xpose.msra.mxu0 %v1267
      %1383 = vmatprep.subr.mxu0 0.0
      %1384 = vmatpush2.xpose.msra.mxu0 0.0
      %1385 = vmatprep.subr.mxu0 0.0
      %1386 = vmatpush2.xpose.msra.mxu0 0.0
      %1387 = vmatprep.subr.mxu0 0.0
      %1388 = vmatpush2.xpose.msra.mxu0 0.0
      %1389 = vmatprep.subr.mxu0 0.0
      %1390 = vmatpush2.xpose.msra.mxu0 0.0
      %1391 = vmatprep.subr.mxu0 0.0
      %1392 = vmatpush2.xpose.msra.mxu0 0.0
      %1393 = vmatprep.subr.mxu0 0.0
      %1394 = vmatpush2.xpose.msra.mxu0 0.0
      %1395 = vmatprep.subr.mxu0 0.0
      %1396 = vmatpush2.xpose.msra.mxu0 0.0
      %1397 = vmatprep.subr.mxu0 0.0
      %1398 = vmatpush2.xpose.msra.mxu0 0.0
      %1399 = vmatprep.subr.mxu0 0.0
      %1400 = vmatpush2.xpose.msra.mxu0 0.0
      %1401 = vmatprep.subr.mxu0 0.0
      %1402 = vmatpush2.xpose.msra.mxu0 0.0
      %1403 = vmatprep.subr.mxu0 0.0
      %1404 = vmatpush2.xpose.msra.mxu0 0.0
      %1405 = vmatprep.subr.mxu0 0.0
      %1406 = vmatpush2.xpose.msra.mxu0 0.0
      %1407 = vmatprep.subr.mxu0 0.0
      %1408 = vmatpush2.xpose.msra.mxu0 0.0
      %1409 = vmatprep.subr.mxu0 0.0
      %1410 = vmatpush2.xpose.msra.mxu0 0.0
      %1411 = vmatprep.subr.mxu0 0.0
      %1412 = vmatpush2.xpose.msra.mxu0 0.0
      %1413 = vmatprep.subr.mxu0 0.0
      %1414 = vmatpush2.xpose.msra.mxu0 0.0
      %1415 = vmatprep.mubr.f32.mxu0 0.0
      %1416 = vmatmul.mubr.f32.gmra.mxu0 %v1349
      %v1417 = vpop.f32.mrf.mxu0
      %v1418 = vadd.f32 0.0, %v1417
      %v1419 = vpop.f32.mrf.mxu0
      %1420 = vdwg.mxu0
      %v1421 = vlaneseq
      %v1422 = vshrl.u32 %v1421, 7
      %v1423 = vsub.s32 0, %v1422
      %v1424 = vrot.slane %v1345, %v1423
      %v1425 = vsub.f32 %v775, %v1424
      %v1426 = vsub.f32 %v780, %v1424
      %v1427 = vsub.f32 %v785, %v1424
      %v1428 = vsub.f32 %v790, %v1424
      %v1429 = vsub.f32 %v795, %v1424
      %v1430 = vsub.f32 %v800, %v1424
      %v1431 = vsub.f32 %v805, %v1424
      %v1432 = vsub.f32 %v810, %v1424
      %v1433 = vsub.f32 %v815, %v1424
      %v1434 = vsub.f32 %v820, %v1424
      %v1435 = vsub.f32 %v825, %v1424
      %v1436 = vsub.f32 %v830, %v1424
      %v1437 = vsub.f32 %v835, %v1424
      %v1438 = vsub.f32 %v840, %v1424
      %v1439 = vsub.f32 %v845, %v1424
      %v1440 = vsub.f32 %v850, %v1424
      %v1441 = vsub.f32 %v855, %v1424
      %v1442 = vsub.f32 %v860, %v1424
      %v1443 = vsub.f32 %v865, %v1424
      %v1444 = vsub.f32 %v870, %v1424
      %v1445 = vsub.f32 %v875, %v1424
      %v1446 = vsub.f32 %v880, %v1424
      %v1447 = vsub.f32 %v885, %v1424
      %v1448 = vsub.f32 %v890, %v1424
      %v1449 = vsub.f32 %v895, %v1424
      %v1450 = vsub.f32 %v900, %v1424
      %v1451 = vsub.f32 %v905, %v1424
      %v1452 = vsub.f32 %v910, %v1424
      %v1453 = vsub.f32 %v915, %v1424
      %v1454 = vsub.f32 %v920, %v1424
      %v1455 = vsub.f32 %v925, %v1424
      %v1456 = vsub.f32 %v930, %v1424
      %v1457 = vmul.f32 %v1418, %v933
      %v1458 = vlaneseq
      %v1459 = vshrl.u32 %v1458, 7
      %v1460 = vsub.s32 0, %v1459
      %v1461 = vrot.slane %v1457, %v1460
      %v1462 = vmul.f32 %v1425, %v1461
      %v1463 = vmul.f32 %v1426, %v1461
      %v1464 = vmul.f32 %v1427, %v1461
      %v1465 = vmul.f32 %v1428, %v1461
      %v1466 = vmul.f32 %v1429, %v1461
      %v1467 = vmul.f32 %v1430, %v1461
      %v1468 = vmul.f32 %v1431, %v1461
      %v1469 = vmul.f32 %v1432, %v1461
      %v1470 = vmul.f32 %v1433, %v1461
      %v1471 = vmul.f32 %v1434, %v1461
      %v1472 = vmul.f32 %v1435, %v1461
      %v1473 = vmul.f32 %v1436, %v1461
      %v1474 = vmul.f32 %v1437, %v1461
      %v1475 = vmul.f32 %v1438, %v1461
      %v1476 = vmul.f32 %v1439, %v1461
      %v1477 = vmul.f32 %v1440, %v1461
      %v1478 = vmul.f32 %v1441, %v1461
      %v1479 = vmul.f32 %v1442, %v1461
      %v1480 = vmul.f32 %v1443, %v1461
      %v1481 = vmul.f32 %v1444, %v1461
      %v1482 = vmul.f32 %v1445, %v1461
      %v1483 = vmul.f32 %v1446, %v1461
      %v1484 = vmul.f32 %v1447, %v1461
      %v1485 = vmul.f32 %v1448, %v1461
      %v1486 = vmul.f32 %v1449, %v1461
      %v1487 = vmul.f32 %v1450, %v1461
      %v1488 = vmul.f32 %v1451, %v1461
      %v1489 = vmul.f32 %v1452, %v1461
      %v1490 = vmul.f32 %v1453, %v1461
      %v1491 = vmul.f32 %v1454, %v1461
      %v1492 = vmul.f32 %v1455, %v1461
      %v1493 = vmul.f32 %v1456, %v1461
      %v1495 = vlaneseq
      %v1496 = vshrl.u32 %v1495, 7
      %v1497 = vsub.s32 0, %v1496
      %v1498 = vrot.slane %v934, %v1497
      %v1500 = vadd.f32 %v1462, %v1498
      %v1501 = vadd.f32 %v1463, %v1498
      %v1502 = vadd.f32 %v1464, %v1498
      %v1503 = vadd.f32 %v1465, %v1498
      %v1504 = vadd.f32 %v1466, %v1498
      %v1505 = vadd.f32 %v1467, %v1498
      %v1506 = vadd.f32 %v1468, %v1498
      %v1507 = vadd.f32 %v1469, %v1498
      %v1508 = vadd.f32 %v1470, %v1498
      %v1509 = vadd.f32 %v1471, %v1498
      %v1510 = vadd.f32 %v1472, %v1498
      %v1511 = vadd.f32 %v1473, %v1498
      %v1512 = vadd.f32 %v1474, %v1498
      %v1513 = vadd.f32 %v1475, %v1498
      %v1514 = vadd.f32 %v1476, %v1498
      %v1515 = vadd.f32 %v1477, %v1498
      %v1516 = vadd.f32 %v1478, %v1498
      %v1517 = vadd.f32 %v1479, %v1498
      %v1518 = vadd.f32 %v1480, %v1498
      %v1519 = vadd.f32 %v1481, %v1498
      %v1520 = vadd.f32 %v1482, %v1498
      %v1521 = vadd.f32 %v1483, %v1498
      %v1522 = vadd.f32 %v1484, %v1498
      %v1523 = vadd.f32 %v1485, %v1498
      %v1524 = vadd.f32 %v1486, %v1498
      %v1525 = vadd.f32 %v1487, %v1498
      %v1526 = vadd.f32 %v1488, %v1498
      %v1527 = vadd.f32 %v1489, %v1498
      %v1528 = vadd.f32 %v1490, %v1498
      %v1529 = vadd.f32 %v1491, %v1498
      %v1530 = vadd.f32 %v1492, %v1498
      %v1531 = vadd.f32 %v1493, %v1498
      %v1532 = vxor.u32 %v1500, 2147483648
      %v1533 = vxor.u32 %v1501, 2147483648
      %v1534 = vxor.u32 %v1502, 2147483648
      %v1535 = vxor.u32 %v1503, 2147483648
      %v1536 = vxor.u32 %v1504, 2147483648
      %v1537 = vxor.u32 %v1505, 2147483648
      %v1538 = vxor.u32 %v1506, 2147483648
      %v1539 = vxor.u32 %v1507, 2147483648
      %v1540 = vxor.u32 %v1508, 2147483648
      %v1541 = vxor.u32 %v1509, 2147483648
      %v1542 = vxor.u32 %v1510, 2147483648
      %v1543 = vxor.u32 %v1511, 2147483648
      %v1544 = vxor.u32 %v1512, 2147483648
      %v1545 = vxor.u32 %v1513, 2147483648
      %v1546 = vxor.u32 %v1514, 2147483648
      %v1547 = vxor.u32 %v1515, 2147483648
      %v1548 = vxor.u32 %v1516, 2147483648
      %v1549 = vxor.u32 %v1517, 2147483648
      %v1550 = vxor.u32 %v1518, 2147483648
      %v1551 = vxor.u32 %v1519, 2147483648
      %v1552 = vxor.u32 %v1520, 2147483648
      %v1553 = vxor.u32 %v1521, 2147483648
      %v1554 = vxor.u32 %v1522, 2147483648
      %v1555 = vxor.u32 %v1523, 2147483648
      %v1556 = vxor.u32 %v1524, 2147483648
      %v1557 = vxor.u32 %v1525, 2147483648
      %v1558 = vxor.u32 %v1526, 2147483648
      %v1559 = vxor.u32 %v1527, 2147483648
      %v1560 = vxor.u32 %v1528, 2147483648
      %v1561 = vxor.u32 %v1529, 2147483648
      %v1562 = vxor.u32 %v1530, 2147483648
      %v1563 = vxor.u32 %v1531, 2147483648
      %v1564 = vmul.f32 %v1532, 1.442695
      %v1565 = vpow.pop %v1564
      %v1566 = vmul.f32 %v1533, 1.442695
      %v1567 = vpow.pop %v1566
      %v1568 = vmul.f32 %v1534, 1.442695
      %v1569 = vpow.pop %v1568
      %v1570 = vmul.f32 %v1535, 1.442695
      %v1571 = vpow.pop %v1570
      %v1572 = vmul.f32 %v1536, 1.442695
      %v1573 = vpow.pop %v1572
      %v1574 = vmul.f32 %v1537, 1.442695
      %v1575 = vpow.pop %v1574
      %v1576 = vmul.f32 %v1538, 1.442695
      %v1577 = vpow.pop %v1576
      %v1578 = vmul.f32 %v1539, 1.442695
      %v1579 = vpow.pop %v1578
      %v1580 = vmul.f32 %v1540, 1.442695
      %v1581 = vpow.pop %v1580
      %v1582 = vmul.f32 %v1541, 1.442695
      %v1583 = vpow.pop %v1582
      %v1584 = vmul.f32 %v1542, 1.442695
      %v1585 = vpow.pop %v1584
      %v1586 = vmul.f32 %v1543, 1.442695
      %v1587 = vpow.pop %v1586
      %v1588 = vmul.f32 %v1544, 1.442695
      %v1589 = vpow.pop %v1588
      %v1590 = vmul.f32 %v1545, 1.442695
      %v1591 = vpow.pop %v1590
      %v1592 = vmul.f32 %v1546, 1.442695
      %v1593 = vpow.pop %v1592
      %v1594 = vmul.f32 %v1547, 1.442695
      %v1595 = vpow.pop %v1594
      %v1596 = vmul.f32 %v1548, 1.442695
      %v1597 = vpow.pop %v1596
      %v1598 = vmul.f32 %v1549, 1.442695
      %v1599 = vpow.pop %v1598
      %v1600 = vmul.f32 %v1550, 1.442695
      %v1601 = vpow.pop %v1600
      %v1602 = vmul.f32 %v1551, 1.442695
      %v1603 = vpow.pop %v1602
      %v1604 = vmul.f32 %v1552, 1.442695
      %v1605 = vpow.pop %v1604
      %v1606 = vmul.f32 %v1553, 1.442695
      %v1607 = vpow.pop %v1606
      %v1608 = vmul.f32 %v1554, 1.442695
      %v1609 = vpow.pop %v1608
      %v1610 = vmul.f32 %v1555, 1.442695
      %v1611 = vpow.pop %v1610
      %v1612 = vmul.f32 %v1556, 1.442695
      %v1613 = vpow.pop %v1612
      %v1614 = vmul.f32 %v1557, 1.442695
      %v1615 = vpow.pop %v1614
      %v1616 = vmul.f32 %v1558, 1.442695
      %v1617 = vpow.pop %v1616
      %v1618 = vmul.f32 %v1559, 1.442695
      %v1619 = vpow.pop %v1618
      %v1620 = vmul.f32 %v1560, 1.442695
      %v1621 = vpow.pop %v1620
      %v1622 = vmul.f32 %v1561, 1.442695
      %v1623 = vpow.pop %v1622
      %v1624 = vmul.f32 %v1562, 1.442695
      %v1625 = vpow.pop %v1624
      %v1626 = vmul.f32 %v1563, 1.442695
      %v1627 = vpow.pop %v1626
      %v1628 = vadd.f32 %v1565, 1.0
      %v1629 = vadd.f32 %v1567, 1.0
      %v1630 = vadd.f32 %v1569, 1.0
      %v1631 = vadd.f32 %v1571, 1.0
      %v1632 = vadd.f32 %v1573, 1.0
      %v1633 = vadd.f32 %v1575, 1.0
      %v1634 = vadd.f32 %v1577, 1.0
      %v1635 = vadd.f32 %v1579, 1.0
      %v1636 = vadd.f32 %v1581, 1.0
      %v1637 = vadd.f32 %v1583, 1.0
      %v1638 = vadd.f32 %v1585, 1.0
      %v1639 = vadd.f32 %v1587, 1.0
      %v1640 = vadd.f32 %v1589, 1.0
      %v1641 = vadd.f32 %v1591, 1.0
      %v1642 = vadd.f32 %v1593, 1.0
      %v1643 = vadd.f32 %v1595, 1.0
      %v1644 = vadd.f32 %v1597, 1.0
      %v1645 = vadd.f32 %v1599, 1.0
      %v1646 = vadd.f32 %v1601, 1.0
      %v1647 = vadd.f32 %v1603, 1.0
      %v1648 = vadd.f32 %v1605, 1.0
      %v1649 = vadd.f32 %v1607, 1.0
      %v1650 = vadd.f32 %v1609, 1.0
      %v1651 = vadd.f32 %v1611, 1.0
      %v1652 = vadd.f32 %v1613, 1.0
      %v1653 = vadd.f32 %v1615, 1.0
      %v1654 = vadd.f32 %v1617, 1.0
      %v1655 = vadd.f32 %v1619, 1.0
      %v1656 = vadd.f32 %v1621, 1.0
      %v1657 = vadd.f32 %v1623, 1.0
      %v1658 = vadd.f32 %v1625, 1.0
      %v1659 = vadd.f32 %v1627, 1.0
      %v1660 = vrcp.pop %v1628
      %v1661 = vmul.f32 1.0, %v1660
      %v1662 = vrcp.pop %v1629
      %v1663 = vmul.f32 1.0, %v1662
      %v1664 = vrcp.pop %v1630
      %v1665 = vmul.f32 1.0, %v1664
      %v1666 = vrcp.pop %v1631
      %v1667 = vmul.f32 1.0, %v1666
      %v1668 = vrcp.pop %v1632
      %v1669 = vmul.f32 1.0, %v1668
      %v1670 = vrcp.pop %v1633
      %v1671 = vmul.f32 1.0, %v1670
      %v1672 = vrcp.pop %v1634
      %v1673 = vmul.f32 1.0, %v1672
      %v1674 = vrcp.pop %v1635
      %v1675 = vmul.f32 1.0, %v1674
      %v1676 = vrcp.pop %v1636
      %v1677 = vmul.f32 1.0, %v1676
      %v1678 = vrcp.pop %v1637
      %v1679 = vmul.f32 1.0, %v1678
      %v1680 = vrcp.pop %v1638
      %v1681 = vmul.f32 1.0, %v1680
      %v1682 = vrcp.pop %v1639
      %v1683 = vmul.f32 1.0, %v1682
      %v1684 = vrcp.pop %v1640
      %v1685 = vmul.f32 1.0, %v1684
      %v1686 = vrcp.pop %v1641
      %v1687 = vmul.f32 1.0, %v1686
      %v1688 = vrcp.pop %v1642
      %v1689 = vmul.f32 1.0, %v1688
      %v1690 = vrcp.pop %v1643
      %v1691 = vmul.f32 1.0, %v1690
      %v1692 = vrcp.pop %v1644
      %v1693 = vmul.f32 1.0, %v1692
      %v1694 = vrcp.pop %v1645
      %v1695 = vmul.f32 1.0, %v1694
      %v1696 = vrcp.pop %v1646
      %v1697 = vmul.f32 1.0, %v1696
      %v1698 = vrcp.pop %v1647
      %v1699 = vmul.f32 1.0, %v1698
      %v1700 = vrcp.pop %v1648
      %v1701 = vmul.f32 1.0, %v1700
      %v1702 = vrcp.pop %v1649
      %v1703 = vmul.f32 1.0, %v1702
      %v1704 = vrcp.pop %v1650
      %v1705 = vmul.f32 1.0, %v1704
      %v1706 = vrcp.pop %v1651
      %v1707 = vmul.f32 1.0, %v1706
      %v1708 = vrcp.pop %v1652
      %v1709 = vmul.f32 1.0, %v1708
      %v1710 = vrcp.pop %v1653
      %v1711 = vmul.f32 1.0, %v1710
      %v1712 = vrcp.pop %v1654
      %v1713 = vmul.f32 1.0, %v1712
      %v1714 = vrcp.pop %v1655
      %v1715 = vmul.f32 1.0, %v1714
      %v1716 = vrcp.pop %v1656
      %v1717 = vmul.f32 1.0, %v1716
      %v1718 = vrcp.pop %v1657
      %v1719 = vmul.f32 1.0, %v1718
      %v1720 = vrcp.pop %v1658
      %v1721 = vmul.f32 1.0, %v1720
      %v1722 = vrcp.pop %v1659
      %v1723 = vmul.f32 1.0, %v1722
      %v1724 = vmul.f32 %v1500, %v1661
      %v1725 = vmul.f32 %v1501, %v1663
      %v1726 = vmul.f32 %v1502, %v1665
      %v1727 = vmul.f32 %v1503, %v1667
      %v1728 = vmul.f32 %v1504, %v1669
      %v1729 = vmul.f32 %v1505, %v1671
      %v1730 = vmul.f32 %v1506, %v1673
      %v1731 = vmul.f32 %v1507, %v1675
      %v1732 = vmul.f32 %v1508, %v1677
      %v1733 = vmul.f32 %v1509, %v1679
      %v1734 = vmul.f32 %v1510, %v1681
      %v1735 = vmul.f32 %v1511, %v1683
      %v1736 = vmul.f32 %v1512, %v1685
      %v1737 = vmul.f32 %v1513, %v1687
      %v1738 = vmul.f32 %v1514, %v1689
      %v1739 = vmul.f32 %v1515, %v1691
      %v1740 = vmul.f32 %v1516, %v1693
      %v1741 = vmul.f32 %v1517, %v1695
      %v1742 = vmul.f32 %v1518, %v1697
      %v1743 = vmul.f32 %v1519, %v1699
      %v1744 = vmul.f32 %v1520, %v1701
      %v1745 = vmul.f32 %v1521, %v1703
      %v1746 = vmul.f32 %v1522, %v1705
      %v1747 = vmul.f32 %v1523, %v1707
      %v1748 = vmul.f32 %v1524, %v1709
      %v1749 = vmul.f32 %v1525, %v1711
      %v1750 = vmul.f32 %v1526, %v1713
      %v1751 = vmul.f32 %v1527, %v1715
      %v1752 = vmul.f32 %v1528, %v1717
      %v1753 = vmul.f32 %v1529, %v1719
      %v1754 = vmul.f32 %v1530, %v1721
      %v1755 = vmul.f32 %v1531, %v1723
      %v1756 = vld [vmem:[%s530] sm:$0x1]
      %v1757 = vxor.u32 %v1756, 2147483648
      %v1758 = vmul.f32 %v1757, 1.442695
      %v1759 = vpow.pop %v1758
      %v1760 = vadd.f32 %v1759, 1.0
      %v1761 = vrcp.pop %v1760
      %v1762 = vmul.f32 1.0, %v1761
      %v1763 = vmul.f32 %v1756, %v1762
      %v1764 = vld [vmem:[%s2] sm:$0xff]
      %v1765 = vld [vmem:[%s2 + $0x8] sm:$0xff]
      %v1766 = vld [vmem:[%s2 + $0x10] sm:$0xff]
      %v1767 = vld [vmem:[%s2 + $0x18] sm:$0xff]
      %v1768 = vld [vmem:[%s2 + $0x20] sm:$0xff]
      %v1769 = vld [vmem:[%s2 + $0x28] sm:$0xff]
      %v1770 = vld [vmem:[%s2 + $0x30] sm:$0xff]
      %v1771 = vld [vmem:[%s2 + $0x38] sm:$0xff]
      %v1772 = vld [vmem:[%s3] sm:$0x1]
      %vm1773 = vcmask 523264
      %v1775 = vsel %vm1773, %v1763, 0
      %1777 = vmatprep.subr.mxu0 0.0
      %1778 = vmatpush1.msra.mxu0 0.0
      %1779 = vmatprep.subr.mxu0 0.0
      %1780 = vmatpush1.msra.mxu0 0.0
      %1781 = vmatprep.subr.mxu0 0.0
      %1782 = vmatpush1.msra.mxu0 0.0
      %1783 = vmatprep.subr.mxu0 0.0
      %1784 = vmatpush1.msra.mxu0 0.0
      %1785 = vmatprep.subr.mxu0 0.0
      %1786 = vmatpush1.msra.mxu0 0.0
      %1787 = vmatprep.subr.mxu0 0.0
      %1788 = vmatpush1.msra.mxu0 0.0
      %1789 = vmatprep.subr.mxu0 0.0
      %1790 = vmatpush1.msra.mxu0 0.0
      %1791 = vmatprep.subr.mxu0 0.0
      %1792 = vmatpush1.msra.mxu0 0.0
      %1793 = vmatprep.subr.mxu0 0.0
      %1794 = vmatpush1.msra.mxu0 %v1771
      %1795 = vmatprep.subr.mxu0 0.0
      %1796 = vmatpush1.msra.mxu0 %v1770
      %1797 = vmatprep.subr.mxu0 0.0
      %1798 = vmatpush1.msra.mxu0 %v1769
      %1799 = vmatprep.subr.mxu0 0.0
      %1800 = vmatpush1.msra.mxu0 %v1768
      %1801 = vmatprep.subr.mxu0 0.0
      %1802 = vmatpush1.msra.mxu0 %v1767
      %1803 = vmatprep.subr.mxu0 0.0
      %1804 = vmatpush1.msra.mxu0 %v1766
      %1805 = vmatprep.subr.mxu0 0.0
      %1806 = vmatpush1.msra.mxu0 %v1765
      %1807 = vmatprep.subr.mxu0 0.0
      %1808 = vmatpush1.msra.mxu0 %v1764
      %1809 = vmatprep.subr.mxu0 0.0
      %1810 = vmatpush2.msra.mxu0 0.0
      %1811 = vmatprep.subr.mxu0 0.0
      %1812 = vmatpush2.msra.mxu0 0.0
      %1813 = vmatprep.subr.mxu0 0.0
      %1814 = vmatpush2.msra.mxu0 0.0
      %1815 = vmatprep.subr.mxu0 0.0
      %1816 = vmatpush2.msra.mxu0 0.0
      %1817 = vmatprep.subr.mxu0 0.0
      %1818 = vmatpush2.msra.mxu0 0.0
      %1819 = vmatprep.subr.mxu0 0.0
      %1820 = vmatpush2.msra.mxu0 0.0
      %1821 = vmatprep.subr.mxu0 0.0
      %1822 = vmatpush2.msra.mxu0 0.0
      %1823 = vmatprep.subr.mxu0 0.0
      %1824 = vmatpush2.msra.mxu0 0.0
      %1825 = vmatprep.subr.mxu0 0.0
      %1826 = vmatpush2.msra.mxu0 0.0
      %1827 = vmatprep.subr.mxu0 0.0
      %1828 = vmatpush2.msra.mxu0 0.0
      %1829 = vmatprep.subr.mxu0 0.0
      %1830 = vmatpush2.msra.mxu0 0.0
      %1831 = vmatprep.subr.mxu0 0.0
      %1832 = vmatpush2.msra.mxu0 0.0
      %1833 = vmatprep.subr.mxu0 0.0
      %1834 = vmatpush2.msra.mxu0 0.0
      %1835 = vmatprep.subr.mxu0 0.0
      %1836 = vmatpush2.msra.mxu0 0.0
      %1837 = vmatprep.subr.mxu0 0.0
      %1838 = vmatpush2.msra.mxu0 0.0
      %1839 = vmatprep.subr.mxu0 0.0
      %1840 = vmatpush2.msra.mxu0 0.0
      %1841 = vmatprep.mubr.f32.mxu0 0.0
      %1842 = vmatmul.mubr.f32.gmra.mxu0 %v1775
      %v1843 = vpop.f32.mrf.mxu0
      %v1844 = vadd.f32 %v1772, %v1843
      %v1845 = vpop.f32.mrf.mxu0
      %1846 = vdwg.mxu0
      %1847 = vst.msk [vmem:[#allocation2] sm:$0xff] %vm939, 0.0
      %1848 = vst.msk [vmem:[#allocation2 + $0x8] sm:$0xff] %vm939, 0.0
      %vm1849 = vcmask 254976
      %1850 = vst.msk [vmem:[#allocation2 + $0x10] sm:$0x3] %vm1849, 0.0
      %1851 = vst.msk [vmem:[#allocation2 + $0x18] sm:$0xff] %vm939, 0.0
      %1852 = vst.msk [vmem:[#allocation2 + $0x20] sm:$0xff] %vm939, 0.0
      %1853 = vst.msk [vmem:[#allocation2 + $0x28] sm:$0x3] %vm1849, 0.0
      %1854 = vst.msk [vmem:[#allocation2 + $0x30] sm:$0xff] %vm939, 0.0
      %1855 = vst.msk [vmem:[#allocation2 + $0x38] sm:$0xff] %vm939, 0.0
      %1856 = vst.msk [vmem:[#allocation2 + $0x40] sm:$0x3] %vm1849, 0.0
      %1857 = vst.msk [vmem:[#allocation2 + $0x48] sm:$0xff] %vm939, 0.0
      %1858 = vst.msk [vmem:[#allocation2 + $0x50] sm:$0xff] %vm939, 0.0
      %1859 = vst.msk [vmem:[#allocation2 + $0x58] sm:$0x3] %vm1849, 0.0
      %1860 = vst.msk [vmem:[#allocation2 + $0x60] sm:$0xff] %vm939, 0.0
      %1861 = vst.msk [vmem:[#allocation2 + $0x68] sm:$0xff] %vm939, 0.0
      %1862 = vst.msk [vmem:[#allocation2 + $0x70] sm:$0x3] %vm1849, 0.0
      %1863 = vst.msk [vmem:[#allocation2 + $0x78] sm:$0xff] %vm939, 0.0
      %1864 = vst.msk [vmem:[#allocation2 + $0x80] sm:$0xff] %vm939, 0.0
      %1865 = vst.msk [vmem:[#allocation2 + $0x88] sm:$0x3] %vm1849, 0.0
      %1866 = vst.msk [vmem:[#allocation2 + $0x90] sm:$0xff] %vm939, 0.0
      %1867 = vst.msk [vmem:[#allocation2 + $0x98] sm:$0xff] %vm939, 0.0
      %1868 = vst.msk [vmem:[#allocation2 + $0xa0] sm:$0x3] %vm1849, 0.0
      %1869 = vst.msk [vmem:[#allocation2 + $0xa8] sm:$0xff] %vm939, 0.0
      %1870 = vst.msk [vmem:[#allocation2 + $0xb0] sm:$0xff] %vm939, 0.0
      %1871 = vst.msk [vmem:[#allocation2 + $0xb8] sm:$0x3] %vm1849, 0.0
      %1872 = vst.msk [vmem:[#allocation2 + $0xc0] sm:$0xff] %vm939, 0.0
      %1873 = vst.msk [vmem:[#allocation2 + $0xc8] sm:$0xff] %vm939, 0.0
      %1874 = vst.msk [vmem:[#allocation2 + $0xd0] sm:$0x3] %vm1849, 0.0
      %1875 = vst.msk [vmem:[#allocation2 + $0xd8] sm:$0xff] %vm939, 0.0
      %1876 = vst.msk [vmem:[#allocation2 + $0xe0] sm:$0xff] %vm939, 0.0
      %1877 = vst.msk [vmem:[#allocation2 + $0xe8] sm:$0x3] %vm1849, 0.0
      %1878 = vst.msk [vmem:[#allocation2 + $0xf0] sm:$0xff] %vm939, 0.0
      %1879 = vst.msk [vmem:[#allocation2 + $0xf8] sm:$0xff] %vm939, 0.0
      %1880 = vst.msk [vmem:[#allocation2 + $0x100] sm:$0x3] %vm1849, 0.0
      %1881 = vst.msk [vmem:[#allocation2 + $0x108] sm:$0xff] %vm939, 0.0
      %1882 = vst.msk [vmem:[#allocation2 + $0x110] sm:$0xff] %vm939, 0.0
      %1883 = vst.msk [vmem:[#allocation2 + $0x118] sm:$0x3] %vm1849, 0.0
      %1884 = vst.msk [vmem:[#allocation2 + $0x120] sm:$0xff] %vm939, 0.0
      %1885 = vst.msk [vmem:[#allocation2 + $0x128] sm:$0xff] %vm939, 0.0
      %1886 = vst.msk [vmem:[#allocation2 + $0x130] sm:$0x3] %vm1849, 0.0
      %1887 = vst.msk [vmem:[#allocation2 + $0x138] sm:$0xff] %vm939, 0.0
      %1888 = vst.msk [vmem:[#allocation2 + $0x140] sm:$0xff] %vm939, 0.0
      %1889 = vst.msk [vmem:[#allocation2 + $0x148] sm:$0x3] %vm1849, 0.0
      %1890 = vst.msk [vmem:[#allocation2 + $0x150] sm:$0xff] %vm939, 0.0
      %1891 = vst.msk [vmem:[#allocation2 + $0x158] sm:$0xff] %vm939, 0.0
      %1892 = vst.msk [vmem:[#allocation2 + $0x160] sm:$0x3] %vm1849, 0.0
      %1893 = vst.msk [vmem:[#allocation2 + $0x168] sm:$0xff] %vm939, 0.0
      %1894 = vst.msk [vmem:[#allocation2 + $0x170] sm:$0xff] %vm939, 0.0
      %1895 = vst.msk [vmem:[#allocation2 + $0x178] sm:$0x3] %vm1849, 0.0
      %1896 = vst.msk [vmem:[#allocation2 + $0x180] sm:$0xff] %vm939, 0.0
      %1897 = vst.msk [vmem:[#allocation2 + $0x188] sm:$0xff] %vm939, 0.0
      %1898 = vst.msk [vmem:[#allocation2 + $0x190] sm:$0x3] %vm1849, 0.0
      %1899 = vst.msk [vmem:[#allocation2 + $0x198] sm:$0xff] %vm939, 0.0
      %1900 = vst.msk [vmem:[#allocation2 + $0x1a0] sm:$0xff] %vm939, 0.0
      %1901 = vst.msk [vmem:[#allocation2 + $0x1a8] sm:$0x3] %vm1849, 0.0
      %s1902 = scalar_lea.vmem [#allocation2], 24
      %1903 = vst.msk [vmem:[%s1902 + $0x1] sm:$0xff] %vm939, %v1724
      %1904 = vst.msk [vmem:[%s1902 + $0x9] sm:$0xff] %vm939, %v1725
      %1905 = vst.msk [vmem:[%s1902 + $0x19] sm:$0xff] %vm939, %v1726
      %1906 = vst.msk [vmem:[%s1902 + $0x21] sm:$0xff] %vm939, %v1727
      %1907 = vst.msk [vmem:[%s1902 + $0x31] sm:$0xff] %vm939, %v1728
      %1908 = vst.msk [vmem:[%s1902 + $0x39] sm:$0xff] %vm939, %v1729
      %1909 = vst.msk [vmem:[%s1902 + $0x49] sm:$0xff] %vm939, %v1730
      %1910 = vst.msk [vmem:[%s1902 + $0x51] sm:$0xff] %vm939, %v1731
      %1911 = vst.msk [vmem:[%s1902 + $0x61] sm:$0xff] %vm939, %v1732
      %1912 = vst.msk [vmem:[%s1902 + $0x69] sm:$0xff] %vm939, %v1733
      %1913 = vst.msk [vmem:[%s1902 + $0x79] sm:$0xff] %vm939, %v1734
      %1914 = vst.msk [vmem:[%s1902 + $0x81] sm:$0xff] %vm939, %v1735
      %1915 = vst.msk [vmem:[%s1902 + $0x91] sm:$0xff] %vm939, %v1736
      %1916 = vst.msk [vmem:[%s1902 + $0x99] sm:$0xff] %vm939, %v1737
      %1917 = vst.msk [vmem:[%s1902 + $0xa9] sm:$0xff] %vm939, %v1738
      %1918 = vst.msk [vmem:[%s1902 + $0xb1] sm:$0xff] %vm939, %v1739
      %1919 = vst.msk [vmem:[%s1902 + $0xc1] sm:$0xff] %vm939, %v1740
      %1920 = vst.msk [vmem:[%s1902 + $0xc9] sm:$0xff] %vm939, %v1741
      %1921 = vst.msk [vmem:[%s1902 + $0xd9] sm:$0xff] %vm939, %v1742
      %1922 = vst.msk [vmem:[%s1902 + $0xe1] sm:$0xff] %vm939, %v1743
      %1923 = vst.msk [vmem:[%s1902 + $0xf1] sm:$0xff] %vm939, %v1744
      %1924 = vst.msk [vmem:[%s1902 + $0xf9] sm:$0xff] %vm939, %v1745
      %1925 = vst.msk [vmem:[%s1902 + $0x109] sm:$0xff] %vm939, %v1746
      %1926 = vst.msk [vmem:[%s1902 + $0x111] sm:$0xff] %vm939, %v1747
      %1927 = vst.msk [vmem:[%s1902 + $0x121] sm:$0xff] %vm939, %v1748
      %1928 = vst.msk [vmem:[%s1902 + $0x129] sm:$0xff] %vm939, %v1749
      %1929 = vst.msk [vmem:[%s1902 + $0x139] sm:$0xff] %vm939, %v1750
      %1930 = vst.msk [vmem:[%s1902 + $0x141] sm:$0xff] %vm939, %v1751
      %1931 = vst.msk [vmem:[%s1902 + $0x151] sm:$0xff] %vm939, %v1752
      %1932 = vst.msk [vmem:[%s1902 + $0x159] sm:$0xff] %vm939, %v1753
      %1933 = vst.msk [vmem:[%s1902 + $0x169] sm:$0xff] %vm939, %v1754
      %1934 = vst.msk [vmem:[%s1902 + $0x171] sm:$0xff] %vm939, %v1755
      %v1935 = vld [vmem:[%s7] sm:$0xff]
      %v1936 = vld [vmem:[%s7 + $0x8] sm:$0xff]
      %v1937 = vld [vmem:[%s7 + $0x10] sm:$0xff]
      %v1938 = vld [vmem:[%s7 + $0x18] sm:$0xff]
      %v1939 = vld [vmem:[%s7 + $0x20] sm:$0xff]
      %v1940 = vld [vmem:[%s7 + $0x28] sm:$0xff]
      %v1941 = vld [vmem:[%s7 + $0x30] sm:$0xff]
      %v1942 = vld [vmem:[%s7 + $0x38] sm:$0xff]
      %v1943 = vld [vmem:[%s7 + $0x40] sm:$0xff]
      %v1944 = vld [vmem:[%s7 + $0x48] sm:$0xff]
      %v1945 = vld [vmem:[%s7 + $0x50] sm:$0xff]
      %v1946 = vld [vmem:[%s7 + $0x58] sm:$0xff]
      %v1947 = vld [vmem:[%s7 + $0x60] sm:$0xff]
      %v1948 = vld [vmem:[%s7 + $0x68] sm:$0xff]
      %v1949 = vld [vmem:[%s7 + $0x70] sm:$0xff]
      %v1950 = vld [vmem:[%s7 + $0x78] sm:$0xff]
      %v1951 = vld [vmem:[%s7 + $0x80] sm:$0xff]
      %v1952 = vld [vmem:[%s7 + $0x88] sm:$0xff]
      %v1953 = vld [vmem:[%s7 + $0x90] sm:$0xff]
      %v1954 = vld [vmem:[%s7 + $0x98] sm:$0xff]
      %v1955 = vld [vmem:[%s7 + $0xa0] sm:$0xff]
      %v1956 = vld [vmem:[%s7 + $0xa8] sm:$0xff]
      %v1957 = vld [vmem:[%s7 + $0xb0] sm:$0xff]
      %v1958 = vld [vmem:[%s7 + $0xb8] sm:$0xff]
      %v1959 = vld [vmem:[%s7 + $0xc0] sm:$0xff]
      %v1960 = vld [vmem:[%s7 + $0xc8] sm:$0xff]
      %v1961 = vld [vmem:[%s7 + $0xd0] sm:$0xff]
      %v1962 = vld [vmem:[%s7 + $0xd8] sm:$0xff]
      %v1963 = vld [vmem:[%s7 + $0xe0] sm:$0xff]
      %v1964 = vld [vmem:[%s7 + $0xe8] sm:$0xff]
      %v1965 = vld [vmem:[%s7 + $0xf0] sm:$0xff]
      %v1966 = vld [vmem:[%s7 + $0xf8] sm:$0xff]
      %v1967 = vld [vmem:[%s7 + $0x100] sm:$0xff]
      %v1968 = vld [vmem:[%s7 + $0x108] sm:$0xff]
      %v1969 = vld [vmem:[%s7 + $0x110] sm:$0xff]
      %v1970 = vld [vmem:[%s7 + $0x118] sm:$0xff]
      %v1971 = vld [vmem:[#allocation2] sm:$0xff]
      %v1972 = vld [vmem:[#allocation2 + $0x8] sm:$0xff]
      %v1973 = vld [vmem:[#allocation2 + $0x18] sm:$0xff]
      %v1974 = vld [vmem:[#allocation2 + $0x20] sm:$0xff]
      %v1975 = vld [vmem:[#allocation2 + $0x30] sm:$0xff]
      %v1976 = vld [vmem:[#allocation2 + $0x38] sm:$0xff]
      %v1977 = vld [vmem:[#allocation2 + $0x48] sm:$0xff]
      %v1978 = vld [vmem:[#allocation2 + $0x50] sm:$0xff]
      %v1979 = vld [vmem:[#allocation2 + $0x60] sm:$0xff]
      %v1980 = vld [vmem:[#allocation2 + $0x68] sm:$0xff]
      %v1981 = vld [vmem:[#allocation2 + $0x78] sm:$0xff]
      %v1982 = vld [vmem:[#allocation2 + $0x80] sm:$0xff]
      %v1983 = vld [vmem:[#allocation2 + $0x90] sm:$0xff]
      %v1984 = vld [vmem:[#allocation2 + $0x98] sm:$0xff]
      %v1985 = vld [vmem:[#allocation2 + $0xa8] sm:$0xff]
      %v1986 = vld [vmem:[#allocation2 + $0xb0] sm:$0xff]
      %v1987 = vld [vmem:[#allocation2 + $0xc0] sm:$0xff]
      %v1988 = vld [vmem:[#allocation2 + $0xc8] sm:$0xff]
      %v1989 = vld [vmem:[#allocation2 + $0xd8] sm:$0xff]
      %v1990 = vld [vmem:[#allocation2 + $0xe0] sm:$0xff]
      %v1991 = vld [vmem:[#allocation2 + $0xf0] sm:$0xff]
      %v1992 = vld [vmem:[#allocation2 + $0xf8] sm:$0xff]
      %v1993 = vld [vmem:[#allocation2 + $0x108] sm:$0xff]
      %v1994 = vld [vmem:[#allocation2 + $0x110] sm:$0xff]
      %v1995 = vld [vmem:[#allocation2 + $0x120] sm:$0xff]
      %v1996 = vld [vmem:[#allocation2 + $0x128] sm:$0xff]
      %v1997 = vld [vmem:[#allocation2 + $0x138] sm:$0xff]
      %v1998 = vld [vmem:[#allocation2 + $0x140] sm:$0xff]
      %v1999 = vld [vmem:[#allocation2 + $0x150] sm:$0xff]
      %v2000 = vld [vmem:[#allocation2 + $0x158] sm:$0xff]
      %v2001 = vld [vmem:[#allocation2 + $0x168] sm:$0xff]
      %v2002 = vld [vmem:[#allocation2 + $0x170] sm:$0xff]
      %v2003 = vld [vmem:[#allocation2 + $0x1] sm:$0xff]
      %v2004 = vld [vmem:[#allocation2 + $0x9] sm:$0xff]
      %v2005 = vld [vmem:[#allocation2 + $0x19] sm:$0xff]
      %v2006 = vld [vmem:[#allocation2 + $0x21] sm:$0xff]
      %v2007 = vld [vmem:[#allocation2 + $0x31] sm:$0xff]
      %v2008 = vld [vmem:[#allocation2 + $0x39] sm:$0xff]
      %v2009 = vld [vmem:[#allocation2 + $0x49] sm:$0xff]
      %v2010 = vld [vmem:[#allocation2 + $0x51] sm:$0xff]
      %v2011 = vld [vmem:[#allocation2 + $0x61] sm:$0xff]
      %v2012 = vld [vmem:[#allocation2 + $0x69] sm:$0xff]
      %v2013 = vld [vmem:[#allocation2 + $0x79] sm:$0xff]
      %v2014 = vld [vmem:[#allocation2 + $0x81] sm:$0xff]
      %v2015 = vld [vmem:[#allocation2 + $0x91] sm:$0xff]
      %v2016 = vld [vmem:[#allocation2 + $0x99] sm:$0xff]
      %v2017 = vld [vmem:[#allocation2 + $0xa9] sm:$0xff]
      %v2018 = vld [vmem:[#allocation2 + $0xb1] sm:$0xff]
      %v2019 = vld [vmem:[#allocation2 + $0xc1] sm:$0xff]
      %v2020 = vld [vmem:[#allocation2 + $0xc9] sm:$0xff]
      %v2021 = vld [vmem:[#allocation2 + $0xd9] sm:$0xff]
      %v2022 = vld [vmem:[#allocation2 + $0xe1] sm:$0xff]
      %v2023 = vld [vmem:[#allocation2 + $0xf1] sm:$0xff]
      %v2024 = vld [vmem:[#allocation2 + $0xf9] sm:$0xff]
      %v2025 = vld [vmem:[#allocation2 + $0x109] sm:$0xff]
      %v2026 = vld [vmem:[#allocation2 + $0x111] sm:$0xff]
      %v2027 = vld [vmem:[#allocation2 + $0x121] sm:$0xff]
      %v2028 = vld [vmem:[#allocation2 + $0x129] sm:$0xff]
      %v2029 = vld [vmem:[#allocation2 + $0x139] sm:$0xff]
      %v2030 = vld [vmem:[#allocation2 + $0x141] sm:$0xff]
      %v2031 = vld [vmem:[#allocation2 + $0x151] sm:$0xff]
      %v2032 = vld [vmem:[#allocation2 + $0x159] sm:$0xff]
      %v2033 = vld [vmem:[#allocation2 + $0x169] sm:$0xff]
      %v2034 = vld [vmem:[#allocation2 + $0x171] sm:$0xff]
      %v2036 = vsel %vm939, %v2003, 0
      %v2039 = vsel %vm939, %v2004, 0
      %v2042 = vsel %vm939, %v2005, 0
      %v2045 = vsel %vm939, %v2006, 0
      %v2048 = vsel %vm939, %v2007, 0
      %v2051 = vsel %vm939, %v2008, 0
      %v2054 = vsel %vm939, %v2009, 0
      %v2057 = vsel %vm939, %v2010, 0
      %v2060 = vsel %vm939, %v2011, 0
      %v2063 = vsel %vm939, %v2012, 0
      %v2066 = vsel %vm939, %v2013, 0
      %v2069 = vsel %vm939, %v2014, 0
      %v2072 = vsel %vm939, %v2015, 0
      %v2075 = vsel %vm939, %v2016, 0
      %v2078 = vsel %vm939, %v2017, 0
      %v2081 = vsel %vm939, %v2018, 0
      %v2084 = vsel %vm939, %v2019, 0
      %v2087 = vsel %vm939, %v2020, 0
      %v2090 = vsel %vm939, %v2021, 0
      %v2093 = vsel %vm939, %v2022, 0
      %v2096 = vsel %vm939, %v2023, 0
      %v2099 = vsel %vm939, %v2024, 0
      %v2102 = vsel %vm939, %v2025, 0
      %v2105 = vsel %vm939, %v2026, 0
      %v2108 = vsel %vm939, %v2027, 0
      %v2111 = vsel %vm939, %v2028, 0
      %v2114 = vsel %vm939, %v2029, 0
      %v2117 = vsel %vm939, %v2030, 0
      %v2120 = vsel %vm939, %v2031, 0
      %v2123 = vsel %vm939, %v2032, 0
      %v2126 = vsel %vm939, %v2033, 0
      %v2129 = vsel %vm939, %v2034, 0
      %2131 = vmatprep.subr.mxu0 0.0
      %2132 = vmatpush1.msra.mxu0 0.0
      %2133 = vmatprep.subr.mxu0 0.0
      %2134 = vmatpush1.msra.mxu0 0.0
      %2135 = vmatprep.subr.mxu0 0.0
      %2136 = vmatpush1.msra.mxu0 0.0
      %2137 = vmatprep.subr.mxu0 0.0
      %2138 = vmatpush1.msra.mxu0 0.0
      %2139 = vmatprep.subr.mxu0 0.0
      %2140 = vmatpush1.msra.mxu0 0.0
      %2141 = vmatprep.subr.mxu0 0.0
      %2142 = vmatpush1.msra.mxu0 0.0
      %2143 = vmatprep.subr.mxu0 0.0
      %2144 = vmatpush1.msra.mxu0 0.0
      %2145 = vmatprep.subr.mxu0 0.0
      %2146 = vmatpush1.msra.mxu0 0.0
      %2147 = vmatprep.subr.mxu0 0.0
      %2148 = vmatpush1.msra.mxu0 0.0
      %2149 = vmatprep.subr.mxu0 0.0
      %2150 = vmatpush1.msra.mxu0 0.0
      %2151 = vmatprep.subr.mxu0 0.0
      %2152 = vmatpush1.msra.mxu0 0.0
      %2153 = vmatprep.subr.mxu0 0.0
      %2154 = vmatpush1.msra.mxu0 0.0
      %2155 = vmatprep.subr.mxu0 0.0
      %2156 = vmatpush1.msra.mxu0 %v1942
      %2157 = vmatprep.subr.mxu0 0.0
      %2158 = vmatpush1.msra.mxu0 %v1941
      %2159 = vmatprep.subr.mxu0 0.0
      %2160 = vmatpush1.msra.mxu0 %v1940
      %2161 = vmatprep.subr.mxu0 0.0
      %2162 = vmatpush1.msra.mxu0 %v1939
      %2163 = vmatprep.subr.mxu0 0.0
      %2164 = vmatpush2.msra.mxu0 0.0
      %2165 = vmatprep.subr.mxu0 0.0
      %2166 = vmatpush2.msra.mxu0 0.0
      %2167 = vmatprep.subr.mxu0 0.0
      %2168 = vmatpush2.msra.mxu0 0.0
      %2169 = vmatprep.subr.mxu0 0.0
      %2170 = vmatpush2.msra.mxu0 0.0
      %2171 = vmatprep.subr.mxu0 0.0
      %2172 = vmatpush2.msra.mxu0 0.0
      %2173 = vmatprep.subr.mxu0 0.0
      %2174 = vmatpush2.msra.mxu0 0.0
      %2175 = vmatprep.subr.mxu0 0.0
      %2176 = vmatpush2.msra.mxu0 0.0
      %2177 = vmatprep.subr.mxu0 0.0
      %2178 = vmatpush2.msra.mxu0 0.0
      %2179 = vmatprep.subr.mxu0 0.0
      %2180 = vmatpush2.msra.mxu0 0.0
      %2181 = vmatprep.subr.mxu0 0.0
      %2182 = vmatpush2.msra.mxu0 0.0
      %2183 = vmatprep.subr.mxu0 0.0
      %2184 = vmatpush2.msra.mxu0 0.0
      %2185 = vmatprep.subr.mxu0 0.0
      %2186 = vmatpush2.msra.mxu0 0.0
      %2187 = vmatprep.subr.mxu0 0.0
      %2188 = vmatpush2.msra.mxu0 0.0
      %2189 = vmatprep.subr.mxu0 0.0
      %2190 = vmatpush2.msra.mxu0 0.0
      %2191 = vmatprep.subr.mxu0 0.0
      %2192 = vmatpush2.msra.mxu0 0.0
      %2193 = vmatprep.subr.mxu0 0.0
      %2194 = vmatpush2.msra.mxu0 0.0
      %2195 = vmatprep.mubr.f32.mxu0 0.0
      %2196 = vmatmul.mubr.f32.gmra.mxu0 %v2036
      %v2197 = vpop.f32.mrf.mxu0
      %v2198 = vadd.f32 0.0, %v2197
      %v2199 = vpop.f32.mrf.mxu0
      %2200 = vmatprep.mubr.f32.mxu0 0.0
      %2201 = vmatmul.mubr.f32.gmra.mxu0 %v2039
      %v2202 = vpop.f32.mrf.mxu0
      %v2203 = vadd.f32 0.0, %v2202
      %v2204 = vpop.f32.mrf.mxu0
      %2205 = vmatprep.mubr.f32.mxu0 0.0
      %2206 = vmatmul.mubr.f32.gmra.mxu0 %v2042
      %v2207 = vpop.f32.mrf.mxu0
      %v2208 = vadd.f32 0.0, %v2207
      %v2209 = vpop.f32.mrf.mxu0
      %2210 = vmatprep.mubr.f32.mxu0 0.0
      %2211 = vmatmul.mubr.f32.gmra.mxu0 %v2045
      %v2212 = vpop.f32.mrf.mxu0
      %v2213 = vadd.f32 0.0, %v2212
      %v2214 = vpop.f32.mrf.mxu0
      %2215 = vmatprep.mubr.f32.mxu0 0.0
      %2216 = vmatmul.mubr.f32.gmra.mxu0 %v2048
      %v2217 = vpop.f32.mrf.mxu0
      %v2218 = vadd.f32 0.0, %v2217
      %v2219 = vpop.f32.mrf.mxu0
      %2220 = vmatprep.mubr.f32.mxu0 0.0
      %2221 = vmatmul.mubr.f32.gmra.mxu0 %v2051
      %v2222 = vpop.f32.mrf.mxu0
      %v2223 = vadd.f32 0.0, %v2222
      %v2224 = vpop.f32.mrf.mxu0
      %2225 = vmatprep.mubr.f32.mxu0 0.0
      %2226 = vmatmul.mubr.f32.gmra.mxu0 %v2054
      %v2227 = vpop.f32.mrf.mxu0
      %v2228 = vadd.f32 0.0, %v2227
      %v2229 = vpop.f32.mrf.mxu0
      %2230 = vmatprep.mubr.f32.mxu0 0.0
      %2231 = vmatmul.mubr.f32.gmra.mxu0 %v2057
      %v2232 = vpop.f32.mrf.mxu0
      %v2233 = vadd.f32 0.0, %v2232
      %v2234 = vpop.f32.mrf.mxu0
      %2235 = vmatprep.mubr.f32.mxu0 0.0
      %2236 = vmatmul.mubr.f32.gmra.mxu0 %v2060
      %v2237 = vpop.f32.mrf.mxu0
      %v2238 = vadd.f32 0.0, %v2237
      %v2239 = vpop.f32.mrf.mxu0
      %2240 = vmatprep.mubr.f32.mxu0 0.0
      %2241 = vmatmul.mubr.f32.gmra.mxu0 %v2063
      %v2242 = vpop.f32.mrf.mxu0
      %v2243 = vadd.f32 0.0, %v2242
      %v2244 = vpop.f32.mrf.mxu0
      %2245 = vmatprep.mubr.f32.mxu0 0.0
      %2246 = vmatmul.mubr.f32.gmra.mxu0 %v2066
      %v2247 = vpop.f32.mrf.mxu0
      %v2248 = vadd.f32 0.0, %v2247
      %v2249 = vpop.f32.mrf.mxu0
      %2250 = vmatprep.mubr.f32.mxu0 0.0
      %2251 = vmatmul.mubr.f32.gmra.mxu0 %v2069
      %v2252 = vpop.f32.mrf.mxu0
      %v2253 = vadd.f32 0.0, %v2252
      %v2254 = vpop.f32.mrf.mxu0
      %2255 = vmatprep.mubr.f32.mxu0 0.0
      %2256 = vmatmul.mubr.f32.gmra.mxu0 %v2072
      %v2257 = vpop.f32.mrf.mxu0
      %v2258 = vadd.f32 0.0, %v2257
      %v2259 = vpop.f32.mrf.mxu0
      %2260 = vmatprep.mubr.f32.mxu0 0.0
      %2261 = vmatmul.mubr.f32.gmra.mxu0 %v2075
      %v2262 = vpop.f32.mrf.mxu0
      %v2263 = vadd.f32 0.0, %v2262
      %v2264 = vpop.f32.mrf.mxu0
      %2265 = vmatprep.mubr.f32.mxu0 0.0
      %2266 = vmatmul.mubr.f32.gmra.mxu0 %v2078
      %v2267 = vpop.f32.mrf.mxu0
      %v2268 = vadd.f32 0.0, %v2267
      %v2269 = vpop.f32.mrf.mxu0
      %2270 = vmatprep.mubr.f32.mxu0 0.0
      %2271 = vmatmul.mubr.f32.gmra.mxu0 %v2081
      %v2272 = vpop.f32.mrf.mxu0
      %v2273 = vadd.f32 0.0, %v2272
      %v2274 = vpop.f32.mrf.mxu0
      %2275 = vmatprep.mubr.f32.mxu0 0.0
      %2276 = vmatmul.mubr.f32.gmra.mxu0 %v2084
      %v2277 = vpop.f32.mrf.mxu0
      %v2278 = vadd.f32 0.0, %v2277
      %v2279 = vpop.f32.mrf.mxu0
      %2280 = vmatprep.mubr.f32.mxu0 0.0
      %2281 = vmatmul.mubr.f32.gmra.mxu0 %v2087
      %v2282 = vpop.f32.mrf.mxu0
      %v2283 = vadd.f32 0.0, %v2282
      %v2284 = vpop.f32.mrf.mxu0
      %2285 = vmatprep.mubr.f32.mxu0 0.0
      %2286 = vmatmul.mubr.f32.gmra.mxu0 %v2090
      %v2287 = vpop.f32.mrf.mxu0
      %v2288 = vadd.f32 0.0, %v2287
      %v2289 = vpop.f32.mrf.mxu0
      %2290 = vmatprep.mubr.f32.mxu0 0.0
      %2291 = vmatmul.mubr.f32.gmra.mxu0 %v2093
      %v2292 = vpop.f32.mrf.mxu0
      %v2293 = vadd.f32 0.0, %v2292
      %v2294 = vpop.f32.mrf.mxu0
      %2295 = vmatprep.mubr.f32.mxu0 0.0
      %2296 = vmatmul.mubr.f32.gmra.mxu0 %v2096
      %v2297 = vpop.f32.mrf.mxu0
      %v2298 = vadd.f32 0.0, %v2297
      %v2299 = vpop.f32.mrf.mxu0
      %2300 = vmatprep.mubr.f32.mxu0 0.0
      %2301 = vmatmul.mubr.f32.gmra.mxu0 %v2099
      %v2302 = vpop.f32.mrf.mxu0
      %v2303 = vadd.f32 0.0, %v2302
      %v2304 = vpop.f32.mrf.mxu0
      %2305 = vmatprep.mubr.f32.mxu0 0.0
      %2306 = vmatmul.mubr.f32.gmra.mxu0 %v2102
      %v2307 = vpop.f32.mrf.mxu0
      %v2308 = vadd.f32 0.0, %v2307
      %v2309 = vpop.f32.mrf.mxu0
      %2310 = vmatprep.mubr.f32.mxu0 0.0
      %2311 = vmatmul.mubr.f32.gmra.mxu0 %v2105
      %v2312 = vpop.f32.mrf.mxu0
      %v2313 = vadd.f32 0.0, %v2312
      %v2314 = vpop.f32.mrf.mxu0
      %2315 = vmatprep.mubr.f32.mxu0 0.0
      %2316 = vmatmul.mubr.f32.gmra.mxu0 %v2108
      %v2317 = vpop.f32.mrf.mxu0
      %v2318 = vadd.f32 0.0, %v2317
      %v2319 = vpop.f32.mrf.mxu0
      %2320 = vmatprep.mubr.f32.mxu0 0.0
      %2321 = vmatmul.mubr.f32.gmra.mxu0 %v2111
      %v2322 = vpop.f32.mrf.mxu0
      %v2323 = vadd.f32 0.0, %v2322
      %v2324 = vpop.f32.mrf.mxu0
      %2325 = vmatprep.mubr.f32.mxu0 0.0
      %2326 = vmatmul.mubr.f32.gmra.mxu0 %v2114
      %v2327 = vpop.f32.mrf.mxu0
      %v2328 = vadd.f32 0.0, %v2327
      %v2329 = vpop.f32.mrf.mxu0
      %2330 = vmatprep.mubr.f32.mxu0 0.0
      %2331 = vmatmul.mubr.f32.gmra.mxu0 %v2117
      %v2332 = vpop.f32.mrf.mxu0
      %v2333 = vadd.f32 0.0, %v2332
      %v2334 = vpop.f32.mrf.mxu0
      %2335 = vmatprep.mubr.f32.mxu0 0.0
      %2336 = vmatmul.mubr.f32.gmra.mxu0 %v2120
      %v2337 = vpop.f32.mrf.mxu0
      %v2338 = vadd.f32 0.0, %v2337
      %v2339 = vpop.f32.mrf.mxu0
      %2340 = vmatprep.mubr.f32.mxu0 0.0
      %2341 = vmatmul.mubr.f32.gmra.mxu0 %v2123
      %v2342 = vpop.f32.mrf.mxu0
      %v2343 = vadd.f32 0.0, %v2342
      %v2344 = vpop.f32.mrf.mxu0
      %2345 = vmatprep.mubr.f32.mxu0 0.0
      %2346 = vmatmul.mubr.f32.gmra.mxu0 %v2126
      %v2347 = vpop.f32.mrf.mxu0
      %v2348 = vadd.f32 0.0, %v2347
      %v2349 = vpop.f32.mrf.mxu0
      %2350 = vmatprep.mubr.f32.mxu0 0.0
      %2351 = vmatmul.mubr.f32.gmra.mxu0 %v2129
      %v2352 = vpop.f32.mrf.mxu0
      %v2353 = vadd.f32 0.0, %v2352
      %v2354 = vpop.f32.mrf.mxu0
      %2355 = vdwg.mxu0
      %v2357 = vsel %vm939, %v1971, 0
      %v2360 = vsel %vm939, %v1972, 0
      %v2363 = vsel %vm939, %v1973, 0
      %v2366 = vsel %vm939, %v1974, 0
      %v2369 = vsel %vm939, %v1975, 0
      %v2372 = vsel %vm939, %v1976, 0
      %v2375 = vsel %vm939, %v1977, 0
      %v2378 = vsel %vm939, %v1978, 0
      %v2381 = vsel %vm939, %v1979, 0
      %v2384 = vsel %vm939, %v1980, 0
      %v2387 = vsel %vm939, %v1981, 0
      %v2390 = vsel %vm939, %v1982, 0
      %v2393 = vsel %vm939, %v1983, 0
      %v2396 = vsel %vm939, %v1984, 0
      %v2399 = vsel %vm939, %v1985, 0
      %v2402 = vsel %vm939, %v1986, 0
      %v2405 = vsel %vm939, %v1987, 0
      %v2408 = vsel %vm939, %v1988, 0
      %v2411 = vsel %vm939, %v1989, 0
      %v2414 = vsel %vm939, %v1990, 0
      %v2417 = vsel %vm939, %v1991, 0
      %v2420 = vsel %vm939, %v1992, 0
      %v2423 = vsel %vm939, %v1993, 0
      %v2426 = vsel %vm939, %v1994, 0
      %v2429 = vsel %vm939, %v1995, 0
      %v2432 = vsel %vm939, %v1996, 0
      %v2435 = vsel %vm939, %v1997, 0
      %v2438 = vsel %vm939, %v1998, 0
      %v2441 = vsel %vm939, %v1999, 0
      %v2444 = vsel %vm939, %v2000, 0
      %v2447 = vsel %vm939, %v2001, 0
      %v2450 = vsel %vm939, %v2002, 0
      %2452 = vmatprep.subr.mxu0 0.0
      %2453 = vmatpush1.msra.mxu0 0.0
      %2454 = vmatprep.subr.mxu0 0.0
      %2455 = vmatpush1.msra.mxu0 0.0
      %2456 = vmatprep.subr.mxu0 0.0
      %2457 = vmatpush1.msra.mxu0 0.0
      %2458 = vmatprep.subr.mxu0 0.0
      %2459 = vmatpush1.msra.mxu0 0.0
      %2460 = vmatprep.subr.mxu0 0.0
      %2461 = vmatpush1.msra.mxu0 0.0
      %2462 = vmatprep.subr.mxu0 0.0
      %2463 = vmatpush1.msra.mxu0 0.0
      %2464 = vmatprep.subr.mxu0 0.0
      %2465 = vmatpush1.msra.mxu0 0.0
      %2466 = vmatprep.subr.mxu0 0.0
      %2467 = vmatpush1.msra.mxu0 0.0
      %2468 = vmatprep.subr.mxu0 0.0
      %2469 = vmatpush1.msra.mxu0 0.0
      %2470 = vmatprep.subr.mxu0 0.0
      %2471 = vmatpush1.msra.mxu0 0.0
      %2472 = vmatprep.subr.mxu0 0.0
      %2473 = vmatpush1.msra.mxu0 0.0
      %2474 = vmatprep.subr.mxu0 0.0
      %2475 = vmatpush1.msra.mxu0 0.0
      %2476 = vmatprep.subr.mxu0 0.0
      %2477 = vmatpush1.msra.mxu0 %v1938
      %2478 = vmatprep.subr.mxu0 0.0
      %2479 = vmatpush1.msra.mxu0 %v1937
      %2480 = vmatprep.subr.mxu0 0.0
      %2481 = vmatpush1.msra.mxu0 %v1936
      %2482 = vmatprep.subr.mxu0 0.0
      %2483 = vmatpush1.msra.mxu0 %v1935
      %2484 = vmatprep.subr.mxu0 0.0
      %2485 = vmatpush2.msra.mxu0 0.0
      %2486 = vmatprep.subr.mxu0 0.0
      %2487 = vmatpush2.msra.mxu0 0.0
      %2488 = vmatprep.subr.mxu0 0.0
      %2489 = vmatpush2.msra.mxu0 0.0
      %2490 = vmatprep.subr.mxu0 0.0
      %2491 = vmatpush2.msra.mxu0 0.0
      %2492 = vmatprep.subr.mxu0 0.0
      %2493 = vmatpush2.msra.mxu0 0.0
      %2494 = vmatprep.subr.mxu0 0.0
      %2495 = vmatpush2.msra.mxu0 0.0
      %2496 = vmatprep.subr.mxu0 0.0
      %2497 = vmatpush2.msra.mxu0 0.0
      %2498 = vmatprep.subr.mxu0 0.0
      %2499 = vmatpush2.msra.mxu0 0.0
      %2500 = vmatprep.subr.mxu0 0.0
      %2501 = vmatpush2.msra.mxu0 0.0
      %2502 = vmatprep.subr.mxu0 0.0
      %2503 = vmatpush2.msra.mxu0 0.0
      %2504 = vmatprep.subr.mxu0 0.0
      %2505 = vmatpush2.msra.mxu0 0.0
      %2506 = vmatprep.subr.mxu0 0.0
      %2507 = vmatpush2.msra.mxu0 0.0
      %2508 = vmatprep.subr.mxu0 0.0
      %2509 = vmatpush2.msra.mxu0 0.0
      %2510 = vmatprep.subr.mxu0 0.0
      %2511 = vmatpush2.msra.mxu0 0.0
      %2512 = vmatprep.subr.mxu0 0.0
      %2513 = vmatpush2.msra.mxu0 0.0
      %2514 = vmatprep.subr.mxu0 0.0
      %2515 = vmatpush2.msra.mxu0 0.0
      %2516 = vmatprep.mubr.f32.mxu0 0.0
      %2517 = vmatmul.mubr.f32.gmra.mxu0 %v2357
      %v2518 = vpop.f32.mrf.mxu0
      %v2519 = vadd.f32 %v2198, %v2518
      %v2520 = vpop.f32.mrf.mxu0
      %2521 = vmatprep.mubr.f32.mxu0 0.0
      %2522 = vmatmul.mubr.f32.gmra.mxu0 %v2360
      %v2523 = vpop.f32.mrf.mxu0
      %v2524 = vadd.f32 %v2203, %v2523
      %v2525 = vpop.f32.mrf.mxu0
      %2526 = vmatprep.mubr.f32.mxu0 0.0
      %2527 = vmatmul.mubr.f32.gmra.mxu0 %v2363
      %v2528 = vpop.f32.mrf.mxu0
      %v2529 = vadd.f32 %v2208, %v2528
      %v2530 = vpop.f32.mrf.mxu0
      %2531 = vmatprep.mubr.f32.mxu0 0.0
      %2532 = vmatmul.mubr.f32.gmra.mxu0 %v2366
      %v2533 = vpop.f32.mrf.mxu0
      %v2534 = vadd.f32 %v2213, %v2533
      %v2535 = vpop.f32.mrf.mxu0
      %2536 = vmatprep.mubr.f32.mxu0 0.0
      %2537 = vmatmul.mubr.f32.gmra.mxu0 %v2369
      %v2538 = vpop.f32.mrf.mxu0
      %v2539 = vadd.f32 %v2218, %v2538
      %v2540 = vpop.f32.mrf.mxu0
      %2541 = vmatprep.mubr.f32.mxu0 0.0
      %2542 = vmatmul.mubr.f32.gmra.mxu0 %v2372
      %v2543 = vpop.f32.mrf.mxu0
      %v2544 = vadd.f32 %v2223, %v2543
      %v2545 = vpop.f32.mrf.mxu0
      %2546 = vmatprep.mubr.f32.mxu0 0.0
      %2547 = vmatmul.mubr.f32.gmra.mxu0 %v2375
      %v2548 = vpop.f32.mrf.mxu0
      %v2549 = vadd.f32 %v2228, %v2548
      %v2550 = vpop.f32.mrf.mxu0
      %2551 = vmatprep.mubr.f32.mxu0 0.0
      %2552 = vmatmul.mubr.f32.gmra.mxu0 %v2378
      %v2553 = vpop.f32.mrf.mxu0
      %v2554 = vadd.f32 %v2233, %v2553
      %v2555 = vpop.f32.mrf.mxu0
      %2556 = vmatprep.mubr.f32.mxu0 0.0
      %2557 = vmatmul.mubr.f32.gmra.mxu0 %v2381
      %v2558 = vpop.f32.mrf.mxu0
      %v2559 = vadd.f32 %v2238, %v2558
      %v2560 = vpop.f32.mrf.mxu0
      %2561 = vmatprep.mubr.f32.mxu0 0.0
      %2562 = vmatmul.mubr.f32.gmra.mxu0 %v2384
      %v2563 = vpop.f32.mrf.mxu0
      %v2564 = vadd.f32 %v2243, %v2563
      %v2565 = vpop.f32.mrf.mxu0
      %2566 = vmatprep.mubr.f32.mxu0 0.0
      %2567 = vmatmul.mubr.f32.gmra.mxu0 %v2387
      %v2568 = vpop.f32.mrf.mxu0
      %v2569 = vadd.f32 %v2248, %v2568
      %v2570 = vpop.f32.mrf.mxu0
      %2571 = vmatprep.mubr.f32.mxu0 0.0
      %2572 = vmatmul.mubr.f32.gmra.mxu0 %v2390
      %v2573 = vpop.f32.mrf.mxu0
      %v2574 = vadd.f32 %v2253, %v2573
      %v2575 = vpop.f32.mrf.mxu0
      %2576 = vmatprep.mubr.f32.mxu0 0.0
      %2577 = vmatmul.mubr.f32.gmra.mxu0 %v2393
      %v2578 = vpop.f32.mrf.mxu0
      %v2579 = vadd.f32 %v2258, %v2578
      %v2580 = vpop.f32.mrf.mxu0
      %2581 = vmatprep.mubr.f32.mxu0 0.0
      %2582 = vmatmul.mubr.f32.gmra.mxu0 %v2396
      %v2583 = vpop.f32.mrf.mxu0
      %v2584 = vadd.f32 %v2263, %v2583
      %v2585 = vpop.f32.mrf.mxu0
      %2586 = vmatprep.mubr.f32.mxu0 0.0
      %2587 = vmatmul.mubr.f32.gmra.mxu0 %v2399
      %v2588 = vpop.f32.mrf.mxu0
      %v2589 = vadd.f32 %v2268, %v2588
      %v2590 = vpop.f32.mrf.mxu0
      %2591 = vmatprep.mubr.f32.mxu0 0.0
      %2592 = vmatmul.mubr.f32.gmra.mxu0 %v2402
      %v2593 = vpop.f32.mrf.mxu0
      %v2594 = vadd.f32 %v2273, %v2593
      %v2595 = vpop.f32.mrf.mxu0
      %2596 = vmatprep.mubr.f32.mxu0 0.0
      %2597 = vmatmul.mubr.f32.gmra.mxu0 %v2405
      %v2598 = vpop.f32.mrf.mxu0
      %v2599 = vadd.f32 %v2278, %v2598
      %v2600 = vpop.f32.mrf.mxu0
      %2601 = vmatprep.mubr.f32.mxu0 0.0
      %2602 = vmatmul.mubr.f32.gmra.mxu0 %v2408
      %v2603 = vpop.f32.mrf.mxu0
      %v2604 = vadd.f32 %v2283, %v2603
      %v2605 = vpop.f32.mrf.mxu0
      %2606 = vmatprep.mubr.f32.mxu0 0.0
      %2607 = vmatmul.mubr.f32.gmra.mxu0 %v2411
      %v2608 = vpop.f32.mrf.mxu0
      %v2609 = vadd.f32 %v2288, %v2608
      %v2610 = vpop.f32.mrf.mxu0
      %2611 = vmatprep.mubr.f32.mxu0 0.0
      %2612 = vmatmul.mubr.f32.gmra.mxu0 %v2414
      %v2613 = vpop.f32.mrf.mxu0
      %v2614 = vadd.f32 %v2293, %v2613
      %v2615 = vpop.f32.mrf.mxu0
      %2616 = vmatprep.mubr.f32.mxu0 0.0
      %2617 = vmatmul.mubr.f32.gmra.mxu0 %v2417
      %v2618 = vpop.f32.mrf.mxu0
      %v2619 = vadd.f32 %v2298, %v2618
      %v2620 = vpop.f32.mrf.mxu0
      %2621 = vmatprep.mubr.f32.mxu0 0.0
      %2622 = vmatmul.mubr.f32.gmra.mxu0 %v2420
      %v2623 = vpop.f32.mrf.mxu0
      %v2624 = vadd.f32 %v2303, %v2623
      %v2625 = vpop.f32.mrf.mxu0
      %2626 = vmatprep.mubr.f32.mxu0 0.0
      %2627 = vmatmul.mubr.f32.gmra.mxu0 %v2423
      %v2628 = vpop.f32.mrf.mxu0
      %v2629 = vadd.f32 %v2308, %v2628
      %v2630 = vpop.f32.mrf.mxu0
      %2631 = vmatprep.mubr.f32.mxu0 0.0
      %2632 = vmatmul.mubr.f32.gmra.mxu0 %v2426
      %v2633 = vpop.f32.mrf.mxu0
      %v2634 = vadd.f32 %v2313, %v2633
      %v2635 = vpop.f32.mrf.mxu0
      %2636 = vmatprep.mubr.f32.mxu0 0.0
      %2637 = vmatmul.mubr.f32.gmra.mxu0 %v2429
      %v2638 = vpop.f32.mrf.mxu0
      %v2639 = vadd.f32 %v2318, %v2638
      %v2640 = vpop.f32.mrf.mxu0
      %2641 = vmatprep.mubr.f32.mxu0 0.0
      %2642 = vmatmul.mubr.f32.gmra.mxu0 %v2432
      %v2643 = vpop.f32.mrf.mxu0
      %v2644 = vadd.f32 %v2323, %v2643
      %v2645 = vpop.f32.mrf.mxu0
      %2646 = vmatprep.mubr.f32.mxu0 0.0
      %2647 = vmatmul.mubr.f32.gmra.mxu0 %v2435
      %v2648 = vpop.f32.mrf.mxu0
      %v2649 = vadd.f32 %v2328, %v2648
      %v2650 = vpop.f32.mrf.mxu0
      %2651 = vmatprep.mubr.f32.mxu0 0.0
      %2652 = vmatmul.mubr.f32.gmra.mxu0 %v2438
      %v2653 = vpop.f32.mrf.mxu0
      %v2654 = vadd.f32 %v2333, %v2653
      %v2655 = vpop.f32.mrf.mxu0
      %2656 = vmatprep.mubr.f32.mxu0 0.0
      %2657 = vmatmul.mubr.f32.gmra.mxu0 %v2441
      %v2658 = vpop.f32.mrf.mxu0
      %v2659 = vadd.f32 %v2338, %v2658
      %v2660 = vpop.f32.mrf.mxu0
      %2661 = vmatprep.mubr.f32.mxu0 0.0
      %2662 = vmatmul.mubr.f32.gmra.mxu0 %v2444
      %v2663 = vpop.f32.mrf.mxu0
      %v2664 = vadd.f32 %v2343, %v2663
      %v2665 = vpop.f32.mrf.mxu0
      %2666 = vmatprep.mubr.f32.mxu0 0.0
      %2667 = vmatmul.mubr.f32.gmra.mxu0 %v2447
      %v2668 = vpop.f32.mrf.mxu0
      %v2669 = vadd.f32 %v2348, %v2668
      %v2670 = vpop.f32.mrf.mxu0
      %2671 = vmatprep.mubr.f32.mxu0 0.0
      %2672 = vmatmul.mubr.f32.gmra.mxu0 %v2450
      %v2673 = vpop.f32.mrf.mxu0
      %v2674 = vadd.f32 %v2353, %v2673
      %v2675 = vpop.f32.mrf.mxu0
      %2676 = vdwg.mxu0
      %v2677 = vld [vmem:[#allocation2 + $0x2] sm:$0xff]
      %v2678 = vld [vmem:[#allocation2 + $0xa] sm:$0xff]
      %v2679 = vld [vmem:[#allocation2 + $0x1a] sm:$0xff]
      %v2680 = vld [vmem:[#allocation2 + $0x22] sm:$0xff]
      %v2681 = vld [vmem:[#allocation2 + $0x32] sm:$0xff]
      %v2682 = vld [vmem:[#allocation2 + $0x3a] sm:$0xff]
      %v2683 = vld [vmem:[#allocation2 + $0x4a] sm:$0xff]
      %v2684 = vld [vmem:[#allocation2 + $0x52] sm:$0xff]
      %v2685 = vld [vmem:[#allocation2 + $0x62] sm:$0xff]
      %v2686 = vld [vmem:[#allocation2 + $0x6a] sm:$0xff]
      %v2687 = vld [vmem:[#allocation2 + $0x7a] sm:$0xff]
      %v2688 = vld [vmem:[#allocation2 + $0x82] sm:$0xff]
      %v2689 = vld [vmem:[#allocation2 + $0x92] sm:$0xff]
      %v2690 = vld [vmem:[#allocation2 + $0x9a] sm:$0xff]
      %v2691 = vld [vmem:[#allocation2 + $0xaa] sm:$0xff]
      %v2692 = vld [vmem:[#allocation2 + $0xb2] sm:$0xff]
      %v2693 = vld [vmem:[#allocation2 + $0xc2] sm:$0xff]
      %v2694 = vld [vmem:[#allocation2 + $0xca] sm:$0xff]
      %v2695 = vld [vmem:[#allocation2 + $0xda] sm:$0xff]
      %v2696 = vld [vmem:[#allocation2 + $0xe2] sm:$0xff]
      %v2697 = vld [vmem:[#allocation2 + $0xf2] sm:$0xff]
      %v2698 = vld [vmem:[#allocation2 + $0xfa] sm:$0xff]
      %v2699 = vld [vmem:[#allocation2 + $0x10a] sm:$0xff]
      %v2700 = vld [vmem:[#allocation2 + $0x112] sm:$0xff]
      %v2701 = vld [vmem:[#allocation2 + $0x122] sm:$0xff]
      %v2702 = vld [vmem:[#allocation2 + $0x12a] sm:$0xff]
      %v2703 = vld [vmem:[#allocation2 + $0x13a] sm:$0xff]
      %v2704 = vld [vmem:[#allocation2 + $0x142] sm:$0xff]
      %v2705 = vld [vmem:[#allocation2 + $0x152] sm:$0xff]
      %v2706 = vld [vmem:[#allocation2 + $0x15a] sm:$0xff]
      %v2707 = vld [vmem:[#allocation2 + $0x16a] sm:$0xff]
      %v2708 = vld [vmem:[#allocation2 + $0x172] sm:$0xff]
      %v2710 = vsel %vm939, %v2677, 0
      %v2713 = vsel %vm939, %v2678, 0
      %v2716 = vsel %vm939, %v2679, 0
      %v2719 = vsel %vm939, %v2680, 0
      %v2722 = vsel %vm939, %v2681, 0
      %v2725 = vsel %vm939, %v2682, 0
      %v2728 = vsel %vm939, %v2683, 0
      %v2731 = vsel %vm939, %v2684, 0
      %v2734 = vsel %vm939, %v2685, 0
      %v2737 = vsel %vm939, %v2686, 0
      %v2740 = vsel %vm939, %v2687, 0
      %v2743 = vsel %vm939, %v2688, 0
      %v2746 = vsel %vm939, %v2689, 0
      %v2749 = vsel %vm939, %v2690, 0
      %v2752 = vsel %vm939, %v2691, 0
      %v2755 = vsel %vm939, %v2692, 0
      %v2758 = vsel %vm939, %v2693, 0
      %v2761 = vsel %vm939, %v2694, 0
      %v2764 = vsel %vm939, %v2695, 0
      %v2767 = vsel %vm939, %v2696, 0
      %v2770 = vsel %vm939, %v2697, 0
      %v2773 = vsel %vm939, %v2698, 0
      %v2776 = vsel %vm939, %v2699, 0
      %v2779 = vsel %vm939, %v2700, 0
      %v2782 = vsel %vm939, %v2701, 0
      %v2785 = vsel %vm939, %v2702, 0
      %v2788 = vsel %vm939, %v2703, 0
      %v2791 = vsel %vm939, %v2704, 0
      %v2794 = vsel %vm939, %v2705, 0
      %v2797 = vsel %vm939, %v2706, 0
      %v2800 = vsel %vm939, %v2707, 0
      %v2803 = vsel %vm939, %v2708, 0
      %2805 = vmatprep.subr.mxu0 0.0
      %2806 = vmatpush1.msra.mxu0 0.0
      %2807 = vmatprep.subr.mxu0 0.0
      %2808 = vmatpush1.msra.mxu0 0.0
      %2809 = vmatprep.subr.mxu0 0.0
      %2810 = vmatpush1.msra.mxu0 0.0
      %2811 = vmatprep.subr.mxu0 0.0
      %2812 = vmatpush1.msra.mxu0 0.0
      %2813 = vmatprep.subr.mxu0 0.0
      %2814 = vmatpush1.msra.mxu0 0.0
      %2815 = vmatprep.subr.mxu0 0.0
      %2816 = vmatpush1.msra.mxu0 0.0
      %2817 = vmatprep.subr.mxu0 0.0
      %2818 = vmatpush1.msra.mxu0 0.0
      %2819 = vmatprep.subr.mxu0 0.0
      %2820 = vmatpush1.msra.mxu0 0.0
      %2821 = vmatprep.subr.mxu0 0.0
      %2822 = vmatpush1.msra.mxu0 0.0
      %2823 = vmatprep.subr.mxu0 0.0
      %2824 = vmatpush1.msra.mxu0 0.0
      %2825 = vmatprep.subr.mxu0 0.0
      %2826 = vmatpush1.msra.mxu0 0.0
      %2827 = vmatprep.subr.mxu0 0.0
      %2828 = vmatpush1.msra.mxu0 0.0
      %2829 = vmatprep.subr.mxu0 0.0
      %2830 = vmatpush1.msra.mxu0 %v1946
      %2831 = vmatprep.subr.mxu0 0.0
      %2832 = vmatpush1.msra.mxu0 %v1945
      %2833 = vmatprep.subr.mxu0 0.0
      %2834 = vmatpush1.msra.mxu0 %v1944
      %2835 = vmatprep.subr.mxu0 0.0
      %2836 = vmatpush1.msra.mxu0 %v1943
      %2837 = vmatprep.subr.mxu0 0.0
      %2838 = vmatpush2.msra.mxu0 0.0
      %2839 = vmatprep.subr.mxu0 0.0
      %2840 = vmatpush2.msra.mxu0 0.0
      %2841 = vmatprep.subr.mxu0 0.0
      %2842 = vmatpush2.msra.mxu0 0.0
      %2843 = vmatprep.subr.mxu0 0.0
      %2844 = vmatpush2.msra.mxu0 0.0
      %2845 = vmatprep.subr.mxu0 0.0
      %2846 = vmatpush2.msra.mxu0 0.0
      %2847 = vmatprep.subr.mxu0 0.0
      %2848 = vmatpush2.msra.mxu0 0.0
      %2849 = vmatprep.subr.mxu0 0.0
      %2850 = vmatpush2.msra.mxu0 0.0
      %2851 = vmatprep.subr.mxu0 0.0
      %2852 = vmatpush2.msra.mxu0 0.0
      %2853 = vmatprep.subr.mxu0 0.0
      %2854 = vmatpush2.msra.mxu0 0.0
      %2855 = vmatprep.subr.mxu0 0.0
      %2856 = vmatpush2.msra.mxu0 0.0
      %2857 = vmatprep.subr.mxu0 0.0
      %2858 = vmatpush2.msra.mxu0 0.0
      %2859 = vmatprep.subr.mxu0 0.0
      %2860 = vmatpush2.msra.mxu0 0.0
      %2861 = vmatprep.subr.mxu0 0.0
      %2862 = vmatpush2.msra.mxu0 0.0
      %2863 = vmatprep.subr.mxu0 0.0
      %2864 = vmatpush2.msra.mxu0 0.0
      %2865 = vmatprep.subr.mxu0 0.0
      %2866 = vmatpush2.msra.mxu0 0.0
      %2867 = vmatprep.subr.mxu0 0.0
      %2868 = vmatpush2.msra.mxu0 0.0
      %2869 = vmatprep.mubr.f32.mxu0 0.0
      %2870 = vmatmul.mubr.f32.gmra.mxu0 %v2710
      %v2871 = vpop.f32.mrf.mxu0
      %v2872 = vadd.f32 0.0, %v2871
      %v2873 = vpop.f32.mrf.mxu0
      %2874 = vmatprep.mubr.f32.mxu0 0.0
      %2875 = vmatmul.mubr.f32.gmra.mxu0 %v2713
      %v2876 = vpop.f32.mrf.mxu0
      %v2877 = vadd.f32 0.0, %v2876
      %v2878 = vpop.f32.mrf.mxu0
      %2879 = vmatprep.mubr.f32.mxu0 0.0
      %2880 = vmatmul.mubr.f32.gmra.mxu0 %v2716
      %v2881 = vpop.f32.mrf.mxu0
      %v2882 = vadd.f32 0.0, %v2881
      %v2883 = vpop.f32.mrf.mxu0
      %2884 = vmatprep.mubr.f32.mxu0 0.0
      %2885 = vmatmul.mubr.f32.gmra.mxu0 %v2719
      %v2886 = vpop.f32.mrf.mxu0
      %v2887 = vadd.f32 0.0, %v2886
      %v2888 = vpop.f32.mrf.mxu0
      %2889 = vmatprep.mubr.f32.mxu0 0.0
      %2890 = vmatmul.mubr.f32.gmra.mxu0 %v2722
      %v2891 = vpop.f32.mrf.mxu0
      %v2892 = vadd.f32 0.0, %v2891
      %v2893 = vpop.f32.mrf.mxu0
      %2894 = vmatprep.mubr.f32.mxu0 0.0
      %2895 = vmatmul.mubr.f32.gmra.mxu0 %v2725
      %v2896 = vpop.f32.mrf.mxu0
      %v2897 = vadd.f32 0.0, %v2896
      %v2898 = vpop.f32.mrf.mxu0
      %2899 = vmatprep.mubr.f32.mxu0 0.0
      %2900 = vmatmul.mubr.f32.gmra.mxu0 %v2728
      %v2901 = vpop.f32.mrf.mxu0
      %v2902 = vadd.f32 0.0, %v2901
      %v2903 = vpop.f32.mrf.mxu0
      %2904 = vmatprep.mubr.f32.mxu0 0.0
      %2905 = vmatmul.mubr.f32.gmra.mxu0 %v2731
      %v2906 = vpop.f32.mrf.mxu0
      %v2907 = vadd.f32 0.0, %v2906
      %v2908 = vpop.f32.mrf.mxu0
      %2909 = vmatprep.mubr.f32.mxu0 0.0
      %2910 = vmatmul.mubr.f32.gmra.mxu0 %v2734
      %v2911 = vpop.f32.mrf.mxu0
      %v2912 = vadd.f32 0.0, %v2911
      %v2913 = vpop.f32.mrf.mxu0
      %2914 = vmatprep.mubr.f32.mxu0 0.0
      %2915 = vmatmul.mubr.f32.gmra.mxu0 %v2737
      %v2916 = vpop.f32.mrf.mxu0
      %v2917 = vadd.f32 0.0, %v2916
      %v2918 = vpop.f32.mrf.mxu0
      %2919 = vmatprep.mubr.f32.mxu0 0.0
      %2920 = vmatmul.mubr.f32.gmra.mxu0 %v2740
      %v2921 = vpop.f32.mrf.mxu0
      %v2922 = vadd.f32 0.0, %v2921
      %v2923 = vpop.f32.mrf.mxu0
      %2924 = vmatprep.mubr.f32.mxu0 0.0
      %2925 = vmatmul.mubr.f32.gmra.mxu0 %v2743
      %v2926 = vpop.f32.mrf.mxu0
      %v2927 = vadd.f32 0.0, %v2926
      %v2928 = vpop.f32.mrf.mxu0
      %2929 = vmatprep.mubr.f32.mxu0 0.0
      %2930 = vmatmul.mubr.f32.gmra.mxu0 %v2746
      %v2931 = vpop.f32.mrf.mxu0
      %v2932 = vadd.f32 0.0, %v2931
      %v2933 = vpop.f32.mrf.mxu0
      %2934 = vmatprep.mubr.f32.mxu0 0.0
      %2935 = vmatmul.mubr.f32.gmra.mxu0 %v2749
      %v2936 = vpop.f32.mrf.mxu0
      %v2937 = vadd.f32 0.0, %v2936
      %v2938 = vpop.f32.mrf.mxu0
      %2939 = vmatprep.mubr.f32.mxu0 0.0
      %2940 = vmatmul.mubr.f32.gmra.mxu0 %v2752
      %v2941 = vpop.f32.mrf.mxu0
      %v2942 = vadd.f32 0.0, %v2941
      %v2943 = vpop.f32.mrf.mxu0
      %2944 = vmatprep.mubr.f32.mxu0 0.0
      %2945 = vmatmul.mubr.f32.gmra.mxu0 %v2755
      %v2946 = vpop.f32.mrf.mxu0
      %v2947 = vadd.f32 0.0, %v2946
      %v2948 = vpop.f32.mrf.mxu0
      %2949 = vmatprep.mubr.f32.mxu0 0.0
      %2950 = vmatmul.mubr.f32.gmra.mxu0 %v2758
      %v2951 = vpop.f32.mrf.mxu0
      %v2952 = vadd.f32 0.0, %v2951
      %v2953 = vpop.f32.mrf.mxu0
      %2954 = vmatprep.mubr.f32.mxu0 0.0
      %2955 = vmatmul.mubr.f32.gmra.mxu0 %v2761
      %v2956 = vpop.f32.mrf.mxu0
      %v2957 = vadd.f32 0.0, %v2956
      %v2958 = vpop.f32.mrf.mxu0
      %2959 = vmatprep.mubr.f32.mxu0 0.0
      %2960 = vmatmul.mubr.f32.gmra.mxu0 %v2764
      %v2961 = vpop.f32.mrf.mxu0
      %v2962 = vadd.f32 0.0, %v2961
      %v2963 = vpop.f32.mrf.mxu0
      %2964 = vmatprep.mubr.f32.mxu0 0.0
      %2965 = vmatmul.mubr.f32.gmra.mxu0 %v2767
      %v2966 = vpop.f32.mrf.mxu0
      %v2967 = vadd.f32 0.0, %v2966
      %v2968 = vpop.f32.mrf.mxu0
      %2969 = vmatprep.mubr.f32.mxu0 0.0
      %2970 = vmatmul.mubr.f32.gmra.mxu0 %v2770
      %v2971 = vpop.f32.mrf.mxu0
      %v2972 = vadd.f32 0.0, %v2971
      %v2973 = vpop.f32.mrf.mxu0
      %2974 = vmatprep.mubr.f32.mxu0 0.0
      %2975 = vmatmul.mubr.f32.gmra.mxu0 %v2773
      %v2976 = vpop.f32.mrf.mxu0
      %v2977 = vadd.f32 0.0, %v2976
      %v2978 = vpop.f32.mrf.mxu0
      %2979 = vmatprep.mubr.f32.mxu0 0.0
      %2980 = vmatmul.mubr.f32.gmra.mxu0 %v2776
      %v2981 = vpop.f32.mrf.mxu0
      %v2982 = vadd.f32 0.0, %v2981
      %v2983 = vpop.f32.mrf.mxu0
      %2984 = vmatprep.mubr.f32.mxu0 0.0
      %2985 = vmatmul.mubr.f32.gmra.mxu0 %v2779
      %v2986 = vpop.f32.mrf.mxu0
      %v2987 = vadd.f32 0.0, %v2986
      %v2988 = vpop.f32.mrf.mxu0
      %2989 = vmatprep.mubr.f32.mxu0 0.0
      %2990 = vmatmul.mubr.f32.gmra.mxu0 %v2782
      %v2991 = vpop.f32.mrf.mxu0
      %v2992 = vadd.f32 0.0, %v2991
      %v2993 = vpop.f32.mrf.mxu0
      %2994 = vmatprep.mubr.f32.mxu0 0.0
      %2995 = vmatmul.mubr.f32.gmra.mxu0 %v2785
      %v2996 = vpop.f32.mrf.mxu0
      %v2997 = vadd.f32 0.0, %v2996
      %v2998 = vpop.f32.mrf.mxu0
      %2999 = vmatprep.mubr.f32.mxu0 0.0
      %3000 = vmatmul.mubr.f32.gmra.mxu0 %v2788
      %v3001 = vpop.f32.mrf.mxu0
      %v3002 = vadd.f32 0.0, %v3001
      %v3003 = vpop.f32.mrf.mxu0
      %3004 = vmatprep.mubr.f32.mxu0 0.0
      %3005 = vmatmul.mubr.f32.gmra.mxu0 %v2791
      %v3006 = vpop.f32.mrf.mxu0
      %v3007 = vadd.f32 0.0, %v3006
      %v3008 = vpop.f32.mrf.mxu0
      %3009 = vmatprep.mubr.f32.mxu0 0.0
      %3010 = vmatmul.mubr.f32.gmra.mxu0 %v2794
      %v3011 = vpop.f32.mrf.mxu0
      %v3012 = vadd.f32 0.0, %v3011
      %v3013 = vpop.f32.mrf.mxu0
      %3014 = vmatprep.mubr.f32.mxu0 0.0
      %3015 = vmatmul.mubr.f32.gmra.mxu0 %v2797
      %v3016 = vpop.f32.mrf.mxu0
      %v3017 = vadd.f32 0.0, %v3016
      %v3018 = vpop.f32.mrf.mxu0
      %3019 = vmatprep.mubr.f32.mxu0 0.0
      %3020 = vmatmul.mubr.f32.gmra.mxu0 %v2800
      %v3021 = vpop.f32.mrf.mxu0
      %v3022 = vadd.f32 0.0, %v3021
      %v3023 = vpop.f32.mrf.mxu0
      %3024 = vmatprep.mubr.f32.mxu0 0.0
      %3025 = vmatmul.mubr.f32.gmra.mxu0 %v2803
      %v3026 = vpop.f32.mrf.mxu0
      %v3027 = vadd.f32 0.0, %v3026
      %v3028 = vpop.f32.mrf.mxu0
      %3029 = vdwg.mxu0
      %v3030 = vadd.f32 %v2519, %v2872
      %v3031 = vadd.f32 %v2524, %v2877
      %v3032 = vadd.f32 %v2529, %v2882
      %v3033 = vadd.f32 %v2534, %v2887
      %v3034 = vadd.f32 %v2539, %v2892
      %v3035 = vadd.f32 %v2544, %v2897
      %v3036 = vadd.f32 %v2549, %v2902
      %v3037 = vadd.f32 %v2554, %v2907
      %v3038 = vadd.f32 %v2559, %v2912
      %v3039 = vadd.f32 %v2564, %v2917
      %v3040 = vadd.f32 %v2569, %v2922
      %v3041 = vadd.f32 %v2574, %v2927
      %v3042 = vadd.f32 %v2579, %v2932
      %v3043 = vadd.f32 %v2584, %v2937
      %v3044 = vadd.f32 %v2589, %v2942
      %v3045 = vadd.f32 %v2594, %v2947
      %v3046 = vadd.f32 %v2599, %v2952
      %v3047 = vadd.f32 %v2604, %v2957
      %v3048 = vadd.f32 %v2609, %v2962
      %v3049 = vadd.f32 %v2614, %v2967
      %v3050 = vadd.f32 %v2619, %v2972
      %v3051 = vadd.f32 %v2624, %v2977
      %v3052 = vadd.f32 %v2629, %v2982
      %v3053 = vadd.f32 %v2634, %v2987
      %v3054 = vadd.f32 %v2639, %v2992
      %v3055 = vadd.f32 %v2644, %v2997
      %v3056 = vadd.f32 %v2649, %v3002
      %v3057 = vadd.f32 %v2654, %v3007
      %v3058 = vadd.f32 %v2659, %v3012
      %v3059 = vadd.f32 %v2664, %v3017
      %v3060 = vadd.f32 %v2669, %v3022
      %v3061 = vadd.f32 %v2674, %v3027
      %v3062 = vld [vmem:[%s1902] sm:$0xff]
      %v3063 = vld [vmem:[%s1902 + $0x8] sm:$0xff]
      %v3064 = vld [vmem:[%s1902 + $0x18] sm:$0xff]
      %v3065 = vld [vmem:[%s1902 + $0x20] sm:$0xff]
      %v3066 = vld [vmem:[%s1902 + $0x30] sm:$0xff]
      %v3067 = vld [vmem:[%s1902 + $0x38] sm:$0xff]
      %v3068 = vld [vmem:[%s1902 + $0x48] sm:$0xff]
      %v3069 = vld [vmem:[%s1902 + $0x50] sm:$0xff]
      %v3070 = vld [vmem:[%s1902 + $0x60] sm:$0xff]
      %v3071 = vld [vmem:[%s1902 + $0x68] sm:$0xff]
      %v3072 = vld [vmem:[%s1902 + $0x78] sm:$0xff]
      %v3073 = vld [vmem:[%s1902 + $0x80] sm:$0xff]
      %v3074 = vld [vmem:[%s1902 + $0x90] sm:$0xff]
      %v3075 = vld [vmem:[%s1902 + $0x98] sm:$0xff]
      %v3076 = vld [vmem:[%s1902 + $0xa8] sm:$0xff]
      %v3077 = vld [vmem:[%s1902 + $0xb0] sm:$0xff]
      %v3078 = vld [vmem:[%s1902 + $0xc0] sm:$0xff]
      %v3079 = vld [vmem:[%s1902 + $0xc8] sm:$0xff]
      %v3080 = vld [vmem:[%s1902 + $0xd8] sm:$0xff]
      %v3081 = vld [vmem:[%s1902 + $0xe0] sm:$0xff]
      %v3082 = vld [vmem:[%s1902 + $0xf0] sm:$0xff]
      %v3083 = vld [vmem:[%s1902 + $0xf8] sm:$0xff]
      %v3084 = vld [vmem:[%s1902 + $0x108] sm:$0xff]
      %v3085 = vld [vmem:[%s1902 + $0x110] sm:$0xff]
      %v3086 = vld [vmem:[%s1902 + $0x120] sm:$0xff]
      %v3087 = vld [vmem:[%s1902 + $0x128] sm:$0xff]
      %v3088 = vld [vmem:[%s1902 + $0x138] sm:$0xff]
      %v3089 = vld [vmem:[%s1902 + $0x140] sm:$0xff]
      %v3090 = vld [vmem:[%s1902 + $0x150] sm:$0xff]
      %v3091 = vld [vmem:[%s1902 + $0x158] sm:$0xff]
      %v3092 = vld [vmem:[%s1902 + $0x168] sm:$0xff]
      %v3093 = vld [vmem:[%s1902 + $0x170] sm:$0xff]
      %v3095 = vsel %vm939, %v3062, 0
      %v3098 = vsel %vm939, %v3063, 0
      %v3101 = vsel %vm939, %v3064, 0
      %v3104 = vsel %vm939, %v3065, 0
      %v3107 = vsel %vm939, %v3066, 0
      %v3110 = vsel %vm939, %v3067, 0
      %v3113 = vsel %vm939, %v3068, 0
      %v3116 = vsel %vm939, %v3069, 0
      %v3119 = vsel %vm939, %v3070, 0
      %v3122 = vsel %vm939, %v3071, 0
      %v3125 = vsel %vm939, %v3072, 0
      %v3128 = vsel %vm939, %v3073, 0
      %v3131 = vsel %vm939, %v3074, 0
      %v3134 = vsel %vm939, %v3075, 0
      %v3137 = vsel %vm939, %v3076, 0
      %v3140 = vsel %vm939, %v3077, 0
      %v3143 = vsel %vm939, %v3078, 0
      %v3146 = vsel %vm939, %v3079, 0
      %v3149 = vsel %vm939, %v3080, 0
      %v3152 = vsel %vm939, %v3081, 0
      %v3155 = vsel %vm939, %v3082, 0
      %v3158 = vsel %vm939, %v3083, 0
      %v3161 = vsel %vm939, %v3084, 0
      %v3164 = vsel %vm939, %v3085, 0
      %v3167 = vsel %vm939, %v3086, 0
      %v3170 = vsel %vm939, %v3087, 0
      %v3173 = vsel %vm939, %v3088, 0
      %v3176 = vsel %vm939, %v3089, 0
      %v3179 = vsel %vm939, %v3090, 0
      %v3182 = vsel %vm939, %v3091, 0
      %v3185 = vsel %vm939, %v3092, 0
      %v3188 = vsel %vm939, %v3093, 0
      %3190 = vmatprep.subr.mxu0 0.0
      %3191 = vmatpush1.msra.mxu0 0.0
      %3192 = vmatprep.subr.mxu0 0.0
      %3193 = vmatpush1.msra.mxu0 0.0
      %3194 = vmatprep.subr.mxu0 0.0
      %3195 = vmatpush1.msra.mxu0 0.0
      %3196 = vmatprep.subr.mxu0 0.0
      %3197 = vmatpush1.msra.mxu0 0.0
      %3198 = vmatprep.subr.mxu0 0.0
      %3199 = vmatpush1.msra.mxu0 0.0
      %3200 = vmatprep.subr.mxu0 0.0
      %3201 = vmatpush1.msra.mxu0 0.0
      %3202 = vmatprep.subr.mxu0 0.0
      %3203 = vmatpush1.msra.mxu0 0.0
      %3204 = vmatprep.subr.mxu0 0.0
      %3205 = vmatpush1.msra.mxu0 0.0
      %3206 = vmatprep.subr.mxu0 0.0
      %3207 = vmatpush1.msra.mxu0 0.0
      %3208 = vmatprep.subr.mxu0 0.0
      %3209 = vmatpush1.msra.mxu0 0.0
      %3210 = vmatprep.subr.mxu0 0.0
      %3211 = vmatpush1.msra.mxu0 0.0
      %3212 = vmatprep.subr.mxu0 0.0
      %3213 = vmatpush1.msra.mxu0 0.0
      %3214 = vmatprep.subr.mxu0 0.0
      %3215 = vmatpush1.msra.mxu0 %v1950
      %3216 = vmatprep.subr.mxu0 0.0
      %3217 = vmatpush1.msra.mxu0 %v1949
      %3218 = vmatprep.subr.mxu0 0.0
      %3219 = vmatpush1.msra.mxu0 %v1948
      %3220 = vmatprep.subr.mxu0 0.0
      %3221 = vmatpush1.msra.mxu0 %v1947
      %3222 = vmatprep.subr.mxu0 0.0
      %3223 = vmatpush2.msra.mxu0 0.0
      %3224 = vmatprep.subr.mxu0 0.0
      %3225 = vmatpush2.msra.mxu0 0.0
      %3226 = vmatprep.subr.mxu0 0.0
      %3227 = vmatpush2.msra.mxu0 0.0
      %3228 = vmatprep.subr.mxu0 0.0
      %3229 = vmatpush2.msra.mxu0 0.0
      %3230 = vmatprep.subr.mxu0 0.0
      %3231 = vmatpush2.msra.mxu0 0.0
      %3232 = vmatprep.subr.mxu0 0.0
      %3233 = vmatpush2.msra.mxu0 0.0
      %3234 = vmatprep.subr.mxu0 0.0
      %3235 = vmatpush2.msra.mxu0 0.0
      %3236 = vmatprep.subr.mxu0 0.0
      %3237 = vmatpush2.msra.mxu0 0.0
      %3238 = vmatprep.subr.mxu0 0.0
      %3239 = vmatpush2.msra.mxu0 0.0
      %3240 = vmatprep.subr.mxu0 0.0
      %3241 = vmatpush2.msra.mxu0 0.0
      %3242 = vmatprep.subr.mxu0 0.0
      %3243 = vmatpush2.msra.mxu0 0.0
      %3244 = vmatprep.subr.mxu0 0.0
      %3245 = vmatpush2.msra.mxu0 0.0
      %3246 = vmatprep.subr.mxu0 0.0
      %3247 = vmatpush2.msra.mxu0 0.0
      %3248 = vmatprep.subr.mxu0 0.0
      %3249 = vmatpush2.msra.mxu0 0.0
      %3250 = vmatprep.subr.mxu0 0.0
      %3251 = vmatpush2.msra.mxu0 0.0
      %3252 = vmatprep.subr.mxu0 0.0
      %3253 = vmatpush2.msra.mxu0 0.0
      %3254 = vmatprep.mubr.f32.mxu0 0.0
      %3255 = vmatmul.mubr.f32.gmra.mxu0 %v3095
      %v3256 = vpop.f32.mrf.mxu0
      %v3257 = vadd.f32 0.0, %v3256
      %v3258 = vpop.f32.mrf.mxu0
      %3259 = vmatprep.mubr.f32.mxu0 0.0
      %3260 = vmatmul.mubr.f32.gmra.mxu0 %v3098
      %v3261 = vpop.f32.mrf.mxu0
      %v3262 = vadd.f32 0.0, %v3261
      %v3263 = vpop.f32.mrf.mxu0
      %3264 = vmatprep.mubr.f32.mxu0 0.0
      %3265 = vmatmul.mubr.f32.gmra.mxu0 %v3101
      %v3266 = vpop.f32.mrf.mxu0
      %v3267 = vadd.f32 0.0, %v3266
      %v3268 = vpop.f32.mrf.mxu0
      %3269 = vmatprep.mubr.f32.mxu0 0.0
      %3270 = vmatmul.mubr.f32.gmra.mxu0 %v3104
      %v3271 = vpop.f32.mrf.mxu0
      %v3272 = vadd.f32 0.0, %v3271
      %v3273 = vpop.f32.mrf.mxu0
      %3274 = vmatprep.mubr.f32.mxu0 0.0
      %3275 = vmatmul.mubr.f32.gmra.mxu0 %v3107
      %v3276 = vpop.f32.mrf.mxu0
      %v3277 = vadd.f32 0.0, %v3276
      %v3278 = vpop.f32.mrf.mxu0
      %3279 = vmatprep.mubr.f32.mxu0 0.0
      %3280 = vmatmul.mubr.f32.gmra.mxu0 %v3110
      %v3281 = vpop.f32.mrf.mxu0
      %v3282 = vadd.f32 0.0, %v3281
      %v3283 = vpop.f32.mrf.mxu0
      %3284 = vmatprep.mubr.f32.mxu0 0.0
      %3285 = vmatmul.mubr.f32.gmra.mxu0 %v3113
      %v3286 = vpop.f32.mrf.mxu0
      %v3287 = vadd.f32 0.0, %v3286
      %v3288 = vpop.f32.mrf.mxu0
      %3289 = vmatprep.mubr.f32.mxu0 0.0
      %3290 = vmatmul.mubr.f32.gmra.mxu0 %v3116
      %v3291 = vpop.f32.mrf.mxu0
      %v3292 = vadd.f32 0.0, %v3291
      %v3293 = vpop.f32.mrf.mxu0
      %3294 = vmatprep.mubr.f32.mxu0 0.0
      %3295 = vmatmul.mubr.f32.gmra.mxu0 %v3119
      %v3296 = vpop.f32.mrf.mxu0
      %v3297 = vadd.f32 0.0, %v3296
      %v3298 = vpop.f32.mrf.mxu0
      %3299 = vmatprep.mubr.f32.mxu0 0.0
      %3300 = vmatmul.mubr.f32.gmra.mxu0 %v3122
      %v3301 = vpop.f32.mrf.mxu0
      %v3302 = vadd.f32 0.0, %v3301
      %v3303 = vpop.f32.mrf.mxu0
      %3304 = vmatprep.mubr.f32.mxu0 0.0
      %3305 = vmatmul.mubr.f32.gmra.mxu0 %v3125
      %v3306 = vpop.f32.mrf.mxu0
      %v3307 = vadd.f32 0.0, %v3306
      %v3308 = vpop.f32.mrf.mxu0
      %3309 = vmatprep.mubr.f32.mxu0 0.0
      %3310 = vmatmul.mubr.f32.gmra.mxu0 %v3128
      %v3311 = vpop.f32.mrf.mxu0
      %v3312 = vadd.f32 0.0, %v3311
      %v3313 = vpop.f32.mrf.mxu0
      %3314 = vmatprep.mubr.f32.mxu0 0.0
      %3315 = vmatmul.mubr.f32.gmra.mxu0 %v3131
      %v3316 = vpop.f32.mrf.mxu0
      %v3317 = vadd.f32 0.0, %v3316
      %v3318 = vpop.f32.mrf.mxu0
      %3319 = vmatprep.mubr.f32.mxu0 0.0
      %3320 = vmatmul.mubr.f32.gmra.mxu0 %v3134
      %v3321 = vpop.f32.mrf.mxu0
      %v3322 = vadd.f32 0.0, %v3321
      %v3323 = vpop.f32.mrf.mxu0
      %3324 = vmatprep.mubr.f32.mxu0 0.0
      %3325 = vmatmul.mubr.f32.gmra.mxu0 %v3137
      %v3326 = vpop.f32.mrf.mxu0
      %v3327 = vadd.f32 0.0, %v3326
      %v3328 = vpop.f32.mrf.mxu0
      %3329 = vmatprep.mubr.f32.mxu0 0.0
      %3330 = vmatmul.mubr.f32.gmra.mxu0 %v3140
      %v3331 = vpop.f32.mrf.mxu0
      %v3332 = vadd.f32 0.0, %v3331
      %v3333 = vpop.f32.mrf.mxu0
      %3334 = vmatprep.mubr.f32.mxu0 0.0
      %3335 = vmatmul.mubr.f32.gmra.mxu0 %v3143
      %v3336 = vpop.f32.mrf.mxu0
      %v3337 = vadd.f32 0.0, %v3336
      %v3338 = vpop.f32.mrf.mxu0
      %3339 = vmatprep.mubr.f32.mxu0 0.0
      %3340 = vmatmul.mubr.f32.gmra.mxu0 %v3146
      %v3341 = vpop.f32.mrf.mxu0
      %v3342 = vadd.f32 0.0, %v3341
      %v3343 = vpop.f32.mrf.mxu0
      %3344 = vmatprep.mubr.f32.mxu0 0.0
      %3345 = vmatmul.mubr.f32.gmra.mxu0 %v3149
      %v3346 = vpop.f32.mrf.mxu0
      %v3347 = vadd.f32 0.0, %v3346
      %v3348 = vpop.f32.mrf.mxu0
      %3349 = vmatprep.mubr.f32.mxu0 0.0
      %3350 = vmatmul.mubr.f32.gmra.mxu0 %v3152
      %v3351 = vpop.f32.mrf.mxu0
      %v3352 = vadd.f32 0.0, %v3351
      %v3353 = vpop.f32.mrf.mxu0
      %3354 = vmatprep.mubr.f32.mxu0 0.0
      %3355 = vmatmul.mubr.f32.gmra.mxu0 %v3155
      %v3356 = vpop.f32.mrf.mxu0
      %v3357 = vadd.f32 0.0, %v3356
      %v3358 = vpop.f32.mrf.mxu0
      %3359 = vmatprep.mubr.f32.mxu0 0.0
      %3360 = vmatmul.mubr.f32.gmra.mxu0 %v3158
      %v3361 = vpop.f32.mrf.mxu0
      %v3362 = vadd.f32 0.0, %v3361
      %v3363 = vpop.f32.mrf.mxu0
      %3364 = vmatprep.mubr.f32.mxu0 0.0
      %3365 = vmatmul.mubr.f32.gmra.mxu0 %v3161
      %v3366 = vpop.f32.mrf.mxu0
      %v3367 = vadd.f32 0.0, %v3366
      %v3368 = vpop.f32.mrf.mxu0
      %3369 = vmatprep.mubr.f32.mxu0 0.0
      %3370 = vmatmul.mubr.f32.gmra.mxu0 %v3164
      %v3371 = vpop.f32.mrf.mxu0
      %v3372 = vadd.f32 0.0, %v3371
      %v3373 = vpop.f32.mrf.mxu0
      %3374 = vmatprep.mubr.f32.mxu0 0.0
      %3375 = vmatmul.mubr.f32.gmra.mxu0 %v3167
      %v3376 = vpop.f32.mrf.mxu0
      %v3377 = vadd.f32 0.0, %v3376
      %v3378 = vpop.f32.mrf.mxu0
      %3379 = vmatprep.mubr.f32.mxu0 0.0
      %3380 = vmatmul.mubr.f32.gmra.mxu0 %v3170
      %v3381 = vpop.f32.mrf.mxu0
      %v3382 = vadd.f32 0.0, %v3381
      %v3383 = vpop.f32.mrf.mxu0
      %3384 = vmatprep.mubr.f32.mxu0 0.0
      %3385 = vmatmul.mubr.f32.gmra.mxu0 %v3173
      %v3386 = vpop.f32.mrf.mxu0
      %v3387 = vadd.f32 0.0, %v3386
      %v3388 = vpop.f32.mrf.mxu0
      %3389 = vmatprep.mubr.f32.mxu0 0.0
      %3390 = vmatmul.mubr.f32.gmra.mxu0 %v3176
      %v3391 = vpop.f32.mrf.mxu0
      %v3392 = vadd.f32 0.0, %v3391
      %v3393 = vpop.f32.mrf.mxu0
      %3394 = vmatprep.mubr.f32.mxu0 0.0
      %3395 = vmatmul.mubr.f32.gmra.mxu0 %v3179
      %v3396 = vpop.f32.mrf.mxu0
      %v3397 = vadd.f32 0.0, %v3396
      %v3398 = vpop.f32.mrf.mxu0
      %3399 = vmatprep.mubr.f32.mxu0 0.0
      %3400 = vmatmul.mubr.f32.gmra.mxu0 %v3182
      %v3401 = vpop.f32.mrf.mxu0
      %v3402 = vadd.f32 0.0, %v3401
      %v3403 = vpop.f32.mrf.mxu0
      %3404 = vmatprep.mubr.f32.mxu0 0.0
      %3405 = vmatmul.mubr.f32.gmra.mxu0 %v3185
      %v3406 = vpop.f32.mrf.mxu0
      %v3407 = vadd.f32 0.0, %v3406
      %v3408 = vpop.f32.mrf.mxu0
      %3409 = vmatprep.mubr.f32.mxu0 0.0
      %3410 = vmatmul.mubr.f32.gmra.mxu0 %v3188
      %v3411 = vpop.f32.mrf.mxu0
      %v3412 = vadd.f32 0.0, %v3411
      %v3413 = vpop.f32.mrf.mxu0
      %3414 = vdwg.mxu0
      %v3415 = vadd.f32 %v3030, %v3257
      %v3416 = vadd.f32 %v3031, %v3262
      %v3417 = vadd.f32 %v3032, %v3267
      %v3418 = vadd.f32 %v3033, %v3272
      %v3419 = vadd.f32 %v3034, %v3277
      %v3420 = vadd.f32 %v3035, %v3282
      %v3421 = vadd.f32 %v3036, %v3287
      %v3422 = vadd.f32 %v3037, %v3292
      %v3423 = vadd.f32 %v3038, %v3297
      %v3424 = vadd.f32 %v3039, %v3302
      %v3425 = vadd.f32 %v3040, %v3307
      %v3426 = vadd.f32 %v3041, %v3312
      %v3427 = vadd.f32 %v3042, %v3317
      %v3428 = vadd.f32 %v3043, %v3322
      %v3429 = vadd.f32 %v3044, %v3327
      %v3430 = vadd.f32 %v3045, %v3332
      %v3431 = vadd.f32 %v3046, %v3337
      %v3432 = vadd.f32 %v3047, %v3342
      %v3433 = vadd.f32 %v3048, %v3347
      %v3434 = vadd.f32 %v3049, %v3352
      %v3435 = vadd.f32 %v3050, %v3357
      %v3436 = vadd.f32 %v3051, %v3362
      %v3437 = vadd.f32 %v3052, %v3367
      %v3438 = vadd.f32 %v3053, %v3372
      %v3439 = vadd.f32 %v3054, %v3377
      %v3440 = vadd.f32 %v3055, %v3382
      %v3441 = vadd.f32 %v3056, %v3387
      %v3442 = vadd.f32 %v3057, %v3392
      %v3443 = vadd.f32 %v3058, %v3397
      %v3444 = vadd.f32 %v3059, %v3402
      %v3445 = vadd.f32 %v3060, %v3407
      %v3446 = vadd.f32 %v3061, %v3412
      %v3447 = vld [vmem:[%s1902 + $0x1] sm:$0xff]
      %v3448 = vld [vmem:[%s1902 + $0x9] sm:$0xff]
      %v3449 = vld [vmem:[%s1902 + $0x19] sm:$0xff]
      %v3450 = vld [vmem:[%s1902 + $0x21] sm:$0xff]
      %v3451 = vld [vmem:[%s1902 + $0x31] sm:$0xff]
      %v3452 = vld [vmem:[%s1902 + $0x39] sm:$0xff]
      %v3453 = vld [vmem:[%s1902 + $0x49] sm:$0xff]
      %v3454 = vld [vmem:[%s1902 + $0x51] sm:$0xff]
      %v3455 = vld [vmem:[%s1902 + $0x61] sm:$0xff]
      %v3456 = vld [vmem:[%s1902 + $0x69] sm:$0xff]
      %v3457 = vld [vmem:[%s1902 + $0x79] sm:$0xff]
      %v3458 = vld [vmem:[%s1902 + $0x81] sm:$0xff]
      %v3459 = vld [vmem:[%s1902 + $0x91] sm:$0xff]
      %v3460 = vld [vmem:[%s1902 + $0x99] sm:$0xff]
      %v3461 = vld [vmem:[%s1902 + $0xa9] sm:$0xff]
      %v3462 = vld [vmem:[%s1902 + $0xb1] sm:$0xff]
      %v3463 = vld [vmem:[%s1902 + $0xc1] sm:$0xff]
      %v3464 = vld [vmem:[%s1902 + $0xc9] sm:$0xff]
      %v3465 = vld [vmem:[%s1902 + $0xd9] sm:$0xff]
      %v3466 = vld [vmem:[%s1902 + $0xe1] sm:$0xff]
      %v3467 = vld [vmem:[%s1902 + $0xf1] sm:$0xff]
      %v3468 = vld [vmem:[%s1902 + $0xf9] sm:$0xff]
      %v3469 = vld [vmem:[%s1902 + $0x109] sm:$0xff]
      %v3470 = vld [vmem:[%s1902 + $0x111] sm:$0xff]
      %v3471 = vld [vmem:[%s1902 + $0x121] sm:$0xff]
      %v3472 = vld [vmem:[%s1902 + $0x129] sm:$0xff]
      %v3473 = vld [vmem:[%s1902 + $0x139] sm:$0xff]
      %v3474 = vld [vmem:[%s1902 + $0x141] sm:$0xff]
      %v3475 = vld [vmem:[%s1902 + $0x151] sm:$0xff]
      %v3476 = vld [vmem:[%s1902 + $0x159] sm:$0xff]
      %v3477 = vld [vmem:[%s1902 + $0x169] sm:$0xff]
      %v3478 = vld [vmem:[%s1902 + $0x171] sm:$0xff]
      %v3480 = vsel %vm939, %v3447, 0
      %v3483 = vsel %vm939, %v3448, 0
      %v3486 = vsel %vm939, %v3449, 0
      %v3489 = vsel %vm939, %v3450, 0
      %v3492 = vsel %vm939, %v3451, 0
      %v3495 = vsel %vm939, %v3452, 0
      %v3498 = vsel %vm939, %v3453, 0
      %v3501 = vsel %vm939, %v3454, 0
      %v3504 = vsel %vm939, %v3455, 0
      %v3507 = vsel %vm939, %v3456, 0
      %v3510 = vsel %vm939, %v3457, 0
      %v3513 = vsel %vm939, %v3458, 0
      %v3516 = vsel %vm939, %v3459, 0
      %v3519 = vsel %vm939, %v3460, 0
      %v3522 = vsel %vm939, %v3461, 0
      %v3525 = vsel %vm939, %v3462, 0
      %v3528 = vsel %vm939, %v3463, 0
      %v3531 = vsel %vm939, %v3464, 0
      %v3534 = vsel %vm939, %v3465, 0
      %v3537 = vsel %vm939, %v3466, 0
      %v3540 = vsel %vm939, %v3467, 0
      %v3543 = vsel %vm939, %v3468, 0
      %v3546 = vsel %vm939, %v3469, 0
      %v3549 = vsel %vm939, %v3470, 0
      %v3552 = vsel %vm939, %v3471, 0
      %v3555 = vsel %vm939, %v3472, 0
      %v3558 = vsel %vm939, %v3473, 0
      %v3561 = vsel %vm939, %v3474, 0
      %v3564 = vsel %vm939, %v3475, 0
      %v3567 = vsel %vm939, %v3476, 0
      %v3570 = vsel %vm939, %v3477, 0
      %v3573 = vsel %vm939, %v3478, 0
      %3575 = vmatprep.subr.mxu0 0.0
      %3576 = vmatpush1.msra.mxu0 0.0
      %3577 = vmatprep.subr.mxu0 0.0
      %3578 = vmatpush1.msra.mxu0 0.0
      %3579 = vmatprep.subr.mxu0 0.0
      %3580 = vmatpush1.msra.mxu0 0.0
      %3581 = vmatprep.subr.mxu0 0.0
      %3582 = vmatpush1.msra.mxu0 0.0
      %3583 = vmatprep.subr.mxu0 0.0
      %3584 = vmatpush1.msra.mxu0 0.0
      %3585 = vmatprep.subr.mxu0 0.0
      %3586 = vmatpush1.msra.mxu0 0.0
      %3587 = vmatprep.subr.mxu0 0.0
      %3588 = vmatpush1.msra.mxu0 0.0
      %3589 = vmatprep.subr.mxu0 0.0
      %3590 = vmatpush1.msra.mxu0 0.0
      %3591 = vmatprep.subr.mxu0 0.0
      %3592 = vmatpush1.msra.mxu0 0.0
      %3593 = vmatprep.subr.mxu0 0.0
      %3594 = vmatpush1.msra.mxu0 0.0
      %3595 = vmatprep.subr.mxu0 0.0
      %3596 = vmatpush1.msra.mxu0 0.0
      %3597 = vmatprep.subr.mxu0 0.0
      %3598 = vmatpush1.msra.mxu0 0.0
      %3599 = vmatprep.subr.mxu0 0.0
      %3600 = vmatpush1.msra.mxu0 %v1954
      %3601 = vmatprep.subr.mxu0 0.0
      %3602 = vmatpush1.msra.mxu0 %v1953
      %3603 = vmatprep.subr.mxu0 0.0
      %3604 = vmatpush1.msra.mxu0 %v1952
      %3605 = vmatprep.subr.mxu0 0.0
      %3606 = vmatpush1.msra.mxu0 %v1951
      %3607 = vmatprep.subr.mxu0 0.0
      %3608 = vmatpush2.msra.mxu0 0.0
      %3609 = vmatprep.subr.mxu0 0.0
      %3610 = vmatpush2.msra.mxu0 0.0
      %3611 = vmatprep.subr.mxu0 0.0
      %3612 = vmatpush2.msra.mxu0 0.0
      %3613 = vmatprep.subr.mxu0 0.0
      %3614 = vmatpush2.msra.mxu0 0.0
      %3615 = vmatprep.subr.mxu0 0.0
      %3616 = vmatpush2.msra.mxu0 0.0
      %3617 = vmatprep.subr.mxu0 0.0
      %3618 = vmatpush2.msra.mxu0 0.0
      %3619 = vmatprep.subr.mxu0 0.0
      %3620 = vmatpush2.msra.mxu0 0.0
      %3621 = vmatprep.subr.mxu0 0.0
      %3622 = vmatpush2.msra.mxu0 0.0
      %3623 = vmatprep.subr.mxu0 0.0
      %3624 = vmatpush2.msra.mxu0 0.0
      %3625 = vmatprep.subr.mxu0 0.0
      %3626 = vmatpush2.msra.mxu0 0.0
      %3627 = vmatprep.subr.mxu0 0.0
      %3628 = vmatpush2.msra.mxu0 0.0
      %3629 = vmatprep.subr.mxu0 0.0
      %3630 = vmatpush2.msra.mxu0 0.0
      %3631 = vmatprep.subr.mxu0 0.0
      %3632 = vmatpush2.msra.mxu0 0.0
      %3633 = vmatprep.subr.mxu0 0.0
      %3634 = vmatpush2.msra.mxu0 0.0
      %3635 = vmatprep.subr.mxu0 0.0
      %3636 = vmatpush2.msra.mxu0 0.0
      %3637 = vmatprep.subr.mxu0 0.0
      %3638 = vmatpush2.msra.mxu0 0.0
      %3639 = vmatprep.mubr.f32.mxu0 0.0
      %3640 = vmatmul.mubr.f32.gmra.mxu0 %v3480
      %v3641 = vpop.f32.mrf.mxu0
      %v3642 = vadd.f32 0.0, %v3641
      %v3643 = vpop.f32.mrf.mxu0
      %3644 = vmatprep.mubr.f32.mxu0 0.0
      %3645 = vmatmul.mubr.f32.gmra.mxu0 %v3483
      %v3646 = vpop.f32.mrf.mxu0
      %v3647 = vadd.f32 0.0, %v3646
      %v3648 = vpop.f32.mrf.mxu0
      %3649 = vmatprep.mubr.f32.mxu0 0.0
      %3650 = vmatmul.mubr.f32.gmra.mxu0 %v3486
      %v3651 = vpop.f32.mrf.mxu0
      %v3652 = vadd.f32 0.0, %v3651
      %v3653 = vpop.f32.mrf.mxu0
      %3654 = vmatprep.mubr.f32.mxu0 0.0
      %3655 = vmatmul.mubr.f32.gmra.mxu0 %v3489
      %v3656 = vpop.f32.mrf.mxu0
      %v3657 = vadd.f32 0.0, %v3656
      %v3658 = vpop.f32.mrf.mxu0
      %3659 = vmatprep.mubr.f32.mxu0 0.0
      %3660 = vmatmul.mubr.f32.gmra.mxu0 %v3492
      %v3661 = vpop.f32.mrf.mxu0
      %v3662 = vadd.f32 0.0, %v3661
      %v3663 = vpop.f32.mrf.mxu0
      %3664 = vmatprep.mubr.f32.mxu0 0.0
      %3665 = vmatmul.mubr.f32.gmra.mxu0 %v3495
      %v3666 = vpop.f32.mrf.mxu0
      %v3667 = vadd.f32 0.0, %v3666
      %v3668 = vpop.f32.mrf.mxu0
      %3669 = vmatprep.mubr.f32.mxu0 0.0
      %3670 = vmatmul.mubr.f32.gmra.mxu0 %v3498
      %v3671 = vpop.f32.mrf.mxu0
      %v3672 = vadd.f32 0.0, %v3671
      %v3673 = vpop.f32.mrf.mxu0
      %3674 = vmatprep.mubr.f32.mxu0 0.0
      %3675 = vmatmul.mubr.f32.gmra.mxu0 %v3501
      %v3676 = vpop.f32.mrf.mxu0
      %v3677 = vadd.f32 0.0, %v3676
      %v3678 = vpop.f32.mrf.mxu0
      %3679 = vmatprep.mubr.f32.mxu0 0.0
      %3680 = vmatmul.mubr.f32.gmra.mxu0 %v3504
      %v3681 = vpop.f32.mrf.mxu0
      %v3682 = vadd.f32 0.0, %v3681
      %v3683 = vpop.f32.mrf.mxu0
      %3684 = vmatprep.mubr.f32.mxu0 0.0
      %3685 = vmatmul.mubr.f32.gmra.mxu0 %v3507
      %v3686 = vpop.f32.mrf.mxu0
      %v3687 = vadd.f32 0.0, %v3686
      %v3688 = vpop.f32.mrf.mxu0
      %3689 = vmatprep.mubr.f32.mxu0 0.0
      %3690 = vmatmul.mubr.f32.gmra.mxu0 %v3510
      %v3691 = vpop.f32.mrf.mxu0
      %v3692 = vadd.f32 0.0, %v3691
      %v3693 = vpop.f32.mrf.mxu0
      %3694 = vmatprep.mubr.f32.mxu0 0.0
      %3695 = vmatmul.mubr.f32.gmra.mxu0 %v3513
      %v3696 = vpop.f32.mrf.mxu0
      %v3697 = vadd.f32 0.0, %v3696
      %v3698 = vpop.f32.mrf.mxu0
      %3699 = vmatprep.mubr.f32.mxu0 0.0
      %3700 = vmatmul.mubr.f32.gmra.mxu0 %v3516
      %v3701 = vpop.f32.mrf.mxu0
      %v3702 = vadd.f32 0.0, %v3701
      %v3703 = vpop.f32.mrf.mxu0
      %3704 = vmatprep.mubr.f32.mxu0 0.0
      %3705 = vmatmul.mubr.f32.gmra.mxu0 %v3519
      %v3706 = vpop.f32.mrf.mxu0
      %v3707 = vadd.f32 0.0, %v3706
      %v3708 = vpop.f32.mrf.mxu0
      %3709 = vmatprep.mubr.f32.mxu0 0.0
      %3710 = vmatmul.mubr.f32.gmra.mxu0 %v3522
      %v3711 = vpop.f32.mrf.mxu0
      %v3712 = vadd.f32 0.0, %v3711
      %v3713 = vpop.f32.mrf.mxu0
      %3714 = vmatprep.mubr.f32.mxu0 0.0
      %3715 = vmatmul.mubr.f32.gmra.mxu0 %v3525
      %v3716 = vpop.f32.mrf.mxu0
      %v3717 = vadd.f32 0.0, %v3716
      %v3718 = vpop.f32.mrf.mxu0
      %3719 = vmatprep.mubr.f32.mxu0 0.0
      %3720 = vmatmul.mubr.f32.gmra.mxu0 %v3528
      %v3721 = vpop.f32.mrf.mxu0
      %v3722 = vadd.f32 0.0, %v3721
      %v3723 = vpop.f32.mrf.mxu0
      %3724 = vmatprep.mubr.f32.mxu0 0.0
      %3725 = vmatmul.mubr.f32.gmra.mxu0 %v3531
      %v3726 = vpop.f32.mrf.mxu0
      %v3727 = vadd.f32 0.0, %v3726
      %v3728 = vpop.f32.mrf.mxu0
      %3729 = vmatprep.mubr.f32.mxu0 0.0
      %3730 = vmatmul.mubr.f32.gmra.mxu0 %v3534
      %v3731 = vpop.f32.mrf.mxu0
      %v3732 = vadd.f32 0.0, %v3731
      %v3733 = vpop.f32.mrf.mxu0
      %3734 = vmatprep.mubr.f32.mxu0 0.0
      %3735 = vmatmul.mubr.f32.gmra.mxu0 %v3537
      %v3736 = vpop.f32.mrf.mxu0
      %v3737 = vadd.f32 0.0, %v3736
      %v3738 = vpop.f32.mrf.mxu0
      %3739 = vmatprep.mubr.f32.mxu0 0.0
      %3740 = vmatmul.mubr.f32.gmra.mxu0 %v3540
      %v3741 = vpop.f32.mrf.mxu0
      %v3742 = vadd.f32 0.0, %v3741
      %v3743 = vpop.f32.mrf.mxu0
      %3744 = vmatprep.mubr.f32.mxu0 0.0
      %3745 = vmatmul.mubr.f32.gmra.mxu0 %v3543
      %v3746 = vpop.f32.mrf.mxu0
      %v3747 = vadd.f32 0.0, %v3746
      %v3748 = vpop.f32.mrf.mxu0
      %3749 = vmatprep.mubr.f32.mxu0 0.0
      %3750 = vmatmul.mubr.f32.gmra.mxu0 %v3546
      %v3751 = vpop.f32.mrf.mxu0
      %v3752 = vadd.f32 0.0, %v3751
      %v3753 = vpop.f32.mrf.mxu0
      %3754 = vmatprep.mubr.f32.mxu0 0.0
      %3755 = vmatmul.mubr.f32.gmra.mxu0 %v3549
      %v3756 = vpop.f32.mrf.mxu0
      %v3757 = vadd.f32 0.0, %v3756
      %v3758 = vpop.f32.mrf.mxu0
      %3759 = vmatprep.mubr.f32.mxu0 0.0
      %3760 = vmatmul.mubr.f32.gmra.mxu0 %v3552
      %v3761 = vpop.f32.mrf.mxu0
      %v3762 = vadd.f32 0.0, %v3761
      %v3763 = vpop.f32.mrf.mxu0
      %3764 = vmatprep.mubr.f32.mxu0 0.0
      %3765 = vmatmul.mubr.f32.gmra.mxu0 %v3555
      %v3766 = vpop.f32.mrf.mxu0
      %v3767 = vadd.f32 0.0, %v3766
      %v3768 = vpop.f32.mrf.mxu0
      %3769 = vmatprep.mubr.f32.mxu0 0.0
      %3770 = vmatmul.mubr.f32.gmra.mxu0 %v3558
      %v3771 = vpop.f32.mrf.mxu0
      %v3772 = vadd.f32 0.0, %v3771
      %v3773 = vpop.f32.mrf.mxu0
      %3774 = vmatprep.mubr.f32.mxu0 0.0
      %3775 = vmatmul.mubr.f32.gmra.mxu0 %v3561
      %v3776 = vpop.f32.mrf.mxu0
      %v3777 = vadd.f32 0.0, %v3776
      %v3778 = vpop.f32.mrf.mxu0
      %3779 = vmatprep.mubr.f32.mxu0 0.0
      %3780 = vmatmul.mubr.f32.gmra.mxu0 %v3564
      %v3781 = vpop.f32.mrf.mxu0
      %v3782 = vadd.f32 0.0, %v3781
      %v3783 = vpop.f32.mrf.mxu0
      %3784 = vmatprep.mubr.f32.mxu0 0.0
      %3785 = vmatmul.mubr.f32.gmra.mxu0 %v3567
      %v3786 = vpop.f32.mrf.mxu0
      %v3787 = vadd.f32 0.0, %v3786
      %v3788 = vpop.f32.mrf.mxu0
      %3789 = vmatprep.mubr.f32.mxu0 0.0
      %3790 = vmatmul.mubr.f32.gmra.mxu0 %v3570
      %v3791 = vpop.f32.mrf.mxu0
      %v3792 = vadd.f32 0.0, %v3791
      %v3793 = vpop.f32.mrf.mxu0
      %3794 = vmatprep.mubr.f32.mxu0 0.0
      %3795 = vmatmul.mubr.f32.gmra.mxu0 %v3573
      %v3796 = vpop.f32.mrf.mxu0
      %v3797 = vadd.f32 0.0, %v3796
      %v3798 = vpop.f32.mrf.mxu0
      %3799 = vdwg.mxu0
      %v3800 = vadd.f32 %v3415, %v3642
      %v3801 = vadd.f32 %v3416, %v3647
      %v3802 = vadd.f32 %v3417, %v3652
      %v3803 = vadd.f32 %v3418, %v3657
      %v3804 = vadd.f32 %v3419, %v3662
      %v3805 = vadd.f32 %v3420, %v3667
      %v3806 = vadd.f32 %v3421, %v3672
      %v3807 = vadd.f32 %v3422, %v3677
      %v3808 = vadd.f32 %v3423, %v3682
      %v3809 = vadd.f32 %v3424, %v3687
      %v3810 = vadd.f32 %v3425, %v3692
      %v3811 = vadd.f32 %v3426, %v3697
      %v3812 = vadd.f32 %v3427, %v3702
      %v3813 = vadd.f32 %v3428, %v3707
      %v3814 = vadd.f32 %v3429, %v3712
      %v3815 = vadd.f32 %v3430, %v3717
      %v3816 = vadd.f32 %v3431, %v3722
      %v3817 = vadd.f32 %v3432, %v3727
      %v3818 = vadd.f32 %v3433, %v3732
      %v3819 = vadd.f32 %v3434, %v3737
      %v3820 = vadd.f32 %v3435, %v3742
      %v3821 = vadd.f32 %v3436, %v3747
      %v3822 = vadd.f32 %v3437, %v3752
      %v3823 = vadd.f32 %v3438, %v3757
      %v3824 = vadd.f32 %v3439, %v3762
      %v3825 = vadd.f32 %v3440, %v3767
      %v3826 = vadd.f32 %v3441, %v3772
      %v3827 = vadd.f32 %v3442, %v3777
      %v3828 = vadd.f32 %v3443, %v3782
      %v3829 = vadd.f32 %v3444, %v3787
      %v3830 = vadd.f32 %v3445, %v3792
      %v3831 = vadd.f32 %v3446, %v3797
      %v3832 = vld [vmem:[%s1902 + $0x2] sm:$0xff]
      %v3833 = vld [vmem:[%s1902 + $0xa] sm:$0xff]
      %v3834 = vld [vmem:[%s1902 + $0x1a] sm:$0xff]
      %v3835 = vld [vmem:[%s1902 + $0x22] sm:$0xff]
      %v3836 = vld [vmem:[%s1902 + $0x32] sm:$0xff]
      %v3837 = vld [vmem:[%s1902 + $0x3a] sm:$0xff]
      %v3838 = vld [vmem:[%s1902 + $0x4a] sm:$0xff]
      %v3839 = vld [vmem:[%s1902 + $0x52] sm:$0xff]
      %v3840 = vld [vmem:[%s1902 + $0x62] sm:$0xff]
      %v3841 = vld [vmem:[%s1902 + $0x6a] sm:$0xff]
      %v3842 = vld [vmem:[%s1902 + $0x7a] sm:$0xff]
      %v3843 = vld [vmem:[%s1902 + $0x82] sm:$0xff]
      %v3844 = vld [vmem:[%s1902 + $0x92] sm:$0xff]
      %v3845 = vld [vmem:[%s1902 + $0x9a] sm:$0xff]
      %v3846 = vld [vmem:[%s1902 + $0xaa] sm:$0xff]
      %v3847 = vld [vmem:[%s1902 + $0xb2] sm:$0xff]
      %v3848 = vld [vmem:[%s1902 + $0xc2] sm:$0xff]
      %v3849 = vld [vmem:[%s1902 + $0xca] sm:$0xff]
      %v3850 = vld [vmem:[%s1902 + $0xda] sm:$0xff]
      %v3851 = vld [vmem:[%s1902 + $0xe2] sm:$0xff]
      %v3852 = vld [vmem:[%s1902 + $0xf2] sm:$0xff]
      %v3853 = vld [vmem:[%s1902 + $0xfa] sm:$0xff]
      %v3854 = vld [vmem:[%s1902 + $0x10a] sm:$0xff]
      %v3855 = vld [vmem:[%s1902 + $0x112] sm:$0xff]
      %v3856 = vld [vmem:[%s1902 + $0x122] sm:$0xff]
      %v3857 = vld [vmem:[%s1902 + $0x12a] sm:$0xff]
      %v3858 = vld [vmem:[%s1902 + $0x13a] sm:$0xff]
      %v3859 = vld [vmem:[%s1902 + $0x142] sm:$0xff]
      %v3860 = vld [vmem:[%s1902 + $0x152] sm:$0xff]
      %v3861 = vld [vmem:[%s1902 + $0x15a] sm:$0xff]
      %v3862 = vld [vmem:[%s1902 + $0x16a] sm:$0xff]
      %v3863 = vld [vmem:[%s1902 + $0x172] sm:$0xff]
      %v3865 = vsel %vm939, %v3832, 0
      %v3868 = vsel %vm939, %v3833, 0
      %v3871 = vsel %vm939, %v3834, 0
      %v3874 = vsel %vm939, %v3835, 0
      %v3877 = vsel %vm939, %v3836, 0
      %v3880 = vsel %vm939, %v3837, 0
      %v3883 = vsel %vm939, %v3838, 0
      %v3886 = vsel %vm939, %v3839, 0
      %v3889 = vsel %vm939, %v3840, 0
      %v3892 = vsel %vm939, %v3841, 0
      %v3895 = vsel %vm939, %v3842, 0
      %v3898 = vsel %vm939, %v3843, 0
      %v3901 = vsel %vm939, %v3844, 0
      %v3904 = vsel %vm939, %v3845, 0
      %v3907 = vsel %vm939, %v3846, 0
      %v3910 = vsel %vm939, %v3847, 0
      %v3913 = vsel %vm939, %v3848, 0
      %v3916 = vsel %vm939, %v3849, 0
      %v3919 = vsel %vm939, %v3850, 0
      %v3922 = vsel %vm939, %v3851, 0
      %v3925 = vsel %vm939, %v3852, 0
      %v3928 = vsel %vm939, %v3853, 0
      %v3931 = vsel %vm939, %v3854, 0
      %v3934 = vsel %vm939, %v3855, 0
      %v3937 = vsel %vm939, %v3856, 0
      %v3940 = vsel %vm939, %v3857, 0
      %v3943 = vsel %vm939, %v3858, 0
      %v3946 = vsel %vm939, %v3859, 0
      %v3949 = vsel %vm939, %v3860, 0
      %v3952 = vsel %vm939, %v3861, 0
      %v3955 = vsel %vm939, %v3862, 0
      %v3958 = vsel %vm939, %v3863, 0
      %3960 = vmatprep.subr.mxu0 0.0
      %3961 = vmatpush1.msra.mxu0 0.0
      %3962 = vmatprep.subr.mxu0 0.0
      %3963 = vmatpush1.msra.mxu0 0.0
      %3964 = vmatprep.subr.mxu0 0.0
      %3965 = vmatpush1.msra.mxu0 0.0
      %3966 = vmatprep.subr.mxu0 0.0
      %3967 = vmatpush1.msra.mxu0 0.0
      %3968 = vmatprep.subr.mxu0 0.0
      %3969 = vmatpush1.msra.mxu0 0.0
      %3970 = vmatprep.subr.mxu0 0.0
      %3971 = vmatpush1.msra.mxu0 0.0
      %3972 = vmatprep.subr.mxu0 0.0
      %3973 = vmatpush1.msra.mxu0 0.0
      %3974 = vmatprep.subr.mxu0 0.0
      %3975 = vmatpush1.msra.mxu0 0.0
      %3976 = vmatprep.subr.mxu0 0.0
      %3977 = vmatpush1.msra.mxu0 0.0
      %3978 = vmatprep.subr.mxu0 0.0
      %3979 = vmatpush1.msra.mxu0 0.0
      %3980 = vmatprep.subr.mxu0 0.0
      %3981 = vmatpush1.msra.mxu0 0.0
      %3982 = vmatprep.subr.mxu0 0.0
      %3983 = vmatpush1.msra.mxu0 0.0
      %3984 = vmatprep.subr.mxu0 0.0
      %3985 = vmatpush1.msra.mxu0 %v1958
      %3986 = vmatprep.subr.mxu0 0.0
      %3987 = vmatpush1.msra.mxu0 %v1957
      %3988 = vmatprep.subr.mxu0 0.0
      %3989 = vmatpush1.msra.mxu0 %v1956
      %3990 = vmatprep.subr.mxu0 0.0
      %3991 = vmatpush1.msra.mxu0 %v1955
      %3992 = vmatprep.subr.mxu0 0.0
      %3993 = vmatpush2.msra.mxu0 0.0
      %3994 = vmatprep.subr.mxu0 0.0
      %3995 = vmatpush2.msra.mxu0 0.0
      %3996 = vmatprep.subr.mxu0 0.0
      %3997 = vmatpush2.msra.mxu0 0.0
      %3998 = vmatprep.subr.mxu0 0.0
      %3999 = vmatpush2.msra.mxu0 0.0
      %4000 = vmatprep.subr.mxu0 0.0
      %4001 = vmatpush2.msra.mxu0 0.0
      %4002 = vmatprep.subr.mxu0 0.0
      %4003 = vmatpush2.msra.mxu0 0.0
      %4004 = vmatprep.subr.mxu0 0.0
      %4005 = vmatpush2.msra.mxu0 0.0
      %4006 = vmatprep.subr.mxu0 0.0
      %4007 = vmatpush2.msra.mxu0 0.0
      %4008 = vmatprep.subr.mxu0 0.0
      %4009 = vmatpush2.msra.mxu0 0.0
      %4010 = vmatprep.subr.mxu0 0.0
      %4011 = vmatpush2.msra.mxu0 0.0
      %4012 = vmatprep.subr.mxu0 0.0
      %4013 = vmatpush2.msra.mxu0 0.0
      %4014 = vmatprep.subr.mxu0 0.0
      %4015 = vmatpush2.msra.mxu0 0.0
      %4016 = vmatprep.subr.mxu0 0.0
      %4017 = vmatpush2.msra.mxu0 0.0
      %4018 = vmatprep.subr.mxu0 0.0
      %4019 = vmatpush2.msra.mxu0 0.0
      %4020 = vmatprep.subr.mxu0 0.0
      %4021 = vmatpush2.msra.mxu0 0.0
      %4022 = vmatprep.subr.mxu0 0.0
      %4023 = vmatpush2.msra.mxu0 0.0
      %4024 = vmatprep.mubr.f32.mxu0 0.0
      %4025 = vmatmul.mubr.f32.gmra.mxu0 %v3865
      %v4026 = vpop.f32.mrf.mxu0
      %v4027 = vadd.f32 0.0, %v4026
      %v4028 = vpop.f32.mrf.mxu0
      %4029 = vmatprep.mubr.f32.mxu0 0.0
      %4030 = vmatmul.mubr.f32.gmra.mxu0 %v3868
      %v4031 = vpop.f32.mrf.mxu0
      %v4032 = vadd.f32 0.0, %v4031
      %v4033 = vpop.f32.mrf.mxu0
      %4034 = vmatprep.mubr.f32.mxu0 0.0
      %4035 = vmatmul.mubr.f32.gmra.mxu0 %v3871
      %v4036 = vpop.f32.mrf.mxu0
      %v4037 = vadd.f32 0.0, %v4036
      %v4038 = vpop.f32.mrf.mxu0
      %4039 = vmatprep.mubr.f32.mxu0 0.0
      %4040 = vmatmul.mubr.f32.gmra.mxu0 %v3874
      %v4041 = vpop.f32.mrf.mxu0
      %v4042 = vadd.f32 0.0, %v4041
      %v4043 = vpop.f32.mrf.mxu0
      %4044 = vmatprep.mubr.f32.mxu0 0.0
      %4045 = vmatmul.mubr.f32.gmra.mxu0 %v3877
      %v4046 = vpop.f32.mrf.mxu0
      %v4047 = vadd.f32 0.0, %v4046
      %v4048 = vpop.f32.mrf.mxu0
      %4049 = vmatprep.mubr.f32.mxu0 0.0
      %4050 = vmatmul.mubr.f32.gmra.mxu0 %v3880
      %v4051 = vpop.f32.mrf.mxu0
      %v4052 = vadd.f32 0.0, %v4051
      %v4053 = vpop.f32.mrf.mxu0
      %4054 = vmatprep.mubr.f32.mxu0 0.0
      %4055 = vmatmul.mubr.f32.gmra.mxu0 %v3883
      %v4056 = vpop.f32.mrf.mxu0
      %v4057 = vadd.f32 0.0, %v4056
      %v4058 = vpop.f32.mrf.mxu0
      %4059 = vmatprep.mubr.f32.mxu0 0.0
      %4060 = vmatmul.mubr.f32.gmra.mxu0 %v3886
      %v4061 = vpop.f32.mrf.mxu0
      %v4062 = vadd.f32 0.0, %v4061
      %v4063 = vpop.f32.mrf.mxu0
      %4064 = vmatprep.mubr.f32.mxu0 0.0
      %4065 = vmatmul.mubr.f32.gmra.mxu0 %v3889
      %v4066 = vpop.f32.mrf.mxu0
      %v4067 = vadd.f32 0.0, %v4066
      %v4068 = vpop.f32.mrf.mxu0
      %4069 = vmatprep.mubr.f32.mxu0 0.0
      %4070 = vmatmul.mubr.f32.gmra.mxu0 %v3892
      %v4071 = vpop.f32.mrf.mxu0
      %v4072 = vadd.f32 0.0, %v4071
      %v4073 = vpop.f32.mrf.mxu0
      %4074 = vmatprep.mubr.f32.mxu0 0.0
      %4075 = vmatmul.mubr.f32.gmra.mxu0 %v3895
      %v4076 = vpop.f32.mrf.mxu0
      %v4077 = vadd.f32 0.0, %v4076
      %v4078 = vpop.f32.mrf.mxu0
      %4079 = vmatprep.mubr.f32.mxu0 0.0
      %4080 = vmatmul.mubr.f32.gmra.mxu0 %v3898
      %v4081 = vpop.f32.mrf.mxu0
      %v4082 = vadd.f32 0.0, %v4081
      %v4083 = vpop.f32.mrf.mxu0
      %4084 = vmatprep.mubr.f32.mxu0 0.0
      %4085 = vmatmul.mubr.f32.gmra.mxu0 %v3901
      %v4086 = vpop.f32.mrf.mxu0
      %v4087 = vadd.f32 0.0, %v4086
      %v4088 = vpop.f32.mrf.mxu0
      %4089 = vmatprep.mubr.f32.mxu0 0.0
      %4090 = vmatmul.mubr.f32.gmra.mxu0 %v3904
      %v4091 = vpop.f32.mrf.mxu0
      %v4092 = vadd.f32 0.0, %v4091
      %v4093 = vpop.f32.mrf.mxu0
      %4094 = vmatprep.mubr.f32.mxu0 0.0
      %4095 = vmatmul.mubr.f32.gmra.mxu0 %v3907
      %v4096 = vpop.f32.mrf.mxu0
      %v4097 = vadd.f32 0.0, %v4096
      %v4098 = vpop.f32.mrf.mxu0
      %4099 = vmatprep.mubr.f32.mxu0 0.0
      %4100 = vmatmul.mubr.f32.gmra.mxu0 %v3910
      %v4101 = vpop.f32.mrf.mxu0
      %v4102 = vadd.f32 0.0, %v4101
      %v4103 = vpop.f32.mrf.mxu0
      %4104 = vmatprep.mubr.f32.mxu0 0.0
      %4105 = vmatmul.mubr.f32.gmra.mxu0 %v3913
      %v4106 = vpop.f32.mrf.mxu0
      %v4107 = vadd.f32 0.0, %v4106
      %v4108 = vpop.f32.mrf.mxu0
      %4109 = vmatprep.mubr.f32.mxu0 0.0
      %4110 = vmatmul.mubr.f32.gmra.mxu0 %v3916
      %v4111 = vpop.f32.mrf.mxu0
      %v4112 = vadd.f32 0.0, %v4111
      %v4113 = vpop.f32.mrf.mxu0
      %4114 = vmatprep.mubr.f32.mxu0 0.0
      %4115 = vmatmul.mubr.f32.gmra.mxu0 %v3919
      %v4116 = vpop.f32.mrf.mxu0
      %v4117 = vadd.f32 0.0, %v4116
      %v4118 = vpop.f32.mrf.mxu0
      %4119 = vmatprep.mubr.f32.mxu0 0.0
      %4120 = vmatmul.mubr.f32.gmra.mxu0 %v3922
      %v4121 = vpop.f32.mrf.mxu0
      %v4122 = vadd.f32 0.0, %v4121
      %v4123 = vpop.f32.mrf.mxu0
      %4124 = vmatprep.mubr.f32.mxu0 0.0
      %4125 = vmatmul.mubr.f32.gmra.mxu0 %v3925
      %v4126 = vpop.f32.mrf.mxu0
      %v4127 = vadd.f32 0.0, %v4126
      %v4128 = vpop.f32.mrf.mxu0
      %4129 = vmatprep.mubr.f32.mxu0 0.0
      %4130 = vmatmul.mubr.f32.gmra.mxu0 %v3928
      %v4131 = vpop.f32.mrf.mxu0
      %v4132 = vadd.f32 0.0, %v4131
      %v4133 = vpop.f32.mrf.mxu0
      %4134 = vmatprep.mubr.f32.mxu0 0.0
      %4135 = vmatmul.mubr.f32.gmra.mxu0 %v3931
      %v4136 = vpop.f32.mrf.mxu0
      %v4137 = vadd.f32 0.0, %v4136
      %v4138 = vpop.f32.mrf.mxu0
      %4139 = vmatprep.mubr.f32.mxu0 0.0
      %4140 = vmatmul.mubr.f32.gmra.mxu0 %v3934
      %v4141 = vpop.f32.mrf.mxu0
      %v4142 = vadd.f32 0.0, %v4141
      %v4143 = vpop.f32.mrf.mxu0
      %4144 = vmatprep.mubr.f32.mxu0 0.0
      %4145 = vmatmul.mubr.f32.gmra.mxu0 %v3937
      %v4146 = vpop.f32.mrf.mxu0
      %v4147 = vadd.f32 0.0, %v4146
      %v4148 = vpop.f32.mrf.mxu0
      %4149 = vmatprep.mubr.f32.mxu0 0.0
      %4150 = vmatmul.mubr.f32.gmra.mxu0 %v3940
      %v4151 = vpop.f32.mrf.mxu0
      %v4152 = vadd.f32 0.0, %v4151
      %v4153 = vpop.f32.mrf.mxu0
      %4154 = vmatprep.mubr.f32.mxu0 0.0
      %4155 = vmatmul.mubr.f32.gmra.mxu0 %v3943
      %v4156 = vpop.f32.mrf.mxu0
      %v4157 = vadd.f32 0.0, %v4156
      %v4158 = vpop.f32.mrf.mxu0
      %4159 = vmatprep.mubr.f32.mxu0 0.0
      %4160 = vmatmul.mubr.f32.gmra.mxu0 %v3946
      %v4161 = vpop.f32.mrf.mxu0
      %v4162 = vadd.f32 0.0, %v4161
      %v4163 = vpop.f32.mrf.mxu0
      %4164 = vmatprep.mubr.f32.mxu0 0.0
      %4165 = vmatmul.mubr.f32.gmra.mxu0 %v3949
      %v4166 = vpop.f32.mrf.mxu0
      %v4167 = vadd.f32 0.0, %v4166
      %v4168 = vpop.f32.mrf.mxu0
      %4169 = vmatprep.mubr.f32.mxu0 0.0
      %4170 = vmatmul.mubr.f32.gmra.mxu0 %v3952
      %v4171 = vpop.f32.mrf.mxu0
      %v4172 = vadd.f32 0.0, %v4171
      %v4173 = vpop.f32.mrf.mxu0
      %4174 = vmatprep.mubr.f32.mxu0 0.0
      %4175 = vmatmul.mubr.f32.gmra.mxu0 %v3955
      %v4176 = vpop.f32.mrf.mxu0
      %v4177 = vadd.f32 0.0, %v4176
      %v4178 = vpop.f32.mrf.mxu0
      %4179 = vmatprep.mubr.f32.mxu0 0.0
      %4180 = vmatmul.mubr.f32.gmra.mxu0 %v3958
      %v4181 = vpop.f32.mrf.mxu0
      %v4182 = vadd.f32 0.0, %v4181
      %v4183 = vpop.f32.mrf.mxu0
      %4184 = vdwg.mxu0
      %v4185 = vadd.f32 %v3800, %v4027
      %v4186 = vadd.f32 %v3801, %v4032
      %v4187 = vadd.f32 %v3802, %v4037
      %v4188 = vadd.f32 %v3803, %v4042
      %v4189 = vadd.f32 %v3804, %v4047
      %v4190 = vadd.f32 %v3805, %v4052
      %v4191 = vadd.f32 %v3806, %v4057
      %v4192 = vadd.f32 %v3807, %v4062
      %v4193 = vadd.f32 %v3808, %v4067
      %v4194 = vadd.f32 %v3809, %v4072
      %v4195 = vadd.f32 %v3810, %v4077
      %v4196 = vadd.f32 %v3811, %v4082
      %v4197 = vadd.f32 %v3812, %v4087
      %v4198 = vadd.f32 %v3813, %v4092
      %v4199 = vadd.f32 %v3814, %v4097
      %v4200 = vadd.f32 %v3815, %v4102
      %v4201 = vadd.f32 %v3816, %v4107
      %v4202 = vadd.f32 %v3817, %v4112
      %v4203 = vadd.f32 %v3818, %v4117
      %v4204 = vadd.f32 %v3819, %v4122
      %v4205 = vadd.f32 %v3820, %v4127
      %v4206 = vadd.f32 %v3821, %v4132
      %v4207 = vadd.f32 %v3822, %v4137
      %v4208 = vadd.f32 %v3823, %v4142
      %v4209 = vadd.f32 %v3824, %v4147
      %v4210 = vadd.f32 %v3825, %v4152
      %v4211 = vadd.f32 %v3826, %v4157
      %v4212 = vadd.f32 %v3827, %v4162
      %v4213 = vadd.f32 %v3828, %v4167
      %v4214 = vadd.f32 %v3829, %v4172
      %v4215 = vadd.f32 %v3830, %v4177
      %v4216 = vadd.f32 %v3831, %v4182
      %s4217 = scalar_lea.vmem [#allocation2], 48
      %v4218 = vld [vmem:[%s4217] sm:$0xff]
      %v4219 = vld [vmem:[%s4217 + $0x8] sm:$0xff]
      %v4220 = vld [vmem:[%s4217 + $0x18] sm:$0xff]
      %v4221 = vld [vmem:[%s4217 + $0x20] sm:$0xff]
      %v4222 = vld [vmem:[%s4217 + $0x30] sm:$0xff]
      %v4223 = vld [vmem:[%s4217 + $0x38] sm:$0xff]
      %v4224 = vld [vmem:[%s4217 + $0x48] sm:$0xff]
      %v4225 = vld [vmem:[%s4217 + $0x50] sm:$0xff]
      %v4226 = vld [vmem:[%s4217 + $0x60] sm:$0xff]
      %v4227 = vld [vmem:[%s4217 + $0x68] sm:$0xff]
      %v4228 = vld [vmem:[%s4217 + $0x78] sm:$0xff]
      %v4229 = vld [vmem:[%s4217 + $0x80] sm:$0xff]
      %v4230 = vld [vmem:[%s4217 + $0x90] sm:$0xff]
      %v4231 = vld [vmem:[%s4217 + $0x98] sm:$0xff]
      %v4232 = vld [vmem:[%s4217 + $0xa8] sm:$0xff]
      %v4233 = vld [vmem:[%s4217 + $0xb0] sm:$0xff]
      %v4234 = vld [vmem:[%s4217 + $0xc0] sm:$0xff]
      %v4235 = vld [vmem:[%s4217 + $0xc8] sm:$0xff]
      %v4236 = vld [vmem:[%s4217 + $0xd8] sm:$0xff]
      %v4237 = vld [vmem:[%s4217 + $0xe0] sm:$0xff]
      %v4238 = vld [vmem:[%s4217 + $0xf0] sm:$0xff]
      %v4239 = vld [vmem:[%s4217 + $0xf8] sm:$0xff]
      %v4240 = vld [vmem:[%s4217 + $0x108] sm:$0xff]
      %v4241 = vld [vmem:[%s4217 + $0x110] sm:$0xff]
      %v4242 = vld [vmem:[%s4217 + $0x120] sm:$0xff]
      %v4243 = vld [vmem:[%s4217 + $0x128] sm:$0xff]
      %v4244 = vld [vmem:[%s4217 + $0x138] sm:$0xff]
      %v4245 = vld [vmem:[%s4217 + $0x140] sm:$0xff]
      %v4246 = vld [vmem:[%s4217 + $0x150] sm:$0xff]
      %v4247 = vld [vmem:[%s4217 + $0x158] sm:$0xff]
      %v4248 = vld [vmem:[%s4217 + $0x168] sm:$0xff]
      %v4249 = vld [vmem:[%s4217 + $0x170] sm:$0xff]
      %v4251 = vsel %vm939, %v4218, 0
      %v4254 = vsel %vm939, %v4219, 0
      %v4257 = vsel %vm939, %v4220, 0
      %v4260 = vsel %vm939, %v4221, 0
      %v4263 = vsel %vm939, %v4222, 0
      %v4266 = vsel %vm939, %v4223, 0
      %v4269 = vsel %vm939, %v4224, 0
      %v4272 = vsel %vm939, %v4225, 0
      %v4275 = vsel %vm939, %v4226, 0
      %v4278 = vsel %vm939, %v4227, 0
      %v4281 = vsel %vm939, %v4228, 0
      %v4284 = vsel %vm939, %v4229, 0
      %v4287 = vsel %vm939, %v4230, 0
      %v4290 = vsel %vm939, %v4231, 0
      %v4293 = vsel %vm939, %v4232, 0
      %v4296 = vsel %vm939, %v4233, 0
      %v4299 = vsel %vm939, %v4234, 0
      %v4302 = vsel %vm939, %v4235, 0
      %v4305 = vsel %vm939, %v4236, 0
      %v4308 = vsel %vm939, %v4237, 0
      %v4311 = vsel %vm939, %v4238, 0
      %v4314 = vsel %vm939, %v4239, 0
      %v4317 = vsel %vm939, %v4240, 0
      %v4320 = vsel %vm939, %v4241, 0
      %v4323 = vsel %vm939, %v4242, 0
      %v4326 = vsel %vm939, %v4243, 0
      %v4329 = vsel %vm939, %v4244, 0
      %v4332 = vsel %vm939, %v4245, 0
      %v4335 = vsel %vm939, %v4246, 0
      %v4338 = vsel %vm939, %v4247, 0
      %v4341 = vsel %vm939, %v4248, 0
      %v4344 = vsel %vm939, %v4249, 0
      %4346 = vmatprep.subr.mxu0 0.0
      %4347 = vmatpush1.msra.mxu0 0.0
      %4348 = vmatprep.subr.mxu0 0.0
      %4349 = vmatpush1.msra.mxu0 0.0
      %4350 = vmatprep.subr.mxu0 0.0
      %4351 = vmatpush1.msra.mxu0 0.0
      %4352 = vmatprep.subr.mxu0 0.0
      %4353 = vmatpush1.msra.mxu0 0.0
      %4354 = vmatprep.subr.mxu0 0.0
      %4355 = vmatpush1.msra.mxu0 0.0
      %4356 = vmatprep.subr.mxu0 0.0
      %4357 = vmatpush1.msra.mxu0 0.0
      %4358 = vmatprep.subr.mxu0 0.0
      %4359 = vmatpush1.msra.mxu0 0.0
      %4360 = vmatprep.subr.mxu0 0.0
      %4361 = vmatpush1.msra.mxu0 0.0
      %4362 = vmatprep.subr.mxu0 0.0
      %4363 = vmatpush1.msra.mxu0 0.0
      %4364 = vmatprep.subr.mxu0 0.0
      %4365 = vmatpush1.msra.mxu0 0.0
      %4366 = vmatprep.subr.mxu0 0.0
      %4367 = vmatpush1.msra.mxu0 0.0
      %4368 = vmatprep.subr.mxu0 0.0
      %4369 = vmatpush1.msra.mxu0 0.0
      %4370 = vmatprep.subr.mxu0 0.0
      %4371 = vmatpush1.msra.mxu0 %v1962
      %4372 = vmatprep.subr.mxu0 0.0
      %4373 = vmatpush1.msra.mxu0 %v1961
      %4374 = vmatprep.subr.mxu0 0.0
      %4375 = vmatpush1.msra.mxu0 %v1960
      %4376 = vmatprep.subr.mxu0 0.0
      %4377 = vmatpush1.msra.mxu0 %v1959
      %4378 = vmatprep.subr.mxu0 0.0
      %4379 = vmatpush2.msra.mxu0 0.0
      %4380 = vmatprep.subr.mxu0 0.0
      %4381 = vmatpush2.msra.mxu0 0.0
      %4382 = vmatprep.subr.mxu0 0.0
      %4383 = vmatpush2.msra.mxu0 0.0
      %4384 = vmatprep.subr.mxu0 0.0
      %4385 = vmatpush2.msra.mxu0 0.0
      %4386 = vmatprep.subr.mxu0 0.0
      %4387 = vmatpush2.msra.mxu0 0.0
      %4388 = vmatprep.subr.mxu0 0.0
      %4389 = vmatpush2.msra.mxu0 0.0
      %4390 = vmatprep.subr.mxu0 0.0
      %4391 = vmatpush2.msra.mxu0 0.0
      %4392 = vmatprep.subr.mxu0 0.0
      %4393 = vmatpush2.msra.mxu0 0.0
      %4394 = vmatprep.subr.mxu0 0.0
      %4395 = vmatpush2.msra.mxu0 0.0
      %4396 = vmatprep.subr.mxu0 0.0
      %4397 = vmatpush2.msra.mxu0 0.0
      %4398 = vmatprep.subr.mxu0 0.0
      %4399 = vmatpush2.msra.mxu0 0.0
      %4400 = vmatprep.subr.mxu0 0.0
      %4401 = vmatpush2.msra.mxu0 0.0
      %4402 = vmatprep.subr.mxu0 0.0
      %4403 = vmatpush2.msra.mxu0 0.0
      %4404 = vmatprep.subr.mxu0 0.0
      %4405 = vmatpush2.msra.mxu0 0.0
      %4406 = vmatprep.subr.mxu0 0.0
      %4407 = vmatpush2.msra.mxu0 0.0
      %4408 = vmatprep.subr.mxu0 0.0
      %4409 = vmatpush2.msra.mxu0 0.0
      %4410 = vmatprep.mubr.f32.mxu0 0.0
      %4411 = vmatmul.mubr.f32.gmra.mxu0 %v4251
      %v4412 = vpop.f32.mrf.mxu0
      %v4413 = vadd.f32 0.0, %v4412
      %v4414 = vpop.f32.mrf.mxu0
      %4415 = vmatprep.mubr.f32.mxu0 0.0
      %4416 = vmatmul.mubr.f32.gmra.mxu0 %v4254
      %v4417 = vpop.f32.mrf.mxu0
      %v4418 = vadd.f32 0.0, %v4417
      %v4419 = vpop.f32.mrf.mxu0
      %4420 = vmatprep.mubr.f32.mxu0 0.0
      %4421 = vmatmul.mubr.f32.gmra.mxu0 %v4257
      %v4422 = vpop.f32.mrf.mxu0
      %v4423 = vadd.f32 0.0, %v4422
      %v4424 = vpop.f32.mrf.mxu0
      %4425 = vmatprep.mubr.f32.mxu0 0.0
      %4426 = vmatmul.mubr.f32.gmra.mxu0 %v4260
      %v4427 = vpop.f32.mrf.mxu0
      %v4428 = vadd.f32 0.0, %v4427
      %v4429 = vpop.f32.mrf.mxu0
      %4430 = vmatprep.mubr.f32.mxu0 0.0
      %4431 = vmatmul.mubr.f32.gmra.mxu0 %v4263
      %v4432 = vpop.f32.mrf.mxu0
      %v4433 = vadd.f32 0.0, %v4432
      %v4434 = vpop.f32.mrf.mxu0
      %4435 = vmatprep.mubr.f32.mxu0 0.0
      %4436 = vmatmul.mubr.f32.gmra.mxu0 %v4266
      %v4437 = vpop.f32.mrf.mxu0
      %v4438 = vadd.f32 0.0, %v4437
      %v4439 = vpop.f32.mrf.mxu0
      %4440 = vmatprep.mubr.f32.mxu0 0.0
      %4441 = vmatmul.mubr.f32.gmra.mxu0 %v4269
      %v4442 = vpop.f32.mrf.mxu0
      %v4443 = vadd.f32 0.0, %v4442
      %v4444 = vpop.f32.mrf.mxu0
      %4445 = vmatprep.mubr.f32.mxu0 0.0
      %4446 = vmatmul.mubr.f32.gmra.mxu0 %v4272
      %v4447 = vpop.f32.mrf.mxu0
      %v4448 = vadd.f32 0.0, %v4447
      %v4449 = vpop.f32.mrf.mxu0
      %4450 = vmatprep.mubr.f32.mxu0 0.0
      %4451 = vmatmul.mubr.f32.gmra.mxu0 %v4275
      %v4452 = vpop.f32.mrf.mxu0
      %v4453 = vadd.f32 0.0, %v4452
      %v4454 = vpop.f32.mrf.mxu0
      %4455 = vmatprep.mubr.f32.mxu0 0.0
      %4456 = vmatmul.mubr.f32.gmra.mxu0 %v4278
      %v4457 = vpop.f32.mrf.mxu0
      %v4458 = vadd.f32 0.0, %v4457
      %v4459 = vpop.f32.mrf.mxu0
      %4460 = vmatprep.mubr.f32.mxu0 0.0
      %4461 = vmatmul.mubr.f32.gmra.mxu0 %v4281
      %v4462 = vpop.f32.mrf.mxu0
      %v4463 = vadd.f32 0.0, %v4462
      %v4464 = vpop.f32.mrf.mxu0
      %4465 = vmatprep.mubr.f32.mxu0 0.0
      %4466 = vmatmul.mubr.f32.gmra.mxu0 %v4284
      %v4467 = vpop.f32.mrf.mxu0
      %v4468 = vadd.f32 0.0, %v4467
      %v4469 = vpop.f32.mrf.mxu0
      %4470 = vmatprep.mubr.f32.mxu0 0.0
      %4471 = vmatmul.mubr.f32.gmra.mxu0 %v4287
      %v4472 = vpop.f32.mrf.mxu0
      %v4473 = vadd.f32 0.0, %v4472
      %v4474 = vpop.f32.mrf.mxu0
      %4475 = vmatprep.mubr.f32.mxu0 0.0
      %4476 = vmatmul.mubr.f32.gmra.mxu0 %v4290
      %v4477 = vpop.f32.mrf.mxu0
      %v4478 = vadd.f32 0.0, %v4477
      %v4479 = vpop.f32.mrf.mxu0
      %4480 = vmatprep.mubr.f32.mxu0 0.0
      %4481 = vmatmul.mubr.f32.gmra.mxu0 %v4293
      %v4482 = vpop.f32.mrf.mxu0
      %v4483 = vadd.f32 0.0, %v4482
      %v4484 = vpop.f32.mrf.mxu0
      %4485 = vmatprep.mubr.f32.mxu0 0.0
      %4486 = vmatmul.mubr.f32.gmra.mxu0 %v4296
      %v4487 = vpop.f32.mrf.mxu0
      %v4488 = vadd.f32 0.0, %v4487
      %v4489 = vpop.f32.mrf.mxu0
      %4490 = vmatprep.mubr.f32.mxu0 0.0
      %4491 = vmatmul.mubr.f32.gmra.mxu0 %v4299
      %v4492 = vpop.f32.mrf.mxu0
      %v4493 = vadd.f32 0.0, %v4492
      %v4494 = vpop.f32.mrf.mxu0
      %4495 = vmatprep.mubr.f32.mxu0 0.0
      %4496 = vmatmul.mubr.f32.gmra.mxu0 %v4302
      %v4497 = vpop.f32.mrf.mxu0
      %v4498 = vadd.f32 0.0, %v4497
      %v4499 = vpop.f32.mrf.mxu0
      %4500 = vmatprep.mubr.f32.mxu0 0.0
      %4501 = vmatmul.mubr.f32.gmra.mxu0 %v4305
      %v4502 = vpop.f32.mrf.mxu0
      %v4503 = vadd.f32 0.0, %v4502
      %v4504 = vpop.f32.mrf.mxu0
      %4505 = vmatprep.mubr.f32.mxu0 0.0
      %4506 = vmatmul.mubr.f32.gmra.mxu0 %v4308
      %v4507 = vpop.f32.mrf.mxu0
      %v4508 = vadd.f32 0.0, %v4507
      %v4509 = vpop.f32.mrf.mxu0
      %4510 = vmatprep.mubr.f32.mxu0 0.0
      %4511 = vmatmul.mubr.f32.gmra.mxu0 %v4311
      %v4512 = vpop.f32.mrf.mxu0
      %v4513 = vadd.f32 0.0, %v4512
      %v4514 = vpop.f32.mrf.mxu0
      %4515 = vmatprep.mubr.f32.mxu0 0.0
      %4516 = vmatmul.mubr.f32.gmra.mxu0 %v4314
      %v4517 = vpop.f32.mrf.mxu0
      %v4518 = vadd.f32 0.0, %v4517
      %v4519 = vpop.f32.mrf.mxu0
      %4520 = vmatprep.mubr.f32.mxu0 0.0
      %4521 = vmatmul.mubr.f32.gmra.mxu0 %v4317
      %v4522 = vpop.f32.mrf.mxu0
      %v4523 = vadd.f32 0.0, %v4522
      %v4524 = vpop.f32.mrf.mxu0
      %4525 = vmatprep.mubr.f32.mxu0 0.0
      %4526 = vmatmul.mubr.f32.gmra.mxu0 %v4320
      %v4527 = vpop.f32.mrf.mxu0
      %v4528 = vadd.f32 0.0, %v4527
      %v4529 = vpop.f32.mrf.mxu0
      %4530 = vmatprep.mubr.f32.mxu0 0.0
      %4531 = vmatmul.mubr.f32.gmra.mxu0 %v4323
      %v4532 = vpop.f32.mrf.mxu0
      %v4533 = vadd.f32 0.0, %v4532
      %v4534 = vpop.f32.mrf.mxu0
      %4535 = vmatprep.mubr.f32.mxu0 0.0
      %4536 = vmatmul.mubr.f32.gmra.mxu0 %v4326
      %v4537 = vpop.f32.mrf.mxu0
      %v4538 = vadd.f32 0.0, %v4537
      %v4539 = vpop.f32.mrf.mxu0
      %4540 = vmatprep.mubr.f32.mxu0 0.0
      %4541 = vmatmul.mubr.f32.gmra.mxu0 %v4329
      %v4542 = vpop.f32.mrf.mxu0
      %v4543 = vadd.f32 0.0, %v4542
      %v4544 = vpop.f32.mrf.mxu0
      %4545 = vmatprep.mubr.f32.mxu0 0.0
      %4546 = vmatmul.mubr.f32.gmra.mxu0 %v4332
      %v4547 = vpop.f32.mrf.mxu0
      %v4548 = vadd.f32 0.0, %v4547
      %v4549 = vpop.f32.mrf.mxu0
      %4550 = vmatprep.mubr.f32.mxu0 0.0
      %4551 = vmatmul.mubr.f32.gmra.mxu0 %v4335
      %v4552 = vpop.f32.mrf.mxu0
      %v4553 = vadd.f32 0.0, %v4552
      %v4554 = vpop.f32.mrf.mxu0
      %4555 = vmatprep.mubr.f32.mxu0 0.0
      %4556 = vmatmul.mubr.f32.gmra.mxu0 %v4338
      %v4557 = vpop.f32.mrf.mxu0
      %v4558 = vadd.f32 0.0, %v4557
      %v4559 = vpop.f32.mrf.mxu0
      %4560 = vmatprep.mubr.f32.mxu0 0.0
      %4561 = vmatmul.mubr.f32.gmra.mxu0 %v4341
      %v4562 = vpop.f32.mrf.mxu0
      %v4563 = vadd.f32 0.0, %v4562
      %v4564 = vpop.f32.mrf.mxu0
      %4565 = vmatprep.mubr.f32.mxu0 0.0
      %4566 = vmatmul.mubr.f32.gmra.mxu0 %v4344
      %v4567 = vpop.f32.mrf.mxu0
      %v4568 = vadd.f32 0.0, %v4567
      %v4569 = vpop.f32.mrf.mxu0
      %4570 = vdwg.mxu0
      %v4571 = vadd.f32 %v4185, %v4413
      %v4572 = vadd.f32 %v4186, %v4418
      %v4573 = vadd.f32 %v4187, %v4423
      %v4574 = vadd.f32 %v4188, %v4428
      %v4575 = vadd.f32 %v4189, %v4433
      %v4576 = vadd.f32 %v4190, %v4438
      %v4577 = vadd.f32 %v4191, %v4443
      %v4578 = vadd.f32 %v4192, %v4448
      %v4579 = vadd.f32 %v4193, %v4453
      %v4580 = vadd.f32 %v4194, %v4458
      %v4581 = vadd.f32 %v4195, %v4463
      %v4582 = vadd.f32 %v4196, %v4468
      %v4583 = vadd.f32 %v4197, %v4473
      %v4584 = vadd.f32 %v4198, %v4478
      %v4585 = vadd.f32 %v4199, %v4483
      %v4586 = vadd.f32 %v4200, %v4488
      %v4587 = vadd.f32 %v4201, %v4493
      %v4588 = vadd.f32 %v4202, %v4498
      %v4589 = vadd.f32 %v4203, %v4503
      %v4590 = vadd.f32 %v4204, %v4508
      %v4591 = vadd.f32 %v4205, %v4513
      %v4592 = vadd.f32 %v4206, %v4518
      %v4593 = vadd.f32 %v4207, %v4523
      %v4594 = vadd.f32 %v4208, %v4528
      %v4595 = vadd.f32 %v4209, %v4533
      %v4596 = vadd.f32 %v4210, %v4538
      %v4597 = vadd.f32 %v4211, %v4543
      %v4598 = vadd.f32 %v4212, %v4548
      %v4599 = vadd.f32 %v4213, %v4553
      %v4600 = vadd.f32 %v4214, %v4558
      %v4601 = vadd.f32 %v4215, %v4563
      %v4602 = vadd.f32 %v4216, %v4568
      %v4603 = vld [vmem:[%s4217 + $0x1] sm:$0xff]
      %v4604 = vld [vmem:[%s4217 + $0x9] sm:$0xff]
      %v4605 = vld [vmem:[%s4217 + $0x19] sm:$0xff]
      %v4606 = vld [vmem:[%s4217 + $0x21] sm:$0xff]
      %v4607 = vld [vmem:[%s4217 + $0x31] sm:$0xff]
      %v4608 = vld [vmem:[%s4217 + $0x39] sm:$0xff]
      %v4609 = vld [vmem:[%s4217 + $0x49] sm:$0xff]
      %v4610 = vld [vmem:[%s4217 + $0x51] sm:$0xff]
      %v4611 = vld [vmem:[%s4217 + $0x61] sm:$0xff]
      %v4612 = vld [vmem:[%s4217 + $0x69] sm:$0xff]
      %v4613 = vld [vmem:[%s4217 + $0x79] sm:$0xff]
      %v4614 = vld [vmem:[%s4217 + $0x81] sm:$0xff]
      %v4615 = vld [vmem:[%s4217 + $0x91] sm:$0xff]
      %v4616 = vld [vmem:[%s4217 + $0x99] sm:$0xff]
      %v4617 = vld [vmem:[%s4217 + $0xa9] sm:$0xff]
      %v4618 = vld [vmem:[%s4217 + $0xb1] sm:$0xff]
      %v4619 = vld [vmem:[%s4217 + $0xc1] sm:$0xff]
      %v4620 = vld [vmem:[%s4217 + $0xc9] sm:$0xff]
      %v4621 = vld [vmem:[%s4217 + $0xd9] sm:$0xff]
      %v4622 = vld [vmem:[%s4217 + $0xe1] sm:$0xff]
      %v4623 = vld [vmem:[%s4217 + $0xf1] sm:$0xff]
      %v4624 = vld [vmem:[%s4217 + $0xf9] sm:$0xff]
      %v4625 = vld [vmem:[%s4217 + $0x109] sm:$0xff]
      %v4626 = vld [vmem:[%s4217 + $0x111] sm:$0xff]
      %v4627 = vld [vmem:[%s4217 + $0x121] sm:$0xff]
      %v4628 = vld [vmem:[%s4217 + $0x129] sm:$0xff]
      %v4629 = vld [vmem:[%s4217 + $0x139] sm:$0xff]
      %v4630 = vld [vmem:[%s4217 + $0x141] sm:$0xff]
      %v4631 = vld [vmem:[%s4217 + $0x151] sm:$0xff]
      %v4632 = vld [vmem:[%s4217 + $0x159] sm:$0xff]
      %v4633 = vld [vmem:[%s4217 + $0x169] sm:$0xff]
      %v4634 = vld [vmem:[%s4217 + $0x171] sm:$0xff]
      %v4636 = vsel %vm939, %v4603, 0
      %v4639 = vsel %vm939, %v4604, 0
      %v4642 = vsel %vm939, %v4605, 0
      %v4645 = vsel %vm939, %v4606, 0
      %v4648 = vsel %vm939, %v4607, 0
      %v4651 = vsel %vm939, %v4608, 0
      %v4654 = vsel %vm939, %v4609, 0
      %v4657 = vsel %vm939, %v4610, 0
      %v4660 = vsel %vm939, %v4611, 0
      %v4663 = vsel %vm939, %v4612, 0
      %v4666 = vsel %vm939, %v4613, 0
      %v4669 = vsel %vm939, %v4614, 0
      %v4672 = vsel %vm939, %v4615, 0
      %v4675 = vsel %vm939, %v4616, 0
      %v4678 = vsel %vm939, %v4617, 0
      %v4681 = vsel %vm939, %v4618, 0
      %v4684 = vsel %vm939, %v4619, 0
      %v4687 = vsel %vm939, %v4620, 0
      %v4690 = vsel %vm939, %v4621, 0
      %v4693 = vsel %vm939, %v4622, 0
      %v4696 = vsel %vm939, %v4623, 0
      %v4699 = vsel %vm939, %v4624, 0
      %v4702 = vsel %vm939, %v4625, 0
      %v4705 = vsel %vm939, %v4626, 0
      %v4708 = vsel %vm939, %v4627, 0
      %v4711 = vsel %vm939, %v4628, 0
      %v4714 = vsel %vm939, %v4629, 0
      %v4717 = vsel %vm939, %v4630, 0
      %v4720 = vsel %vm939, %v4631, 0
      %v4723 = vsel %vm939, %v4632, 0
      %v4726 = vsel %vm939, %v4633, 0
      %v4729 = vsel %vm939, %v4634, 0
      %4731 = vmatprep.subr.mxu0 0.0
      %4732 = vmatpush1.msra.mxu0 0.0
      %4733 = vmatprep.subr.mxu0 0.0
      %4734 = vmatpush1.msra.mxu0 0.0
      %4735 = vmatprep.subr.mxu0 0.0
      %4736 = vmatpush1.msra.mxu0 0.0
      %4737 = vmatprep.subr.mxu0 0.0
      %4738 = vmatpush1.msra.mxu0 0.0
      %4739 = vmatprep.subr.mxu0 0.0
      %4740 = vmatpush1.msra.mxu0 0.0
      %4741 = vmatprep.subr.mxu0 0.0
      %4742 = vmatpush1.msra.mxu0 0.0
      %4743 = vmatprep.subr.mxu0 0.0
      %4744 = vmatpush1.msra.mxu0 0.0
      %4745 = vmatprep.subr.mxu0 0.0
      %4746 = vmatpush1.msra.mxu0 0.0
      %4747 = vmatprep.subr.mxu0 0.0
      %4748 = vmatpush1.msra.mxu0 0.0
      %4749 = vmatprep.subr.mxu0 0.0
      %4750 = vmatpush1.msra.mxu0 0.0
      %4751 = vmatprep.subr.mxu0 0.0
      %4752 = vmatpush1.msra.mxu0 0.0
      %4753 = vmatprep.subr.mxu0 0.0
      %4754 = vmatpush1.msra.mxu0 0.0
      %4755 = vmatprep.subr.mxu0 0.0
      %4756 = vmatpush1.msra.mxu0 %v1966
      %4757 = vmatprep.subr.mxu0 0.0
      %4758 = vmatpush1.msra.mxu0 %v1965
      %4759 = vmatprep.subr.mxu0 0.0
      %4760 = vmatpush1.msra.mxu0 %v1964
      %4761 = vmatprep.subr.mxu0 0.0
      %4762 = vmatpush1.msra.mxu0 %v1963
      %4763 = vmatprep.subr.mxu0 0.0
      %4764 = vmatpush2.msra.mxu0 0.0
      %4765 = vmatprep.subr.mxu0 0.0
      %4766 = vmatpush2.msra.mxu0 0.0
      %4767 = vmatprep.subr.mxu0 0.0
      %4768 = vmatpush2.msra.mxu0 0.0
      %4769 = vmatprep.subr.mxu0 0.0
      %4770 = vmatpush2.msra.mxu0 0.0
      %4771 = vmatprep.subr.mxu0 0.0
      %4772 = vmatpush2.msra.mxu0 0.0
      %4773 = vmatprep.subr.mxu0 0.0
      %4774 = vmatpush2.msra.mxu0 0.0
      %4775 = vmatprep.subr.mxu0 0.0
      %4776 = vmatpush2.msra.mxu0 0.0
      %4777 = vmatprep.subr.mxu0 0.0
      %4778 = vmatpush2.msra.mxu0 0.0
      %4779 = vmatprep.subr.mxu0 0.0
      %4780 = vmatpush2.msra.mxu0 0.0
      %4781 = vmatprep.subr.mxu0 0.0
      %4782 = vmatpush2.msra.mxu0 0.0
      %4783 = vmatprep.subr.mxu0 0.0
      %4784 = vmatpush2.msra.mxu0 0.0
      %4785 = vmatprep.subr.mxu0 0.0
      %4786 = vmatpush2.msra.mxu0 0.0
      %4787 = vmatprep.subr.mxu0 0.0
      %4788 = vmatpush2.msra.mxu0 0.0
      %4789 = vmatprep.subr.mxu0 0.0
      %4790 = vmatpush2.msra.mxu0 0.0
      %4791 = vmatprep.subr.mxu0 0.0
      %4792 = vmatpush2.msra.mxu0 0.0
      %4793 = vmatprep.subr.mxu0 0.0
      %4794 = vmatpush2.msra.mxu0 0.0
      %4795 = vmatprep.mubr.f32.mxu0 0.0
      %4796 = vmatmul.mubr.f32.gmra.mxu0 %v4636
      %v4797 = vpop.f32.mrf.mxu0
      %v4798 = vadd.f32 0.0, %v4797
      %v4799 = vpop.f32.mrf.mxu0
      %4800 = vmatprep.mubr.f32.mxu0 0.0
      %4801 = vmatmul.mubr.f32.gmra.mxu0 %v4639
      %v4802 = vpop.f32.mrf.mxu0
      %v4803 = vadd.f32 0.0, %v4802
      %v4804 = vpop.f32.mrf.mxu0
      %4805 = vmatprep.mubr.f32.mxu0 0.0
      %4806 = vmatmul.mubr.f32.gmra.mxu0 %v4642
      %v4807 = vpop.f32.mrf.mxu0
      %v4808 = vadd.f32 0.0, %v4807
      %v4809 = vpop.f32.mrf.mxu0
      %4810 = vmatprep.mubr.f32.mxu0 0.0
      %4811 = vmatmul.mubr.f32.gmra.mxu0 %v4645
      %v4812 = vpop.f32.mrf.mxu0
      %v4813 = vadd.f32 0.0, %v4812
      %v4814 = vpop.f32.mrf.mxu0
      %4815 = vmatprep.mubr.f32.mxu0 0.0
      %4816 = vmatmul.mubr.f32.gmra.mxu0 %v4648
      %v4817 = vpop.f32.mrf.mxu0
      %v4818 = vadd.f32 0.0, %v4817
      %v4819 = vpop.f32.mrf.mxu0
      %4820 = vmatprep.mubr.f32.mxu0 0.0
      %4821 = vmatmul.mubr.f32.gmra.mxu0 %v4651
      %v4822 = vpop.f32.mrf.mxu0
      %v4823 = vadd.f32 0.0, %v4822
      %v4824 = vpop.f32.mrf.mxu0
      %4825 = vmatprep.mubr.f32.mxu0 0.0
      %4826 = vmatmul.mubr.f32.gmra.mxu0 %v4654
      %v4827 = vpop.f32.mrf.mxu0
      %v4828 = vadd.f32 0.0, %v4827
      %v4829 = vpop.f32.mrf.mxu0
      %4830 = vmatprep.mubr.f32.mxu0 0.0
      %4831 = vmatmul.mubr.f32.gmra.mxu0 %v4657
      %v4832 = vpop.f32.mrf.mxu0
      %v4833 = vadd.f32 0.0, %v4832
      %v4834 = vpop.f32.mrf.mxu0
      %4835 = vmatprep.mubr.f32.mxu0 0.0
      %4836 = vmatmul.mubr.f32.gmra.mxu0 %v4660
      %v4837 = vpop.f32.mrf.mxu0
      %v4838 = vadd.f32 0.0, %v4837
      %v4839 = vpop.f32.mrf.mxu0
      %4840 = vmatprep.mubr.f32.mxu0 0.0
      %4841 = vmatmul.mubr.f32.gmra.mxu0 %v4663
      %v4842 = vpop.f32.mrf.mxu0
      %v4843 = vadd.f32 0.0, %v4842
      %v4844 = vpop.f32.mrf.mxu0
      %4845 = vmatprep.mubr.f32.mxu0 0.0
      %4846 = vmatmul.mubr.f32.gmra.mxu0 %v4666
      %v4847 = vpop.f32.mrf.mxu0
      %v4848 = vadd.f32 0.0, %v4847
      %v4849 = vpop.f32.mrf.mxu0
      %4850 = vmatprep.mubr.f32.mxu0 0.0
      %4851 = vmatmul.mubr.f32.gmra.mxu0 %v4669
      %v4852 = vpop.f32.mrf.mxu0
      %v4853 = vadd.f32 0.0, %v4852
      %v4854 = vpop.f32.mrf.mxu0
      %4855 = vmatprep.mubr.f32.mxu0 0.0
      %4856 = vmatmul.mubr.f32.gmra.mxu0 %v4672
      %v4857 = vpop.f32.mrf.mxu0
      %v4858 = vadd.f32 0.0, %v4857
      %v4859 = vpop.f32.mrf.mxu0
      %4860 = vmatprep.mubr.f32.mxu0 0.0
      %4861 = vmatmul.mubr.f32.gmra.mxu0 %v4675
      %v4862 = vpop.f32.mrf.mxu0
      %v4863 = vadd.f32 0.0, %v4862
      %v4864 = vpop.f32.mrf.mxu0
      %4865 = vmatprep.mubr.f32.mxu0 0.0
      %4866 = vmatmul.mubr.f32.gmra.mxu0 %v4678
      %v4867 = vpop.f32.mrf.mxu0
      %v4868 = vadd.f32 0.0, %v4867
      %v4869 = vpop.f32.mrf.mxu0
      %4870 = vmatprep.mubr.f32.mxu0 0.0
      %4871 = vmatmul.mubr.f32.gmra.mxu0 %v4681
      %v4872 = vpop.f32.mrf.mxu0
      %v4873 = vadd.f32 0.0, %v4872
      %v4874 = vpop.f32.mrf.mxu0
      %4875 = vmatprep.mubr.f32.mxu0 0.0
      %4876 = vmatmul.mubr.f32.gmra.mxu0 %v4684
      %v4877 = vpop.f32.mrf.mxu0
      %v4878 = vadd.f32 0.0, %v4877
      %v4879 = vpop.f32.mrf.mxu0
      %4880 = vmatprep.mubr.f32.mxu0 0.0
      %4881 = vmatmul.mubr.f32.gmra.mxu0 %v4687
      %v4882 = vpop.f32.mrf.mxu0
      %v4883 = vadd.f32 0.0, %v4882
      %v4884 = vpop.f32.mrf.mxu0
      %4885 = vmatprep.mubr.f32.mxu0 0.0
      %4886 = vmatmul.mubr.f32.gmra.mxu0 %v4690
      %v4887 = vpop.f32.mrf.mxu0
      %v4888 = vadd.f32 0.0, %v4887
      %v4889 = vpop.f32.mrf.mxu0
      %4890 = vmatprep.mubr.f32.mxu0 0.0
      %4891 = vmatmul.mubr.f32.gmra.mxu0 %v4693
      %v4892 = vpop.f32.mrf.mxu0
      %v4893 = vadd.f32 0.0, %v4892
      %v4894 = vpop.f32.mrf.mxu0
      %4895 = vmatprep.mubr.f32.mxu0 0.0
      %4896 = vmatmul.mubr.f32.gmra.mxu0 %v4696
      %v4897 = vpop.f32.mrf.mxu0
      %v4898 = vadd.f32 0.0, %v4897
      %v4899 = vpop.f32.mrf.mxu0
      %4900 = vmatprep.mubr.f32.mxu0 0.0
      %4901 = vmatmul.mubr.f32.gmra.mxu0 %v4699
      %v4902 = vpop.f32.mrf.mxu0
      %v4903 = vadd.f32 0.0, %v4902
      %v4904 = vpop.f32.mrf.mxu0
      %4905 = vmatprep.mubr.f32.mxu0 0.0
      %4906 = vmatmul.mubr.f32.gmra.mxu0 %v4702
      %v4907 = vpop.f32.mrf.mxu0
      %v4908 = vadd.f32 0.0, %v4907
      %v4909 = vpop.f32.mrf.mxu0
      %4910 = vmatprep.mubr.f32.mxu0 0.0
      %4911 = vmatmul.mubr.f32.gmra.mxu0 %v4705
      %v4912 = vpop.f32.mrf.mxu0
      %v4913 = vadd.f32 0.0, %v4912
      %v4914 = vpop.f32.mrf.mxu0
      %4915 = vmatprep.mubr.f32.mxu0 0.0
      %4916 = vmatmul.mubr.f32.gmra.mxu0 %v4708
      %v4917 = vpop.f32.mrf.mxu0
      %v4918 = vadd.f32 0.0, %v4917
      %v4919 = vpop.f32.mrf.mxu0
      %4920 = vmatprep.mubr.f32.mxu0 0.0
      %4921 = vmatmul.mubr.f32.gmra.mxu0 %v4711
      %v4922 = vpop.f32.mrf.mxu0
      %v4923 = vadd.f32 0.0, %v4922
      %v4924 = vpop.f32.mrf.mxu0
      %4925 = vmatprep.mubr.f32.mxu0 0.0
      %4926 = vmatmul.mubr.f32.gmra.mxu0 %v4714
      %v4927 = vpop.f32.mrf.mxu0
      %v4928 = vadd.f32 0.0, %v4927
      %v4929 = vpop.f32.mrf.mxu0
      %4930 = vmatprep.mubr.f32.mxu0 0.0
      %4931 = vmatmul.mubr.f32.gmra.mxu0 %v4717
      %v4932 = vpop.f32.mrf.mxu0
      %v4933 = vadd.f32 0.0, %v4932
      %v4934 = vpop.f32.mrf.mxu0
      %4935 = vmatprep.mubr.f32.mxu0 0.0
      %4936 = vmatmul.mubr.f32.gmra.mxu0 %v4720
      %v4937 = vpop.f32.mrf.mxu0
      %v4938 = vadd.f32 0.0, %v4937
      %v4939 = vpop.f32.mrf.mxu0
      %4940 = vmatprep.mubr.f32.mxu0 0.0
      %4941 = vmatmul.mubr.f32.gmra.mxu0 %v4723
      %v4942 = vpop.f32.mrf.mxu0
      %v4943 = vadd.f32 0.0, %v4942
      %v4944 = vpop.f32.mrf.mxu0
      %4945 = vmatprep.mubr.f32.mxu0 0.0
      %4946 = vmatmul.mubr.f32.gmra.mxu0 %v4726
      %v4947 = vpop.f32.mrf.mxu0
      %v4948 = vadd.f32 0.0, %v4947
      %v4949 = vpop.f32.mrf.mxu0
      %4950 = vmatprep.mubr.f32.mxu0 0.0
      %4951 = vmatmul.mubr.f32.gmra.mxu0 %v4729
      %v4952 = vpop.f32.mrf.mxu0
      %v4953 = vadd.f32 0.0, %v4952
      %v4954 = vpop.f32.mrf.mxu0
      %4955 = vdwg.mxu0
      %v4956 = vadd.f32 %v4571, %v4798
      %v4957 = vadd.f32 %v4572, %v4803
      %v4958 = vadd.f32 %v4573, %v4808
      %v4959 = vadd.f32 %v4574, %v4813
      %v4960 = vadd.f32 %v4575, %v4818
      %v4961 = vadd.f32 %v4576, %v4823
      %v4962 = vadd.f32 %v4577, %v4828
      %v4963 = vadd.f32 %v4578, %v4833
      %v4964 = vadd.f32 %v4579, %v4838
      %v4965 = vadd.f32 %v4580, %v4843
      %v4966 = vadd.f32 %v4581, %v4848
      %v4967 = vadd.f32 %v4582, %v4853
      %v4968 = vadd.f32 %v4583, %v4858
      %v4969 = vadd.f32 %v4584, %v4863
      %v4970 = vadd.f32 %v4585, %v4868
      %v4971 = vadd.f32 %v4586, %v4873
      %v4972 = vadd.f32 %v4587, %v4878
      %v4973 = vadd.f32 %v4588, %v4883
      %v4974 = vadd.f32 %v4589, %v4888
      %v4975 = vadd.f32 %v4590, %v4893
      %v4976 = vadd.f32 %v4591, %v4898
      %v4977 = vadd.f32 %v4592, %v4903
      %v4978 = vadd.f32 %v4593, %v4908
      %v4979 = vadd.f32 %v4594, %v4913
      %v4980 = vadd.f32 %v4595, %v4918
      %v4981 = vadd.f32 %v4596, %v4923
      %v4982 = vadd.f32 %v4597, %v4928
      %v4983 = vadd.f32 %v4598, %v4933
      %v4984 = vadd.f32 %v4599, %v4938
      %v4985 = vadd.f32 %v4600, %v4943
      %v4986 = vadd.f32 %v4601, %v4948
      %v4987 = vadd.f32 %v4602, %v4953
      %v4988 = vld [vmem:[%s4217 + $0x2] sm:$0xff]
      %v4989 = vld [vmem:[%s4217 + $0xa] sm:$0xff]
      %v4990 = vld [vmem:[%s4217 + $0x1a] sm:$0xff]
      %v4991 = vld [vmem:[%s4217 + $0x22] sm:$0xff]
      %v4992 = vld [vmem:[%s4217 + $0x32] sm:$0xff]
      %v4993 = vld [vmem:[%s4217 + $0x3a] sm:$0xff]
      %v4994 = vld [vmem:[%s4217 + $0x4a] sm:$0xff]
      %v4995 = vld [vmem:[%s4217 + $0x52] sm:$0xff]
      %v4996 = vld [vmem:[%s4217 + $0x62] sm:$0xff]
      %v4997 = vld [vmem:[%s4217 + $0x6a] sm:$0xff]
      %v4998 = vld [vmem:[%s4217 + $0x7a] sm:$0xff]
      %v4999 = vld [vmem:[%s4217 + $0x82] sm:$0xff]
      %v5000 = vld [vmem:[%s4217 + $0x92] sm:$0xff]
      %v5001 = vld [vmem:[%s4217 + $0x9a] sm:$0xff]
      %v5002 = vld [vmem:[%s4217 + $0xaa] sm:$0xff]
      %v5003 = vld [vmem:[%s4217 + $0xb2] sm:$0xff]
      %v5004 = vld [vmem:[%s4217 + $0xc2] sm:$0xff]
      %v5005 = vld [vmem:[%s4217 + $0xca] sm:$0xff]
      %v5006 = vld [vmem:[%s4217 + $0xda] sm:$0xff]
      %v5007 = vld [vmem:[%s4217 + $0xe2] sm:$0xff]
      %v5008 = vld [vmem:[%s4217 + $0xf2] sm:$0xff]
      %v5009 = vld [vmem:[%s4217 + $0xfa] sm:$0xff]
      %v5010 = vld [vmem:[%s4217 + $0x10a] sm:$0xff]
      %v5011 = vld [vmem:[%s4217 + $0x112] sm:$0xff]
      %v5012 = vld [vmem:[%s4217 + $0x122] sm:$0xff]
      %v5013 = vld [vmem:[%s4217 + $0x12a] sm:$0xff]
      %v5014 = vld [vmem:[%s4217 + $0x13a] sm:$0xff]
      %v5015 = vld [vmem:[%s4217 + $0x142] sm:$0xff]
      %v5016 = vld [vmem:[%s4217 + $0x152] sm:$0xff]
      %v5017 = vld [vmem:[%s4217 + $0x15a] sm:$0xff]
      %v5018 = vld [vmem:[%s4217 + $0x16a] sm:$0xff]
      %v5019 = vld [vmem:[%s4217 + $0x172] sm:$0xff]
      %v5021 = vsel %vm939, %v4988, 0
      %v5024 = vsel %vm939, %v4989, 0
      %v5027 = vsel %vm939, %v4990, 0
      %v5030 = vsel %vm939, %v4991, 0
      %v5033 = vsel %vm939, %v4992, 0
      %v5036 = vsel %vm939, %v4993, 0
      %v5039 = vsel %vm939, %v4994, 0
      %v5042 = vsel %vm939, %v4995, 0
      %v5045 = vsel %vm939, %v4996, 0
      %v5048 = vsel %vm939, %v4997, 0
      %v5051 = vsel %vm939, %v4998, 0
      %v5054 = vsel %vm939, %v4999, 0
      %v5057 = vsel %vm939, %v5000, 0
      %v5060 = vsel %vm939, %v5001, 0
      %v5063 = vsel %vm939, %v5002, 0
      %v5066 = vsel %vm939, %v5003, 0
      %v5069 = vsel %vm939, %v5004, 0
      %v5072 = vsel %vm939, %v5005, 0
      %v5075 = vsel %vm939, %v5006, 0
      %v5078 = vsel %vm939, %v5007, 0
      %v5081 = vsel %vm939, %v5008, 0
      %v5084 = vsel %vm939, %v5009, 0
      %v5087 = vsel %vm939, %v5010, 0
      %v5090 = vsel %vm939, %v5011, 0
      %v5093 = vsel %vm939, %v5012, 0
      %v5096 = vsel %vm939, %v5013, 0
      %v5099 = vsel %vm939, %v5014, 0
      %v5102 = vsel %vm939, %v5015, 0
      %v5105 = vsel %vm939, %v5016, 0
      %v5108 = vsel %vm939, %v5017, 0
      %v5111 = vsel %vm939, %v5018, 0
      %v5114 = vsel %vm939, %v5019, 0
      %5116 = vmatprep.subr.mxu0 0.0
      %5117 = vmatpush1.msra.mxu0 0.0
      %5118 = vmatprep.subr.mxu0 0.0
      %5119 = vmatpush1.msra.mxu0 0.0
      %5120 = vmatprep.subr.mxu0 0.0
      %5121 = vmatpush1.msra.mxu0 0.0
      %5122 = vmatprep.subr.mxu0 0.0
      %5123 = vmatpush1.msra.mxu0 0.0
      %5124 = vmatprep.subr.mxu0 0.0
      %5125 = vmatpush1.msra.mxu0 0.0
      %5126 = vmatprep.subr.mxu0 0.0
      %5127 = vmatpush1.msra.mxu0 0.0
      %5128 = vmatprep.subr.mxu0 0.0
      %5129 = vmatpush1.msra.mxu0 0.0
      %5130 = vmatprep.subr.mxu0 0.0
      %5131 = vmatpush1.msra.mxu0 0.0
      %5132 = vmatprep.subr.mxu0 0.0
      %5133 = vmatpush1.msra.mxu0 0.0
      %5134 = vmatprep.subr.mxu0 0.0
      %5135 = vmatpush1.msra.mxu0 0.0
      %5136 = vmatprep.subr.mxu0 0.0
      %5137 = vmatpush1.msra.mxu0 0.0
      %5138 = vmatprep.subr.mxu0 0.0
      %5139 = vmatpush1.msra.mxu0 0.0
      %5140 = vmatprep.subr.mxu0 0.0
      %5141 = vmatpush1.msra.mxu0 %v1970
      %5142 = vmatprep.subr.mxu0 0.0
      %5143 = vmatpush1.msra.mxu0 %v1969
      %5144 = vmatprep.subr.mxu0 0.0
      %5145 = vmatpush1.msra.mxu0 %v1968
      %5146 = vmatprep.subr.mxu0 0.0
      %5147 = vmatpush1.msra.mxu0 %v1967
      %5148 = vmatprep.subr.mxu0 0.0
      %5149 = vmatpush2.msra.mxu0 0.0
      %5150 = vmatprep.subr.mxu0 0.0
      %5151 = vmatpush2.msra.mxu0 0.0
      %5152 = vmatprep.subr.mxu0 0.0
      %5153 = vmatpush2.msra.mxu0 0.0
      %5154 = vmatprep.subr.mxu0 0.0
      %5155 = vmatpush2.msra.mxu0 0.0
      %5156 = vmatprep.subr.mxu0 0.0
      %5157 = vmatpush2.msra.mxu0 0.0
      %5158 = vmatprep.subr.mxu0 0.0
      %5159 = vmatpush2.msra.mxu0 0.0
      %5160 = vmatprep.subr.mxu0 0.0
      %5161 = vmatpush2.msra.mxu0 0.0
      %5162 = vmatprep.subr.mxu0 0.0
      %5163 = vmatpush2.msra.mxu0 0.0
      %5164 = vmatprep.subr.mxu0 0.0
      %5165 = vmatpush2.msra.mxu0 0.0
      %5166 = vmatprep.subr.mxu0 0.0
      %5167 = vmatpush2.msra.mxu0 0.0
      %5168 = vmatprep.subr.mxu0 0.0
      %5169 = vmatpush2.msra.mxu0 0.0
      %5170 = vmatprep.subr.mxu0 0.0
      %5171 = vmatpush2.msra.mxu0 0.0
      %5172 = vmatprep.subr.mxu0 0.0
      %5173 = vmatpush2.msra.mxu0 0.0
      %5174 = vmatprep.subr.mxu0 0.0
      %5175 = vmatpush2.msra.mxu0 0.0
      %5176 = vmatprep.subr.mxu0 0.0
      %5177 = vmatpush2.msra.mxu0 0.0
      %5178 = vmatprep.subr.mxu0 0.0
      %5179 = vmatpush2.msra.mxu0 0.0
      %5180 = vmatprep.mubr.f32.mxu0 0.0
      %5181 = vmatmul.mubr.f32.gmra.mxu0 %v5021
      %v5182 = vpop.f32.mrf.mxu0
      %v5183 = vadd.f32 0.0, %v5182
      %v5184 = vpop.f32.mrf.mxu0
      %5185 = vmatprep.mubr.f32.mxu0 0.0
      %5186 = vmatmul.mubr.f32.gmra.mxu0 %v5024
      %v5187 = vpop.f32.mrf.mxu0
      %v5188 = vadd.f32 0.0, %v5187
      %v5189 = vpop.f32.mrf.mxu0
      %5190 = vmatprep.mubr.f32.mxu0 0.0
      %5191 = vmatmul.mubr.f32.gmra.mxu0 %v5027
      %v5192 = vpop.f32.mrf.mxu0
      %v5193 = vadd.f32 0.0, %v5192
      %v5194 = vpop.f32.mrf.mxu0
      %5195 = vmatprep.mubr.f32.mxu0 0.0
      %5196 = vmatmul.mubr.f32.gmra.mxu0 %v5030
      %v5197 = vpop.f32.mrf.mxu0
      %v5198 = vadd.f32 0.0, %v5197
      %v5199 = vpop.f32.mrf.mxu0
      %5200 = vmatprep.mubr.f32.mxu0 0.0
      %5201 = vmatmul.mubr.f32.gmra.mxu0 %v5033
      %v5202 = vpop.f32.mrf.mxu0
      %v5203 = vadd.f32 0.0, %v5202
      %v5204 = vpop.f32.mrf.mxu0
      %5205 = vmatprep.mubr.f32.mxu0 0.0
      %5206 = vmatmul.mubr.f32.gmra.mxu0 %v5036
      %v5207 = vpop.f32.mrf.mxu0
      %v5208 = vadd.f32 0.0, %v5207
      %v5209 = vpop.f32.mrf.mxu0
      %5210 = vmatprep.mubr.f32.mxu0 0.0
      %5211 = vmatmul.mubr.f32.gmra.mxu0 %v5039
      %v5212 = vpop.f32.mrf.mxu0
      %v5213 = vadd.f32 0.0, %v5212
      %v5214 = vpop.f32.mrf.mxu0
      %5215 = vmatprep.mubr.f32.mxu0 0.0
      %5216 = vmatmul.mubr.f32.gmra.mxu0 %v5042
      %v5217 = vpop.f32.mrf.mxu0
      %v5218 = vadd.f32 0.0, %v5217
      %v5219 = vpop.f32.mrf.mxu0
      %5220 = vmatprep.mubr.f32.mxu0 0.0
      %5221 = vmatmul.mubr.f32.gmra.mxu0 %v5045
      %v5222 = vpop.f32.mrf.mxu0
      %v5223 = vadd.f32 0.0, %v5222
      %v5224 = vpop.f32.mrf.mxu0
      %5225 = vmatprep.mubr.f32.mxu0 0.0
      %5226 = vmatmul.mubr.f32.gmra.mxu0 %v5048
      %v5227 = vpop.f32.mrf.mxu0
      %v5228 = vadd.f32 0.0, %v5227
      %v5229 = vpop.f32.mrf.mxu0
      %5230 = vmatprep.mubr.f32.mxu0 0.0
      %5231 = vmatmul.mubr.f32.gmra.mxu0 %v5051
      %v5232 = vpop.f32.mrf.mxu0
      %v5233 = vadd.f32 0.0, %v5232
      %v5234 = vpop.f32.mrf.mxu0
      %5235 = vmatprep.mubr.f32.mxu0 0.0
      %5236 = vmatmul.mubr.f32.gmra.mxu0 %v5054
      %v5237 = vpop.f32.mrf.mxu0
      %v5238 = vadd.f32 0.0, %v5237
      %v5239 = vpop.f32.mrf.mxu0
      %5240 = vmatprep.mubr.f32.mxu0 0.0
      %5241 = vmatmul.mubr.f32.gmra.mxu0 %v5057
      %v5242 = vpop.f32.mrf.mxu0
      %v5243 = vadd.f32 0.0, %v5242
      %v5244 = vpop.f32.mrf.mxu0
      %5245 = vmatprep.mubr.f32.mxu0 0.0
      %5246 = vmatmul.mubr.f32.gmra.mxu0 %v5060
      %v5247 = vpop.f32.mrf.mxu0
      %v5248 = vadd.f32 0.0, %v5247
      %v5249 = vpop.f32.mrf.mxu0
      %5250 = vmatprep.mubr.f32.mxu0 0.0
      %5251 = vmatmul.mubr.f32.gmra.mxu0 %v5063
      %v5252 = vpop.f32.mrf.mxu0
      %v5253 = vadd.f32 0.0, %v5252
      %v5254 = vpop.f32.mrf.mxu0
      %5255 = vmatprep.mubr.f32.mxu0 0.0
      %5256 = vmatmul.mubr.f32.gmra.mxu0 %v5066
      %v5257 = vpop.f32.mrf.mxu0
      %v5258 = vadd.f32 0.0, %v5257
      %v5259 = vpop.f32.mrf.mxu0
      %5260 = vmatprep.mubr.f32.mxu0 0.0
      %5261 = vmatmul.mubr.f32.gmra.mxu0 %v5069
      %v5262 = vpop.f32.mrf.mxu0
      %v5263 = vadd.f32 0.0, %v5262
      %v5264 = vpop.f32.mrf.mxu0
      %5265 = vmatprep.mubr.f32.mxu0 0.0
      %5266 = vmatmul.mubr.f32.gmra.mxu0 %v5072
      %v5267 = vpop.f32.mrf.mxu0
      %v5268 = vadd.f32 0.0, %v5267
      %v5269 = vpop.f32.mrf.mxu0
      %5270 = vmatprep.mubr.f32.mxu0 0.0
      %5271 = vmatmul.mubr.f32.gmra.mxu0 %v5075
      %v5272 = vpop.f32.mrf.mxu0
      %v5273 = vadd.f32 0.0, %v5272
      %v5274 = vpop.f32.mrf.mxu0
      %5275 = vmatprep.mubr.f32.mxu0 0.0
      %5276 = vmatmul.mubr.f32.gmra.mxu0 %v5078
      %v5277 = vpop.f32.mrf.mxu0
      %v5278 = vadd.f32 0.0, %v5277
      %v5279 = vpop.f32.mrf.mxu0
      %5280 = vmatprep.mubr.f32.mxu0 0.0
      %5281 = vmatmul.mubr.f32.gmra.mxu0 %v5081
      %v5282 = vpop.f32.mrf.mxu0
      %v5283 = vadd.f32 0.0, %v5282
      %v5284 = vpop.f32.mrf.mxu0
      %5285 = vmatprep.mubr.f32.mxu0 0.0
      %5286 = vmatmul.mubr.f32.gmra.mxu0 %v5084
      %v5287 = vpop.f32.mrf.mxu0
      %v5288 = vadd.f32 0.0, %v5287
      %v5289 = vpop.f32.mrf.mxu0
      %5290 = vmatprep.mubr.f32.mxu0 0.0
      %5291 = vmatmul.mubr.f32.gmra.mxu0 %v5087
      %v5292 = vpop.f32.mrf.mxu0
      %v5293 = vadd.f32 0.0, %v5292
      %v5294 = vpop.f32.mrf.mxu0
      %5295 = vmatprep.mubr.f32.mxu0 0.0
      %5296 = vmatmul.mubr.f32.gmra.mxu0 %v5090
      %v5297 = vpop.f32.mrf.mxu0
      %v5298 = vadd.f32 0.0, %v5297
      %v5299 = vpop.f32.mrf.mxu0
      %5300 = vmatprep.mubr.f32.mxu0 0.0
      %5301 = vmatmul.mubr.f32.gmra.mxu0 %v5093
      %v5302 = vpop.f32.mrf.mxu0
      %v5303 = vadd.f32 0.0, %v5302
      %v5304 = vpop.f32.mrf.mxu0
      %5305 = vmatprep.mubr.f32.mxu0 0.0
      %5306 = vmatmul.mubr.f32.gmra.mxu0 %v5096
      %v5307 = vpop.f32.mrf.mxu0
      %v5308 = vadd.f32 0.0, %v5307
      %v5309 = vpop.f32.mrf.mxu0
      %5310 = vmatprep.mubr.f32.mxu0 0.0
      %5311 = vmatmul.mubr.f32.gmra.mxu0 %v5099
      %v5312 = vpop.f32.mrf.mxu0
      %v5313 = vadd.f32 0.0, %v5312
      %v5314 = vpop.f32.mrf.mxu0
      %5315 = vmatprep.mubr.f32.mxu0 0.0
      %5316 = vmatmul.mubr.f32.gmra.mxu0 %v5102
      %v5317 = vpop.f32.mrf.mxu0
      %v5318 = vadd.f32 0.0, %v5317
      %v5319 = vpop.f32.mrf.mxu0
      %5320 = vmatprep.mubr.f32.mxu0 0.0
      %5321 = vmatmul.mubr.f32.gmra.mxu0 %v5105
      %v5322 = vpop.f32.mrf.mxu0
      %v5323 = vadd.f32 0.0, %v5322
      %v5324 = vpop.f32.mrf.mxu0
      %5325 = vmatprep.mubr.f32.mxu0 0.0
      %5326 = vmatmul.mubr.f32.gmra.mxu0 %v5108
      %v5327 = vpop.f32.mrf.mxu0
      %v5328 = vadd.f32 0.0, %v5327
      %v5329 = vpop.f32.mrf.mxu0
      %5330 = vmatprep.mubr.f32.mxu0 0.0
      %5331 = vmatmul.mubr.f32.gmra.mxu0 %v5111
      %v5332 = vpop.f32.mrf.mxu0
      %v5333 = vadd.f32 0.0, %v5332
      %v5334 = vpop.f32.mrf.mxu0
      %5335 = vmatprep.mubr.f32.mxu0 0.0
      %5336 = vmatmul.mubr.f32.gmra.mxu0 %v5114
      %v5337 = vpop.f32.mrf.mxu0
      %v5338 = vadd.f32 0.0, %v5337
      %v5339 = vpop.f32.mrf.mxu0
      %5340 = vdwg.mxu0
      %v5341 = vadd.f32 %v4956, %v5183
      %v5342 = vadd.f32 %v4957, %v5188
      %v5343 = vadd.f32 %v4958, %v5193
      %v5344 = vadd.f32 %v4959, %v5198
      %v5345 = vadd.f32 %v4960, %v5203
      %v5346 = vadd.f32 %v4961, %v5208
      %v5347 = vadd.f32 %v4962, %v5213
      %v5348 = vadd.f32 %v4963, %v5218
      %v5349 = vadd.f32 %v4964, %v5223
      %v5350 = vadd.f32 %v4965, %v5228
      %v5351 = vadd.f32 %v4966, %v5233
      %v5352 = vadd.f32 %v4967, %v5238
      %v5353 = vadd.f32 %v4968, %v5243
      %v5354 = vadd.f32 %v4969, %v5248
      %v5355 = vadd.f32 %v4970, %v5253
      %v5356 = vadd.f32 %v4971, %v5258
      %v5357 = vadd.f32 %v4972, %v5263
      %v5358 = vadd.f32 %v4973, %v5268
      %v5359 = vadd.f32 %v4974, %v5273
      %v5360 = vadd.f32 %v4975, %v5278
      %v5361 = vadd.f32 %v4976, %v5283
      %v5362 = vadd.f32 %v4977, %v5288
      %v5363 = vadd.f32 %v4978, %v5293
      %v5364 = vadd.f32 %v4979, %v5298
      %v5365 = vadd.f32 %v4980, %v5303
      %v5366 = vadd.f32 %v4981, %v5308
      %v5367 = vadd.f32 %v4982, %v5313
      %v5368 = vadd.f32 %v4983, %v5318
      %v5369 = vadd.f32 %v4984, %v5323
      %v5370 = vadd.f32 %v4985, %v5328
      %v5371 = vadd.f32 %v4986, %v5333
      %v5372 = vadd.f32 %v4987, %v5338
      %v5373 = vld [vmem:[%s8] sm:$0x1]
      %v5375 = vlaneseq
      %v5376 = vshrl.u32 %v5375, 7
      %v5377 = vsub.s32 0, %v5376
      %v5378 = vrot.slane %v5373, %v5377
      %v5380 = vadd.f32 %v5341, %v5378
      %v5381 = vadd.f32 %v5342, %v5378
      %v5382 = vadd.f32 %v5343, %v5378
      %v5383 = vadd.f32 %v5344, %v5378
      %v5384 = vadd.f32 %v5345, %v5378
      %v5385 = vadd.f32 %v5346, %v5378
      %v5386 = vadd.f32 %v5347, %v5378
      %v5387 = vadd.f32 %v5348, %v5378
      %v5388 = vadd.f32 %v5349, %v5378
      %v5389 = vadd.f32 %v5350, %v5378
      %v5390 = vadd.f32 %v5351, %v5378
      %v5391 = vadd.f32 %v5352, %v5378
      %v5392 = vadd.f32 %v5353, %v5378
      %v5393 = vadd.f32 %v5354, %v5378
      %v5394 = vadd.f32 %v5355, %v5378
      %v5395 = vadd.f32 %v5356, %v5378
      %v5396 = vadd.f32 %v5357, %v5378
      %v5397 = vadd.f32 %v5358, %v5378
      %v5398 = vadd.f32 %v5359, %v5378
      %v5399 = vadd.f32 %v5360, %v5378
      %v5400 = vadd.f32 %v5361, %v5378
      %v5401 = vadd.f32 %v5362, %v5378
      %v5402 = vadd.f32 %v5363, %v5378
      %v5403 = vadd.f32 %v5364, %v5378
      %v5404 = vadd.f32 %v5365, %v5378
      %v5405 = vadd.f32 %v5366, %v5378
      %v5406 = vadd.f32 %v5367, %v5378
      %v5407 = vadd.f32 %v5368, %v5378
      %v5408 = vadd.f32 %v5369, %v5378
      %v5409 = vadd.f32 %v5370, %v5378
      %v5410 = vadd.f32 %v5371, %v5378
      %v5411 = vadd.f32 %v5372, %v5378
      %v5412 = vlaneseq
      %v5413 = vshrl.u32 %v5412, 7
      %v5414 = vsub.s32 0, %v5413
      %v5415 = vrot.slane %v1844, %v5414
      %v5416 = vadd.f32 %v5380, %v5415
      %v5417 = vadd.f32 %v5381, %v5415
      %v5418 = vadd.f32 %v5382, %v5415
      %v5419 = vadd.f32 %v5383, %v5415
      %v5420 = vadd.f32 %v5384, %v5415
      %v5421 = vadd.f32 %v5385, %v5415
      %v5422 = vadd.f32 %v5386, %v5415
      %v5423 = vadd.f32 %v5387, %v5415
      %v5424 = vadd.f32 %v5388, %v5415
      %v5425 = vadd.f32 %v5389, %v5415
      %v5426 = vadd.f32 %v5390, %v5415
      %v5427 = vadd.f32 %v5391, %v5415
      %v5428 = vadd.f32 %v5392, %v5415
      %v5429 = vadd.f32 %v5393, %v5415
      %v5430 = vadd.f32 %v5394, %v5415
      %v5431 = vadd.f32 %v5395, %v5415
      %v5432 = vadd.f32 %v5396, %v5415
      %v5433 = vadd.f32 %v5397, %v5415
      %v5434 = vadd.f32 %v5398, %v5415
      %v5435 = vadd.f32 %v5399, %v5415
      %v5436 = vadd.f32 %v5400, %v5415
      %v5437 = vadd.f32 %v5401, %v5415
      %v5438 = vadd.f32 %v5402, %v5415
      %v5439 = vadd.f32 %v5403, %v5415
      %v5440 = vadd.f32 %v5404, %v5415
      %v5441 = vadd.f32 %v5405, %v5415
      %v5442 = vadd.f32 %v5406, %v5415
      %v5443 = vadd.f32 %v5407, %v5415
      %v5444 = vadd.f32 %v5408, %v5415
      %v5445 = vadd.f32 %v5409, %v5415
      %v5446 = vadd.f32 %v5410, %v5415
      %v5447 = vadd.f32 %v5411, %v5415
      %v5448 = vld [vmem:[%s9] sm:$0x1]
      %v5449 = vld [vmem:[%s10] sm:$0x1]
      %v5450 = vld [vmem:[%s11] sm:$0xff]
      %v5451 = vld [vmem:[%s11 + $0x8] sm:$0xff]
      %v5452 = vld [vmem:[%s11 + $0x10] sm:$0xff]
      %v5453 = vld [vmem:[%s11 + $0x18] sm:$0xff]
      %v5454 = vld [vmem:[%s11 + $0x20] sm:$0xff]
      %v5455 = vld [vmem:[%s11 + $0x28] sm:$0xff]
      %v5456 = vld [vmem:[%s11 + $0x30] sm:$0xff]
      %v5457 = vld [vmem:[%s11 + $0x38] sm:$0xff]
      %v5458 = vsel %vm1773, %v5416, 0.0
      %v5459 = vsel %vm1773, %v5417, 0.0
      %v5460 = vadd.f32 %v5458, %v5459
      %v5461 = vsel %vm1773, %v5418, 0.0
      %v5462 = vadd.f32 %v5460, %v5461
      %v5463 = vsel %vm1773, %v5419, 0.0
      %v5464 = vadd.f32 %v5462, %v5463
      %v5465 = vsel %vm1773, %v5420, 0.0
      %v5466 = vadd.f32 %v5464, %v5465
      %v5467 = vsel %vm1773, %v5421, 0.0
      %v5468 = vadd.f32 %v5466, %v5467
      %v5469 = vsel %vm1773, %v5422, 0.0
      %v5470 = vadd.f32 %v5468, %v5469
      %v5471 = vsel %vm1773, %v5423, 0.0
      %v5472 = vadd.f32 %v5470, %v5471
      %v5473 = vsel %vm1773, %v5424, 0.0
      %v5474 = vadd.f32 %v5472, %v5473
      %v5475 = vsel %vm1773, %v5425, 0.0
      %v5476 = vadd.f32 %v5474, %v5475
      %v5477 = vsel %vm1773, %v5426, 0.0
      %v5478 = vadd.f32 %v5476, %v5477
      %v5479 = vsel %vm1773, %v5427, 0.0
      %v5480 = vadd.f32 %v5478, %v5479
      %v5481 = vsel %vm1773, %v5428, 0.0
      %v5482 = vadd.f32 %v5480, %v5481
      %v5483 = vsel %vm1773, %v5429, 0.0
      %v5484 = vadd.f32 %v5482, %v5483
      %v5485 = vsel %vm1773, %v5430, 0.0
      %v5486 = vadd.f32 %v5484, %v5485
      %v5487 = vsel %vm1773, %v5431, 0.0
      %v5488 = vadd.f32 %v5486, %v5487
      %v5489 = vsel %vm1773, %v5432, 0.0
      %v5490 = vadd.f32 %v5488, %v5489
      %v5491 = vsel %vm1773, %v5433, 0.0
      %v5492 = vadd.f32 %v5490, %v5491
      %v5493 = vsel %vm1773, %v5434, 0.0
      %v5494 = vadd.f32 %v5492, %v5493
      %v5495 = vsel %vm1773, %v5435, 0.0
      %v5496 = vadd.f32 %v5494, %v5495
      %v5497 = vsel %vm1773, %v5436, 0.0
      %v5498 = vadd.f32 %v5496, %v5497
      %v5499 = vsel %vm1773, %v5437, 0.0
      %v5500 = vadd.f32 %v5498, %v5499
      %v5501 = vsel %vm1773, %v5438, 0.0
      %v5502 = vadd.f32 %v5500, %v5501
      %v5503 = vsel %vm1773, %v5439, 0.0
      %v5504 = vadd.f32 %v5502, %v5503
      %v5505 = vsel %vm1773, %v5440, 0.0
      %v5506 = vadd.f32 %v5504, %v5505
      %v5507 = vsel %vm1773, %v5441, 0.0
      %v5508 = vadd.f32 %v5506, %v5507
      %v5509 = vsel %vm1773, %v5442, 0.0
      %v5510 = vadd.f32 %v5508, %v5509
      %v5511 = vsel %vm1773, %v5443, 0.0
      %v5512 = vadd.f32 %v5510, %v5511
      %v5513 = vsel %vm1773, %v5444, 0.0
      %v5514 = vadd.f32 %v5512, %v5513
      %v5515 = vsel %vm1773, %v5445, 0.0
      %v5516 = vadd.f32 %v5514, %v5515
      %v5517 = vsel %vm1773, %v5446, 0.0
      %v5518 = vadd.f32 %v5516, %v5517
      %v5519 = vsel %vm1773, %v5447, 0.0
      %v5520 = vadd.f32 %v5518, %v5519
      %v5521 = vrot.slane %v5520, 4
      %v5522 = vadd.f32 %v5520, %v5521
      %v5523 = vrot.slane %v5522, 2
      %v5524 = vadd.f32 %v5522, %v5523
      %v5525 = vrot.slane %v5524, 1
      %v5526 = vadd.f32 %v5524, %v5525
      %v5527 = vmul.f32 %v5416, %v5416
      %v5528 = vmul.f32 %v5417, %v5417
      %v5529 = vmul.f32 %v5418, %v5418
      %v5530 = vmul.f32 %v5419, %v5419
      %v5531 = vmul.f32 %v5420, %v5420
      %v5532 = vmul.f32 %v5421, %v5421
      %v5533 = vmul.f32 %v5422, %v5422
      %v5534 = vmul.f32 %v5423, %v5423
      %v5535 = vmul.f32 %v5424, %v5424
      %v5536 = vmul.f32 %v5425, %v5425
      %v5537 = vmul.f32 %v5426, %v5426
      %v5538 = vmul.f32 %v5427, %v5427
      %v5539 = vmul.f32 %v5428, %v5428
      %v5540 = vmul.f32 %v5429, %v5429
      %v5541 = vmul.f32 %v5430, %v5430
      %v5542 = vmul.f32 %v5431, %v5431
      %v5543 = vmul.f32 %v5432, %v5432
      %v5544 = vmul.f32 %v5433, %v5433
      %v5545 = vmul.f32 %v5434, %v5434
      %v5546 = vmul.f32 %v5435, %v5435
      %v5547 = vmul.f32 %v5436, %v5436
      %v5548 = vmul.f32 %v5437, %v5437
      %v5549 = vmul.f32 %v5438, %v5438
      %v5550 = vmul.f32 %v5439, %v5439
      %v5551 = vmul.f32 %v5440, %v5440
      %v5552 = vmul.f32 %v5441, %v5441
      %v5553 = vmul.f32 %v5442, %v5442
      %v5554 = vmul.f32 %v5443, %v5443
      %v5555 = vmul.f32 %v5444, %v5444
      %v5556 = vmul.f32 %v5445, %v5445
      %v5557 = vmul.f32 %v5446, %v5446
      %v5558 = vmul.f32 %v5447, %v5447
      %v5559 = vsel %vm1773, %v5527, 0.0
      %v5560 = vsel %vm1773, %v5528, 0.0
      %v5561 = vadd.f32 %v5559, %v5560
      %v5562 = vsel %vm1773, %v5529, 0.0
      %v5563 = vadd.f32 %v5561, %v5562
      %v5564 = vsel %vm1773, %v5530, 0.0
      %v5565 = vadd.f32 %v5563, %v5564
      %v5566 = vsel %vm1773, %v5531, 0.0
      %v5567 = vadd.f32 %v5565, %v5566
      %v5568 = vsel %vm1773, %v5532, 0.0
      %v5569 = vadd.f32 %v5567, %v5568
      %v5570 = vsel %vm1773, %v5533, 0.0
      %v5571 = vadd.f32 %v5569, %v5570
      %v5572 = vsel %vm1773, %v5534, 0.0
      %v5573 = vadd.f32 %v5571, %v5572
      %v5574 = vsel %vm1773, %v5535, 0.0
      %v5575 = vadd.f32 %v5573, %v5574
      %v5576 = vsel %vm1773, %v5536, 0.0
      %v5577 = vadd.f32 %v5575, %v5576
      %v5578 = vsel %vm1773, %v5537, 0.0
      %v5579 = vadd.f32 %v5577, %v5578
      %v5580 = vsel %vm1773, %v5538, 0.0
      %v5581 = vadd.f32 %v5579, %v5580
      %v5582 = vsel %vm1773, %v5539, 0.0
      %v5583 = vadd.f32 %v5581, %v5582
      %v5584 = vsel %vm1773, %v5540, 0.0
      %v5585 = vadd.f32 %v5583, %v5584
      %v5586 = vsel %vm1773, %v5541, 0.0
      %v5587 = vadd.f32 %v5585, %v5586
      %v5588 = vsel %vm1773, %v5542, 0.0
      %v5589 = vadd.f32 %v5587, %v5588
      %v5590 = vsel %vm1773, %v5543, 0.0
      %v5591 = vadd.f32 %v5589, %v5590
      %v5592 = vsel %vm1773, %v5544, 0.0
      %v5593 = vadd.f32 %v5591, %v5592
      %v5594 = vsel %vm1773, %v5545, 0.0
      %v5595 = vadd.f32 %v5593, %v5594
      %v5596 = vsel %vm1773, %v5546, 0.0
      %v5597 = vadd.f32 %v5595, %v5596
      %v5598 = vsel %vm1773, %v5547, 0.0
      %v5599 = vadd.f32 %v5597, %v5598
      %v5600 = vsel %vm1773, %v5548, 0.0
      %v5601 = vadd.f32 %v5599, %v5600
      %v5602 = vsel %vm1773, %v5549, 0.0
      %v5603 = vadd.f32 %v5601, %v5602
      %v5604 = vsel %vm1773, %v5550, 0.0
      %v5605 = vadd.f32 %v5603, %v5604
      %v5606 = vsel %vm1773, %v5551, 0.0
      %v5607 = vadd.f32 %v5605, %v5606
      %v5608 = vsel %vm1773, %v5552, 0.0
      %v5609 = vadd.f32 %v5607, %v5608
      %v5610 = vsel %vm1773, %v5553, 0.0
      %v5611 = vadd.f32 %v5609, %v5610
      %v5612 = vsel %vm1773, %v5554, 0.0
      %v5613 = vadd.f32 %v5611, %v5612
      %v5614 = vsel %vm1773, %v5555, 0.0
      %v5615 = vadd.f32 %v5613, %v5614
      %v5616 = vsel %vm1773, %v5556, 0.0
      %v5617 = vadd.f32 %v5615, %v5616
      %v5618 = vsel %vm1773, %v5557, 0.0
      %v5619 = vadd.f32 %v5617, %v5618
      %v5620 = vsel %vm1773, %v5558, 0.0
      %v5621 = vadd.f32 %v5619, %v5620
      %v5622 = vrot.slane %v5621, 4
      %v5623 = vadd.f32 %v5621, %v5622
      %v5624 = vrot.slane %v5623, 2
      %v5625 = vadd.f32 %v5623, %v5624
      %v5626 = vrot.slane %v5625, 1
      %v5627 = vadd.f32 %v5625, %v5626
      %v5629 = vsel %vm1773, %v5526, 0
      %5631 = vmatprep.subr.mxu0 0.0
      %5632 = vmatpush1.msra.mxu0 0.0
      %5633 = vmatprep.subr.mxu0 0.0
      %5634 = vmatpush1.msra.mxu0 0.0
      %5635 = vmatprep.subr.mxu0 0.0
      %5636 = vmatpush1.msra.mxu0 0.0
      %5637 = vmatprep.subr.mxu0 0.0
      %5638 = vmatpush1.msra.mxu0 0.0
      %5639 = vmatprep.subr.mxu0 0.0
      %5640 = vmatpush1.msra.mxu0 0.0
      %5641 = vmatprep.subr.mxu0 0.0
      %5642 = vmatpush1.msra.mxu0 0.0
      %5643 = vmatprep.subr.mxu0 0.0
      %5644 = vmatpush1.msra.mxu0 0.0
      %5645 = vmatprep.subr.mxu0 0.0
      %5646 = vmatpush1.msra.mxu0 0.0
      %5647 = vmatprep.subr.mxu0 0.0
      %5648 = vmatpush1.msra.mxu0 %v5457
      %5649 = vmatprep.subr.mxu0 0.0
      %5650 = vmatpush1.msra.mxu0 %v5456
      %5651 = vmatprep.subr.mxu0 0.0
      %5652 = vmatpush1.msra.mxu0 %v5455
      %5653 = vmatprep.subr.mxu0 0.0
      %5654 = vmatpush1.msra.mxu0 %v5454
      %5655 = vmatprep.subr.mxu0 0.0
      %5656 = vmatpush1.msra.mxu0 %v5453
      %5657 = vmatprep.subr.mxu0 0.0
      %5658 = vmatpush1.msra.mxu0 %v5452
      %5659 = vmatprep.subr.mxu0 0.0
      %5660 = vmatpush1.msra.mxu0 %v5451
      %5661 = vmatprep.subr.mxu0 0.0
      %5662 = vmatpush1.msra.mxu0 %v5450
      %5663 = vmatprep.subr.mxu0 0.0
      %5664 = vmatpush2.msra.mxu0 0.0
      %5665 = vmatprep.subr.mxu0 0.0
      %5666 = vmatpush2.msra.mxu0 0.0
      %5667 = vmatprep.subr.mxu0 0.0
      %5668 = vmatpush2.msra.mxu0 0.0
      %5669 = vmatprep.subr.mxu0 0.0
      %5670 = vmatpush2.msra.mxu0 0.0
      %5671 = vmatprep.subr.mxu0 0.0
      %5672 = vmatpush2.msra.mxu0 0.0
      %5673 = vmatprep.subr.mxu0 0.0
      %5674 = vmatpush2.msra.mxu0 0.0
      %5675 = vmatprep.subr.mxu0 0.0
      %5676 = vmatpush2.msra.mxu0 0.0
      %5677 = vmatprep.subr.mxu0 0.0
      %5678 = vmatpush2.msra.mxu0 0.0
      %5679 = vmatprep.subr.mxu0 0.0
      %5680 = vmatpush2.msra.mxu0 0.0
      %5681 = vmatprep.subr.mxu0 0.0
      %5682 = vmatpush2.msra.mxu0 0.0
      %5683 = vmatprep.subr.mxu0 0.0
      %5684 = vmatpush2.msra.mxu0 0.0
      %5685 = vmatprep.subr.mxu0 0.0
      %5686 = vmatpush2.msra.mxu0 0.0
      %5687 = vmatprep.subr.mxu0 0.0
      %5688 = vmatpush2.msra.mxu0 0.0
      %5689 = vmatprep.subr.mxu0 0.0
      %5690 = vmatpush2.msra.mxu0 0.0
      %5691 = vmatprep.subr.mxu0 0.0
      %5692 = vmatpush2.msra.mxu0 0.0
      %5693 = vmatprep.subr.mxu0 0.0
      %5694 = vmatpush2.msra.mxu0 0.0
      %5695 = vmatprep.mubr.f32.mxu0 0.0
      %5696 = vmatmul.mubr.f32.gmra.mxu0 %v5629
      %v5697 = vpop.f32.mrf.mxu0
      %v5698 = vadd.f32 0.0, %v5697
      %v5699 = vpop.f32.mrf.mxu0
      %5700 = vdwg.mxu0
      %v5701 = vrcp.pop 512.0
      %v5702 = vmul.f32 %v5698, %v5701
      %v5704 = vsel %vm1773, %v5627, 0
      %5706 = vmatprep.subr.mxu0 0.0
      %5707 = vmatpush1.msra.mxu0 0.0
      %5708 = vmatprep.subr.mxu0 0.0
      %5709 = vmatpush1.msra.mxu0 0.0
      %5710 = vmatprep.subr.mxu0 0.0
      %5711 = vmatpush1.msra.mxu0 0.0
      %5712 = vmatprep.subr.mxu0 0.0
      %5713 = vmatpush1.msra.mxu0 0.0
      %5714 = vmatprep.subr.mxu0 0.0
      %5715 = vmatpush1.msra.mxu0 0.0
      %5716 = vmatprep.subr.mxu0 0.0
      %5717 = vmatpush1.msra.mxu0 0.0
      %5718 = vmatprep.subr.mxu0 0.0
      %5719 = vmatpush1.msra.mxu0 0.0
      %5720 = vmatprep.subr.mxu0 0.0
      %5721 = vmatpush1.msra.mxu0 0.0
      %5722 = vmatprep.subr.mxu0 0.0
      %5723 = vmatpush1.msra.mxu0 %v5457
      %5724 = vmatprep.subr.mxu0 0.0
      %5725 = vmatpush1.msra.mxu0 %v5456
      %5726 = vmatprep.subr.mxu0 0.0
      %5727 = vmatpush1.msra.mxu0 %v5455
      %5728 = vmatprep.subr.mxu0 0.0
      %5729 = vmatpush1.msra.mxu0 %v5454
      %5730 = vmatprep.subr.mxu0 0.0
      %5731 = vmatpush1.msra.mxu0 %v5453
      %5732 = vmatprep.subr.mxu0 0.0
      %5733 = vmatpush1.msra.mxu0 %v5452
      %5734 = vmatprep.subr.mxu0 0.0
      %5735 = vmatpush1.msra.mxu0 %v5451
      %5736 = vmatprep.subr.mxu0 0.0
      %5737 = vmatpush1.msra.mxu0 %v5450
      %5738 = vmatprep.subr.mxu0 0.0
      %5739 = vmatpush2.msra.mxu0 0.0
      %5740 = vmatprep.subr.mxu0 0.0
      %5741 = vmatpush2.msra.mxu0 0.0
      %5742 = vmatprep.subr.mxu0 0.0
      %5743 = vmatpush2.msra.mxu0 0.0
      %5744 = vmatprep.subr.mxu0 0.0
      %5745 = vmatpush2.msra.mxu0 0.0
      %5746 = vmatprep.subr.mxu0 0.0
      %5747 = vmatpush2.msra.mxu0 0.0
      %5748 = vmatprep.subr.mxu0 0.0
      %5749 = vmatpush2.msra.mxu0 0.0
      %5750 = vmatprep.subr.mxu0 0.0
      %5751 = vmatpush2.msra.mxu0 0.0
      %5752 = vmatprep.subr.mxu0 0.0
      %5753 = vmatpush2.msra.mxu0 0.0
      %5754 = vmatprep.subr.mxu0 0.0
      %5755 = vmatpush2.msra.mxu0 0.0
      %5756 = vmatprep.subr.mxu0 0.0
      %5757 = vmatpush2.msra.mxu0 0.0
      %5758 = vmatprep.subr.mxu0 0.0
      %5759 = vmatpush2.msra.mxu0 0.0
      %5760 = vmatprep.subr.mxu0 0.0
      %5761 = vmatpush2.msra.mxu0 0.0
      %5762 = vmatprep.subr.mxu0 0.0
      %5763 = vmatpush2.msra.mxu0 0.0
      %5764 = vmatprep.subr.mxu0 0.0
      %5765 = vmatpush2.msra.mxu0 0.0
      %5766 = vmatprep.subr.mxu0 0.0
      %5767 = vmatpush2.msra.mxu0 0.0
      %5768 = vmatprep.subr.mxu0 0.0
      %5769 = vmatpush2.msra.mxu0 0.0
      %5770 = vmatprep.mubr.f32.mxu0 0.0
      %5771 = vmatmul.mubr.f32.gmra.mxu0 %v5704
      %v5772 = vpop.f32.mrf.mxu0
      %v5773 = vadd.f32 0.0, %v5772
      %v5774 = vpop.f32.mrf.mxu0
      %5775 = vdwg.mxu0
      %v5776 = vmul.f32 %v5773, %v5701
      %v5777 = vmul.f32 %v5702, %v5702
      %v5778 = vsub.f32 %v5776, %v5777
      %v5779 = vadd.f32 %v5778, 1e-06
      %v5780 = vrsqrt.pop %v5779
      %v5782 = vsel %vm939, %v5702, 0
      %v5785 = vsel %vm939, %v5450, 0
      %v5788 = vsel %vm939, %v5451, 0
      %v5791 = vsel %vm939, %v5452, 0
      %v5794 = vsel %vm939, %v5453, 0
      %v5797 = vsel %vm939, %v5454, 0
      %v5800 = vsel %vm939, %v5455, 0
      %v5803 = vsel %vm939, %v5456, 0
      %v5806 = vsel %vm939, %v5457, 0
      %5808 = vmatprep.subr.mxu0 0.0
      %5809 = vmatpush1.xpose.msra.mxu0 0.0
      %5810 = vmatprep.subr.mxu0 0.0
      %5811 = vmatpush1.xpose.msra.mxu0 0.0
      %5812 = vmatprep.subr.mxu0 0.0
      %5813 = vmatpush1.xpose.msra.mxu0 0.0
      %5814 = vmatprep.subr.mxu0 0.0
      %5815 = vmatpush1.xpose.msra.mxu0 0.0
      %5816 = vmatprep.subr.mxu0 0.0
      %5817 = vmatpush1.xpose.msra.mxu0 0.0
      %5818 = vmatprep.subr.mxu0 0.0
      %5819 = vmatpush1.xpose.msra.mxu0 0.0
      %5820 = vmatprep.subr.mxu0 0.0
      %5821 = vmatpush1.xpose.msra.mxu0 0.0
      %5822 = vmatprep.subr.mxu0 0.0
      %5823 = vmatpush1.xpose.msra.mxu0 0.0
      %5824 = vmatprep.subr.mxu0 0.0
      %5825 = vmatpush1.xpose.msra.mxu0 %v5806
      %5826 = vmatprep.subr.mxu0 0.0
      %5827 = vmatpush1.xpose.msra.mxu0 %v5803
      %5828 = vmatprep.subr.mxu0 0.0
      %5829 = vmatpush1.xpose.msra.mxu0 %v5800
      %5830 = vmatprep.subr.mxu0 0.0
      %5831 = vmatpush1.xpose.msra.mxu0 %v5797
      %5832 = vmatprep.subr.mxu0 0.0
      %5833 = vmatpush1.xpose.msra.mxu0 %v5794
      %5834 = vmatprep.subr.mxu0 0.0
      %5835 = vmatpush1.xpose.msra.mxu0 %v5791
      %5836 = vmatprep.subr.mxu0 0.0
      %5837 = vmatpush1.xpose.msra.mxu0 %v5788
      %5838 = vmatprep.subr.mxu0 0.0
      %5839 = vmatpush1.xpose.msra.mxu0 %v5785
      %5840 = vmatprep.subr.mxu0 0.0
      %5841 = vmatpush2.xpose.msra.mxu0 0.0
      %5842 = vmatprep.subr.mxu0 0.0
      %5843 = vmatpush2.xpose.msra.mxu0 0.0
      %5844 = vmatprep.subr.mxu0 0.0
      %5845 = vmatpush2.xpose.msra.mxu0 0.0
      %5846 = vmatprep.subr.mxu0 0.0
      %5847 = vmatpush2.xpose.msra.mxu0 0.0
      %5848 = vmatprep.subr.mxu0 0.0
      %5849 = vmatpush2.xpose.msra.mxu0 0.0
      %5850 = vmatprep.subr.mxu0 0.0
      %5851 = vmatpush2.xpose.msra.mxu0 0.0
      %5852 = vmatprep.subr.mxu0 0.0
      %5853 = vmatpush2.xpose.msra.mxu0 0.0
      %5854 = vmatprep.subr.mxu0 0.0
      %5855 = vmatpush2.xpose.msra.mxu0 0.0
      %5856 = vmatprep.subr.mxu0 0.0
      %5857 = vmatpush2.xpose.msra.mxu0 0.0
      %5858 = vmatprep.subr.mxu0 0.0
      %5859 = vmatpush2.xpose.msra.mxu0 0.0
      %5860 = vmatprep.subr.mxu0 0.0
      %5861 = vmatpush2.xpose.msra.mxu0 0.0
      %5862 = vmatprep.subr.mxu0 0.0
      %5863 = vmatpush2.xpose.msra.mxu0 0.0
      %5864 = vmatprep.subr.mxu0 0.0
      %5865 = vmatpush2.xpose.msra.mxu0 0.0
      %5866 = vmatprep.subr.mxu0 0.0
      %5867 = vmatpush2.xpose.msra.mxu0 0.0
      %5868 = vmatprep.subr.mxu0 0.0
      %5869 = vmatpush2.xpose.msra.mxu0 0.0
      %5870 = vmatprep.subr.mxu0 0.0
      %5871 = vmatpush2.xpose.msra.mxu0 0.0
      %5872 = vmatprep.mubr.f32.mxu0 0.0
      %5873 = vmatmul.mubr.f32.gmra.mxu0 %v5782
      %v5874 = vpop.f32.mrf.mxu0
      %v5875 = vadd.f32 0.0, %v5874
      %v5876 = vpop.f32.mrf.mxu0
      %5877 = vdwg.mxu0
      %v5879 = vsel %vm939, %v5780, 0
      %5881 = vmatprep.subr.mxu0 0.0
      %5882 = vmatpush1.xpose.msra.mxu0 0.0
      %5883 = vmatprep.subr.mxu0 0.0
      %5884 = vmatpush1.xpose.msra.mxu0 0.0
      %5885 = vmatprep.subr.mxu0 0.0
      %5886 = vmatpush1.xpose.msra.mxu0 0.0
      %5887 = vmatprep.subr.mxu0 0.0
      %5888 = vmatpush1.xpose.msra.mxu0 0.0
      %5889 = vmatprep.subr.mxu0 0.0
      %5890 = vmatpush1.xpose.msra.mxu0 0.0
      %5891 = vmatprep.subr.mxu0 0.0
      %5892 = vmatpush1.xpose.msra.mxu0 0.0
      %5893 = vmatprep.subr.mxu0 0.0
      %5894 = vmatpush1.xpose.msra.mxu0 0.0
      %5895 = vmatprep.subr.mxu0 0.0
      %5896 = vmatpush1.xpose.msra.mxu0 0.0
      %5897 = vmatprep.subr.mxu0 0.0
      %5898 = vmatpush1.xpose.msra.mxu0 %v5806
      %5899 = vmatprep.subr.mxu0 0.0
      %5900 = vmatpush1.xpose.msra.mxu0 %v5803
      %5901 = vmatprep.subr.mxu0 0.0
      %5902 = vmatpush1.xpose.msra.mxu0 %v5800
      %5903 = vmatprep.subr.mxu0 0.0
      %5904 = vmatpush1.xpose.msra.mxu0 %v5797
      %5905 = vmatprep.subr.mxu0 0.0
      %5906 = vmatpush1.xpose.msra.mxu0 %v5794
      %5907 = vmatprep.subr.mxu0 0.0
      %5908 = vmatpush1.xpose.msra.mxu0 %v5791
      %5909 = vmatprep.subr.mxu0 0.0
      %5910 = vmatpush1.xpose.msra.mxu0 %v5788
      %5911 = vmatprep.subr.mxu0 0.0
      %5912 = vmatpush1.xpose.msra.mxu0 %v5785
      %5913 = vmatprep.subr.mxu0 0.0
      %5914 = vmatpush2.xpose.msra.mxu0 0.0
      %5915 = vmatprep.subr.mxu0 0.0
      %5916 = vmatpush2.xpose.msra.mxu0 0.0
      %5917 = vmatprep.subr.mxu0 0.0
      %5918 = vmatpush2.xpose.msra.mxu0 0.0
      %5919 = vmatprep.subr.mxu0 0.0
      %5920 = vmatpush2.xpose.msra.mxu0 0.0
      %5921 = vmatprep.subr.mxu0 0.0
      %5922 = vmatpush2.xpose.msra.mxu0 0.0
      %5923 = vmatprep.subr.mxu0 0.0
      %5924 = vmatpush2.xpose.msra.mxu0 0.0
      %5925 = vmatprep.subr.mxu0 0.0
      %5926 = vmatpush2.xpose.msra.mxu0 0.0
      %5927 = vmatprep.subr.mxu0 0.0
      %5928 = vmatpush2.xpose.msra.mxu0 0.0
      %5929 = vmatprep.subr.mxu0 0.0
      %5930 = vmatpush2.xpose.msra.mxu0 0.0
      %5931 = vmatprep.subr.mxu0 0.0
      %5932 = vmatpush2.xpose.msra.mxu0 0.0
      %5933 = vmatprep.subr.mxu0 0.0
      %5934 = vmatpush2.xpose.msra.mxu0 0.0
      %5935 = vmatprep.subr.mxu0 0.0
      %5936 = vmatpush2.xpose.msra.mxu0 0.0
      %5937 = vmatprep.subr.mxu0 0.0
      %5938 = vmatpush2.xpose.msra.mxu0 0.0
      %5939 = vmatprep.subr.mxu0 0.0
      %5940 = vmatpush2.xpose.msra.mxu0 0.0
      %5941 = vmatprep.subr.mxu0 0.0
      %5942 = vmatpush2.xpose.msra.mxu0 0.0
      %5943 = vmatprep.subr.mxu0 0.0
      %5944 = vmatpush2.xpose.msra.mxu0 0.0
      %5945 = vmatprep.mubr.f32.mxu0 0.0
      %5946 = vmatmul.mubr.f32.gmra.mxu0 %v5879
      %v5947 = vpop.f32.mrf.mxu0
      %v5948 = vadd.f32 0.0, %v5947
      %v5949 = vpop.f32.mrf.mxu0
      %5950 = vdwg.mxu0
      %v5951 = vlaneseq
      %v5952 = vshrl.u32 %v5951, 7
      %v5953 = vsub.s32 0, %v5952
      %v5954 = vrot.slane %v5875, %v5953
      %v5955 = vsub.f32 %v5416, %v5954
      %v5956 = vsub.f32 %v5417, %v5954
      %v5957 = vsub.f32 %v5418, %v5954
      %v5958 = vsub.f32 %v5419, %v5954
      %v5959 = vsub.f32 %v5420, %v5954
      %v5960 = vsub.f32 %v5421, %v5954
      %v5961 = vsub.f32 %v5422, %v5954
      %v5962 = vsub.f32 %v5423, %v5954
      %v5963 = vsub.f32 %v5424, %v5954
      %v5964 = vsub.f32 %v5425, %v5954
      %v5965 = vsub.f32 %v5426, %v5954
      %v5966 = vsub.f32 %v5427, %v5954
      %v5967 = vsub.f32 %v5428, %v5954
      %v5968 = vsub.f32 %v5429, %v5954
      %v5969 = vsub.f32 %v5430, %v5954
      %v5970 = vsub.f32 %v5431, %v5954
      %v5971 = vsub.f32 %v5432, %v5954
      %v5972 = vsub.f32 %v5433, %v5954
      %v5973 = vsub.f32 %v5434, %v5954
      %v5974 = vsub.f32 %v5435, %v5954
      %v5975 = vsub.f32 %v5436, %v5954
      %v5976 = vsub.f32 %v5437, %v5954
      %v5977 = vsub.f32 %v5438, %v5954
      %v5978 = vsub.f32 %v5439, %v5954
      %v5979 = vsub.f32 %v5440, %v5954
      %v5980 = vsub.f32 %v5441, %v5954
      %v5981 = vsub.f32 %v5442, %v5954
      %v5982 = vsub.f32 %v5443, %v5954
      %v5983 = vsub.f32 %v5444, %v5954
      %v5984 = vsub.f32 %v5445, %v5954
      %v5985 = vsub.f32 %v5446, %v5954
      %v5986 = vsub.f32 %v5447, %v5954
      %v5987 = vmul.f32 %v5948, %v5448
      %v5988 = vlaneseq
      %v5989 = vshrl.u32 %v5988, 7
      %v5990 = vsub.s32 0, %v5989
      %v5991 = vrot.slane %v5987, %v5990
      %v5992 = vmul.f32 %v5955, %v5991
      %v5993 = vmul.f32 %v5956, %v5991
      %v5994 = vmul.f32 %v5957, %v5991
      %v5995 = vmul.f32 %v5958, %v5991
      %v5996 = vmul.f32 %v5959, %v5991
      %v5997 = vmul.f32 %v5960, %v5991
      %v5998 = vmul.f32 %v5961, %v5991
      %v5999 = vmul.f32 %v5962, %v5991
      %v6000 = vmul.f32 %v5963, %v5991
      %v6001 = vmul.f32 %v5964, %v5991
      %v6002 = vmul.f32 %v5965, %v5991
      %v6003 = vmul.f32 %v5966, %v5991
      %v6004 = vmul.f32 %v5967, %v5991
      %v6005 = vmul.f32 %v5968, %v5991
      %v6006 = vmul.f32 %v5969, %v5991
      %v6007 = vmul.f32 %v5970, %v5991
      %v6008 = vmul.f32 %v5971, %v5991
      %v6009 = vmul.f32 %v5972, %v5991
      %v6010 = vmul.f32 %v5973, %v5991
      %v6011 = vmul.f32 %v5974, %v5991
      %v6012 = vmul.f32 %v5975, %v5991
      %v6013 = vmul.f32 %v5976, %v5991
      %v6014 = vmul.f32 %v5977, %v5991
      %v6015 = vmul.f32 %v5978, %v5991
      %v6016 = vmul.f32 %v5979, %v5991
      %v6017 = vmul.f32 %v5980, %v5991
      %v6018 = vmul.f32 %v5981, %v5991
      %v6019 = vmul.f32 %v5982, %v5991
      %v6020 = vmul.f32 %v5983, %v5991
      %v6021 = vmul.f32 %v5984, %v5991
      %v6022 = vmul.f32 %v5985, %v5991
      %v6023 = vmul.f32 %v5986, %v5991
      %v6025 = vlaneseq
      %v6026 = vshrl.u32 %v6025, 7
      %v6027 = vsub.s32 0, %v6026
      %v6028 = vrot.slane %v5449, %v6027
      %v6030 = vadd.f32 %v5992, %v6028
      %v6031 = vadd.f32 %v5993, %v6028
      %v6032 = vadd.f32 %v5994, %v6028
      %v6033 = vadd.f32 %v5995, %v6028
      %v6034 = vadd.f32 %v5996, %v6028
      %v6035 = vadd.f32 %v5997, %v6028
      %v6036 = vadd.f32 %v5998, %v6028
      %v6037 = vadd.f32 %v5999, %v6028
      %v6038 = vadd.f32 %v6000, %v6028
      %v6039 = vadd.f32 %v6001, %v6028
      %v6040 = vadd.f32 %v6002, %v6028
      %v6041 = vadd.f32 %v6003, %v6028
      %v6042 = vadd.f32 %v6004, %v6028
      %v6043 = vadd.f32 %v6005, %v6028
      %v6044 = vadd.f32 %v6006, %v6028
      %v6045 = vadd.f32 %v6007, %v6028
      %v6046 = vadd.f32 %v6008, %v6028
      %v6047 = vadd.f32 %v6009, %v6028
      %v6048 = vadd.f32 %v6010, %v6028
      %v6049 = vadd.f32 %v6011, %v6028
      %v6050 = vadd.f32 %v6012, %v6028
      %v6051 = vadd.f32 %v6013, %v6028
      %v6052 = vadd.f32 %v6014, %v6028
      %v6053 = vadd.f32 %v6015, %v6028
      %v6054 = vadd.f32 %v6016, %v6028
      %v6055 = vadd.f32 %v6017, %v6028
      %v6056 = vadd.f32 %v6018, %v6028
      %v6057 = vadd.f32 %v6019, %v6028
      %v6058 = vadd.f32 %v6020, %v6028
      %v6059 = vadd.f32 %v6021, %v6028
      %v6060 = vadd.f32 %v6022, %v6028
      %v6061 = vadd.f32 %v6023, %v6028
      %v6062 = vxor.u32 %v6030, 2147483648
      %v6063 = vxor.u32 %v6031, 2147483648
      %v6064 = vxor.u32 %v6032, 2147483648
      %v6065 = vxor.u32 %v6033, 2147483648
      %v6066 = vxor.u32 %v6034, 2147483648
      %v6067 = vxor.u32 %v6035, 2147483648
      %v6068 = vxor.u32 %v6036, 2147483648
      %v6069 = vxor.u32 %v6037, 2147483648
      %v6070 = vxor.u32 %v6038, 2147483648
      %v6071 = vxor.u32 %v6039, 2147483648
      %v6072 = vxor.u32 %v6040, 2147483648
      %v6073 = vxor.u32 %v6041, 2147483648
      %v6074 = vxor.u32 %v6042, 2147483648
      %v6075 = vxor.u32 %v6043, 2147483648
      %v6076 = vxor.u32 %v6044, 2147483648
      %v6077 = vxor.u32 %v6045, 2147483648
      %v6078 = vxor.u32 %v6046, 2147483648
      %v6079 = vxor.u32 %v6047, 2147483648
      %v6080 = vxor.u32 %v6048, 2147483648
      %v6081 = vxor.u32 %v6049, 2147483648
      %v6082 = vxor.u32 %v6050, 2147483648
      %v6083 = vxor.u32 %v6051, 2147483648
      %v6084 = vxor.u32 %v6052, 2147483648
      %v6085 = vxor.u32 %v6053, 2147483648
      %v6086 = vxor.u32 %v6054, 2147483648
      %v6087 = vxor.u32 %v6055, 2147483648
      %v6088 = vxor.u32 %v6056, 2147483648
      %v6089 = vxor.u32 %v6057, 2147483648
      %v6090 = vxor.u32 %v6058, 2147483648
      %v6091 = vxor.u32 %v6059, 2147483648
      %v6092 = vxor.u32 %v6060, 2147483648
      %v6093 = vxor.u32 %v6061, 2147483648
      %v6094 = vmul.f32 %v6062, 1.442695
      %v6095 = vpow.pop %v6094
      %v6096 = vmul.f32 %v6063, 1.442695
      %v6097 = vpow.pop %v6096
      %v6098 = vmul.f32 %v6064, 1.442695
      %v6099 = vpow.pop %v6098
      %v6100 = vmul.f32 %v6065, 1.442695
      %v6101 = vpow.pop %v6100
      %v6102 = vmul.f32 %v6066, 1.442695
      %v6103 = vpow.pop %v6102
      %v6104 = vmul.f32 %v6067, 1.442695
      %v6105 = vpow.pop %v6104
      %v6106 = vmul.f32 %v6068, 1.442695
      %v6107 = vpow.pop %v6106
      %v6108 = vmul.f32 %v6069, 1.442695
      %v6109 = vpow.pop %v6108
      %v6110 = vmul.f32 %v6070, 1.442695
      %v6111 = vpow.pop %v6110
      %v6112 = vmul.f32 %v6071, 1.442695
      %v6113 = vpow.pop %v6112
      %v6114 = vmul.f32 %v6072, 1.442695
      %v6115 = vpow.pop %v6114
      %v6116 = vmul.f32 %v6073, 1.442695
      %v6117 = vpow.pop %v6116
      %v6118 = vmul.f32 %v6074, 1.442695
      %v6119 = vpow.pop %v6118
      %v6120 = vmul.f32 %v6075, 1.442695
      %v6121 = vpow.pop %v6120
      %v6122 = vmul.f32 %v6076, 1.442695
      %v6123 = vpow.pop %v6122
      %v6124 = vmul.f32 %v6077, 1.442695
      %v6125 = vpow.pop %v6124
      %v6126 = vmul.f32 %v6078, 1.442695
      %v6127 = vpow.pop %v6126
      %v6128 = vmul.f32 %v6079, 1.442695
      %v6129 = vpow.pop %v6128
      %v6130 = vmul.f32 %v6080, 1.442695
      %v6131 = vpow.pop %v6130
      %v6132 = vmul.f32 %v6081, 1.442695
      %v6133 = vpow.pop %v6132
      %v6134 = vmul.f32 %v6082, 1.442695
      %v6135 = vpow.pop %v6134
      %v6136 = vmul.f32 %v6083, 1.442695
      %v6137 = vpow.pop %v6136
      %v6138 = vmul.f32 %v6084, 1.442695
      %v6139 = vpow.pop %v6138
      %v6140 = vmul.f32 %v6085, 1.442695
      %v6141 = vpow.pop %v6140
      %v6142 = vmul.f32 %v6086, 1.442695
      %v6143 = vpow.pop %v6142
      %v6144 = vmul.f32 %v6087, 1.442695
      %v6145 = vpow.pop %v6144
      %v6146 = vmul.f32 %v6088, 1.442695
      %v6147 = vpow.pop %v6146
      %v6148 = vmul.f32 %v6089, 1.442695
      %v6149 = vpow.pop %v6148
      %v6150 = vmul.f32 %v6090, 1.442695
      %v6151 = vpow.pop %v6150
      %v6152 = vmul.f32 %v6091, 1.442695
      %v6153 = vpow.pop %v6152
      %v6154 = vmul.f32 %v6092, 1.442695
      %v6155 = vpow.pop %v6154
      %v6156 = vmul.f32 %v6093, 1.442695
      %v6157 = vpow.pop %v6156
      %v6158 = vadd.f32 %v6095, 1.0
      %v6159 = vadd.f32 %v6097, 1.0
      %v6160 = vadd.f32 %v6099, 1.0
      %v6161 = vadd.f32 %v6101, 1.0
      %v6162 = vadd.f32 %v6103, 1.0
      %v6163 = vadd.f32 %v6105, 1.0
      %v6164 = vadd.f32 %v6107, 1.0
      %v6165 = vadd.f32 %v6109, 1.0
      %v6166 = vadd.f32 %v6111, 1.0
      %v6167 = vadd.f32 %v6113, 1.0
      %v6168 = vadd.f32 %v6115, 1.0
      %v6169 = vadd.f32 %v6117, 1.0
      %v6170 = vadd.f32 %v6119, 1.0
      %v6171 = vadd.f32 %v6121, 1.0
      %v6172 = vadd.f32 %v6123, 1.0
      %v6173 = vadd.f32 %v6125, 1.0
      %v6174 = vadd.f32 %v6127, 1.0
      %v6175 = vadd.f32 %v6129, 1.0
      %v6176 = vadd.f32 %v6131, 1.0
      %v6177 = vadd.f32 %v6133, 1.0
      %v6178 = vadd.f32 %v6135, 1.0
      %v6179 = vadd.f32 %v6137, 1.0
      %v6180 = vadd.f32 %v6139, 1.0
      %v6181 = vadd.f32 %v6141, 1.0
      %v6182 = vadd.f32 %v6143, 1.0
      %v6183 = vadd.f32 %v6145, 1.0
      %v6184 = vadd.f32 %v6147, 1.0
      %v6185 = vadd.f32 %v6149, 1.0
      %v6186 = vadd.f32 %v6151, 1.0
      %v6187 = vadd.f32 %v6153, 1.0
      %v6188 = vadd.f32 %v6155, 1.0
      %v6189 = vadd.f32 %v6157, 1.0
      %v6190 = vrcp.pop %v6158
      %v6191 = vmul.f32 1.0, %v6190
      %v6192 = vrcp.pop %v6159
      %v6193 = vmul.f32 1.0, %v6192
      %v6194 = vrcp.pop %v6160
      %v6195 = vmul.f32 1.0, %v6194
      %v6196 = vrcp.pop %v6161
      %v6197 = vmul.f32 1.0, %v6196
      %v6198 = vrcp.pop %v6162
      %v6199 = vmul.f32 1.0, %v6198
      %v6200 = vrcp.pop %v6163
      %v6201 = vmul.f32 1.0, %v6200
      %v6202 = vrcp.pop %v6164
      %v6203 = vmul.f32 1.0, %v6202
      %v6204 = vrcp.pop %v6165
      %v6205 = vmul.f32 1.0, %v6204
      %v6206 = vrcp.pop %v6166
      %v6207 = vmul.f32 1.0, %v6206
      %v6208 = vrcp.pop %v6167
      %v6209 = vmul.f32 1.0, %v6208
      %v6210 = vrcp.pop %v6168
      %v6211 = vmul.f32 1.0, %v6210
      %v6212 = vrcp.pop %v6169
      %v6213 = vmul.f32 1.0, %v6212
      %v6214 = vrcp.pop %v6170
      %v6215 = vmul.f32 1.0, %v6214
      %v6216 = vrcp.pop %v6171
      %v6217 = vmul.f32 1.0, %v6216
      %v6218 = vrcp.pop %v6172
      %v6219 = vmul.f32 1.0, %v6218
      %v6220 = vrcp.pop %v6173
      %v6221 = vmul.f32 1.0, %v6220
      %v6222 = vrcp.pop %v6174
      %v6223 = vmul.f32 1.0, %v6222
      %v6224 = vrcp.pop %v6175
      %v6225 = vmul.f32 1.0, %v6224
      %v6226 = vrcp.pop %v6176
      %v6227 = vmul.f32 1.0, %v6226
      %v6228 = vrcp.pop %v6177
      %v6229 = vmul.f32 1.0, %v6228
      %v6230 = vrcp.pop %v6178
      %v6231 = vmul.f32 1.0, %v6230
      %v6232 = vrcp.pop %v6179
      %v6233 = vmul.f32 1.0, %v6232
      %v6234 = vrcp.pop %v6180
      %v6235 = vmul.f32 1.0, %v6234
      %v6236 = vrcp.pop %v6181
      %v6237 = vmul.f32 1.0, %v6236
      %v6238 = vrcp.pop %v6182
      %v6239 = vmul.f32 1.0, %v6238
      %v6240 = vrcp.pop %v6183
      %v6241 = vmul.f32 1.0, %v6240
      %v6242 = vrcp.pop %v6184
      %v6243 = vmul.f32 1.0, %v6242
      %v6244 = vrcp.pop %v6185
      %v6245 = vmul.f32 1.0, %v6244
      %v6246 = vrcp.pop %v6186
      %v6247 = vmul.f32 1.0, %v6246
      %v6248 = vrcp.pop %v6187
      %v6249 = vmul.f32 1.0, %v6248
      %v6250 = vrcp.pop %v6188
      %v6251 = vmul.f32 1.0, %v6250
      %v6252 = vrcp.pop %v6189
      %v6253 = vmul.f32 1.0, %v6252
      %v6254 = vmul.f32 %v6030, %v6191
      %v6255 = vmul.f32 %v6031, %v6193
      %v6256 = vmul.f32 %v6032, %v6195
      %v6257 = vmul.f32 %v6033, %v6197
      %v6258 = vmul.f32 %v6034, %v6199
      %v6259 = vmul.f32 %v6035, %v6201
      %v6260 = vmul.f32 %v6036, %v6203
      %v6261 = vmul.f32 %v6037, %v6205
      %v6262 = vmul.f32 %v6038, %v6207
      %v6263 = vmul.f32 %v6039, %v6209
      %v6264 = vmul.f32 %v6040, %v6211
      %v6265 = vmul.f32 %v6041, %v6213
      %v6266 = vmul.f32 %v6042, %v6215
      %v6267 = vmul.f32 %v6043, %v6217
      %v6268 = vmul.f32 %v6044, %v6219
      %v6269 = vmul.f32 %v6045, %v6221
      %v6270 = vmul.f32 %v6046, %v6223
      %v6271 = vmul.f32 %v6047, %v6225
      %v6272 = vmul.f32 %v6048, %v6227
      %v6273 = vmul.f32 %v6049, %v6229
      %v6274 = vmul.f32 %v6050, %v6231
      %v6275 = vmul.f32 %v6051, %v6233
      %v6276 = vmul.f32 %v6052, %v6235
      %v6277 = vmul.f32 %v6053, %v6237
      %v6278 = vmul.f32 %v6054, %v6239
      %v6279 = vmul.f32 %v6055, %v6241
      %v6280 = vmul.f32 %v6056, %v6243
      %v6281 = vmul.f32 %v6057, %v6245
      %v6282 = vmul.f32 %v6058, %v6247
      %v6283 = vmul.f32 %v6059, %v6249
      %v6284 = vmul.f32 %v6060, %v6251
      %v6285 = vmul.f32 %v6061, %v6253
      %6286 = vst.msk [vmem:[#allocation3] sm:$0xff] %vm1773, 0.0
      %6287 = vst.msk [vmem:[#allocation3 + $0x8] sm:$0xff] %vm1773, 0.0
      %vm6288 = vcmask 517120
      %6289 = vst.msk [vmem:[#allocation3 + $0x10] sm:$0x3] %vm6288, 0.0
      %6290 = vst.msk [vmem:[#allocation3 + $0x18] sm:$0xff] %vm1773, 0.0
      %6291 = vst.msk [vmem:[#allocation3 + $0x20] sm:$0xff] %vm1773, 0.0
      %6292 = vst.msk [vmem:[#allocation3 + $0x28] sm:$0x3] %vm6288, 0.0
      %6293 = vst.msk [vmem:[#allocation3 + $0x30] sm:$0xff] %vm1773, 0.0
      %6294 = vst.msk [vmem:[#allocation3 + $0x38] sm:$0xff] %vm1773, 0.0
      %6295 = vst.msk [vmem:[#allocation3 + $0x40] sm:$0x3] %vm6288, 0.0
      %6296 = vst.msk [vmem:[#allocation3 + $0x48] sm:$0xff] %vm1773, 0.0
      %6297 = vst.msk [vmem:[#allocation3 + $0x50] sm:$0xff] %vm1773, 0.0
      %6298 = vst.msk [vmem:[#allocation3 + $0x58] sm:$0x3] %vm6288, 0.0
      %6299 = vst.msk [vmem:[#allocation3 + $0x60] sm:$0xff] %vm1773, 0.0
      %6300 = vst.msk [vmem:[#allocation3 + $0x68] sm:$0xff] %vm1773, 0.0
      %6301 = vst.msk [vmem:[#allocation3 + $0x70] sm:$0x3] %vm6288, 0.0
      %6302 = vst.msk [vmem:[#allocation3 + $0x78] sm:$0xff] %vm1773, 0.0
      %6303 = vst.msk [vmem:[#allocation3 + $0x80] sm:$0xff] %vm1773, 0.0
      %6304 = vst.msk [vmem:[#allocation3 + $0x88] sm:$0x3] %vm6288, 0.0
      %6305 = vst.msk [vmem:[#allocation3 + $0x90] sm:$0xff] %vm1773, 0.0
      %6306 = vst.msk [vmem:[#allocation3 + $0x98] sm:$0xff] %vm1773, 0.0
      %6307 = vst.msk [vmem:[#allocation3 + $0xa0] sm:$0x3] %vm6288, 0.0
      %6308 = vst.msk [vmem:[#allocation3 + $0xa8] sm:$0xff] %vm1773, 0.0
      %6309 = vst.msk [vmem:[#allocation3 + $0xb0] sm:$0xff] %vm1773, 0.0
      %6310 = vst.msk [vmem:[#allocation3 + $0xb8] sm:$0x3] %vm6288, 0.0
      %6311 = vst.msk [vmem:[#allocation3 + $0xc0] sm:$0xff] %vm1773, 0.0
      %6312 = vst.msk [vmem:[#allocation3 + $0xc8] sm:$0xff] %vm1773, 0.0
      %6313 = vst.msk [vmem:[#allocation3 + $0xd0] sm:$0x3] %vm6288, 0.0
      %6314 = vst.msk [vmem:[#allocation3 + $0xd8] sm:$0xff] %vm1773, 0.0
      %6315 = vst.msk [vmem:[#allocation3 + $0xe0] sm:$0xff] %vm1773, 0.0
      %6316 = vst.msk [vmem:[#allocation3 + $0xe8] sm:$0x3] %vm6288, 0.0
      %6317 = vst.msk [vmem:[#allocation3 + $0xf0] sm:$0xff] %vm1773, 0.0
      %6318 = vst.msk [vmem:[#allocation3 + $0xf8] sm:$0xff] %vm1773, 0.0
      %6319 = vst.msk [vmem:[#allocation3 + $0x100] sm:$0x3] %vm6288, 0.0
      %6320 = vst.msk [vmem:[#allocation3 + $0x108] sm:$0xff] %vm1773, 0.0
      %6321 = vst.msk [vmem:[#allocation3 + $0x110] sm:$0xff] %vm1773, 0.0
      %6322 = vst.msk [vmem:[#allocation3 + $0x118] sm:$0x3] %vm6288, 0.0
      %6323 = vst.msk [vmem:[#allocation3 + $0x120] sm:$0xff] %vm1773, 0.0
      %6324 = vst.msk [vmem:[#allocation3 + $0x128] sm:$0xff] %vm1773, 0.0
      %6325 = vst.msk [vmem:[#allocation3 + $0x130] sm:$0x3] %vm6288, 0.0
      %6326 = vst.msk [vmem:[#allocation3 + $0x138] sm:$0xff] %vm1773, 0.0
      %6327 = vst.msk [vmem:[#allocation3 + $0x140] sm:$0xff] %vm1773, 0.0
      %6328 = vst.msk [vmem:[#allocation3 + $0x148] sm:$0x3] %vm6288, 0.0
      %6329 = vst.msk [vmem:[#allocation3 + $0x150] sm:$0xff] %vm1773, 0.0
      %6330 = vst.msk [vmem:[#allocation3 + $0x158] sm:$0xff] %vm1773, 0.0
      %6331 = vst.msk [vmem:[#allocation3 + $0x160] sm:$0x3] %vm6288, 0.0
      %6332 = vst.msk [vmem:[#allocation3 + $0x168] sm:$0xff] %vm1773, 0.0
      %6333 = vst.msk [vmem:[#allocation3 + $0x170] sm:$0xff] %vm1773, 0.0
      %6334 = vst.msk [vmem:[#allocation3 + $0x178] sm:$0x3] %vm6288, 0.0
      %6335 = vst.msk [vmem:[#allocation3 + $0x180] sm:$0xff] %vm1773, 0.0
      %6336 = vst.msk [vmem:[#allocation3 + $0x188] sm:$0xff] %vm1773, 0.0
      %6337 = vst.msk [vmem:[#allocation3 + $0x190] sm:$0x3] %vm6288, 0.0
      %6338 = vst.msk [vmem:[#allocation3 + $0x198] sm:$0xff] %vm1773, 0.0
      %6339 = vst.msk [vmem:[#allocation3 + $0x1a0] sm:$0xff] %vm1773, 0.0
      %6340 = vst.msk [vmem:[#allocation3 + $0x1a8] sm:$0x3] %vm6288, 0.0
      %s6341 = scalar_lea.vmem [#allocation3], 24
      %6342 = vst.msk [vmem:[%s6341 + $0x1] sm:$0xff] %vm1773, %v6254
      %6343 = vst.msk [vmem:[%s6341 + $0x9] sm:$0xff] %vm1773, %v6255
      %6344 = vst.msk [vmem:[%s6341 + $0x19] sm:$0xff] %vm1773, %v6256
      %6345 = vst.msk [vmem:[%s6341 + $0x21] sm:$0xff] %vm1773, %v6257
      %6346 = vst.msk [vmem:[%s6341 + $0x31] sm:$0xff] %vm1773, %v6258
      %6347 = vst.msk [vmem:[%s6341 + $0x39] sm:$0xff] %vm1773, %v6259
      %6348 = vst.msk [vmem:[%s6341 + $0x49] sm:$0xff] %vm1773, %v6260
      %6349 = vst.msk [vmem:[%s6341 + $0x51] sm:$0xff] %vm1773, %v6261
      %6350 = vst.msk [vmem:[%s6341 + $0x61] sm:$0xff] %vm1773, %v6262
      %6351 = vst.msk [vmem:[%s6341 + $0x69] sm:$0xff] %vm1773, %v6263
      %6352 = vst.msk [vmem:[%s6341 + $0x79] sm:$0xff] %vm1773, %v6264
      %6353 = vst.msk [vmem:[%s6341 + $0x81] sm:$0xff] %vm1773, %v6265
      %6354 = vst.msk [vmem:[%s6341 + $0x91] sm:$0xff] %vm1773, %v6266
      %6355 = vst.msk [vmem:[%s6341 + $0x99] sm:$0xff] %vm1773, %v6267
      %6356 = vst.msk [vmem:[%s6341 + $0xa9] sm:$0xff] %vm1773, %v6268
      %6357 = vst.msk [vmem:[%s6341 + $0xb1] sm:$0xff] %vm1773, %v6269
      %6358 = vst.msk [vmem:[%s6341 + $0xc1] sm:$0xff] %vm1773, %v6270
      %6359 = vst.msk [vmem:[%s6341 + $0xc9] sm:$0xff] %vm1773, %v6271
      %6360 = vst.msk [vmem:[%s6341 + $0xd9] sm:$0xff] %vm1773, %v6272
      %6361 = vst.msk [vmem:[%s6341 + $0xe1] sm:$0xff] %vm1773, %v6273
      %6362 = vst.msk [vmem:[%s6341 + $0xf1] sm:$0xff] %vm1773, %v6274
      %6363 = vst.msk [vmem:[%s6341 + $0xf9] sm:$0xff] %vm1773, %v6275
      %6364 = vst.msk [vmem:[%s6341 + $0x109] sm:$0xff] %vm1773, %v6276
      %6365 = vst.msk [vmem:[%s6341 + $0x111] sm:$0xff] %vm1773, %v6277
      %6366 = vst.msk [vmem:[%s6341 + $0x121] sm:$0xff] %vm1773, %v6278
      %6367 = vst.msk [vmem:[%s6341 + $0x129] sm:$0xff] %vm1773, %v6279
      %6368 = vst.msk [vmem:[%s6341 + $0x139] sm:$0xff] %vm1773, %v6280
      %6369 = vst.msk [vmem:[%s6341 + $0x141] sm:$0xff] %vm1773, %v6281
      %6370 = vst.msk [vmem:[%s6341 + $0x151] sm:$0xff] %vm1773, %v6282
      %6371 = vst.msk [vmem:[%s6341 + $0x159] sm:$0xff] %vm1773, %v6283
      %6372 = vst.msk [vmem:[%s6341 + $0x169] sm:$0xff] %vm1773, %v6284
      %6373 = vst.msk [vmem:[%s6341 + $0x171] sm:$0xff] %vm1773, %v6285
      %v6374 = vld [vmem:[%s12] sm:$0xff]
      %v6375 = vld [vmem:[%s12 + $0x8] sm:$0xff]
      %v6376 = vld [vmem:[%s12 + $0x10] sm:$0xff]
      %v6377 = vld [vmem:[%s12 + $0x18] sm:$0xff]
      %v6378 = vld [vmem:[%s12 + $0x20] sm:$0xff]
      %v6379 = vld [vmem:[%s12 + $0x28] sm:$0xff]
      %v6380 = vld [vmem:[%s12 + $0x30] sm:$0xff]
      %v6381 = vld [vmem:[%s12 + $0x38] sm:$0xff]
      %v6382 = vld [vmem:[%s12 + $0x40] sm:$0xff]
      %v6383 = vld [vmem:[%s12 + $0x48] sm:$0xff]
      %v6384 = vld [vmem:[%s12 + $0x50] sm:$0xff]
      %v6385 = vld [vmem:[%s12 + $0x58] sm:$0xff]
      %v6386 = vld [vmem:[%s12 + $0x60] sm:$0xff]
      %v6387 = vld [vmem:[%s12 + $0x68] sm:$0xff]
      %v6388 = vld [vmem:[%s12 + $0x70] sm:$0xff]
      %v6389 = vld [vmem:[%s12 + $0x78] sm:$0xff]
      %v6390 = vld [vmem:[%s12 + $0x80] sm:$0xff]
      %v6391 = vld [vmem:[%s12 + $0x88] sm:$0xff]
      %v6392 = vld [vmem:[%s12 + $0x90] sm:$0xff]
      %v6393 = vld [vmem:[%s12 + $0x98] sm:$0xff]
      %v6394 = vld [vmem:[%s12 + $0xa0] sm:$0xff]
      %v6395 = vld [vmem:[%s12 + $0xa8] sm:$0xff]
      %v6396 = vld [vmem:[%s12 + $0xb0] sm:$0xff]
      %v6397 = vld [vmem:[%s12 + $0xb8] sm:$0xff]
      %v6398 = vld [vmem:[%s12 + $0xc0] sm:$0xff]
      %v6399 = vld [vmem:[%s12 + $0xc8] sm:$0xff]
      %v6400 = vld [vmem:[%s12 + $0xd0] sm:$0xff]
      %v6401 = vld [vmem:[%s12 + $0xd8] sm:$0xff]
      %v6402 = vld [vmem:[%s12 + $0xe0] sm:$0xff]
      %v6403 = vld [vmem:[%s12 + $0xe8] sm:$0xff]
      %v6404 = vld [vmem:[%s12 + $0xf0] sm:$0xff]
      %v6405 = vld [vmem:[%s12 + $0xf8] sm:$0xff]
      %v6406 = vld [vmem:[%s12 + $0x100] sm:$0xff]
      %v6407 = vld [vmem:[%s12 + $0x108] sm:$0xff]
      %v6408 = vld [vmem:[%s12 + $0x110] sm:$0xff]
      %v6409 = vld [vmem:[%s12 + $0x118] sm:$0xff]
      %v6410 = vld [vmem:[%s12 + $0x120] sm:$0xff]
      %v6411 = vld [vmem:[%s12 + $0x128] sm:$0xff]
      %v6412 = vld [vmem:[%s12 + $0x130] sm:$0xff]
      %v6413 = vld [vmem:[%s12 + $0x138] sm:$0xff]
      %v6414 = vld [vmem:[%s12 + $0x140] sm:$0xff]
      %v6415 = vld [vmem:[%s12 + $0x148] sm:$0xff]
      %v6416 = vld [vmem:[%s12 + $0x150] sm:$0xff]
      %v6417 = vld [vmem:[%s12 + $0x158] sm:$0xff]
      %v6418 = vld [vmem:[%s12 + $0x160] sm:$0xff]
      %v6419 = vld [vmem:[%s12 + $0x168] sm:$0xff]
      %v6420 = vld [vmem:[%s12 + $0x170] sm:$0xff]
      %v6421 = vld [vmem:[%s12 + $0x178] sm:$0xff]
      %v6422 = vld [vmem:[%s12 + $0x180] sm:$0xff]
      %v6423 = vld [vmem:[%s12 + $0x188] sm:$0xff]
      %v6424 = vld [vmem:[%s12 + $0x190] sm:$0xff]
      %v6425 = vld [vmem:[%s12 + $0x198] sm:$0xff]
      %v6426 = vld [vmem:[%s12 + $0x1a0] sm:$0xff]
      %v6427 = vld [vmem:[%s12 + $0x1a8] sm:$0xff]
      %v6428 = vld [vmem:[%s12 + $0x1b0] sm:$0xff]
      %v6429 = vld [vmem:[%s12 + $0x1b8] sm:$0xff]
      %v6430 = vld [vmem:[%s12 + $0x1c0] sm:$0xff]
      %v6431 = vld [vmem:[%s12 + $0x1c8] sm:$0xff]
      %v6432 = vld [vmem:[%s12 + $0x1d0] sm:$0xff]
      %v6433 = vld [vmem:[%s12 + $0x1d8] sm:$0xff]
      %v6434 = vld [vmem:[%s12 + $0x1e0] sm:$0xff]
      %v6435 = vld [vmem:[%s12 + $0x1e8] sm:$0xff]
      %v6436 = vld [vmem:[%s12 + $0x1f0] sm:$0xff]
      %v6437 = vld [vmem:[%s12 + $0x1f8] sm:$0xff]
      %v6438 = vld [vmem:[%s12 + $0x200] sm:$0xff]
      %v6439 = vld [vmem:[%s12 + $0x208] sm:$0xff]
      %v6440 = vld [vmem:[%s12 + $0x210] sm:$0xff]
      %v6441 = vld [vmem:[%s12 + $0x218] sm:$0xff]
      %v6442 = vld [vmem:[%s12 + $0x220] sm:$0xff]
      %v6443 = vld [vmem:[%s12 + $0x228] sm:$0xff]
      %v6444 = vld [vmem:[%s12 + $0x230] sm:$0xff]
      %v6445 = vld [vmem:[%s12 + $0x238] sm:$0xff]
      %v6446 = vld [vmem:[#allocation3] sm:$0xff]
      %v6447 = vld [vmem:[#allocation3 + $0x8] sm:$0xff]
      %v6448 = vld [vmem:[#allocation3 + $0x18] sm:$0xff]
      %v6449 = vld [vmem:[#allocation3 + $0x20] sm:$0xff]
      %v6450 = vld [vmem:[#allocation3 + $0x30] sm:$0xff]
      %v6451 = vld [vmem:[#allocation3 + $0x38] sm:$0xff]
      %v6452 = vld [vmem:[#allocation3 + $0x48] sm:$0xff]
      %v6453 = vld [vmem:[#allocation3 + $0x50] sm:$0xff]
      %v6454 = vld [vmem:[#allocation3 + $0x60] sm:$0xff]
      %v6455 = vld [vmem:[#allocation3 + $0x68] sm:$0xff]
      %v6456 = vld [vmem:[#allocation3 + $0x78] sm:$0xff]
      %v6457 = vld [vmem:[#allocation3 + $0x80] sm:$0xff]
      %v6458 = vld [vmem:[#allocation3 + $0x90] sm:$0xff]
      %v6459 = vld [vmem:[#allocation3 + $0x98] sm:$0xff]
      %v6460 = vld [vmem:[#allocation3 + $0xa8] sm:$0xff]
      %v6461 = vld [vmem:[#allocation3 + $0xb0] sm:$0xff]
      %v6462 = vld [vmem:[#allocation3 + $0xc0] sm:$0xff]
      %v6463 = vld [vmem:[#allocation3 + $0xc8] sm:$0xff]
      %v6464 = vld [vmem:[#allocation3 + $0xd8] sm:$0xff]
      %v6465 = vld [vmem:[#allocation3 + $0xe0] sm:$0xff]
      %v6466 = vld [vmem:[#allocation3 + $0xf0] sm:$0xff]
      %v6467 = vld [vmem:[#allocation3 + $0xf8] sm:$0xff]
      %v6468 = vld [vmem:[#allocation3 + $0x108] sm:$0xff]
      %v6469 = vld [vmem:[#allocation3 + $0x110] sm:$0xff]
      %v6470 = vld [vmem:[#allocation3 + $0x120] sm:$0xff]
      %v6471 = vld [vmem:[#allocation3 + $0x128] sm:$0xff]
      %v6472 = vld [vmem:[#allocation3 + $0x138] sm:$0xff]
      %v6473 = vld [vmem:[#allocation3 + $0x140] sm:$0xff]
      %v6474 = vld [vmem:[#allocation3 + $0x150] sm:$0xff]
      %v6475 = vld [vmem:[#allocation3 + $0x158] sm:$0xff]
      %v6476 = vld [vmem:[#allocation3 + $0x168] sm:$0xff]
      %v6477 = vld [vmem:[#allocation3 + $0x170] sm:$0xff]
      %v6478 = vld [vmem:[#allocation3 + $0x1] sm:$0xff]
      %v6479 = vld [vmem:[#allocation3 + $0x9] sm:$0xff]
      %v6480 = vld [vmem:[#allocation3 + $0x19] sm:$0xff]
      %v6481 = vld [vmem:[#allocation3 + $0x21] sm:$0xff]
      %v6482 = vld [vmem:[#allocation3 + $0x31] sm:$0xff]
      %v6483 = vld [vmem:[#allocation3 + $0x39] sm:$0xff]
      %v6484 = vld [vmem:[#allocation3 + $0x49] sm:$0xff]
      %v6485 = vld [vmem:[#allocation3 + $0x51] sm:$0xff]
      %v6486 = vld [vmem:[#allocation3 + $0x61] sm:$0xff]
      %v6487 = vld [vmem:[#allocation3 + $0x69] sm:$0xff]
      %v6488 = vld [vmem:[#allocation3 + $0x79] sm:$0xff]
      %v6489 = vld [vmem:[#allocation3 + $0x81] sm:$0xff]
      %v6490 = vld [vmem:[#allocation3 + $0x91] sm:$0xff]
      %v6491 = vld [vmem:[#allocation3 + $0x99] sm:$0xff]
      %v6492 = vld [vmem:[#allocation3 + $0xa9] sm:$0xff]
      %v6493 = vld [vmem:[#allocation3 + $0xb1] sm:$0xff]
      %v6494 = vld [vmem:[#allocation3 + $0xc1] sm:$0xff]
      %v6495 = vld [vmem:[#allocation3 + $0xc9] sm:$0xff]
      %v6496 = vld [vmem:[#allocation3 + $0xd9] sm:$0xff]
      %v6497 = vld [vmem:[#allocation3 + $0xe1] sm:$0xff]
      %v6498 = vld [vmem:[#allocation3 + $0xf1] sm:$0xff]
      %v6499 = vld [vmem:[#allocation3 + $0xf9] sm:$0xff]
      %v6500 = vld [vmem:[#allocation3 + $0x109] sm:$0xff]
      %v6501 = vld [vmem:[#allocation3 + $0x111] sm:$0xff]
      %v6502 = vld [vmem:[#allocation3 + $0x121] sm:$0xff]
      %v6503 = vld [vmem:[#allocation3 + $0x129] sm:$0xff]
      %v6504 = vld [vmem:[#allocation3 + $0x139] sm:$0xff]
      %v6505 = vld [vmem:[#allocation3 + $0x141] sm:$0xff]
      %v6506 = vld [vmem:[#allocation3 + $0x151] sm:$0xff]
      %v6507 = vld [vmem:[#allocation3 + $0x159] sm:$0xff]
      %v6508 = vld [vmem:[#allocation3 + $0x169] sm:$0xff]
      %v6509 = vld [vmem:[#allocation3 + $0x171] sm:$0xff]
      %v6511 = vsel %vm1773, %v6382, 0
      %v6514 = vsel %vm1773, %v6383, 0
      %v6517 = vsel %vm1773, %v6384, 0
      %v6520 = vsel %vm1773, %v6385, 0
      %v6523 = vsel %vm1773, %v6386, 0
      %v6526 = vsel %vm1773, %v6387, 0
      %v6529 = vsel %vm1773, %v6388, 0
      %v6532 = vsel %vm1773, %v6389, 0
      %v6535 = vsel %vm1773, %v6478, 0
      %v6538 = vsel %vm1773, %v6479, 0
      %v6541 = vsel %vm1773, %v6480, 0
      %v6544 = vsel %vm1773, %v6481, 0
      %v6547 = vsel %vm1773, %v6482, 0
      %v6550 = vsel %vm1773, %v6483, 0
      %v6553 = vsel %vm1773, %v6484, 0
      %v6556 = vsel %vm1773, %v6485, 0
      %v6559 = vsel %vm1773, %v6486, 0
      %v6562 = vsel %vm1773, %v6487, 0
      %v6565 = vsel %vm1773, %v6488, 0
      %v6568 = vsel %vm1773, %v6489, 0
      %v6571 = vsel %vm1773, %v6490, 0
      %v6574 = vsel %vm1773, %v6491, 0
      %v6577 = vsel %vm1773, %v6492, 0
      %v6580 = vsel %vm1773, %v6493, 0
      %v6583 = vsel %vm1773, %v6494, 0
      %v6586 = vsel %vm1773, %v6495, 0
      %v6589 = vsel %vm1773, %v6496, 0
      %v6592 = vsel %vm1773, %v6497, 0
      %v6595 = vsel %vm1773, %v6498, 0
      %v6598 = vsel %vm1773, %v6499, 0
      %v6601 = vsel %vm1773, %v6500, 0
      %v6604 = vsel %vm1773, %v6501, 0
      %v6607 = vsel %vm1773, %v6502, 0
      %v6610 = vsel %vm1773, %v6503, 0
      %v6613 = vsel %vm1773, %v6504, 0
      %v6616 = vsel %vm1773, %v6505, 0
      %v6619 = vsel %vm1773, %v6506, 0
      %v6622 = vsel %vm1773, %v6507, 0
      %v6625 = vsel %vm1773, %v6508, 0
      %v6628 = vsel %vm1773, %v6509, 0
      %6630 = vmatprep.subr.mxu0 0.0
      %6631 = vmatpush1.xpose.msra.mxu0 %v6580
      %6632 = vmatprep.subr.mxu0 0.0
      %6633 = vmatpush1.xpose.msra.mxu0 %v6577
      %6634 = vmatprep.subr.mxu0 0.0
      %6635 = vmatpush1.xpose.msra.mxu0 %v6574
      %6636 = vmatprep.subr.mxu0 0.0
      %6637 = vmatpush1.xpose.msra.mxu0 %v6571
      %6638 = vmatprep.subr.mxu0 0.0
      %6639 = vmatpush1.xpose.msra.mxu0 %v6568
      %6640 = vmatprep.subr.mxu0 0.0
      %6641 = vmatpush1.xpose.msra.mxu0 %v6565
      %6642 = vmatprep.subr.mxu0 0.0
      %6643 = vmatpush1.xpose.msra.mxu0 %v6562
      %6644 = vmatprep.subr.mxu0 0.0
      %6645 = vmatpush1.xpose.msra.mxu0 %v6559
      %6646 = vmatprep.subr.mxu0 0.0
      %6647 = vmatpush1.xpose.msra.mxu0 %v6556
      %6648 = vmatprep.subr.mxu0 0.0
      %6649 = vmatpush1.xpose.msra.mxu0 %v6553
      %6650 = vmatprep.subr.mxu0 0.0
      %6651 = vmatpush1.xpose.msra.mxu0 %v6550
      %6652 = vmatprep.subr.mxu0 0.0
      %6653 = vmatpush1.xpose.msra.mxu0 %v6547
      %6654 = vmatprep.subr.mxu0 0.0
      %6655 = vmatpush1.xpose.msra.mxu0 %v6544
      %6656 = vmatprep.subr.mxu0 0.0
      %6657 = vmatpush1.xpose.msra.mxu0 %v6541
      %6658 = vmatprep.subr.mxu0 0.0
      %6659 = vmatpush1.xpose.msra.mxu0 %v6538
      %6660 = vmatprep.subr.mxu0 0.0
      %6661 = vmatpush1.xpose.msra.mxu0 %v6535
      %6662 = vmatprep.subr.mxu0 0.0
      %6663 = vmatpush2.xpose.msra.mxu0 %v6628
      %6664 = vmatprep.subr.mxu0 0.0
      %6665 = vmatpush2.xpose.msra.mxu0 %v6625
      %6666 = vmatprep.subr.mxu0 0.0
      %6667 = vmatpush2.xpose.msra.mxu0 %v6622
      %6668 = vmatprep.subr.mxu0 0.0
      %6669 = vmatpush2.xpose.msra.mxu0 %v6619
      %6670 = vmatprep.subr.mxu0 0.0
      %6671 = vmatpush2.xpose.msra.mxu0 %v6616
      %6672 = vmatprep.subr.mxu0 0.0
      %6673 = vmatpush2.xpose.msra.mxu0 %v6613
      %6674 = vmatprep.subr.mxu0 0.0
      %6675 = vmatpush2.xpose.msra.mxu0 %v6610
      %6676 = vmatprep.subr.mxu0 0.0
      %6677 = vmatpush2.xpose.msra.mxu0 %v6607
      %6678 = vmatprep.subr.mxu0 0.0
      %6679 = vmatpush2.xpose.msra.mxu0 %v6604
      %6680 = vmatprep.subr.mxu0 0.0
      %6681 = vmatpush2.xpose.msra.mxu0 %v6601
      %6682 = vmatprep.subr.mxu0 0.0
      %6683 = vmatpush2.xpose.msra.mxu0 %v6598
      %6684 = vmatprep.subr.mxu0 0.0
      %6685 = vmatpush2.xpose.msra.mxu0 %v6595
      %6686 = vmatprep.subr.mxu0 0.0
      %6687 = vmatpush2.xpose.msra.mxu0 %v6592
      %6688 = vmatprep.subr.mxu0 0.0
      %6689 = vmatpush2.xpose.msra.mxu0 %v6589
      %6690 = vmatprep.subr.mxu0 0.0
      %6691 = vmatpush2.xpose.msra.mxu0 %v6586
      %6692 = vmatprep.subr.mxu0 0.0
      %6693 = vmatpush2.xpose.msra.mxu0 %v6583
      %6694 = vmatprep.mubr.f32.mxu0 0.0
      %6695 = vmatmul.mubr.f32.gmra.mxu0 %v6511
      %v6696 = vpop.f32.mrf.mxu0
      %v6697 = vadd.f32 0.0, %v6696
      %v6698 = vpop.f32.mrf.mxu0
      %v6699 = vadd.f32 0.0, %v6698
      %6700 = vmatprep.mubr.f32.mxu0 0.0
      %6701 = vmatmul.mubr.f32.gmra.mxu0 %v6514
      %v6702 = vpop.f32.mrf.mxu0
      %v6703 = vadd.f32 0.0, %v6702
      %v6704 = vpop.f32.mrf.mxu0
      %v6705 = vadd.f32 0.0, %v6704
      %6706 = vmatprep.mubr.f32.mxu0 0.0
      %6707 = vmatmul.mubr.f32.gmra.mxu0 %v6517
      %v6708 = vpop.f32.mrf.mxu0
      %v6709 = vadd.f32 0.0, %v6708
      %v6710 = vpop.f32.mrf.mxu0
      %v6711 = vadd.f32 0.0, %v6710
      %6712 = vmatprep.mubr.f32.mxu0 0.0
      %6713 = vmatmul.mubr.f32.gmra.mxu0 %v6520
      %v6714 = vpop.f32.mrf.mxu0
      %v6715 = vadd.f32 0.0, %v6714
      %v6716 = vpop.f32.mrf.mxu0
      %v6717 = vadd.f32 0.0, %v6716
      %6718 = vmatprep.mubr.f32.mxu0 0.0
      %6719 = vmatmul.mubr.f32.gmra.mxu0 %v6523
      %v6720 = vpop.f32.mrf.mxu0
      %v6721 = vadd.f32 0.0, %v6720
      %v6722 = vpop.f32.mrf.mxu0
      %v6723 = vadd.f32 0.0, %v6722
      %6724 = vmatprep.mubr.f32.mxu0 0.0
      %6725 = vmatmul.mubr.f32.gmra.mxu0 %v6526
      %v6726 = vpop.f32.mrf.mxu0
      %v6727 = vadd.f32 0.0, %v6726
      %v6728 = vpop.f32.mrf.mxu0
      %v6729 = vadd.f32 0.0, %v6728
      %6730 = vmatprep.mubr.f32.mxu0 0.0
      %6731 = vmatmul.mubr.f32.gmra.mxu0 %v6529
      %v6732 = vpop.f32.mrf.mxu0
      %v6733 = vadd.f32 0.0, %v6732
      %v6734 = vpop.f32.mrf.mxu0
      %v6735 = vadd.f32 0.0, %v6734
      %6736 = vmatprep.mubr.f32.mxu0 0.0
      %6737 = vmatmul.mubr.f32.gmra.mxu0 %v6532
      %v6738 = vpop.f32.mrf.mxu0
      %v6739 = vadd.f32 0.0, %v6738
      %v6740 = vpop.f32.mrf.mxu0
      %v6741 = vadd.f32 0.0, %v6740
      %6742 = vdwg.mxu0
      %v6744 = vsel %vm1773, %v6374, 0
      %v6747 = vsel %vm1773, %v6375, 0
      %v6750 = vsel %vm1773, %v6376, 0
      %v6753 = vsel %vm1773, %v6377, 0
      %v6756 = vsel %vm1773, %v6378, 0
      %v6759 = vsel %vm1773, %v6379, 0
      %v6762 = vsel %vm1773, %v6380, 0
      %v6765 = vsel %vm1773, %v6381, 0
      %v6768 = vsel %vm1773, %v6446, 0
      %v6771 = vsel %vm1773, %v6447, 0
      %v6774 = vsel %vm1773, %v6448, 0
      %v6777 = vsel %vm1773, %v6449, 0
      %v6780 = vsel %vm1773, %v6450, 0
      %v6783 = vsel %vm1773, %v6451, 0
      %v6786 = vsel %vm1773, %v6452, 0
      %v6789 = vsel %vm1773, %v6453, 0
      %v6792 = vsel %vm1773, %v6454, 0
      %v6795 = vsel %vm1773, %v6455, 0
      %v6798 = vsel %vm1773, %v6456, 0
      %v6801 = vsel %vm1773, %v6457, 0
      %v6804 = vsel %vm1773, %v6458, 0
      %v6807 = vsel %vm1773, %v6459, 0
      %v6810 = vsel %vm1773, %v6460, 0
      %v6813 = vsel %vm1773, %v6461, 0
      %v6816 = vsel %vm1773, %v6462, 0
      %v6819 = vsel %vm1773, %v6463, 0
      %v6822 = vsel %vm1773, %v6464, 0
      %v6825 = vsel %vm1773, %v6465, 0
      %v6828 = vsel %vm1773, %v6466, 0
      %v6831 = vsel %vm1773, %v6467, 0
      %v6834 = vsel %vm1773, %v6468, 0
      %v6837 = vsel %vm1773, %v6469, 0
      %v6840 = vsel %vm1773, %v6470, 0
      %v6843 = vsel %vm1773, %v6471, 0
      %v6846 = vsel %vm1773, %v6472, 0
      %v6849 = vsel %vm1773, %v6473, 0
      %v6852 = vsel %vm1773, %v6474, 0
      %v6855 = vsel %vm1773, %v6475, 0
      %v6858 = vsel %vm1773, %v6476, 0
      %v6861 = vsel %vm1773, %v6477, 0
      %6863 = vmatprep.subr.mxu0 0.0
      %6864 = vmatpush1.xpose.msra.mxu0 %v6813
      %6865 = vmatprep.subr.mxu0 0.0
      %6866 = vmatpush1.xpose.msra.mxu0 %v6810
      %6867 = vmatprep.subr.mxu0 0.0
      %6868 = vmatpush1.xpose.msra.mxu0 %v6807
      %6869 = vmatprep.subr.mxu0 0.0
      %6870 = vmatpush1.xpose.msra.mxu0 %v6804
      %6871 = vmatprep.subr.mxu0 0.0
      %6872 = vmatpush1.xpose.msra.mxu0 %v6801
      %6873 = vmatprep.subr.mxu0 0.0
      %6874 = vmatpush1.xpose.msra.mxu0 %v6798
      %6875 = vmatprep.subr.mxu0 0.0
      %6876 = vmatpush1.xpose.msra.mxu0 %v6795
      %6877 = vmatprep.subr.mxu0 0.0
      %6878 = vmatpush1.xpose.msra.mxu0 %v6792
      %6879 = vmatprep.subr.mxu0 0.0
      %6880 = vmatpush1.xpose.msra.mxu0 %v6789
      %6881 = vmatprep.subr.mxu0 0.0
      %6882 = vmatpush1.xpose.msra.mxu0 %v6786
      %6883 = vmatprep.subr.mxu0 0.0
      %6884 = vmatpush1.xpose.msra.mxu0 %v6783
      %6885 = vmatprep.subr.mxu0 0.0
      %6886 = vmatpush1.xpose.msra.mxu0 %v6780
      %6887 = vmatprep.subr.mxu0 0.0
      %6888 = vmatpush1.xpose.msra.mxu0 %v6777
      %6889 = vmatprep.subr.mxu0 0.0
      %6890 = vmatpush1.xpose.msra.mxu0 %v6774
      %6891 = vmatprep.subr.mxu0 0.0
      %6892 = vmatpush1.xpose.msra.mxu0 %v6771
      %6893 = vmatprep.subr.mxu0 0.0
      %6894 = vmatpush1.xpose.msra.mxu0 %v6768
      %6895 = vmatprep.subr.mxu0 0.0
      %6896 = vmatpush2.xpose.msra.mxu0 %v6861
      %6897 = vmatprep.subr.mxu0 0.0
      %6898 = vmatpush2.xpose.msra.mxu0 %v6858
      %6899 = vmatprep.subr.mxu0 0.0
      %6900 = vmatpush2.xpose.msra.mxu0 %v6855
      %6901 = vmatprep.subr.mxu0 0.0
      %6902 = vmatpush2.xpose.msra.mxu0 %v6852
      %6903 = vmatprep.subr.mxu0 0.0
      %6904 = vmatpush2.xpose.msra.mxu0 %v6849
      %6905 = vmatprep.subr.mxu0 0.0
      %6906 = vmatpush2.xpose.msra.mxu0 %v6846
      %6907 = vmatprep.subr.mxu0 0.0
      %6908 = vmatpush2.xpose.msra.mxu0 %v6843
      %6909 = vmatprep.subr.mxu0 0.0
      %6910 = vmatpush2.xpose.msra.mxu0 %v6840
      %6911 = vmatprep.subr.mxu0 0.0
      %6912 = vmatpush2.xpose.msra.mxu0 %v6837
      %6913 = vmatprep.subr.mxu0 0.0
      %6914 = vmatpush2.xpose.msra.mxu0 %v6834
      %6915 = vmatprep.subr.mxu0 0.0
      %6916 = vmatpush2.xpose.msra.mxu0 %v6831
      %6917 = vmatprep.subr.mxu0 0.0
      %6918 = vmatpush2.xpose.msra.mxu0 %v6828
      %6919 = vmatprep.subr.mxu0 0.0
      %6920 = vmatpush2.xpose.msra.mxu0 %v6825
      %6921 = vmatprep.subr.mxu0 0.0
      %6922 = vmatpush2.xpose.msra.mxu0 %v6822
      %6923 = vmatprep.subr.mxu0 0.0
      %6924 = vmatpush2.xpose.msra.mxu0 %v6819
      %6925 = vmatprep.subr.mxu0 0.0
      %6926 = vmatpush2.xpose.msra.mxu0 %v6816
      %6927 = vmatprep.mubr.f32.mxu0 0.0
      %6928 = vmatmul.mubr.f32.gmra.mxu0 %v6744
      %v6929 = vpop.f32.mrf.mxu0
      %v6930 = vadd.f32 %v6697, %v6929
      %v6931 = vpop.f32.mrf.mxu0
      %v6932 = vadd.f32 %v6699, %v6931
      %6933 = vmatprep.mubr.f32.mxu0 0.0
      %6934 = vmatmul.mubr.f32.gmra.mxu0 %v6747
      %v6935 = vpop.f32.mrf.mxu0
      %v6936 = vadd.f32 %v6703, %v6935
      %v6937 = vpop.f32.mrf.mxu0
      %v6938 = vadd.f32 %v6705, %v6937
      %6939 = vmatprep.mubr.f32.mxu0 0.0
      %6940 = vmatmul.mubr.f32.gmra.mxu0 %v6750
      %v6941 = vpop.f32.mrf.mxu0
      %v6942 = vadd.f32 %v6709, %v6941
      %v6943 = vpop.f32.mrf.mxu0
      %v6944 = vadd.f32 %v6711, %v6943
      %6945 = vmatprep.mubr.f32.mxu0 0.0
      %6946 = vmatmul.mubr.f32.gmra.mxu0 %v6753
      %v6947 = vpop.f32.mrf.mxu0
      %v6948 = vadd.f32 %v6715, %v6947
      %v6949 = vpop.f32.mrf.mxu0
      %v6950 = vadd.f32 %v6717, %v6949
      %6951 = vmatprep.mubr.f32.mxu0 0.0
      %6952 = vmatmul.mubr.f32.gmra.mxu0 %v6756
      %v6953 = vpop.f32.mrf.mxu0
      %v6954 = vadd.f32 %v6721, %v6953
      %v6955 = vpop.f32.mrf.mxu0
      %v6956 = vadd.f32 %v6723, %v6955
      %6957 = vmatprep.mubr.f32.mxu0 0.0
      %6958 = vmatmul.mubr.f32.gmra.mxu0 %v6759
      %v6959 = vpop.f32.mrf.mxu0
      %v6960 = vadd.f32 %v6727, %v6959
      %v6961 = vpop.f32.mrf.mxu0
      %v6962 = vadd.f32 %v6729, %v6961
      %6963 = vmatprep.mubr.f32.mxu0 0.0
      %6964 = vmatmul.mubr.f32.gmra.mxu0 %v6762
      %v6965 = vpop.f32.mrf.mxu0
      %v6966 = vadd.f32 %v6733, %v6965
      %v6967 = vpop.f32.mrf.mxu0
      %v6968 = vadd.f32 %v6735, %v6967
      %6969 = vmatprep.mubr.f32.mxu0 0.0
      %6970 = vmatmul.mubr.f32.gmra.mxu0 %v6765
      %v6971 = vpop.f32.mrf.mxu0
      %v6972 = vadd.f32 %v6739, %v6971
      %v6973 = vpop.f32.mrf.mxu0
      %v6974 = vadd.f32 %v6741, %v6973
      %6975 = vdwg.mxu0
      %v6976 = vld [vmem:[#allocation3 + $0x2] sm:$0xff]
      %v6977 = vld [vmem:[#allocation3 + $0xa] sm:$0xff]
      %v6978 = vld [vmem:[#allocation3 + $0x1a] sm:$0xff]
      %v6979 = vld [vmem:[#allocation3 + $0x22] sm:$0xff]
      %v6980 = vld [vmem:[#allocation3 + $0x32] sm:$0xff]
      %v6981 = vld [vmem:[#allocation3 + $0x3a] sm:$0xff]
      %v6982 = vld [vmem:[#allocation3 + $0x4a] sm:$0xff]
      %v6983 = vld [vmem:[#allocation3 + $0x52] sm:$0xff]
      %v6984 = vld [vmem:[#allocation3 + $0x62] sm:$0xff]
      %v6985 = vld [vmem:[#allocation3 + $0x6a] sm:$0xff]
      %v6986 = vld [vmem:[#allocation3 + $0x7a] sm:$0xff]
      %v6987 = vld [vmem:[#allocation3 + $0x82] sm:$0xff]
      %v6988 = vld [vmem:[#allocation3 + $0x92] sm:$0xff]
      %v6989 = vld [vmem:[#allocation3 + $0x9a] sm:$0xff]
      %v6990 = vld [vmem:[#allocation3 + $0xaa] sm:$0xff]
      %v6991 = vld [vmem:[#allocation3 + $0xb2] sm:$0xff]
      %v6992 = vld [vmem:[#allocation3 + $0xc2] sm:$0xff]
      %v6993 = vld [vmem:[#allocation3 + $0xca] sm:$0xff]
      %v6994 = vld [vmem:[#allocation3 + $0xda] sm:$0xff]
      %v6995 = vld [vmem:[#allocation3 + $0xe2] sm:$0xff]
      %v6996 = vld [vmem:[#allocation3 + $0xf2] sm:$0xff]
      %v6997 = vld [vmem:[#allocation3 + $0xfa] sm:$0xff]
      %v6998 = vld [vmem:[#allocation3 + $0x10a] sm:$0xff]
      %v6999 = vld [vmem:[#allocation3 + $0x112] sm:$0xff]
      %v7000 = vld [vmem:[#allocation3 + $0x122] sm:$0xff]
      %v7001 = vld [vmem:[#allocation3 + $0x12a] sm:$0xff]
      %v7002 = vld [vmem:[#allocation3 + $0x13a] sm:$0xff]
      %v7003 = vld [vmem:[#allocation3 + $0x142] sm:$0xff]
      %v7004 = vld [vmem:[#allocation3 + $0x152] sm:$0xff]
      %v7005 = vld [vmem:[#allocation3 + $0x15a] sm:$0xff]
      %v7006 = vld [vmem:[#allocation3 + $0x16a] sm:$0xff]
      %v7007 = vld [vmem:[#allocation3 + $0x172] sm:$0xff]
      %v7009 = vsel %vm1773, %v6390, 0
      %v7012 = vsel %vm1773, %v6391, 0
      %v7015 = vsel %vm1773, %v6392, 0
      %v7018 = vsel %vm1773, %v6393, 0
      %v7021 = vsel %vm1773, %v6394, 0
      %v7024 = vsel %vm1773, %v6395, 0
      %v7027 = vsel %vm1773, %v6396, 0
      %v7030 = vsel %vm1773, %v6397, 0
      %v7033 = vsel %vm1773, %v6976, 0
      %v7036 = vsel %vm1773, %v6977, 0
      %v7039 = vsel %vm1773, %v6978, 0
      %v7042 = vsel %vm1773, %v6979, 0
      %v7045 = vsel %vm1773, %v6980, 0
      %v7048 = vsel %vm1773, %v6981, 0
      %v7051 = vsel %vm1773, %v6982, 0
      %v7054 = vsel %vm1773, %v6983, 0
      %v7057 = vsel %vm1773, %v6984, 0
      %v7060 = vsel %vm1773, %v6985, 0
      %v7063 = vsel %vm1773, %v6986, 0
      %v7066 = vsel %vm1773, %v6987, 0
      %v7069 = vsel %vm1773, %v6988, 0
      %v7072 = vsel %vm1773, %v6989, 0
      %v7075 = vsel %vm1773, %v6990, 0
      %v7078 = vsel %vm1773, %v6991, 0
      %v7081 = vsel %vm1773, %v6992, 0
      %v7084 = vsel %vm1773, %v6993, 0
      %v7087 = vsel %vm1773, %v6994, 0
      %v7090 = vsel %vm1773, %v6995, 0
      %v7093 = vsel %vm1773, %v6996, 0
      %v7096 = vsel %vm1773, %v6997, 0
      %v7099 = vsel %vm1773, %v6998, 0
      %v7102 = vsel %vm1773, %v6999, 0
      %v7105 = vsel %vm1773, %v7000, 0
      %v7108 = vsel %vm1773, %v7001, 0
      %v7111 = vsel %vm1773, %v7002, 0
      %v7114 = vsel %vm1773, %v7003, 0
      %v7117 = vsel %vm1773, %v7004, 0
      %v7120 = vsel %vm1773, %v7005, 0
      %v7123 = vsel %vm1773, %v7006, 0
      %v7126 = vsel %vm1773, %v7007, 0
      %7128 = vmatprep.subr.mxu0 0.0
      %7129 = vmatpush1.xpose.msra.mxu0 %v7078
      %7130 = vmatprep.subr.mxu0 0.0
      %7131 = vmatpush1.xpose.msra.mxu0 %v7075
      %7132 = vmatprep.subr.mxu0 0.0
      %7133 = vmatpush1.xpose.msra.mxu0 %v7072
      %7134 = vmatprep.subr.mxu0 0.0
      %7135 = vmatpush1.xpose.msra.mxu0 %v7069
      %7136 = vmatprep.subr.mxu0 0.0
      %7137 = vmatpush1.xpose.msra.mxu0 %v7066
      %7138 = vmatprep.subr.mxu0 0.0
      %7139 = vmatpush1.xpose.msra.mxu0 %v7063
      %7140 = vmatprep.subr.mxu0 0.0
      %7141 = vmatpush1.xpose.msra.mxu0 %v7060
      %7142 = vmatprep.subr.mxu0 0.0
      %7143 = vmatpush1.xpose.msra.mxu0 %v7057
      %7144 = vmatprep.subr.mxu0 0.0
      %7145 = vmatpush1.xpose.msra.mxu0 %v7054
      %7146 = vmatprep.subr.mxu0 0.0
      %7147 = vmatpush1.xpose.msra.mxu0 %v7051
      %7148 = vmatprep.subr.mxu0 0.0
      %7149 = vmatpush1.xpose.msra.mxu0 %v7048
      %7150 = vmatprep.subr.mxu0 0.0
      %7151 = vmatpush1.xpose.msra.mxu0 %v7045
      %7152 = vmatprep.subr.mxu0 0.0
      %7153 = vmatpush1.xpose.msra.mxu0 %v7042
      %7154 = vmatprep.subr.mxu0 0.0
      %7155 = vmatpush1.xpose.msra.mxu0 %v7039
      %7156 = vmatprep.subr.mxu0 0.0
      %7157 = vmatpush1.xpose.msra.mxu0 %v7036
      %7158 = vmatprep.subr.mxu0 0.0
      %7159 = vmatpush1.xpose.msra.mxu0 %v7033
      %7160 = vmatprep.subr.mxu0 0.0
      %7161 = vmatpush2.xpose.msra.mxu0 %v7126
      %7162 = vmatprep.subr.mxu0 0.0
      %7163 = vmatpush2.xpose.msra.mxu0 %v7123
      %7164 = vmatprep.subr.mxu0 0.0
      %7165 = vmatpush2.xpose.msra.mxu0 %v7120
      %7166 = vmatprep.subr.mxu0 0.0
      %7167 = vmatpush2.xpose.msra.mxu0 %v7117
      %7168 = vmatprep.subr.mxu0 0.0
      %7169 = vmatpush2.xpose.msra.mxu0 %v7114
      %7170 = vmatprep.subr.mxu0 0.0
      %7171 = vmatpush2.xpose.msra.mxu0 %v7111
      %7172 = vmatprep.subr.mxu0 0.0
      %7173 = vmatpush2.xpose.msra.mxu0 %v7108
      %7174 = vmatprep.subr.mxu0 0.0
      %7175 = vmatpush2.xpose.msra.mxu0 %v7105
      %7176 = vmatprep.subr.mxu0 0.0
      %7177 = vmatpush2.xpose.msra.mxu0 %v7102
      %7178 = vmatprep.subr.mxu0 0.0
      %7179 = vmatpush2.xpose.msra.mxu0 %v7099
      %7180 = vmatprep.subr.mxu0 0.0
      %7181 = vmatpush2.xpose.msra.mxu0 %v7096
      %7182 = vmatprep.subr.mxu0 0.0
      %7183 = vmatpush2.xpose.msra.mxu0 %v7093
      %7184 = vmatprep.subr.mxu0 0.0
      %7185 = vmatpush2.xpose.msra.mxu0 %v7090
      %7186 = vmatprep.subr.mxu0 0.0
      %7187 = vmatpush2.xpose.msra.mxu0 %v7087
      %7188 = vmatprep.subr.mxu0 0.0
      %7189 = vmatpush2.xpose.msra.mxu0 %v7084
      %7190 = vmatprep.subr.mxu0 0.0
      %7191 = vmatpush2.xpose.msra.mxu0 %v7081
      %7192 = vmatprep.mubr.f32.mxu0 0.0
      %7193 = vmatmul.mubr.f32.gmra.mxu0 %v7009
      %v7194 = vpop.f32.mrf.mxu0
      %v7195 = vadd.f32 0.0, %v7194
      %v7196 = vpop.f32.mrf.mxu0
      %v7197 = vadd.f32 0.0, %v7196
      %7198 = vmatprep.mubr.f32.mxu0 0.0
      %7199 = vmatmul.mubr.f32.gmra.mxu0 %v7012
      %v7200 = vpop.f32.mrf.mxu0
      %v7201 = vadd.f32 0.0, %v7200
      %v7202 = vpop.f32.mrf.mxu0
      %v7203 = vadd.f32 0.0, %v7202
      %7204 = vmatprep.mubr.f32.mxu0 0.0
      %7205 = vmatmul.mubr.f32.gmra.mxu0 %v7015
      %v7206 = vpop.f32.mrf.mxu0
      %v7207 = vadd.f32 0.0, %v7206
      %v7208 = vpop.f32.mrf.mxu0
      %v7209 = vadd.f32 0.0, %v7208
      %7210 = vmatprep.mubr.f32.mxu0 0.0
      %7211 = vmatmul.mubr.f32.gmra.mxu0 %v7018
      %v7212 = vpop.f32.mrf.mxu0
      %v7213 = vadd.f32 0.0, %v7212
      %v7214 = vpop.f32.mrf.mxu0
      %v7215 = vadd.f32 0.0, %v7214
      %7216 = vmatprep.mubr.f32.mxu0 0.0
      %7217 = vmatmul.mubr.f32.gmra.mxu0 %v7021
      %v7218 = vpop.f32.mrf.mxu0
      %v7219 = vadd.f32 0.0, %v7218
      %v7220 = vpop.f32.mrf.mxu0
      %v7221 = vadd.f32 0.0, %v7220
      %7222 = vmatprep.mubr.f32.mxu0 0.0
      %7223 = vmatmul.mubr.f32.gmra.mxu0 %v7024
      %v7224 = vpop.f32.mrf.mxu0
      %v7225 = vadd.f32 0.0, %v7224
      %v7226 = vpop.f32.mrf.mxu0
      %v7227 = vadd.f32 0.0, %v7226
      %7228 = vmatprep.mubr.f32.mxu0 0.0
      %7229 = vmatmul.mubr.f32.gmra.mxu0 %v7027
      %v7230 = vpop.f32.mrf.mxu0
      %v7231 = vadd.f32 0.0, %v7230
      %v7232 = vpop.f32.mrf.mxu0
      %v7233 = vadd.f32 0.0, %v7232
      %7234 = vmatprep.mubr.f32.mxu0 0.0
      %7235 = vmatmul.mubr.f32.gmra.mxu0 %v7030
      %v7236 = vpop.f32.mrf.mxu0
      %v7237 = vadd.f32 0.0, %v7236
      %v7238 = vpop.f32.mrf.mxu0
      %v7239 = vadd.f32 0.0, %v7238
      %7240 = vdwg.mxu0
      %v7241 = vadd.f32 %v6930, %v7195
      %v7242 = vadd.f32 %v6932, %v7197
      %v7243 = vadd.f32 %v6936, %v7201
      %v7244 = vadd.f32 %v6938, %v7203
      %v7245 = vadd.f32 %v6942, %v7207
      %v7246 = vadd.f32 %v6944, %v7209
      %v7247 = vadd.f32 %v6948, %v7213
      %v7248 = vadd.f32 %v6950, %v7215
      %v7249 = vadd.f32 %v6954, %v7219
      %v7250 = vadd.f32 %v6956, %v7221
      %v7251 = vadd.f32 %v6960, %v7225
      %v7252 = vadd.f32 %v6962, %v7227
      %v7253 = vadd.f32 %v6966, %v7231
      %v7254 = vadd.f32 %v6968, %v7233
      %v7255 = vadd.f32 %v6972, %v7237
      %v7256 = vadd.f32 %v6974, %v7239
      %v7257 = vld [vmem:[%s6341] sm:$0xff]
      %v7258 = vld [vmem:[%s6341 + $0x8] sm:$0xff]
      %v7259 = vld [vmem:[%s6341 + $0x18] sm:$0xff]
      %v7260 = vld [vmem:[%s6341 + $0x20] sm:$0xff]
      %v7261 = vld [vmem:[%s6341 + $0x30] sm:$0xff]
      %v7262 = vld [vmem:[%s6341 + $0x38] sm:$0xff]
      %v7263 = vld [vmem:[%s6341 + $0x48] sm:$0xff]
      %v7264 = vld [vmem:[%s6341 + $0x50] sm:$0xff]
      %v7265 = vld [vmem:[%s6341 + $0x60] sm:$0xff]
      %v7266 = vld [vmem:[%s6341 + $0x68] sm:$0xff]
      %v7267 = vld [vmem:[%s6341 + $0x78] sm:$0xff]
      %v7268 = vld [vmem:[%s6341 + $0x80] sm:$0xff]
      %v7269 = vld [vmem:[%s6341 + $0x90] sm:$0xff]
      %v7270 = vld [vmem:[%s6341 + $0x98] sm:$0xff]
      %v7271 = vld [vmem:[%s6341 + $0xa8] sm:$0xff]
      %v7272 = vld [vmem:[%s6341 + $0xb0] sm:$0xff]
      %v7273 = vld [vmem:[%s6341 + $0xc0] sm:$0xff]
      %v7274 = vld [vmem:[%s6341 + $0xc8] sm:$0xff]
      %v7275 = vld [vmem:[%s6341 + $0xd8] sm:$0xff]
      %v7276 = vld [vmem:[%s6341 + $0xe0] sm:$0xff]
      %v7277 = vld [vmem:[%s6341 + $0xf0] sm:$0xff]
      %v7278 = vld [vmem:[%s6341 + $0xf8] sm:$0xff]
      %v7279 = vld [vmem:[%s6341 + $0x108] sm:$0xff]
      %v7280 = vld [vmem:[%s6341 + $0x110] sm:$0xff]
      %v7281 = vld [vmem:[%s6341 + $0x120] sm:$0xff]
      %v7282 = vld [vmem:[%s6341 + $0x128] sm:$0xff]
      %v7283 = vld [vmem:[%s6341 + $0x138] sm:$0xff]
      %v7284 = vld [vmem:[%s6341 + $0x140] sm:$0xff]
      %v7285 = vld [vmem:[%s6341 + $0x150] sm:$0xff]
      %v7286 = vld [vmem:[%s6341 + $0x158] sm:$0xff]
      %v7287 = vld [vmem:[%s6341 + $0x168] sm:$0xff]
      %v7288 = vld [vmem:[%s6341 + $0x170] sm:$0xff]
      %v7290 = vsel %vm1773, %v6398, 0
      %v7293 = vsel %vm1773, %v6399, 0
      %v7296 = vsel %vm1773, %v6400, 0
      %v7299 = vsel %vm1773, %v6401, 0
      %v7302 = vsel %vm1773, %v6402, 0
      %v7305 = vsel %vm1773, %v6403, 0
      %v7308 = vsel %vm1773, %v6404, 0
      %v7311 = vsel %vm1773, %v6405, 0
      %v7314 = vsel %vm1773, %v7257, 0
      %v7317 = vsel %vm1773, %v7258, 0
      %v7320 = vsel %vm1773, %v7259, 0
      %v7323 = vsel %vm1773, %v7260, 0
      %v7326 = vsel %vm1773, %v7261, 0
      %v7329 = vsel %vm1773, %v7262, 0
      %v7332 = vsel %vm1773, %v7263, 0
      %v7335 = vsel %vm1773, %v7264, 0
      %v7338 = vsel %vm1773, %v7265, 0
      %v7341 = vsel %vm1773, %v7266, 0
      %v7344 = vsel %vm1773, %v7267, 0
      %v7347 = vsel %vm1773, %v7268, 0
      %v7350 = vsel %vm1773, %v7269, 0
      %v7353 = vsel %vm1773, %v7270, 0
      %v7356 = vsel %vm1773, %v7271, 0
      %v7359 = vsel %vm1773, %v7272, 0
      %v7362 = vsel %vm1773, %v7273, 0
      %v7365 = vsel %vm1773, %v7274, 0
      %v7368 = vsel %vm1773, %v7275, 0
      %v7371 = vsel %vm1773, %v7276, 0
      %v7374 = vsel %vm1773, %v7277, 0
      %v7377 = vsel %vm1773, %v7278, 0
      %v7380 = vsel %vm1773, %v7279, 0
      %v7383 = vsel %vm1773, %v7280, 0
      %v7386 = vsel %vm1773, %v7281, 0
      %v7389 = vsel %vm1773, %v7282, 0
      %v7392 = vsel %vm1773, %v7283, 0
      %v7395 = vsel %vm1773, %v7284, 0
      %v7398 = vsel %vm1773, %v7285, 0
      %v7401 = vsel %vm1773, %v7286, 0
      %v7404 = vsel %vm1773, %v7287, 0
      %v7407 = vsel %vm1773, %v7288, 0
      %7409 = vmatprep.subr.mxu0 0.0
      %7410 = vmatpush1.xpose.msra.mxu0 %v7359
      %7411 = vmatprep.subr.mxu0 0.0
      %7412 = vmatpush1.xpose.msra.mxu0 %v7356
      %7413 = vmatprep.subr.mxu0 0.0
      %7414 = vmatpush1.xpose.msra.mxu0 %v7353
      %7415 = vmatprep.subr.mxu0 0.0
      %7416 = vmatpush1.xpose.msra.mxu0 %v7350
      %7417 = vmatprep.subr.mxu0 0.0
      %7418 = vmatpush1.xpose.msra.mxu0 %v7347
      %7419 = vmatprep.subr.mxu0 0.0
      %7420 = vmatpush1.xpose.msra.mxu0 %v7344
      %7421 = vmatprep.subr.mxu0 0.0
      %7422 = vmatpush1.xpose.msra.mxu0 %v7341
      %7423 = vmatprep.subr.mxu0 0.0
      %7424 = vmatpush1.xpose.msra.mxu0 %v7338
      %7425 = vmatprep.subr.mxu0 0.0
      %7426 = vmatpush1.xpose.msra.mxu0 %v7335
      %7427 = vmatprep.subr.mxu0 0.0
      %7428 = vmatpush1.xpose.msra.mxu0 %v7332
      %7429 = vmatprep.subr.mxu0 0.0
      %7430 = vmatpush1.xpose.msra.mxu0 %v7329
      %7431 = vmatprep.subr.mxu0 0.0
      %7432 = vmatpush1.xpose.msra.mxu0 %v7326
      %7433 = vmatprep.subr.mxu0 0.0
      %7434 = vmatpush1.xpose.msra.mxu0 %v7323
      %7435 = vmatprep.subr.mxu0 0.0
      %7436 = vmatpush1.xpose.msra.mxu0 %v7320
      %7437 = vmatprep.subr.mxu0 0.0
      %7438 = vmatpush1.xpose.msra.mxu0 %v7317
      %7439 = vmatprep.subr.mxu0 0.0
      %7440 = vmatpush1.xpose.msra.mxu0 %v7314
      %7441 = vmatprep.subr.mxu0 0.0
      %7442 = vmatpush2.xpose.msra.mxu0 %v7407
      %7443 = vmatprep.subr.mxu0 0.0
      %7444 = vmatpush2.xpose.msra.mxu0 %v7404
      %7445 = vmatprep.subr.mxu0 0.0
      %7446 = vmatpush2.xpose.msra.mxu0 %v7401
      %7447 = vmatprep.subr.mxu0 0.0
      %7448 = vmatpush2.xpose.msra.mxu0 %v7398
      %7449 = vmatprep.subr.mxu0 0.0
      %7450 = vmatpush2.xpose.msra.mxu0 %v7395
      %7451 = vmatprep.subr.mxu0 0.0
      %7452 = vmatpush2.xpose.msra.mxu0 %v7392
      %7453 = vmatprep.subr.mxu0 0.0
      %7454 = vmatpush2.xpose.msra.mxu0 %v7389
      %7455 = vmatprep.subr.mxu0 0.0
      %7456 = vmatpush2.xpose.msra.mxu0 %v7386
      %7457 = vmatprep.subr.mxu0 0.0
      %7458 = vmatpush2.xpose.msra.mxu0 %v7383
      %7459 = vmatprep.subr.mxu0 0.0
      %7460 = vmatpush2.xpose.msra.mxu0 %v7380
      %7461 = vmatprep.subr.mxu0 0.0
      %7462 = vmatpush2.xpose.msra.mxu0 %v7377
      %7463 = vmatprep.subr.mxu0 0.0
      %7464 = vmatpush2.xpose.msra.mxu0 %v7374
      %7465 = vmatprep.subr.mxu0 0.0
      %7466 = vmatpush2.xpose.msra.mxu0 %v7371
      %7467 = vmatprep.subr.mxu0 0.0
      %7468 = vmatpush2.xpose.msra.mxu0 %v7368
      %7469 = vmatprep.subr.mxu0 0.0
      %7470 = vmatpush2.xpose.msra.mxu0 %v7365
      %7471 = vmatprep.subr.mxu0 0.0
      %7472 = vmatpush2.xpose.msra.mxu0 %v7362
      %7473 = vmatprep.mubr.f32.mxu0 0.0
      %7474 = vmatmul.mubr.f32.gmra.mxu0 %v7290
      %v7475 = vpop.f32.mrf.mxu0
      %v7476 = vadd.f32 0.0, %v7475
      %v7477 = vpop.f32.mrf.mxu0
      %v7478 = vadd.f32 0.0, %v7477
      %7479 = vmatprep.mubr.f32.mxu0 0.0
      %7480 = vmatmul.mubr.f32.gmra.mxu0 %v7293
      %v7481 = vpop.f32.mrf.mxu0
      %v7482 = vadd.f32 0.0, %v7481
      %v7483 = vpop.f32.mrf.mxu0
      %v7484 = vadd.f32 0.0, %v7483
      %7485 = vmatprep.mubr.f32.mxu0 0.0
      %7486 = vmatmul.mubr.f32.gmra.mxu0 %v7296
      %v7487 = vpop.f32.mrf.mxu0
      %v7488 = vadd.f32 0.0, %v7487
      %v7489 = vpop.f32.mrf.mxu0
      %v7490 = vadd.f32 0.0, %v7489
      %7491 = vmatprep.mubr.f32.mxu0 0.0
      %7492 = vmatmul.mubr.f32.gmra.mxu0 %v7299
      %v7493 = vpop.f32.mrf.mxu0
      %v7494 = vadd.f32 0.0, %v7493
      %v7495 = vpop.f32.mrf.mxu0
      %v7496 = vadd.f32 0.0, %v7495
      %7497 = vmatprep.mubr.f32.mxu0 0.0
      %7498 = vmatmul.mubr.f32.gmra.mxu0 %v7302
      %v7499 = vpop.f32.mrf.mxu0
      %v7500 = vadd.f32 0.0, %v7499
      %v7501 = vpop.f32.mrf.mxu0
      %v7502 = vadd.f32 0.0, %v7501
      %7503 = vmatprep.mubr.f32.mxu0 0.0
      %7504 = vmatmul.mubr.f32.gmra.mxu0 %v7305
      %v7505 = vpop.f32.mrf.mxu0
      %v7506 = vadd.f32 0.0, %v7505
      %v7507 = vpop.f32.mrf.mxu0
      %v7508 = vadd.f32 0.0, %v7507
      %7509 = vmatprep.mubr.f32.mxu0 0.0
      %7510 = vmatmul.mubr.f32.gmra.mxu0 %v7308
      %v7511 = vpop.f32.mrf.mxu0
      %v7512 = vadd.f32 0.0, %v7511
      %v7513 = vpop.f32.mrf.mxu0
      %v7514 = vadd.f32 0.0, %v7513
      %7515 = vmatprep.mubr.f32.mxu0 0.0
      %7516 = vmatmul.mubr.f32.gmra.mxu0 %v7311
      %v7517 = vpop.f32.mrf.mxu0
      %v7518 = vadd.f32 0.0, %v7517
      %v7519 = vpop.f32.mrf.mxu0
      %v7520 = vadd.f32 0.0, %v7519
      %7521 = vdwg.mxu0
      %v7522 = vadd.f32 %v7241, %v7476
      %v7523 = vadd.f32 %v7242, %v7478
      %v7524 = vadd.f32 %v7243, %v7482
      %v7525 = vadd.f32 %v7244, %v7484
      %v7526 = vadd.f32 %v7245, %v7488
      %v7527 = vadd.f32 %v7246, %v7490
      %v7528 = vadd.f32 %v7247, %v7494
      %v7529 = vadd.f32 %v7248, %v7496
      %v7530 = vadd.f32 %v7249, %v7500
      %v7531 = vadd.f32 %v7250, %v7502
      %v7532 = vadd.f32 %v7251, %v7506
      %v7533 = vadd.f32 %v7252, %v7508
      %v7534 = vadd.f32 %v7253, %v7512
      %v7535 = vadd.f32 %v7254, %v7514
      %v7536 = vadd.f32 %v7255, %v7518
      %v7537 = vadd.f32 %v7256, %v7520
      %v7538 = vld [vmem:[%s6341 + $0x1] sm:$0xff]
      %v7539 = vld [vmem:[%s6341 + $0x9] sm:$0xff]
      %v7540 = vld [vmem:[%s6341 + $0x19] sm:$0xff]
      %v7541 = vld [vmem:[%s6341 + $0x21] sm:$0xff]
      %v7542 = vld [vmem:[%s6341 + $0x31] sm:$0xff]
      %v7543 = vld [vmem:[%s6341 + $0x39] sm:$0xff]
      %v7544 = vld [vmem:[%s6341 + $0x49] sm:$0xff]
      %v7545 = vld [vmem:[%s6341 + $0x51] sm:$0xff]
      %v7546 = vld [vmem:[%s6341 + $0x61] sm:$0xff]
      %v7547 = vld [vmem:[%s6341 + $0x69] sm:$0xff]
      %v7548 = vld [vmem:[%s6341 + $0x79] sm:$0xff]
      %v7549 = vld [vmem:[%s6341 + $0x81] sm:$0xff]
      %v7550 = vld [vmem:[%s6341 + $0x91] sm:$0xff]
      %v7551 = vld [vmem:[%s6341 + $0x99] sm:$0xff]
      %v7552 = vld [vmem:[%s6341 + $0xa9] sm:$0xff]
      %v7553 = vld [vmem:[%s6341 + $0xb1] sm:$0xff]
      %v7554 = vld [vmem:[%s6341 + $0xc1] sm:$0xff]
      %v7555 = vld [vmem:[%s6341 + $0xc9] sm:$0xff]
      %v7556 = vld [vmem:[%s6341 + $0xd9] sm:$0xff]
      %v7557 = vld [vmem:[%s6341 + $0xe1] sm:$0xff]
      %v7558 = vld [vmem:[%s6341 + $0xf1] sm:$0xff]
      %v7559 = vld [vmem:[%s6341 + $0xf9] sm:$0xff]
      %v7560 = vld [vmem:[%s6341 + $0x109] sm:$0xff]
      %v7561 = vld [vmem:[%s6341 + $0x111] sm:$0xff]
      %v7562 = vld [vmem:[%s6341 + $0x121] sm:$0xff]
      %v7563 = vld [vmem:[%s6341 + $0x129] sm:$0xff]
      %v7564 = vld [vmem:[%s6341 + $0x139] sm:$0xff]
      %v7565 = vld [vmem:[%s6341 + $0x141] sm:$0xff]
      %v7566 = vld [vmem:[%s6341 + $0x151] sm:$0xff]
      %v7567 = vld [vmem:[%s6341 + $0x159] sm:$0xff]
      %v7568 = vld [vmem:[%s6341 + $0x169] sm:$0xff]
      %v7569 = vld [vmem:[%s6341 + $0x171] sm:$0xff]
      %v7571 = vsel %vm1773, %v6406, 0
      %v7574 = vsel %vm1773, %v6407, 0
      %v7577 = vsel %vm1773, %v6408, 0
      %v7580 = vsel %vm1773, %v6409, 0
      %v7583 = vsel %vm1773, %v6410, 0
      %v7586 = vsel %vm1773, %v6411, 0
      %v7589 = vsel %vm1773, %v6412, 0
      %v7592 = vsel %vm1773, %v6413, 0
      %v7595 = vsel %vm1773, %v7538, 0
      %v7598 = vsel %vm1773, %v7539, 0
      %v7601 = vsel %vm1773, %v7540, 0
      %v7604 = vsel %vm1773, %v7541, 0
      %v7607 = vsel %vm1773, %v7542, 0
      %v7610 = vsel %vm1773, %v7543, 0
      %v7613 = vsel %vm1773, %v7544, 0
      %v7616 = vsel %vm1773, %v7545, 0
      %v7619 = vsel %vm1773, %v7546, 0
      %v7622 = vsel %vm1773, %v7547, 0
      %v7625 = vsel %vm1773, %v7548, 0
      %v7628 = vsel %vm1773, %v7549, 0
      %v7631 = vsel %vm1773, %v7550, 0
      %v7634 = vsel %vm1773, %v7551, 0
      %v7637 = vsel %vm1773, %v7552, 0
      %v7640 = vsel %vm1773, %v7553, 0
      %v7643 = vsel %vm1773, %v7554, 0
      %v7646 = vsel %vm1773, %v7555, 0
      %v7649 = vsel %vm1773, %v7556, 0
      %v7652 = vsel %vm1773, %v7557, 0
      %v7655 = vsel %vm1773, %v7558, 0
      %v7658 = vsel %vm1773, %v7559, 0
      %v7661 = vsel %vm1773, %v7560, 0
      %v7664 = vsel %vm1773, %v7561, 0
      %v7667 = vsel %vm1773, %v7562, 0
      %v7670 = vsel %vm1773, %v7563, 0
      %v7673 = vsel %vm1773, %v7564, 0
      %v7676 = vsel %vm1773, %v7565, 0
      %v7679 = vsel %vm1773, %v7566, 0
      %v7682 = vsel %vm1773, %v7567, 0
      %v7685 = vsel %vm1773, %v7568, 0
      %v7688 = vsel %vm1773, %v7569, 0
      %7690 = vmatprep.subr.mxu0 0.0
      %7691 = vmatpush1.xpose.msra.mxu0 %v7640
      %7692 = vmatprep.subr.mxu0 0.0
      %7693 = vmatpush1.xpose.msra.mxu0 %v7637
      %7694 = vmatprep.subr.mxu0 0.0
      %7695 = vmatpush1.xpose.msra.mxu0 %v7634
      %7696 = vmatprep.subr.mxu0 0.0
      %7697 = vmatpush1.xpose.msra.mxu0 %v7631
      %7698 = vmatprep.subr.mxu0 0.0
      %7699 = vmatpush1.xpose.msra.mxu0 %v7628
      %7700 = vmatprep.subr.mxu0 0.0
      %7701 = vmatpush1.xpose.msra.mxu0 %v7625
      %7702 = vmatprep.subr.mxu0 0.0
      %7703 = vmatpush1.xpose.msra.mxu0 %v7622
      %7704 = vmatprep.subr.mxu0 0.0
      %7705 = vmatpush1.xpose.msra.mxu0 %v7619
      %7706 = vmatprep.subr.mxu0 0.0
      %7707 = vmatpush1.xpose.msra.mxu0 %v7616
      %7708 = vmatprep.subr.mxu0 0.0
      %7709 = vmatpush1.xpose.msra.mxu0 %v7613
      %7710 = vmatprep.subr.mxu0 0.0
      %7711 = vmatpush1.xpose.msra.mxu0 %v7610
      %7712 = vmatprep.subr.mxu0 0.0
      %7713 = vmatpush1.xpose.msra.mxu0 %v7607
      %7714 = vmatprep.subr.mxu0 0.0
      %7715 = vmatpush1.xpose.msra.mxu0 %v7604
      %7716 = vmatprep.subr.mxu0 0.0
      %7717 = vmatpush1.xpose.msra.mxu0 %v7601
      %7718 = vmatprep.subr.mxu0 0.0
      %7719 = vmatpush1.xpose.msra.mxu0 %v7598
      %7720 = vmatprep.subr.mxu0 0.0
      %7721 = vmatpush1.xpose.msra.mxu0 %v7595
      %7722 = vmatprep.subr.mxu0 0.0
      %7723 = vmatpush2.xpose.msra.mxu0 %v7688
      %7724 = vmatprep.subr.mxu0 0.0
      %7725 = vmatpush2.xpose.msra.mxu0 %v7685
      %7726 = vmatprep.subr.mxu0 0.0
      %7727 = vmatpush2.xpose.msra.mxu0 %v7682
      %7728 = vmatprep.subr.mxu0 0.0
      %7729 = vmatpush2.xpose.msra.mxu0 %v7679
      %7730 = vmatprep.subr.mxu0 0.0
      %7731 = vmatpush2.xpose.msra.mxu0 %v7676
      %7732 = vmatprep.subr.mxu0 0.0
      %7733 = vmatpush2.xpose.msra.mxu0 %v7673
      %7734 = vmatprep.subr.mxu0 0.0
      %7735 = vmatpush2.xpose.msra.mxu0 %v7670
      %7736 = vmatprep.subr.mxu0 0.0
      %7737 = vmatpush2.xpose.msra.mxu0 %v7667
      %7738 = vmatprep.subr.mxu0 0.0
      %7739 = vmatpush2.xpose.msra.mxu0 %v7664
      %7740 = vmatprep.subr.mxu0 0.0
      %7741 = vmatpush2.xpose.msra.mxu0 %v7661
      %7742 = vmatprep.subr.mxu0 0.0
      %7743 = vmatpush2.xpose.msra.mxu0 %v7658
      %7744 = vmatprep.subr.mxu0 0.0
      %7745 = vmatpush2.xpose.msra.mxu0 %v7655
      %7746 = vmatprep.subr.mxu0 0.0
      %7747 = vmatpush2.xpose.msra.mxu0 %v7652
      %7748 = vmatprep.subr.mxu0 0.0
      %7749 = vmatpush2.xpose.msra.mxu0 %v7649
      %7750 = vmatprep.subr.mxu0 0.0
      %7751 = vmatpush2.xpose.msra.mxu0 %v7646
      %7752 = vmatprep.subr.mxu0 0.0
      %7753 = vmatpush2.xpose.msra.mxu0 %v7643
      %7754 = vmatprep.mubr.f32.mxu0 0.0
      %7755 = vmatmul.mubr.f32.gmra.mxu0 %v7571
      %v7756 = vpop.f32.mrf.mxu0
      %v7757 = vadd.f32 0.0, %v7756
      %v7758 = vpop.f32.mrf.mxu0
      %v7759 = vadd.f32 0.0, %v7758
      %7760 = vmatprep.mubr.f32.mxu0 0.0
      %7761 = vmatmul.mubr.f32.gmra.mxu0 %v7574
      %v7762 = vpop.f32.mrf.mxu0
      %v7763 = vadd.f32 0.0, %v7762
      %v7764 = vpop.f32.mrf.mxu0
      %v7765 = vadd.f32 0.0, %v7764
      %7766 = vmatprep.mubr.f32.mxu0 0.0
      %7767 = vmatmul.mubr.f32.gmra.mxu0 %v7577
      %v7768 = vpop.f32.mrf.mxu0
      %v7769 = vadd.f32 0.0, %v7768
      %v7770 = vpop.f32.mrf.mxu0
      %v7771 = vadd.f32 0.0, %v7770
      %7772 = vmatprep.mubr.f32.mxu0 0.0
      %7773 = vmatmul.mubr.f32.gmra.mxu0 %v7580
      %v7774 = vpop.f32.mrf.mxu0
      %v7775 = vadd.f32 0.0, %v7774
      %v7776 = vpop.f32.mrf.mxu0
      %v7777 = vadd.f32 0.0, %v7776
      %7778 = vmatprep.mubr.f32.mxu0 0.0
      %7779 = vmatmul.mubr.f32.gmra.mxu0 %v7583
      %v7780 = vpop.f32.mrf.mxu0
      %v7781 = vadd.f32 0.0, %v7780
      %v7782 = vpop.f32.mrf.mxu0
      %v7783 = vadd.f32 0.0, %v7782
      %7784 = vmatprep.mubr.f32.mxu0 0.0
      %7785 = vmatmul.mubr.f32.gmra.mxu0 %v7586
      %v7786 = vpop.f32.mrf.mxu0
      %v7787 = vadd.f32 0.0, %v7786
      %v7788 = vpop.f32.mrf.mxu0
      %v7789 = vadd.f32 0.0, %v7788
      %7790 = vmatprep.mubr.f32.mxu0 0.0
      %7791 = vmatmul.mubr.f32.gmra.mxu0 %v7589
      %v7792 = vpop.f32.mrf.mxu0
      %v7793 = vadd.f32 0.0, %v7792
      %v7794 = vpop.f32.mrf.mxu0
      %v7795 = vadd.f32 0.0, %v7794
      %7796 = vmatprep.mubr.f32.mxu0 0.0
      %7797 = vmatmul.mubr.f32.gmra.mxu0 %v7592
      %v7798 = vpop.f32.mrf.mxu0
      %v7799 = vadd.f32 0.0, %v7798
      %v7800 = vpop.f32.mrf.mxu0
      %v7801 = vadd.f32 0.0, %v7800
      %7802 = vdwg.mxu0
      %v7803 = vadd.f32 %v7522, %v7757
      %v7804 = vadd.f32 %v7523, %v7759
      %v7805 = vadd.f32 %v7524, %v7763
      %v7806 = vadd.f32 %v7525, %v7765
      %v7807 = vadd.f32 %v7526, %v7769
      %v7808 = vadd.f32 %v7527, %v7771
      %v7809 = vadd.f32 %v7528, %v7775
      %v7810 = vadd.f32 %v7529, %v7777
      %v7811 = vadd.f32 %v7530, %v7781
      %v7812 = vadd.f32 %v7531, %v7783
      %v7813 = vadd.f32 %v7532, %v7787
      %v7814 = vadd.f32 %v7533, %v7789
      %v7815 = vadd.f32 %v7534, %v7793
      %v7816 = vadd.f32 %v7535, %v7795
      %v7817 = vadd.f32 %v7536, %v7799
      %v7818 = vadd.f32 %v7537, %v7801
      %v7819 = vld [vmem:[%s6341 + $0x2] sm:$0xff]
      %v7820 = vld [vmem:[%s6341 + $0xa] sm:$0xff]
      %v7821 = vld [vmem:[%s6341 + $0x1a] sm:$0xff]
      %v7822 = vld [vmem:[%s6341 + $0x22] sm:$0xff]
      %v7823 = vld [vmem:[%s6341 + $0x32] sm:$0xff]
      %v7824 = vld [vmem:[%s6341 + $0x3a] sm:$0xff]
      %v7825 = vld [vmem:[%s6341 + $0x4a] sm:$0xff]
      %v7826 = vld [vmem:[%s6341 + $0x52] sm:$0xff]
      %v7827 = vld [vmem:[%s6341 + $0x62] sm:$0xff]
      %v7828 = vld [vmem:[%s6341 + $0x6a] sm:$0xff]
      %v7829 = vld [vmem:[%s6341 + $0x7a] sm:$0xff]
      %v7830 = vld [vmem:[%s6341 + $0x82] sm:$0xff]
      %v7831 = vld [vmem:[%s6341 + $0x92] sm:$0xff]
      %v7832 = vld [vmem:[%s6341 + $0x9a] sm:$0xff]
      %v7833 = vld [vmem:[%s6341 + $0xaa] sm:$0xff]
      %v7834 = vld [vmem:[%s6341 + $0xb2] sm:$0xff]
      %v7835 = vld [vmem:[%s6341 + $0xc2] sm:$0xff]
      %v7836 = vld [vmem:[%s6341 + $0xca] sm:$0xff]
      %v7837 = vld [vmem:[%s6341 + $0xda] sm:$0xff]
      %v7838 = vld [vmem:[%s6341 + $0xe2] sm:$0xff]
      %v7839 = vld [vmem:[%s6341 + $0xf2] sm:$0xff]
      %v7840 = vld [vmem:[%s6341 + $0xfa] sm:$0xff]
      %v7841 = vld [vmem:[%s6341 + $0x10a] sm:$0xff]
      %v7842 = vld [vmem:[%s6341 + $0x112] sm:$0xff]
      %v7843 = vld [vmem:[%s6341 + $0x122] sm:$0xff]
      %v7844 = vld [vmem:[%s6341 + $0x12a] sm:$0xff]
      %v7845 = vld [vmem:[%s6341 + $0x13a] sm:$0xff]
      %v7846 = vld [vmem:[%s6341 + $0x142] sm:$0xff]
      %v7847 = vld [vmem:[%s6341 + $0x152] sm:$0xff]
      %v7848 = vld [vmem:[%s6341 + $0x15a] sm:$0xff]
      %v7849 = vld [vmem:[%s6341 + $0x16a] sm:$0xff]
      %v7850 = vld [vmem:[%s6341 + $0x172] sm:$0xff]
      %v7852 = vsel %vm1773, %v6414, 0
      %v7855 = vsel %vm1773, %v6415, 0
      %v7858 = vsel %vm1773, %v6416, 0
      %v7861 = vsel %vm1773, %v6417, 0
      %v7864 = vsel %vm1773, %v6418, 0
      %v7867 = vsel %vm1773, %v6419, 0
      %v7870 = vsel %vm1773, %v6420, 0
      %v7873 = vsel %vm1773, %v6421, 0
      %v7876 = vsel %vm1773, %v7819, 0
      %v7879 = vsel %vm1773, %v7820, 0
      %v7882 = vsel %vm1773, %v7821, 0
      %v7885 = vsel %vm1773, %v7822, 0
      %v7888 = vsel %vm1773, %v7823, 0
      %v7891 = vsel %vm1773, %v7824, 0
      %v7894 = vsel %vm1773, %v7825, 0
      %v7897 = vsel %vm1773, %v7826, 0
      %v7900 = vsel %vm1773, %v7827, 0
      %v7903 = vsel %vm1773, %v7828, 0
      %v7906 = vsel %vm1773, %v7829, 0
      %v7909 = vsel %vm1773, %v7830, 0
      %v7912 = vsel %vm1773, %v7831, 0
      %v7915 = vsel %vm1773, %v7832, 0
      %v7918 = vsel %vm1773, %v7833, 0
      %v7921 = vsel %vm1773, %v7834, 0
      %v7924 = vsel %vm1773, %v7835, 0
      %v7927 = vsel %vm1773, %v7836, 0
      %v7930 = vsel %vm1773, %v7837, 0
      %v7933 = vsel %vm1773, %v7838, 0
      %v7936 = vsel %vm1773, %v7839, 0
      %v7939 = vsel %vm1773, %v7840, 0
      %v7942 = vsel %vm1773, %v7841, 0
      %v7945 = vsel %vm1773, %v7842, 0
      %v7948 = vsel %vm1773, %v7843, 0
      %v7951 = vsel %vm1773, %v7844, 0
      %v7954 = vsel %vm1773, %v7845, 0
      %v7957 = vsel %vm1773, %v7846, 0
      %v7960 = vsel %vm1773, %v7847, 0
      %v7963 = vsel %vm1773, %v7848, 0
      %v7966 = vsel %vm1773, %v7849, 0
      %v7969 = vsel %vm1773, %v7850, 0
      %7971 = vmatprep.subr.mxu0 0.0
      %7972 = vmatpush1.xpose.msra.mxu0 %v7921
      %7973 = vmatprep.subr.mxu0 0.0
      %7974 = vmatpush1.xpose.msra.mxu0 %v7918
      %7975 = vmatprep.subr.mxu0 0.0
      %7976 = vmatpush1.xpose.msra.mxu0 %v7915
      %7977 = vmatprep.subr.mxu0 0.0
      %7978 = vmatpush1.xpose.msra.mxu0 %v7912
      %7979 = vmatprep.subr.mxu0 0.0
      %7980 = vmatpush1.xpose.msra.mxu0 %v7909
      %7981 = vmatprep.subr.mxu0 0.0
      %7982 = vmatpush1.xpose.msra.mxu0 %v7906
      %7983 = vmatprep.subr.mxu0 0.0
      %7984 = vmatpush1.xpose.msra.mxu0 %v7903
      %7985 = vmatprep.subr.mxu0 0.0
      %7986 = vmatpush1.xpose.msra.mxu0 %v7900
      %7987 = vmatprep.subr.mxu0 0.0
      %7988 = vmatpush1.xpose.msra.mxu0 %v7897
      %7989 = vmatprep.subr.mxu0 0.0
      %7990 = vmatpush1.xpose.msra.mxu0 %v7894
      %7991 = vmatprep.subr.mxu0 0.0
      %7992 = vmatpush1.xpose.msra.mxu0 %v7891
      %7993 = vmatprep.subr.mxu0 0.0
      %7994 = vmatpush1.xpose.msra.mxu0 %v7888
      %7995 = vmatprep.subr.mxu0 0.0
      %7996 = vmatpush1.xpose.msra.mxu0 %v7885
      %7997 = vmatprep.subr.mxu0 0.0
      %7998 = vmatpush1.xpose.msra.mxu0 %v7882
      %7999 = vmatprep.subr.mxu0 0.0
      %8000 = vmatpush1.xpose.msra.mxu0 %v7879
      %8001 = vmatprep.subr.mxu0 0.0
      %8002 = vmatpush1.xpose.msra.mxu0 %v7876
      %8003 = vmatprep.subr.mxu0 0.0
      %8004 = vmatpush2.xpose.msra.mxu0 %v7969
      %8005 = vmatprep.subr.mxu0 0.0
      %8006 = vmatpush2.xpose.msra.mxu0 %v7966
      %8007 = vmatprep.subr.mxu0 0.0
      %8008 = vmatpush2.xpose.msra.mxu0 %v7963
      %8009 = vmatprep.subr.mxu0 0.0
      %8010 = vmatpush2.xpose.msra.mxu0 %v7960
      %8011 = vmatprep.subr.mxu0 0.0
      %8012 = vmatpush2.xpose.msra.mxu0 %v7957
      %8013 = vmatprep.subr.mxu0 0.0
      %8014 = vmatpush2.xpose.msra.mxu0 %v7954
      %8015 = vmatprep.subr.mxu0 0.0
      %8016 = vmatpush2.xpose.msra.mxu0 %v7951
      %8017 = vmatprep.subr.mxu0 0.0
      %8018 = vmatpush2.xpose.msra.mxu0 %v7948
      %8019 = vmatprep.subr.mxu0 0.0
      %8020 = vmatpush2.xpose.msra.mxu0 %v7945
      %8021 = vmatprep.subr.mxu0 0.0
      %8022 = vmatpush2.xpose.msra.mxu0 %v7942
      %8023 = vmatprep.subr.mxu0 0.0
      %8024 = vmatpush2.xpose.msra.mxu0 %v7939
      %8025 = vmatprep.subr.mxu0 0.0
      %8026 = vmatpush2.xpose.msra.mxu0 %v7936
      %8027 = vmatprep.subr.mxu0 0.0
      %8028 = vmatpush2.xpose.msra.mxu0 %v7933
      %8029 = vmatprep.subr.mxu0 0.0
      %8030 = vmatpush2.xpose.msra.mxu0 %v7930
      %8031 = vmatprep.subr.mxu0 0.0
      %8032 = vmatpush2.xpose.msra.mxu0 %v7927
      %8033 = vmatprep.subr.mxu0 0.0
      %8034 = vmatpush2.xpose.msra.mxu0 %v7924
      %8035 = vmatprep.mubr.f32.mxu0 0.0
      %8036 = vmatmul.mubr.f32.gmra.mxu0 %v7852
      %v8037 = vpop.f32.mrf.mxu0
      %v8038 = vadd.f32 0.0, %v8037
      %v8039 = vpop.f32.mrf.mxu0
      %v8040 = vadd.f32 0.0, %v8039
      %8041 = vmatprep.mubr.f32.mxu0 0.0
      %8042 = vmatmul.mubr.f32.gmra.mxu0 %v7855
      %v8043 = vpop.f32.mrf.mxu0
      %v8044 = vadd.f32 0.0, %v8043
      %v8045 = vpop.f32.mrf.mxu0
      %v8046 = vadd.f32 0.0, %v8045
      %8047 = vmatprep.mubr.f32.mxu0 0.0
      %8048 = vmatmul.mubr.f32.gmra.mxu0 %v7858
      %v8049 = vpop.f32.mrf.mxu0
      %v8050 = vadd.f32 0.0, %v8049
      %v8051 = vpop.f32.mrf.mxu0
      %v8052 = vadd.f32 0.0, %v8051
      %8053 = vmatprep.mubr.f32.mxu0 0.0
      %8054 = vmatmul.mubr.f32.gmra.mxu0 %v7861
      %v8055 = vpop.f32.mrf.mxu0
      %v8056 = vadd.f32 0.0, %v8055
      %v8057 = vpop.f32.mrf.mxu0
      %v8058 = vadd.f32 0.0, %v8057
      %8059 = vmatprep.mubr.f32.mxu0 0.0
      %8060 = vmatmul.mubr.f32.gmra.mxu0 %v7864
      %v8061 = vpop.f32.mrf.mxu0
      %v8062 = vadd.f32 0.0, %v8061
      %v8063 = vpop.f32.mrf.mxu0
      %v8064 = vadd.f32 0.0, %v8063
      %8065 = vmatprep.mubr.f32.mxu0 0.0
      %8066 = vmatmul.mubr.f32.gmra.mxu0 %v7867
      %v8067 = vpop.f32.mrf.mxu0
      %v8068 = vadd.f32 0.0, %v8067
      %v8069 = vpop.f32.mrf.mxu0
      %v8070 = vadd.f32 0.0, %v8069
      %8071 = vmatprep.mubr.f32.mxu0 0.0
      %8072 = vmatmul.mubr.f32.gmra.mxu0 %v7870
      %v8073 = vpop.f32.mrf.mxu0
      %v8074 = vadd.f32 0.0, %v8073
      %v8075 = vpop.f32.mrf.mxu0
      %v8076 = vadd.f32 0.0, %v8075
      %8077 = vmatprep.mubr.f32.mxu0 0.0
      %8078 = vmatmul.mubr.f32.gmra.mxu0 %v7873
      %v8079 = vpop.f32.mrf.mxu0
      %v8080 = vadd.f32 0.0, %v8079
      %v8081 = vpop.f32.mrf.mxu0
      %v8082 = vadd.f32 0.0, %v8081
      %8083 = vdwg.mxu0
      %v8084 = vadd.f32 %v7803, %v8038
      %v8085 = vadd.f32 %v7804, %v8040
      %v8086 = vadd.f32 %v7805, %v8044
      %v8087 = vadd.f32 %v7806, %v8046
      %v8088 = vadd.f32 %v7807, %v8050
      %v8089 = vadd.f32 %v7808, %v8052
      %v8090 = vadd.f32 %v7809, %v8056
      %v8091 = vadd.f32 %v7810, %v8058
      %v8092 = vadd.f32 %v7811, %v8062
      %v8093 = vadd.f32 %v7812, %v8064
      %v8094 = vadd.f32 %v7813, %v8068
      %v8095 = vadd.f32 %v7814, %v8070
      %v8096 = vadd.f32 %v7815, %v8074
      %v8097 = vadd.f32 %v7816, %v8076
      %v8098 = vadd.f32 %v7817, %v8080
      %v8099 = vadd.f32 %v7818, %v8082
      %s8100 = scalar_lea.vmem [#allocation3], 48
      %v8101 = vld [vmem:[%s8100] sm:$0xff]
      %v8102 = vld [vmem:[%s8100 + $0x8] sm:$0xff]
      %v8103 = vld [vmem:[%s8100 + $0x18] sm:$0xff]
      %v8104 = vld [vmem:[%s8100 + $0x20] sm:$0xff]
      %v8105 = vld [vmem:[%s8100 + $0x30] sm:$0xff]
      %v8106 = vld [vmem:[%s8100 + $0x38] sm:$0xff]
      %v8107 = vld [vmem:[%s8100 + $0x48] sm:$0xff]
      %v8108 = vld [vmem:[%s8100 + $0x50] sm:$0xff]
      %v8109 = vld [vmem:[%s8100 + $0x60] sm:$0xff]
      %v8110 = vld [vmem:[%s8100 + $0x68] sm:$0xff]
      %v8111 = vld [vmem:[%s8100 + $0x78] sm:$0xff]
      %v8112 = vld [vmem:[%s8100 + $0x80] sm:$0xff]
      %v8113 = vld [vmem:[%s8100 + $0x90] sm:$0xff]
      %v8114 = vld [vmem:[%s8100 + $0x98] sm:$0xff]
      %v8115 = vld [vmem:[%s8100 + $0xa8] sm:$0xff]
      %v8116 = vld [vmem:[%s8100 + $0xb0] sm:$0xff]
      %v8117 = vld [vmem:[%s8100 + $0xc0] sm:$0xff]
      %v8118 = vld [vmem:[%s8100 + $0xc8] sm:$0xff]
      %v8119 = vld [vmem:[%s8100 + $0xd8] sm:$0xff]
      %v8120 = vld [vmem:[%s8100 + $0xe0] sm:$0xff]
      %v8121 = vld [vmem:[%s8100 + $0xf0] sm:$0xff]
      %v8122 = vld [vmem:[%s8100 + $0xf8] sm:$0xff]
      %v8123 = vld [vmem:[%s8100 + $0x108] sm:$0xff]
      %v8124 = vld [vmem:[%s8100 + $0x110] sm:$0xff]
      %v8125 = vld [vmem:[%s8100 + $0x120] sm:$0xff]
      %v8126 = vld [vmem:[%s8100 + $0x128] sm:$0xff]
      %v8127 = vld [vmem:[%s8100 + $0x138] sm:$0xff]
      %v8128 = vld [vmem:[%s8100 + $0x140] sm:$0xff]
      %v8129 = vld [vmem:[%s8100 + $0x150] sm:$0xff]
      %v8130 = vld [vmem:[%s8100 + $0x158] sm:$0xff]
      %v8131 = vld [vmem:[%s8100 + $0x168] sm:$0xff]
      %v8132 = vld [vmem:[%s8100 + $0x170] sm:$0xff]
      %v8134 = vsel %vm1773, %v6422, 0
      %v8137 = vsel %vm1773, %v6423, 0
      %v8140 = vsel %vm1773, %v6424, 0
      %v8143 = vsel %vm1773, %v6425, 0
      %v8146 = vsel %vm1773, %v6426, 0
      %v8149 = vsel %vm1773, %v6427, 0
      %v8152 = vsel %vm1773, %v6428, 0
      %v8155 = vsel %vm1773, %v6429, 0
      %v8158 = vsel %vm1773, %v8101, 0
      %v8161 = vsel %vm1773, %v8102, 0
      %v8164 = vsel %vm1773, %v8103, 0
      %v8167 = vsel %vm1773, %v8104, 0
      %v8170 = vsel %vm1773, %v8105, 0
      %v8173 = vsel %vm1773, %v8106, 0
      %v8176 = vsel %vm1773, %v8107, 0
      %v8179 = vsel %vm1773, %v8108, 0
      %v8182 = vsel %vm1773, %v8109, 0
      %v8185 = vsel %vm1773, %v8110, 0
      %v8188 = vsel %vm1773, %v8111, 0
      %v8191 = vsel %vm1773, %v8112, 0
      %v8194 = vsel %vm1773, %v8113, 0
      %v8197 = vsel %vm1773, %v8114, 0
      %v8200 = vsel %vm1773, %v8115, 0
      %v8203 = vsel %vm1773, %v8116, 0
      %v8206 = vsel %vm1773, %v8117, 0
      %v8209 = vsel %vm1773, %v8118, 0
      %v8212 = vsel %vm1773, %v8119, 0
      %v8215 = vsel %vm1773, %v8120, 0
      %v8218 = vsel %vm1773, %v8121, 0
      %v8221 = vsel %vm1773, %v8122, 0
      %v8224 = vsel %vm1773, %v8123, 0
      %v8227 = vsel %vm1773, %v8124, 0
      %v8230 = vsel %vm1773, %v8125, 0
      %v8233 = vsel %vm1773, %v8126, 0
      %v8236 = vsel %vm1773, %v8127, 0
      %v8239 = vsel %vm1773, %v8128, 0
      %v8242 = vsel %vm1773, %v8129, 0
      %v8245 = vsel %vm1773, %v8130, 0
      %v8248 = vsel %vm1773, %v8131, 0
      %v8251 = vsel %vm1773, %v8132, 0
      %8253 = vmatprep.subr.mxu0 0.0
      %8254 = vmatpush1.xpose.msra.mxu0 %v8203
      %8255 = vmatprep.subr.mxu0 0.0
      %8256 = vmatpush1.xpose.msra.mxu0 %v8200
      %8257 = vmatprep.subr.mxu0 0.0
      %8258 = vmatpush1.xpose.msra.mxu0 %v8197
      %8259 = vmatprep.subr.mxu0 0.0
      %8260 = vmatpush1.xpose.msra.mxu0 %v8194
      %8261 = vmatprep.subr.mxu0 0.0
      %8262 = vmatpush1.xpose.msra.mxu0 %v8191
      %8263 = vmatprep.subr.mxu0 0.0
      %8264 = vmatpush1.xpose.msra.mxu0 %v8188
      %8265 = vmatprep.subr.mxu0 0.0
      %8266 = vmatpush1.xpose.msra.mxu0 %v8185
      %8267 = vmatprep.subr.mxu0 0.0
      %8268 = vmatpush1.xpose.msra.mxu0 %v8182
      %8269 = vmatprep.subr.mxu0 0.0
      %8270 = vmatpush1.xpose.msra.mxu0 %v8179
      %8271 = vmatprep.subr.mxu0 0.0
      %8272 = vmatpush1.xpose.msra.mxu0 %v8176
      %8273 = vmatprep.subr.mxu0 0.0
      %8274 = vmatpush1.xpose.msra.mxu0 %v8173
      %8275 = vmatprep.subr.mxu0 0.0
      %8276 = vmatpush1.xpose.msra.mxu0 %v8170
      %8277 = vmatprep.subr.mxu0 0.0
      %8278 = vmatpush1.xpose.msra.mxu0 %v8167
      %8279 = vmatprep.subr.mxu0 0.0
      %8280 = vmatpush1.xpose.msra.mxu0 %v8164
      %8281 = vmatprep.subr.mxu0 0.0
      %8282 = vmatpush1.xpose.msra.mxu0 %v8161
      %8283 = vmatprep.subr.mxu0 0.0
      %8284 = vmatpush1.xpose.msra.mxu0 %v8158
      %8285 = vmatprep.subr.mxu0 0.0
      %8286 = vmatpush2.xpose.msra.mxu0 %v8251
      %8287 = vmatprep.subr.mxu0 0.0
      %8288 = vmatpush2.xpose.msra.mxu0 %v8248
      %8289 = vmatprep.subr.mxu0 0.0
      %8290 = vmatpush2.xpose.msra.mxu0 %v8245
      %8291 = vmatprep.subr.mxu0 0.0
      %8292 = vmatpush2.xpose.msra.mxu0 %v8242
      %8293 = vmatprep.subr.mxu0 0.0
      %8294 = vmatpush2.xpose.msra.mxu0 %v8239
      %8295 = vmatprep.subr.mxu0 0.0
      %8296 = vmatpush2.xpose.msra.mxu0 %v8236
      %8297 = vmatprep.subr.mxu0 0.0
      %8298 = vmatpush2.xpose.msra.mxu0 %v8233
      %8299 = vmatprep.subr.mxu0 0.0
      %8300 = vmatpush2.xpose.msra.mxu0 %v8230
      %8301 = vmatprep.subr.mxu0 0.0
      %8302 = vmatpush2.xpose.msra.mxu0 %v8227
      %8303 = vmatprep.subr.mxu0 0.0
      %8304 = vmatpush2.xpose.msra.mxu0 %v8224
      %8305 = vmatprep.subr.mxu0 0.0
      %8306 = vmatpush2.xpose.msra.mxu0 %v8221
      %8307 = vmatprep.subr.mxu0 0.0
      %8308 = vmatpush2.xpose.msra.mxu0 %v8218
      %8309 = vmatprep.subr.mxu0 0.0
      %8310 = vmatpush2.xpose.msra.mxu0 %v8215
      %8311 = vmatprep.subr.mxu0 0.0
      %8312 = vmatpush2.xpose.msra.mxu0 %v8212
      %8313 = vmatprep.subr.mxu0 0.0
      %8314 = vmatpush2.xpose.msra.mxu0 %v8209
      %8315 = vmatprep.subr.mxu0 0.0
      %8316 = vmatpush2.xpose.msra.mxu0 %v8206
      %8317 = vmatprep.mubr.f32.mxu0 0.0
      %8318 = vmatmul.mubr.f32.gmra.mxu0 %v8134
      %v8319 = vpop.f32.mrf.mxu0
      %v8320 = vadd.f32 0.0, %v8319
      %v8321 = vpop.f32.mrf.mxu0
      %v8322 = vadd.f32 0.0, %v8321
      %8323 = vmatprep.mubr.f32.mxu0 0.0
      %8324 = vmatmul.mubr.f32.gmra.mxu0 %v8137
      %v8325 = vpop.f32.mrf.mxu0
      %v8326 = vadd.f32 0.0, %v8325
      %v8327 = vpop.f32.mrf.mxu0
      %v8328 = vadd.f32 0.0, %v8327
      %8329 = vmatprep.mubr.f32.mxu0 0.0
      %8330 = vmatmul.mubr.f32.gmra.mxu0 %v8140
      %v8331 = vpop.f32.mrf.mxu0
      %v8332 = vadd.f32 0.0, %v8331
      %v8333 = vpop.f32.mrf.mxu0
      %v8334 = vadd.f32 0.0, %v8333
      %8335 = vmatprep.mubr.f32.mxu0 0.0
      %8336 = vmatmul.mubr.f32.gmra.mxu0 %v8143
      %v8337 = vpop.f32.mrf.mxu0
      %v8338 = vadd.f32 0.0, %v8337
      %v8339 = vpop.f32.mrf.mxu0
      %v8340 = vadd.f32 0.0, %v8339
      %8341 = vmatprep.mubr.f32.mxu0 0.0
      %8342 = vmatmul.mubr.f32.gmra.mxu0 %v8146
      %v8343 = vpop.f32.mrf.mxu0
      %v8344 = vadd.f32 0.0, %v8343
      %v8345 = vpop.f32.mrf.mxu0
      %v8346 = vadd.f32 0.0, %v8345
      %8347 = vmatprep.mubr.f32.mxu0 0.0
      %8348 = vmatmul.mubr.f32.gmra.mxu0 %v8149
      %v8349 = vpop.f32.mrf.mxu0
      %v8350 = vadd.f32 0.0, %v8349
      %v8351 = vpop.f32.mrf.mxu0
      %v8352 = vadd.f32 0.0, %v8351
      %8353 = vmatprep.mubr.f32.mxu0 0.0
      %8354 = vmatmul.mubr.f32.gmra.mxu0 %v8152
      %v8355 = vpop.f32.mrf.mxu0
      %v8356 = vadd.f32 0.0, %v8355
      %v8357 = vpop.f32.mrf.mxu0
      %v8358 = vadd.f32 0.0, %v8357
      %8359 = vmatprep.mubr.f32.mxu0 0.0
      %8360 = vmatmul.mubr.f32.gmra.mxu0 %v8155
      %v8361 = vpop.f32.mrf.mxu0
      %v8362 = vadd.f32 0.0, %v8361
      %v8363 = vpop.f32.mrf.mxu0
      %v8364 = vadd.f32 0.0, %v8363
      %8365 = vdwg.mxu0
      %v8366 = vadd.f32 %v8084, %v8320
      %v8367 = vadd.f32 %v8085, %v8322
      %v8368 = vadd.f32 %v8086, %v8326
      %v8369 = vadd.f32 %v8087, %v8328
      %v8370 = vadd.f32 %v8088, %v8332
      %v8371 = vadd.f32 %v8089, %v8334
      %v8372 = vadd.f32 %v8090, %v8338
      %v8373 = vadd.f32 %v8091, %v8340
      %v8374 = vadd.f32 %v8092, %v8344
      %v8375 = vadd.f32 %v8093, %v8346
      %v8376 = vadd.f32 %v8094, %v8350
      %v8377 = vadd.f32 %v8095, %v8352
      %v8378 = vadd.f32 %v8096, %v8356
      %v8379 = vadd.f32 %v8097, %v8358
      %v8380 = vadd.f32 %v8098, %v8362
      %v8381 = vadd.f32 %v8099, %v8364
      %v8382 = vld [vmem:[%s8100 + $0x1] sm:$0xff]
      %v8383 = vld [vmem:[%s8100 + $0x9] sm:$0xff]
      %v8384 = vld [vmem:[%s8100 + $0x19] sm:$0xff]
      %v8385 = vld [vmem:[%s8100 + $0x21] sm:$0xff]
      %v8386 = vld [vmem:[%s8100 + $0x31] sm:$0xff]
      %v8387 = vld [vmem:[%s8100 + $0x39] sm:$0xff]
      %v8388 = vld [vmem:[%s8100 + $0x49] sm:$0xff]
      %v8389 = vld [vmem:[%s8100 + $0x51] sm:$0xff]
      %v8390 = vld [vmem:[%s8100 + $0x61] sm:$0xff]
      %v8391 = vld [vmem:[%s8100 + $0x69] sm:$0xff]
      %v8392 = vld [vmem:[%s8100 + $0x79] sm:$0xff]
      %v8393 = vld [vmem:[%s8100 + $0x81] sm:$0xff]
      %v8394 = vld [vmem:[%s8100 + $0x91] sm:$0xff]
      %v8395 = vld [vmem:[%s8100 + $0x99] sm:$0xff]
      %v8396 = vld [vmem:[%s8100 + $0xa9] sm:$0xff]
      %v8397 = vld [vmem:[%s8100 + $0xb1] sm:$0xff]
      %v8398 = vld [vmem:[%s8100 + $0xc1] sm:$0xff]
      %v8399 = vld [vmem:[%s8100 + $0xc9] sm:$0xff]
      %v8400 = vld [vmem:[%s8100 + $0xd9] sm:$0xff]
      %v8401 = vld [vmem:[%s8100 + $0xe1] sm:$0xff]
      %v8402 = vld [vmem:[%s8100 + $0xf1] sm:$0xff]
      %v8403 = vld [vmem:[%s8100 + $0xf9] sm:$0xff]
      %v8404 = vld [vmem:[%s8100 + $0x109] sm:$0xff]
      %v8405 = vld [vmem:[%s8100 + $0x111] sm:$0xff]
      %v8406 = vld [vmem:[%s8100 + $0x121] sm:$0xff]
      %v8407 = vld [vmem:[%s8100 + $0x129] sm:$0xff]
      %v8408 = vld [vmem:[%s8100 + $0x139] sm:$0xff]
      %v8409 = vld [vmem:[%s8100 + $0x141] sm:$0xff]
      %v8410 = vld [vmem:[%s8100 + $0x151] sm:$0xff]
      %v8411 = vld [vmem:[%s8100 + $0x159] sm:$0xff]
      %v8412 = vld [vmem:[%s8100 + $0x169] sm:$0xff]
      %v8413 = vld [vmem:[%s8100 + $0x171] sm:$0xff]
      %v8415 = vsel %vm1773, %v6430, 0
      %v8418 = vsel %vm1773, %v6431, 0
      %v8421 = vsel %vm1773, %v6432, 0
      %v8424 = vsel %vm1773, %v6433, 0
      %v8427 = vsel %vm1773, %v6434, 0
      %v8430 = vsel %vm1773, %v6435, 0
      %v8433 = vsel %vm1773, %v6436, 0
      %v8436 = vsel %vm1773, %v6437, 0
      %v8439 = vsel %vm1773, %v8382, 0
      %v8442 = vsel %vm1773, %v8383, 0
      %v8445 = vsel %vm1773, %v8384, 0
      %v8448 = vsel %vm1773, %v8385, 0
      %v8451 = vsel %vm1773, %v8386, 0
      %v8454 = vsel %vm1773, %v8387, 0
      %v8457 = vsel %vm1773, %v8388, 0
      %v8460 = vsel %vm1773, %v8389, 0
      %v8463 = vsel %vm1773, %v8390, 0
      %v8466 = vsel %vm1773, %v8391, 0
      %v8469 = vsel %vm1773, %v8392, 0
      %v8472 = vsel %vm1773, %v8393, 0
      %v8475 = vsel %vm1773, %v8394, 0
      %v8478 = vsel %vm1773, %v8395, 0
      %v8481 = vsel %vm1773, %v8396, 0
      %v8484 = vsel %vm1773, %v8397, 0
      %v8487 = vsel %vm1773, %v8398, 0
      %v8490 = vsel %vm1773, %v8399, 0
      %v8493 = vsel %vm1773, %v8400, 0
      %v8496 = vsel %vm1773, %v8401, 0
      %v8499 = vsel %vm1773, %v8402, 0
      %v8502 = vsel %vm1773, %v8403, 0
      %v8505 = vsel %vm1773, %v8404, 0
      %v8508 = vsel %vm1773, %v8405, 0
      %v8511 = vsel %vm1773, %v8406, 0
      %v8514 = vsel %vm1773, %v8407, 0
      %v8517 = vsel %vm1773, %v8408, 0
      %v8520 = vsel %vm1773, %v8409, 0
      %v8523 = vsel %vm1773, %v8410, 0
      %v8526 = vsel %vm1773, %v8411, 0
      %v8529 = vsel %vm1773, %v8412, 0
      %v8532 = vsel %vm1773, %v8413, 0
      %8534 = vmatprep.subr.mxu0 0.0
      %8535 = vmatpush1.xpose.msra.mxu0 %v8484
      %8536 = vmatprep.subr.mxu0 0.0
      %8537 = vmatpush1.xpose.msra.mxu0 %v8481
      %8538 = vmatprep.subr.mxu0 0.0
      %8539 = vmatpush1.xpose.msra.mxu0 %v8478
      %8540 = vmatprep.subr.mxu0 0.0
      %8541 = vmatpush1.xpose.msra.mxu0 %v8475
      %8542 = vmatprep.subr.mxu0 0.0
      %8543 = vmatpush1.xpose.msra.mxu0 %v8472
      %8544 = vmatprep.subr.mxu0 0.0
      %8545 = vmatpush1.xpose.msra.mxu0 %v8469
      %8546 = vmatprep.subr.mxu0 0.0
      %8547 = vmatpush1.xpose.msra.mxu0 %v8466
      %8548 = vmatprep.subr.mxu0 0.0
      %8549 = vmatpush1.xpose.msra.mxu0 %v8463
      %8550 = vmatprep.subr.mxu0 0.0
      %8551 = vmatpush1.xpose.msra.mxu0 %v8460
      %8552 = vmatprep.subr.mxu0 0.0
      %8553 = vmatpush1.xpose.msra.mxu0 %v8457
      %8554 = vmatprep.subr.mxu0 0.0
      %8555 = vmatpush1.xpose.msra.mxu0 %v8454
      %8556 = vmatprep.subr.mxu0 0.0
      %8557 = vmatpush1.xpose.msra.mxu0 %v8451
      %8558 = vmatprep.subr.mxu0 0.0
      %8559 = vmatpush1.xpose.msra.mxu0 %v8448
      %8560 = vmatprep.subr.mxu0 0.0
      %8561 = vmatpush1.xpose.msra.mxu0 %v8445
      %8562 = vmatprep.subr.mxu0 0.0
      %8563 = vmatpush1.xpose.msra.mxu0 %v8442
      %8564 = vmatprep.subr.mxu0 0.0
      %8565 = vmatpush1.xpose.msra.mxu0 %v8439
      %8566 = vmatprep.subr.mxu0 0.0
      %8567 = vmatpush2.xpose.msra.mxu0 %v8532
      %8568 = vmatprep.subr.mxu0 0.0
      %8569 = vmatpush2.xpose.msra.mxu0 %v8529
      %8570 = vmatprep.subr.mxu0 0.0
      %8571 = vmatpush2.xpose.msra.mxu0 %v8526
      %8572 = vmatprep.subr.mxu0 0.0
      %8573 = vmatpush2.xpose.msra.mxu0 %v8523
      %8574 = vmatprep.subr.mxu0 0.0
      %8575 = vmatpush2.xpose.msra.mxu0 %v8520
      %8576 = vmatprep.subr.mxu0 0.0
      %8577 = vmatpush2.xpose.msra.mxu0 %v8517
      %8578 = vmatprep.subr.mxu0 0.0
      %8579 = vmatpush2.xpose.msra.mxu0 %v8514
      %8580 = vmatprep.subr.mxu0 0.0
      %8581 = vmatpush2.xpose.msra.mxu0 %v8511
      %8582 = vmatprep.subr.mxu0 0.0
      %8583 = vmatpush2.xpose.msra.mxu0 %v8508
      %8584 = vmatprep.subr.mxu0 0.0
      %8585 = vmatpush2.xpose.msra.mxu0 %v8505
      %8586 = vmatprep.subr.mxu0 0.0
      %8587 = vmatpush2.xpose.msra.mxu0 %v8502
      %8588 = vmatprep.subr.mxu0 0.0
      %8589 = vmatpush2.xpose.msra.mxu0 %v8499
      %8590 = vmatprep.subr.mxu0 0.0
      %8591 = vmatpush2.xpose.msra.mxu0 %v8496
      %8592 = vmatprep.subr.mxu0 0.0
      %8593 = vmatpush2.xpose.msra.mxu0 %v8493
      %8594 = vmatprep.subr.mxu0 0.0
      %8595 = vmatpush2.xpose.msra.mxu0 %v8490
      %8596 = vmatprep.subr.mxu0 0.0
      %8597 = vmatpush2.xpose.msra.mxu0 %v8487
      %8598 = vmatprep.mubr.f32.mxu0 0.0
      %8599 = vmatmul.mubr.f32.gmra.mxu0 %v8415
      %v8600 = vpop.f32.mrf.mxu0
      %v8601 = vadd.f32 0.0, %v8600
      %v8602 = vpop.f32.mrf.mxu0
      %v8603 = vadd.f32 0.0, %v8602
      %8604 = vmatprep.mubr.f32.mxu0 0.0
      %8605 = vmatmul.mubr.f32.gmra.mxu0 %v8418
      %v8606 = vpop.f32.mrf.mxu0
      %v8607 = vadd.f32 0.0, %v8606
      %v8608 = vpop.f32.mrf.mxu0
      %v8609 = vadd.f32 0.0, %v8608
      %8610 = vmatprep.mubr.f32.mxu0 0.0
      %8611 = vmatmul.mubr.f32.gmra.mxu0 %v8421
      %v8612 = vpop.f32.mrf.mxu0
      %v8613 = vadd.f32 0.0, %v8612
      %v8614 = vpop.f32.mrf.mxu0
      %v8615 = vadd.f32 0.0, %v8614
      %8616 = vmatprep.mubr.f32.mxu0 0.0
      %8617 = vmatmul.mubr.f32.gmra.mxu0 %v8424
      %v8618 = vpop.f32.mrf.mxu0
      %v8619 = vadd.f32 0.0, %v8618
      %v8620 = vpop.f32.mrf.mxu0
      %v8621 = vadd.f32 0.0, %v8620
      %8622 = vmatprep.mubr.f32.mxu0 0.0
      %8623 = vmatmul.mubr.f32.gmra.mxu0 %v8427
      %v8624 = vpop.f32.mrf.mxu0
      %v8625 = vadd.f32 0.0, %v8624
      %v8626 = vpop.f32.mrf.mxu0
      %v8627 = vadd.f32 0.0, %v8626
      %8628 = vmatprep.mubr.f32.mxu0 0.0
      %8629 = vmatmul.mubr.f32.gmra.mxu0 %v8430
      %v8630 = vpop.f32.mrf.mxu0
      %v8631 = vadd.f32 0.0, %v8630
      %v8632 = vpop.f32.mrf.mxu0
      %v8633 = vadd.f32 0.0, %v8632
      %8634 = vmatprep.mubr.f32.mxu0 0.0
      %8635 = vmatmul.mubr.f32.gmra.mxu0 %v8433
      %v8636 = vpop.f32.mrf.mxu0
      %v8637 = vadd.f32 0.0, %v8636
      %v8638 = vpop.f32.mrf.mxu0
      %v8639 = vadd.f32 0.0, %v8638
      %8640 = vmatprep.mubr.f32.mxu0 0.0
      %8641 = vmatmul.mubr.f32.gmra.mxu0 %v8436
      %v8642 = vpop.f32.mrf.mxu0
      %v8643 = vadd.f32 0.0, %v8642
      %v8644 = vpop.f32.mrf.mxu0
      %v8645 = vadd.f32 0.0, %v8644
      %8646 = vdwg.mxu0
      %v8647 = vadd.f32 %v8366, %v8601
      %v8648 = vadd.f32 %v8367, %v8603
      %v8649 = vadd.f32 %v8368, %v8607
      %v8650 = vadd.f32 %v8369, %v8609
      %v8651 = vadd.f32 %v8370, %v8613
      %v8652 = vadd.f32 %v8371, %v8615
      %v8653 = vadd.f32 %v8372, %v8619
      %v8654 = vadd.f32 %v8373, %v8621
      %v8655 = vadd.f32 %v8374, %v8625
      %v8656 = vadd.f32 %v8375, %v8627
      %v8657 = vadd.f32 %v8376, %v8631
      %v8658 = vadd.f32 %v8377, %v8633
      %v8659 = vadd.f32 %v8378, %v8637
      %v8660 = vadd.f32 %v8379, %v8639
      %v8661 = vadd.f32 %v8380, %v8643
      %v8662 = vadd.f32 %v8381, %v8645
      %v8663 = vld [vmem:[%s8100 + $0x2] sm:$0xff]
      %v8664 = vld [vmem:[%s8100 + $0xa] sm:$0xff]
      %v8665 = vld [vmem:[%s8100 + $0x1a] sm:$0xff]
      %v8666 = vld [vmem:[%s8100 + $0x22] sm:$0xff]
      %v8667 = vld [vmem:[%s8100 + $0x32] sm:$0xff]
      %v8668 = vld [vmem:[%s8100 + $0x3a] sm:$0xff]
      %v8669 = vld [vmem:[%s8100 + $0x4a] sm:$0xff]
      %v8670 = vld [vmem:[%s8100 + $0x52] sm:$0xff]
      %v8671 = vld [vmem:[%s8100 + $0x62] sm:$0xff]
      %v8672 = vld [vmem:[%s8100 + $0x6a] sm:$0xff]
      %v8673 = vld [vmem:[%s8100 + $0x7a] sm:$0xff]
      %v8674 = vld [vmem:[%s8100 + $0x82] sm:$0xff]
      %v8675 = vld [vmem:[%s8100 + $0x92] sm:$0xff]
      %v8676 = vld [vmem:[%s8100 + $0x9a] sm:$0xff]
      %v8677 = vld [vmem:[%s8100 + $0xaa] sm:$0xff]
      %v8678 = vld [vmem:[%s8100 + $0xb2] sm:$0xff]
      %v8679 = vld [vmem:[%s8100 + $0xc2] sm:$0xff]
      %v8680 = vld [vmem:[%s8100 + $0xca] sm:$0xff]
      %v8681 = vld [vmem:[%s8100 + $0xda] sm:$0xff]
      %v8682 = vld [vmem:[%s8100 + $0xe2] sm:$0xff]
      %v8683 = vld [vmem:[%s8100 + $0xf2] sm:$0xff]
      %v8684 = vld [vmem:[%s8100 + $0xfa] sm:$0xff]
      %v8685 = vld [vmem:[%s8100 + $0x10a] sm:$0xff]
      %v8686 = vld [vmem:[%s8100 + $0x112] sm:$0xff]
      %v8687 = vld [vmem:[%s8100 + $0x122] sm:$0xff]
      %v8688 = vld [vmem:[%s8100 + $0x12a] sm:$0xff]
      %v8689 = vld [vmem:[%s8100 + $0x13a] sm:$0xff]
      %v8690 = vld [vmem:[%s8100 + $0x142] sm:$0xff]
      %v8691 = vld [vmem:[%s8100 + $0x152] sm:$0xff]
      %v8692 = vld [vmem:[%s8100 + $0x15a] sm:$0xff]
      %v8693 = vld [vmem:[%s8100 + $0x16a] sm:$0xff]
      %v8694 = vld [vmem:[%s8100 + $0x172] sm:$0xff]
      %v8696 = vsel %vm1773, %v6438, 0
      %v8699 = vsel %vm1773, %v6439, 0
      %v8702 = vsel %vm1773, %v6440, 0
      %v8705 = vsel %vm1773, %v6441, 0
      %v8708 = vsel %vm1773, %v6442, 0
      %v8711 = vsel %vm1773, %v6443, 0
      %v8714 = vsel %vm1773, %v6444, 0
      %v8717 = vsel %vm1773, %v6445, 0
      %v8720 = vsel %vm1773, %v8663, 0
      %v8723 = vsel %vm1773, %v8664, 0
      %v8726 = vsel %vm1773, %v8665, 0
      %v8729 = vsel %vm1773, %v8666, 0
      %v8732 = vsel %vm1773, %v8667, 0
      %v8735 = vsel %vm1773, %v8668, 0
      %v8738 = vsel %vm1773, %v8669, 0
      %v8741 = vsel %vm1773, %v8670, 0
      %v8744 = vsel %vm1773, %v8671, 0
      %v8747 = vsel %vm1773, %v8672, 0
      %v8750 = vsel %vm1773, %v8673, 0
      %v8753 = vsel %vm1773, %v8674, 0
      %v8756 = vsel %vm1773, %v8675, 0
      %v8759 = vsel %vm1773, %v8676, 0
      %v8762 = vsel %vm1773, %v8677, 0
      %v8765 = vsel %vm1773, %v8678, 0
      %v8768 = vsel %vm1773, %v8679, 0
      %v8771 = vsel %vm1773, %v8680, 0
      %v8774 = vsel %vm1773, %v8681, 0
      %v8777 = vsel %vm1773, %v8682, 0
      %v8780 = vsel %vm1773, %v8683, 0
      %v8783 = vsel %vm1773, %v8684, 0
      %v8786 = vsel %vm1773, %v8685, 0
      %v8789 = vsel %vm1773, %v8686, 0
      %v8792 = vsel %vm1773, %v8687, 0
      %v8795 = vsel %vm1773, %v8688, 0
      %v8798 = vsel %vm1773, %v8689, 0
      %v8801 = vsel %vm1773, %v8690, 0
      %v8804 = vsel %vm1773, %v8691, 0
      %v8807 = vsel %vm1773, %v8692, 0
      %v8810 = vsel %vm1773, %v8693, 0
      %v8813 = vsel %vm1773, %v8694, 0
      %8815 = vmatprep.subr.mxu0 0.0
      %8816 = vmatpush1.xpose.msra.mxu0 %v8765
      %8817 = vmatprep.subr.mxu0 0.0
      %8818 = vmatpush1.xpose.msra.mxu0 %v8762
      %8819 = vmatprep.subr.mxu0 0.0
      %8820 = vmatpush1.xpose.msra.mxu0 %v8759
      %8821 = vmatprep.subr.mxu0 0.0
      %8822 = vmatpush1.xpose.msra.mxu0 %v8756
      %8823 = vmatprep.subr.mxu0 0.0
      %8824 = vmatpush1.xpose.msra.mxu0 %v8753
      %8825 = vmatprep.subr.mxu0 0.0
      %8826 = vmatpush1.xpose.msra.mxu0 %v8750
      %8827 = vmatprep.subr.mxu0 0.0
      %8828 = vmatpush1.xpose.msra.mxu0 %v8747
      %8829 = vmatprep.subr.mxu0 0.0
      %8830 = vmatpush1.xpose.msra.mxu0 %v8744
      %8831 = vmatprep.subr.mxu0 0.0
      %8832 = vmatpush1.xpose.msra.mxu0 %v8741
      %8833 = vmatprep.subr.mxu0 0.0
      %8834 = vmatpush1.xpose.msra.mxu0 %v8738
      %8835 = vmatprep.subr.mxu0 0.0
      %8836 = vmatpush1.xpose.msra.mxu0 %v8735
      %8837 = vmatprep.subr.mxu0 0.0
      %8838 = vmatpush1.xpose.msra.mxu0 %v8732
      %8839 = vmatprep.subr.mxu0 0.0
      %8840 = vmatpush1.xpose.msra.mxu0 %v8729
      %8841 = vmatprep.subr.mxu0 0.0
      %8842 = vmatpush1.xpose.msra.mxu0 %v8726
      %8843 = vmatprep.subr.mxu0 0.0
      %8844 = vmatpush1.xpose.msra.mxu0 %v8723
      %8845 = vmatprep.subr.mxu0 0.0
      %8846 = vmatpush1.xpose.msra.mxu0 %v8720
      %8847 = vmatprep.subr.mxu0 0.0
      %8848 = vmatpush2.xpose.msra.mxu0 %v8813
      %8849 = vmatprep.subr.mxu0 0.0
      %8850 = vmatpush2.xpose.msra.mxu0 %v8810
      %8851 = vmatprep.subr.mxu0 0.0
      %8852 = vmatpush2.xpose.msra.mxu0 %v8807
      %8853 = vmatprep.subr.mxu0 0.0
      %8854 = vmatpush2.xpose.msra.mxu0 %v8804
      %8855 = vmatprep.subr.mxu0 0.0
      %8856 = vmatpush2.xpose.msra.mxu0 %v8801
      %8857 = vmatprep.subr.mxu0 0.0
      %8858 = vmatpush2.xpose.msra.mxu0 %v8798
      %8859 = vmatprep.subr.mxu0 0.0
      %8860 = vmatpush2.xpose.msra.mxu0 %v8795
      %8861 = vmatprep.subr.mxu0 0.0
      %8862 = vmatpush2.xpose.msra.mxu0 %v8792
      %8863 = vmatprep.subr.mxu0 0.0
      %8864 = vmatpush2.xpose.msra.mxu0 %v8789
      %8865 = vmatprep.subr.mxu0 0.0
      %8866 = vmatpush2.xpose.msra.mxu0 %v8786
      %8867 = vmatprep.subr.mxu0 0.0
      %8868 = vmatpush2.xpose.msra.mxu0 %v8783
      %8869 = vmatprep.subr.mxu0 0.0
      %8870 = vmatpush2.xpose.msra.mxu0 %v8780
      %8871 = vmatprep.subr.mxu0 0.0
      %8872 = vmatpush2.xpose.msra.mxu0 %v8777
      %8873 = vmatprep.subr.mxu0 0.0
      %8874 = vmatpush2.xpose.msra.mxu0 %v8774
      %8875 = vmatprep.subr.mxu0 0.0
      %8876 = vmatpush2.xpose.msra.mxu0 %v8771
      %8877 = vmatprep.subr.mxu0 0.0
      %8878 = vmatpush2.xpose.msra.mxu0 %v8768
      %8879 = vmatprep.mubr.f32.mxu0 0.0
      %8880 = vmatmul.mubr.f32.gmra.mxu0 %v8696
      %v8881 = vpop.f32.mrf.mxu0
      %v8882 = vadd.f32 0.0, %v8881
      %v8883 = vpop.f32.mrf.mxu0
      %v8884 = vadd.f32 0.0, %v8883
      %8885 = vmatprep.mubr.f32.mxu0 0.0
      %8886 = vmatmul.mubr.f32.gmra.mxu0 %v8699
      %v8887 = vpop.f32.mrf.mxu0
      %v8888 = vadd.f32 0.0, %v8887
      %v8889 = vpop.f32.mrf.mxu0
      %v8890 = vadd.f32 0.0, %v8889
      %8891 = vmatprep.mubr.f32.mxu0 0.0
      %8892 = vmatmul.mubr.f32.gmra.mxu0 %v8702
      %v8893 = vpop.f32.mrf.mxu0
      %v8894 = vadd.f32 0.0, %v8893
      %v8895 = vpop.f32.mrf.mxu0
      %v8896 = vadd.f32 0.0, %v8895
      %8897 = vmatprep.mubr.f32.mxu0 0.0
      %8898 = vmatmul.mubr.f32.gmra.mxu0 %v8705
      %v8899 = vpop.f32.mrf.mxu0
      %v8900 = vadd.f32 0.0, %v8899
      %v8901 = vpop.f32.mrf.mxu0
      %v8902 = vadd.f32 0.0, %v8901
      %8903 = vmatprep.mubr.f32.mxu0 0.0
      %8904 = vmatmul.mubr.f32.gmra.mxu0 %v8708
      %v8905 = vpop.f32.mrf.mxu0
      %v8906 = vadd.f32 0.0, %v8905
      %v8907 = vpop.f32.mrf.mxu0
      %v8908 = vadd.f32 0.0, %v8907
      %8909 = vmatprep.mubr.f32.mxu0 0.0
      %8910 = vmatmul.mubr.f32.gmra.mxu0 %v8711
      %v8911 = vpop.f32.mrf.mxu0
      %v8912 = vadd.f32 0.0, %v8911
      %v8913 = vpop.f32.mrf.mxu0
      %v8914 = vadd.f32 0.0, %v8913
      %8915 = vmatprep.mubr.f32.mxu0 0.0
      %8916 = vmatmul.mubr.f32.gmra.mxu0 %v8714
      %v8917 = vpop.f32.mrf.mxu0
      %v8918 = vadd.f32 0.0, %v8917
      %v8919 = vpop.f32.mrf.mxu0
      %v8920 = vadd.f32 0.0, %v8919
      %8921 = vmatprep.mubr.f32.mxu0 0.0
      %8922 = vmatmul.mubr.f32.gmra.mxu0 %v8717
      %v8923 = vpop.f32.mrf.mxu0
      %v8924 = vadd.f32 0.0, %v8923
      %v8925 = vpop.f32.mrf.mxu0
      %v8926 = vadd.f32 0.0, %v8925
      %8927 = vdwg.mxu0
      %v8928 = vadd.f32 %v8647, %v8882
      %v8929 = vadd.f32 %v8648, %v8884
      %v8930 = vadd.f32 %v8649, %v8888
      %v8931 = vadd.f32 %v8650, %v8890
      %v8932 = vadd.f32 %v8651, %v8894
      %v8933 = vadd.f32 %v8652, %v8896
      %v8934 = vadd.f32 %v8653, %v8900
      %v8935 = vadd.f32 %v8654, %v8902
      %v8936 = vadd.f32 %v8655, %v8906
      %v8937 = vadd.f32 %v8656, %v8908
      %v8938 = vadd.f32 %v8657, %v8912
      %v8939 = vadd.f32 %v8658, %v8914
      %v8940 = vadd.f32 %v8659, %v8918
      %v8941 = vadd.f32 %v8660, %v8920
      %v8942 = vadd.f32 %v8661, %v8924
      %v8943 = vadd.f32 %v8662, %v8926
      %v8944 = vld [vmem:[%s14] sm:$0xff]
      %v8945 = vld [vmem:[%s14 + $0x8] sm:$0xff]
      %v8946 = vld [vmem:[%s14 + $0x10] sm:$0xff]
      %v8947 = vld [vmem:[%s14 + $0x18] sm:$0xff]
      %v8948 = vld [vmem:[%s14 + $0x20] sm:$0xff]
      %v8949 = vld [vmem:[%s14 + $0x28] sm:$0xff]
      %v8950 = vld [vmem:[%s14 + $0x30] sm:$0xff]
      %v8951 = vld [vmem:[%s14 + $0x38] sm:$0xff]
      %v8953 = vsel %vm939, %v8944, 0
      %v8956 = vsel %vm939, %v8945, 0
      %v8959 = vsel %vm939, %v8946, 0
      %v8962 = vsel %vm939, %v8947, 0
      %v8965 = vsel %vm939, %v8948, 0
      %v8968 = vsel %vm939, %v8949, 0
      %v8971 = vsel %vm939, %v8950, 0
      %v8974 = vsel %vm939, %v8951, 0
      %8976 = vmatprep.subr.mxu0 0.0
      %8977 = vmatpush1.msra.mxu0 0.0
      %8978 = vmatprep.subr.mxu0 0.0
      %8979 = vmatpush1.msra.mxu0 0.0
      %8980 = vmatprep.subr.mxu0 0.0
      %8981 = vmatpush1.msra.mxu0 0.0
      %8982 = vmatprep.subr.mxu0 0.0
      %8983 = vmatpush1.msra.mxu0 0.0
      %8984 = vmatprep.subr.mxu0 0.0
      %8985 = vmatpush1.msra.mxu0 0.0
      %8986 = vmatprep.subr.mxu0 0.0
      %8987 = vmatpush1.msra.mxu0 0.0
      %8988 = vmatprep.subr.mxu0 0.0
      %8989 = vmatpush1.msra.mxu0 0.0
      %8990 = vmatprep.subr.mxu0 0.0
      %8991 = vmatpush1.msra.mxu0 0.0
      %8992 = vmatprep.subr.mxu0 0.0
      %8993 = vmatpush1.msra.mxu0 0.0
      %8994 = vmatprep.subr.mxu0 0.0
      %8995 = vmatpush1.msra.mxu0 0.0
      %8996 = vmatprep.subr.mxu0 0.0
      %8997 = vmatpush1.msra.mxu0 0.0
      %8998 = vmatprep.subr.mxu0 0.0
      %8999 = vmatpush1.msra.mxu0 0.0
      %9000 = vmatprep.subr.mxu0 %v543
      %9001 = vmatpush1.msra.mxu0 %v542
      %9002 = vmatprep.subr.mxu0 %v541
      %9003 = vmatpush1.msra.mxu0 %v540
      %9004 = vmatprep.subr.mxu0 %v539
      %9005 = vmatpush1.msra.mxu0 %v538
      %9006 = vmatprep.subr.mxu0 %v537
      %9007 = vmatpush1.msra.mxu0 %v536
      %9008 = vmatprep.subr.mxu0 0.0
      %9009 = vmatpush2.msra.mxu0 0.0
      %9010 = vmatprep.subr.mxu0 0.0
      %9011 = vmatpush2.msra.mxu0 0.0
      %9012 = vmatprep.subr.mxu0 0.0
      %9013 = vmatpush2.msra.mxu0 0.0
      %9014 = vmatprep.subr.mxu0 0.0
      %9015 = vmatpush2.msra.mxu0 0.0
      %9016 = vmatprep.subr.mxu0 0.0
      %9017 = vmatpush2.msra.mxu0 0.0
      %9018 = vmatprep.subr.mxu0 0.0
      %9019 = vmatpush2.msra.mxu0 0.0
      %9020 = vmatprep.subr.mxu0 0.0
      %9021 = vmatpush2.msra.mxu0 0.0
      %9022 = vmatprep.subr.mxu0 0.0
      %9023 = vmatpush2.msra.mxu0 0.0
      %9024 = vmatprep.subr.mxu0 0.0
      %9025 = vmatpush2.msra.mxu0 0.0
      %9026 = vmatprep.subr.mxu0 0.0
      %9027 = vmatpush2.msra.mxu0 0.0
      %9028 = vmatprep.subr.mxu0 0.0
      %9029 = vmatpush2.msra.mxu0 0.0
      %9030 = vmatprep.subr.mxu0 0.0
      %9031 = vmatpush2.msra.mxu0 0.0
      %9032 = vmatprep.subr.mxu0 0.0
      %9033 = vmatpush2.msra.mxu0 0.0
      %9034 = vmatprep.subr.mxu0 0.0
      %9035 = vmatpush2.msra.mxu0 0.0
      %9036 = vmatprep.subr.mxu0 0.0
      %9037 = vmatpush2.msra.mxu0 0.0
      %9038 = vmatprep.subr.mxu0 0.0
      %9039 = vmatpush2.msra.mxu0 0.0
      %9040 = vmatprep.mubr.f32.mxu0 0.0
      %9041 = vmatmul.mubr.f32.gmra.mxu0 %v8953
      %v9042 = vpop.f32.mrf.mxu0
      %v9043 = vadd.f32 0.0, %v9042
      %v9044 = vpop.f32.mrf.mxu0
      %v9045 = vadd.f32 0.0, %v9044
      %9046 = vmatprep.mubr.f32.mxu0 0.0
      %9047 = vmatmul.mubr.f32.gmra.mxu0 %v8956
      %v9048 = vpop.f32.mrf.mxu0
      %v9049 = vadd.f32 0.0, %v9048
      %v9050 = vpop.f32.mrf.mxu0
      %v9051 = vadd.f32 0.0, %v9050
      %9052 = vmatprep.mubr.f32.mxu0 0.0
      %9053 = vmatmul.mubr.f32.gmra.mxu0 %v8959
      %v9054 = vpop.f32.mrf.mxu0
      %v9055 = vadd.f32 0.0, %v9054
      %v9056 = vpop.f32.mrf.mxu0
      %v9057 = vadd.f32 0.0, %v9056
      %9058 = vmatprep.mubr.f32.mxu0 0.0
      %9059 = vmatmul.mubr.f32.gmra.mxu0 %v8962
      %v9060 = vpop.f32.mrf.mxu0
      %v9061 = vadd.f32 0.0, %v9060
      %v9062 = vpop.f32.mrf.mxu0
      %v9063 = vadd.f32 0.0, %v9062
      %9064 = vmatprep.mubr.f32.mxu0 0.0
      %9065 = vmatmul.mubr.f32.gmra.mxu0 %v8965
      %v9066 = vpop.f32.mrf.mxu0
      %v9067 = vadd.f32 0.0, %v9066
      %v9068 = vpop.f32.mrf.mxu0
      %v9069 = vadd.f32 0.0, %v9068
      %9070 = vmatprep.mubr.f32.mxu0 0.0
      %9071 = vmatmul.mubr.f32.gmra.mxu0 %v8968
      %v9072 = vpop.f32.mrf.mxu0
      %v9073 = vadd.f32 0.0, %v9072
      %v9074 = vpop.f32.mrf.mxu0
      %v9075 = vadd.f32 0.0, %v9074
      %9076 = vmatprep.mubr.f32.mxu0 0.0
      %9077 = vmatmul.mubr.f32.gmra.mxu0 %v8971
      %v9078 = vpop.f32.mrf.mxu0
      %v9079 = vadd.f32 0.0, %v9078
      %v9080 = vpop.f32.mrf.mxu0
      %v9081 = vadd.f32 0.0, %v9080
      %9082 = vmatprep.mubr.f32.mxu0 0.0
      %9083 = vmatmul.mubr.f32.gmra.mxu0 %v8974
      %v9084 = vpop.f32.mrf.mxu0
      %v9085 = vadd.f32 0.0, %v9084
      %v9086 = vpop.f32.mrf.mxu0
      %v9087 = vadd.f32 0.0, %v9086
      %9088 = vdwg.mxu0
      %v9089 = vld [vmem:[%s13] sm:$0xff]
      %v9090 = vld [vmem:[%s13 + $0x8] sm:$0xff]
      %v9091 = vld [vmem:[%s13 + $0x10] sm:$0xff]
      %v9092 = vld [vmem:[%s13 + $0x18] sm:$0xff]
      %v9093 = vld [vmem:[%s13 + $0x20] sm:$0xff]
      %v9094 = vld [vmem:[%s13 + $0x28] sm:$0xff]
      %v9095 = vld [vmem:[%s13 + $0x30] sm:$0xff]
      %v9096 = vld [vmem:[%s13 + $0x38] sm:$0xff]
      %9098 = vset.pattern.permute.xlu0 0
      %9099 = vperm.xlu0 %9098, %v9089
      %v9100 = vpop.permute.xlu0 %9099
      %9103 = vset.pattern.permute.xlu0 0
      %9104 = vperm.xlu0 %9103, %v9090
      %v9105 = vpop.permute.xlu0 %9104
      %9108 = vset.pattern.permute.xlu0 0
      %9109 = vperm.xlu0 %9108, %v9091
      %v9110 = vpop.permute.xlu0 %9109
      %9113 = vset.pattern.permute.xlu0 0
      %9114 = vperm.xlu0 %9113, %v9092
      %v9115 = vpop.permute.xlu0 %9114
      %9118 = vset.pattern.permute.xlu0 0
      %9119 = vperm.xlu0 %9118, %v9093
      %v9120 = vpop.permute.xlu0 %9119
      %9123 = vset.pattern.permute.xlu0 0
      %9124 = vperm.xlu0 %9123, %v9094
      %v9125 = vpop.permute.xlu0 %9124
      %9128 = vset.pattern.permute.xlu0 0
      %9129 = vperm.xlu0 %9128, %v9095
      %v9130 = vpop.permute.xlu0 %9129
      %9133 = vset.pattern.permute.xlu0 0
      %9134 = vperm.xlu0 %9133, %v9096
      %v9135 = vpop.permute.xlu0 %9134
      %v9137 = vadd.f32 %v8928, %v9100
      %v9138 = vadd.f32 %v8929, %v9100
      %v9139 = vadd.f32 %v8930, %v9105
      %v9140 = vadd.f32 %v8931, %v9105
      %v9141 = vadd.f32 %v8932, %v9110
      %v9142 = vadd.f32 %v8933, %v9110
      %v9143 = vadd.f32 %v8934, %v9115
      %v9144 = vadd.f32 %v8935, %v9115
      %v9145 = vadd.f32 %v8936, %v9120
      %v9146 = vadd.f32 %v8937, %v9120
      %v9147 = vadd.f32 %v8938, %v9125
      %v9148 = vadd.f32 %v8939, %v9125
      %v9149 = vadd.f32 %v8940, %v9130
      %v9150 = vadd.f32 %v8941, %v9130
      %v9151 = vadd.f32 %v8942, %v9135
      %v9152 = vadd.f32 %v8943, %v9135
      %v9153 = vadd.f32 %v9137, %v9043
      %v9154 = vadd.f32 %v9138, %v9045
      %v9155 = vadd.f32 %v9139, %v9049
      %v9156 = vadd.f32 %v9140, %v9051
      %v9157 = vadd.f32 %v9141, %v9055
      %v9158 = vadd.f32 %v9142, %v9057
      %v9159 = vadd.f32 %v9143, %v9061
      %v9160 = vadd.f32 %v9144, %v9063
      %v9161 = vadd.f32 %v9145, %v9067
      %v9162 = vadd.f32 %v9146, %v9069
      %v9163 = vadd.f32 %v9147, %v9073
      %v9164 = vadd.f32 %v9148, %v9075
      %v9165 = vadd.f32 %v9149, %v9079
      %v9166 = vadd.f32 %v9150, %v9081
      %v9167 = vadd.f32 %v9151, %v9085
      %v9168 = vadd.f32 %v9152, %v9087
      %v9169 = vld [vmem:[%s15] sm:$0xff]
      %v9170 = vld [vmem:[%s15 + $0x8] sm:$0xff]
      %v9171 = vld [vmem:[%s15 + $0x10] sm:$0xff]
      %v9172 = vld [vmem:[%s15 + $0x18] sm:$0xff]
      %v9173 = vld [vmem:[%s15 + $0x20] sm:$0xff]
      %v9174 = vld [vmem:[%s15 + $0x28] sm:$0xff]
      %v9175 = vld [vmem:[%s15 + $0x30] sm:$0xff]
      %v9176 = vld [vmem:[%s15 + $0x38] sm:$0xff]
      %9178 = vset.pattern.permute.xlu0 0
      %9179 = vperm.xlu0 %9178, %v9169
      %v9180 = vpop.permute.xlu0 %9179
      %9183 = vset.pattern.permute.xlu0 0
      %9184 = vperm.xlu0 %9183, %v9170
      %v9185 = vpop.permute.xlu0 %9184
      %9188 = vset.pattern.permute.xlu0 0
      %9189 = vperm.xlu0 %9188, %v9171
      %v9190 = vpop.permute.xlu0 %9189
      %9193 = vset.pattern.permute.xlu0 0
      %9194 = vperm.xlu0 %9193, %v9172
      %v9195 = vpop.permute.xlu0 %9194
      %9198 = vset.pattern.permute.xlu0 0
      %9199 = vperm.xlu0 %9198, %v9173
      %v9200 = vpop.permute.xlu0 %9199
      %9203 = vset.pattern.permute.xlu0 0
      %9204 = vperm.xlu0 %9203, %v9174
      %v9205 = vpop.permute.xlu0 %9204
      %9208 = vset.pattern.permute.xlu0 0
      %9209 = vperm.xlu0 %9208, %v9175
      %v9210 = vpop.permute.xlu0 %9209
      %9213 = vset.pattern.permute.xlu0 0
      %9214 = vperm.xlu0 %9213, %v9176
      %v9215 = vpop.permute.xlu0 %9214
      %v9217 = vadd.f32 %v9153, %v9180
      %v9218 = vadd.f32 %v9154, %v9180
      %v9219 = vadd.f32 %v9155, %v9185
      %v9220 = vadd.f32 %v9156, %v9185
      %v9221 = vadd.f32 %v9157, %v9190
      %v9222 = vadd.f32 %v9158, %v9190
      %v9223 = vadd.f32 %v9159, %v9195
      %v9224 = vadd.f32 %v9160, %v9195
      %v9225 = vadd.f32 %v9161, %v9200
      %v9226 = vadd.f32 %v9162, %v9200
      %v9227 = vadd.f32 %v9163, %v9205
      %v9228 = vadd.f32 %v9164, %v9205
      %v9229 = vadd.f32 %v9165, %v9210
      %v9230 = vadd.f32 %v9166, %v9210
      %v9231 = vadd.f32 %v9167, %v9215
      %v9232 = vadd.f32 %v9168, %v9215
      %9233 = vst [vmem:[%s535] sm:$0xff] %v9217
      %9234 = vst [vmem:[%s535 + $0x8] sm:$0xff] %v9218
      %9235 = vst [vmem:[%s535 + $0x10] sm:$0xff] %v9219
      %9236 = vst [vmem:[%s535 + $0x18] sm:$0xff] %v9220
      %9237 = vst [vmem:[%s535 + $0x20] sm:$0xff] %v9221
      %9238 = vst [vmem:[%s535 + $0x28] sm:$0xff] %v9222
      %9239 = vst [vmem:[%s535 + $0x30] sm:$0xff] %v9223
      %9240 = vst [vmem:[%s535 + $0x38] sm:$0xff] %v9224
      %9241 = vst [vmem:[%s535 + $0x40] sm:$0xff] %v9225
      %9242 = vst [vmem:[%s535 + $0x48] sm:$0xff] %v9226
      %9243 = vst [vmem:[%s535 + $0x50] sm:$0xff] %v9227
      %9244 = vst [vmem:[%s535 + $0x58] sm:$0xff] %v9228
      %9245 = vst [vmem:[%s535 + $0x60] sm:$0xff] %v9229
      %9246 = vst [vmem:[%s535 + $0x68] sm:$0xff] %v9230
      %9247 = vst [vmem:[%s535 + $0x70] sm:$0xff] %v9231
      %9248 = vst [vmem:[%s535 + $0x78] sm:$0xff] %v9232
      %p9249 = scmp.lt.s32.totalorder %s27, 1
      %s9250 = scalar_select %p9249, %s27, 1
      %s9251 = smul.addr %s9250, 16
      %s9252 = smul.addr %s9251, 8
      %s9253 = scalar_lea.vmem %s16, %s9252
      // Predicated region
      $region85: #{resnet_block_forward.1} parent=83 // pred_check
        %p9254 = pneg %p391
      $region86: #{resnet_block_forward.1} parent=83 // pred_check_branch
        %9256 = sbr.rel (%p9254) target = $region88
      $region87: #{resnet_block_forward.1} parent=83 // pred_region
        _
      $region88: #{resnet_block_forward.1} parent=83 // pred_fallthru
        _
    $region84: #{resnet_block_forward.1} parent=5 // pred_fallthru
      _
    %p9257 = scmp.le.s32.totalorder 2, %s22
    // Predicated region
    $region89: #{resnet_block_forward.1} parent=5 // pred_check
      %p9258 = pneg %p9257
    $region90: #{resnet_block_forward.1} parent=5 // pred_check_branch
      %9260 = sbr.rel (%p9258) target = $region92
    $region91: #{resnet_block_forward.1} parent=5 // pred_region
      %s9261 = ssub.s32 %s22, 2
      // Predicated region
      $region93: #{resnet_block_forward.1} parent=91 // pred_check
        %p9262 = pneg %p397
      $region94: #{resnet_block_forward.1} parent=91 // pred_check_branch
        %9264 = sbr.rel (%p9262) target = $region96
      $region95: #{resnet_block_forward.1} parent=91 // pred_region
        %p9265 = scmp.lt.s32.totalorder %s28, 1
        %s9266 = scalar_select %p9265, %s28, 1
        %s9267 = smul.addr %s9266, 16
        %s9268 = smul.addr %s9267, 8
        %s9269 = scalar_lea.vmem %s16, %s9268
      $region96: #{resnet_block_forward.1} parent=91 // pred_fallthru
        _
    $region92: #{resnet_block_forward.1} parent=5 // pred_fallthru
      _
  $region6: #{resnet_block_forward.1} parent=0 // loop_footer
    %s26 = sadd.s32 1, %s22
  $region7: #{resnet_block_forward.1} parent=0 // loop_footer_branch
    %21 = sbr.rel target = $region3
  $region8: #{resnet_block_forward.1} parent=0 // loop_exit
    _

</llo_original>
